<compile_context>
chip_gen: v5e
topology: v5e:2x2
jax: 0.10.0
libtpu: 0.0.40
codegen_flags: <defaults>
</compile_context>

<pallas_src>
import functools
import math

import jax
import jax.numpy as jnp
from jax.experimental import pallas as pl
from jax.experimental.pallas import tpu as pltpu

# ----------------------------- model config ---------------------------------
STATE_DIM = 6
ACT_DIM = 3
HIDDEN = 32
N_LAYER = 2
N_HEAD = 4
HEAD_DIM = HIDDEN // N_HEAD
BATCH = 2
SEQ = 8                      # seq_length L ; transformer sees T = 3*L tokens
N_POSITIONS = 64             # >= 3*SEQ
LN_EPS = 1e-5
HEAD_PAD = 128               # lane-dense fused prediction-head output width
# fused head column layout: [0]=return, [1:1+STATE_DIM]=state, next ACT_DIM=action
_ACT_LO = 1 + STATE_DIM
_ACT_HI = 1 + STATE_DIM + ACT_DIM


# ------------------------------ fused kernel --------------------------------
def _dt_forward_kernel(
        states_ref, actions_ref, rtg_ref,
        w_ret_ref, b_ret_ref, w_st_ref, b_st_ref, w_ac_ref, b_ac_ref,
        eln_g_ref, eln_b_ref, wpe_ref, pos_row_ref, pos_col_ref,
        ln1_g_ref, ln1_b_ref,
        wq_ref, bq_ref, wk_ref, bk_ref, wv_ref, bv_ref,
        wproj_ref, bproj_ref,
        ln2_g_ref, ln2_b_ref,
        wfc_ref, bfc_ref, wfcp_ref, bfcp_ref,
        lnf_g_ref, lnf_b_ref,
        w_head_ref, b_head_ref,
        out_ref, *, batch, seq):
    B, L = batch, seq
    T = 3 * L
    BT = B * T
    H = HIDDEN
    f32 = jnp.float32

    def ln(x, g, b):
        mean = jnp.mean(x, axis=-1, keepdims=True)
        var = jnp.mean(jnp.square(x - mean), axis=-1, keepdims=True)
        return (x - mean) * jax.lax.rsqrt(var + LN_EPS) * g + b

    def gelu_new(x):
        c = 0.7978845608028654  # sqrt(2/pi)
        return 0.5 * x * (1.0 + jnp.tanh(c * (x + 0.044715 * x * x * x)))

    # ---- token-type embeddings: (B*L, H) each ----
    r_emb = jnp.dot(rtg_ref[...], w_ret_ref[...],
                    preferred_element_type=f32) + b_ret_ref[...]
    s_emb = jnp.dot(states_ref[...], w_st_ref[...],
                    preferred_element_type=f32) + b_st_ref[...]
    a_emb = jnp.dot(actions_ref[...], w_ac_ref[...],
                    preferred_element_type=f32) + b_ac_ref[...]

    # ---- grouped residual stream (B*T, H): per batch [R rows | s rows | a rows]
    rows = []
    for b in range(B):
        rows.append(r_emb[b * L:(b + 1) * L, :])
        rows.append(s_emb[b * L:(b + 1) * L, :])
        rows.append(a_emb[b * L:(b + 1) * L, :])
    h = jnp.concatenate(rows, axis=0)                       # (B*T, H)

    # embed_ln, then learned position embeddings (already permuted to grouped order)
    h = ln(h, eln_g_ref[...], eln_b_ref[...])
    wpe = wpe_ref[...]                                      # (T, H)
    h = h + jnp.concatenate([wpe] * B, axis=0)

    # causal mask in grouped layout: [q, k] allowed iff pos[k] <= pos[q],
    # where pos is the original interleaved position 3t+g (precomputed).
    causal = pos_row_ref[...] <= pos_col_ref[...]           # (T, T)
    neg = jnp.float32(-1e30)
    scale = 1.0 / math.sqrt(HEAD_DIM)

    for l in range(N_LAYER):
        # --------------------------- attention ---------------------------
        x = ln(h, ln1_g_ref[l], ln1_b_ref[l])               # (B*T, H)
        acc = [jnp.zeros((T, H), f32) for _ in range(B)]
        for hh in range(N_HEAD):
            w_idx = l * N_HEAD + hh
            q = jnp.dot(x, wq_ref[w_idx], preferred_element_type=f32) + bq_ref[w_idx]
            k = jnp.dot(x, wk_ref[w_idx], preferred_element_type=f32) + bk_ref[w_idx]
            v = jnp.dot(x, wv_ref[w_idx], preferred_element_type=f32) + bv_ref[w_idx]
            for b in range(B):
                qb = q[b * T:(b + 1) * T, :]                # (T, hd)
                kb = k[b * T:(b + 1) * T, :]
                vb = v[b * T:(b + 1) * T, :]
                s = jnp.dot(qb, kb.T, preferred_element_type=f32) * scale
                s = jnp.where(causal, s, neg)
                s = s - jnp.max(s, axis=-1, keepdims=True)
                p = jnp.exp(s)
                p = p * pl.reciprocal(jnp.sum(p, axis=-1, keepdims=True), approx=True)
                o = jnp.dot(p, vb, preferred_element_type=f32)          # (T, hd)
                acc[b] = acc[b] + jnp.dot(o, wproj_ref[w_idx],
                                          preferred_element_type=f32)   # (T, H)
        attn_out = jnp.concatenate(acc, axis=0) + bproj_ref[l]          # (B*T, H)
        h = h + attn_out

        # ------------------------------ MLP ------------------------------
        x = ln(h, ln2_g_ref[l], ln2_b_ref[l])
        ff = jnp.dot(x, wfc_ref[l], preferred_element_type=f32) + bfc_ref[l]
        ff = gelu_new(ff)
        ff = jnp.dot(ff, wfcp_ref[l], preferred_element_type=f32) + bfcp_ref[l]
        h = h + ff

    # final LN + fused prediction heads (lane-dense (B*T, 128) output)
    h = ln(h, lnf_g_ref[...], lnf_b_ref[...])
    y = jnp.dot(h, w_head_ref[...], preferred_element_type=f32) + b_head_ref[...]
    col = jax.lax.broadcasted_iota(jnp.int32, (BT, HEAD_PAD), 1)
    act_cols = (col >= _ACT_LO) & (col < _ACT_HI)
    y = jnp.where(act_cols, jnp.tanh(y), y)                 # tanh only on action cols
    out_ref[...] = y


# --------------------------- parameter creation ------------------------------
def init_params(key):
    """Synthetic deterministic weights, stored directly in the kernel's packed
    layout.  wpe/position ids are precomputed for the fixed context length SEQ."""
    H = HIDDEN
    T = 3 * SEQ

    def nrm(k, shape, scale=0.02):
        return scale * jax.random.normal(k, shape, dtype=jnp.float32)

    keys = jax.random.split(key, 16)
    ki = iter(keys)
    p = {}

    # token-type embedding linears
    p["w_return"] = nrm(next(ki), (1, H))
    p["b_return"] = jnp.zeros((1, H), jnp.float32)
    p["w_state"] = nrm(next(ki), (STATE_DIM, H))
    p["b_state"] = jnp.zeros((1, H), jnp.float32)
    p["w_action"] = nrm(next(ki), (ACT_DIM, H))
    p["b_action"] = jnp.zeros((1, H), jnp.float32)
    p["eln_g"] = jnp.ones((1, H), jnp.float32)
    p["eln_b"] = jnp.zeros((1, H), jnp.float32)

    # learned position embeddings, permuted into grouped (R|s|a) order for T tokens
    wpe = nrm(next(ki), (N_POSITIONS, H), 0.01)
    p["wpe_grouped"] = wpe[:T].reshape(SEQ, 3, H).transpose(1, 0, 2).reshape(T, H)
    # original interleaved position of grouped token (g, t) is 3t + g
    pos = (3 * jnp.arange(SEQ, dtype=jnp.int32)[None, :]
           + jnp.arange(3, dtype=jnp.int32)[:, None]).reshape(T)
    p["pos_row"] = pos.reshape(1, T)
    p["pos_col"] = pos.reshape(T, 1)

    # GPT2 blocks (weights pre-split per head, stacked over layers)
    LH = N_LAYER * N_HEAD
    p["ln1_g"] = jnp.ones((N_LAYER, 1, H), jnp.float32)
    p["ln1_b"] = jnp.zeros((N_LAYER, 1, H), jnp.float32)
    p["ln2_g"] = jnp.ones((N_LAYER, 1, H), jnp.float32)
    p["ln2_b"] = jnp.zeros((N_LAYER, 1, H), jnp.float32)
    p["wq"] = nrm(next(ki), (LH, H, HEAD_DIM))
    p["bq"] = jnp.zeros((LH, 1, HEAD_DIM), jnp.float32)
    p["wk"] = nrm(next(ki), (LH, H, HEAD_DIM))
    p["bk"] = jnp.zeros((LH, 1, HEAD_DIM), jnp.float32)
    p["wv"] = nrm(next(ki), (LH, H, HEAD_DIM))
    p["bv"] = jnp.zeros((LH, 1, HEAD_DIM), jnp.float32)
    p["wproj"] = nrm(next(ki), (LH, HEAD_DIM, H))
    p["bproj"] = jnp.zeros((N_LAYER, 1, H), jnp.float32)
    p["wfc"] = nrm(next(ki), (N_LAYER, H, 4 * H))
    p["bfc"] = jnp.zeros((N_LAYER, 1, 4 * H), jnp.float32)
    p["wfcp"] = nrm(next(ki), (N_LAYER, 4 * H, H))
    p["bfcp"] = jnp.zeros((N_LAYER, 1, H), jnp.float32)
    p["lnf_g"] = jnp.ones((1, H), jnp.float32)
    p["lnf_b"] = jnp.zeros((1, H), jnp.float32)

    # fused prediction heads, lane-padded to 128 output columns
    w_head = jnp.zeros((H, HEAD_PAD), jnp.float32)
    w_head = w_head.at[:, 0:1].set(nrm(next(ki), (H, 1)))                    # return
    w_head = w_head.at[:, 1:1 + STATE_DIM].set(nrm(next(ki), (H, STATE_DIM)))  # state
    w_head = w_head.at[:, _ACT_LO:_ACT_HI].set(nrm(next(ki), (H, ACT_DIM)))    # action
    p["w_head"] = w_head
    p["b_head"] = jnp.zeros((1, HEAD_PAD), jnp.float32)
    return p


# ------------------------------ forward pass ---------------------------------
def decision_transformer_forward(params, states, actions, returns_to_go, timesteps):
    """Matches DecisionTransformer.forward with ordering=0, padding_mask=None,
    stochastic_policy=False, action_tanh=True.  L must equal SEQ (wpe/pos ids
    are precomputed for that context length at init)."""
    B, L, _ = states.shape
    T = 3 * L
    del timesteps  # ordering == 0 -> embed_timestep / embed_ordering unused

    kernel = functools.partial(_dt_forward_kernel, batch=B, seq=L)
    args = (
        states.reshape(B * L, STATE_DIM).astype(jnp.float32),
        actions.reshape(B * L, ACT_DIM).astype(jnp.float32),
        returns_to_go.reshape(B * L, 1).astype(jnp.float32),
        params["w_return"], params["b_return"],
        params["w_state"], params["b_state"],
        params["w_action"], params["b_action"],
        params["eln_g"], params["eln_b"],
        params["wpe_grouped"], params["pos_row"], params["pos_col"],
        params["ln1_g"], params["ln1_b"],
        params["wq"], params["bq"], params["wk"], params["bk"],
        params["wv"], params["bv"],
        params["wproj"], params["bproj"],
        params["ln2_g"], params["ln2_b"],
        params["wfc"], params["bfc"], params["wfcp"], params["bfcp"],
        params["lnf_g"], params["lnf_b"],
        params["w_head"], params["b_head"],
    )
    vmem_spec = pl.BlockSpec(memory_space=pltpu.MemorySpace.VMEM)
    out = pl.pallas_call(
        kernel,
        out_shape=jax.ShapeDtypeStruct((B * T, HEAD_PAD), jnp.float32),
        in_specs=[vmem_spec] * len(args),
        out_specs=vmem_spec,
    )(*args)

    # grouped layout: per batch rows are [return-tokens | state-tokens | action-tokens]
    y = out.reshape(B, 3, L, HEAD_PAD)
    x_state_tok = y[:, 1]        # hidden after state tokens  -> action preds
    x_act_tok = y[:, 2]          # hidden after action tokens -> return/state preds
    return_preds = x_act_tok[:, :, 0:1]
    state_preds = x_act_tok[:, :, 1:1 + STATE_DIM]
    action_preds = x_state_tok[:, :, _ACT_LO:_ACT_HI]   # tanh already applied in-kernel
    return state_preds, action_preds, return_preds


# ---------------------------------- main -------------------------------------
if __name__ == "__main__":
    key = jax.random.PRNGKey(0)
    kp, ks, ka, kr = jax.random.split(key, 4)

    params = init_params(kp)
    states = jax.random.normal(ks, (BATCH, SEQ, STATE_DIM), dtype=jnp.float32)
    actions = jax.random.normal(ka, (BATCH, SEQ, ACT_DIM), dtype=jnp.float32)
    returns_to_go = jax.random.normal(kr, (BATCH, SEQ, 1), dtype=jnp.float32)
    timesteps = jnp.tile(jnp.arange(SEQ, dtype=jnp.int32)[None, :], (BATCH, 1))

    fwd = jax.jit(decision_transformer_forward)
    state_preds, action_preds, return_preds = fwd(
        params, states, actions, returns_to_go, timesteps)
    jax.block_until_ready((state_preds, action_preds, return_preds))

    assert state_preds.shape == (BATCH, SEQ, STATE_DIM)
    assert action_preds.shape == (BATCH, SEQ, ACT_DIM)
    assert return_preds.shape == (BATCH, SEQ, 1)
    assert bool(jnp.all(jnp.isfinite(state_preds)))
    assert bool(jnp.all(jnp.isfinite(return_preds)))
    assert bool(jnp.all(jnp.abs(action_preds) <= 1.0))  # tanh head

    # TODO(synk): stochastic_policy (DiagGaussianActor / SquashedNormal) branch and
    # dropout are not implemented (eval-mode deterministic policy only).
    print("KERNEL_OK")
</pallas_src>

<mosaic_0001>
module attributes {stable_mosaic.version = 11 : i64} {
  func.func @_dt_forward_kernel(%arg0: memref<16x6xf32, #tpu.memory_space<vmem>>, %arg1: memref<16x3xf32, #tpu.memory_space<vmem>>, %arg2: memref<16x1xf32, #tpu.memory_space<vmem>>, %arg3: memref<1x32xf32, #tpu.memory_space<vmem>>, %arg4: memref<1x32xf32, #tpu.memory_space<vmem>>, %arg5: memref<6x32xf32, #tpu.memory_space<vmem>>, %arg6: memref<1x32xf32, #tpu.memory_space<vmem>>, %arg7: memref<3x32xf32, #tpu.memory_space<vmem>>, %arg8: memref<1x32xf32, #tpu.memory_space<vmem>>, %arg9: memref<1x32xf32, #tpu.memory_space<vmem>>, %arg10: memref<1x32xf32, #tpu.memory_space<vmem>>, %arg11: memref<24x32xf32, #tpu.memory_space<vmem>>, %arg12: memref<1x24xi32, #tpu.memory_space<vmem>>, %arg13: memref<24x1xi32, #tpu.memory_space<vmem>>, %arg14: memref<2x1x32xf32, #tpu.memory_space<vmem>>, %arg15: memref<2x1x32xf32, #tpu.memory_space<vmem>>, %arg16: memref<8x32x8xf32, #tpu.memory_space<vmem>>, %arg17: memref<8x1x8xf32, #tpu.memory_space<vmem>>, %arg18: memref<8x32x8xf32, #tpu.memory_space<vmem>>, %arg19: memref<8x1x8xf32, #tpu.memory_space<vmem>>, %arg20: memref<8x32x8xf32, #tpu.memory_space<vmem>>, %arg21: memref<8x1x8xf32, #tpu.memory_space<vmem>>, %arg22: memref<8x8x32xf32, #tpu.memory_space<vmem>>, %arg23: memref<2x1x32xf32, #tpu.memory_space<vmem>>, %arg24: memref<2x1x32xf32, #tpu.memory_space<vmem>>, %arg25: memref<2x1x32xf32, #tpu.memory_space<vmem>>, %arg26: memref<2x32x128xf32, #tpu.memory_space<vmem>>, %arg27: memref<2x1x128xf32, #tpu.memory_space<vmem>>, %arg28: memref<2x128x32xf32, #tpu.memory_space<vmem>>, %arg29: memref<2x1x32xf32, #tpu.memory_space<vmem>>, %arg30: memref<1x32xf32, #tpu.memory_space<vmem>>, %arg31: memref<1x32xf32, #tpu.memory_space<vmem>>, %arg32: memref<32x128xf32, #tpu.memory_space<vmem>>, %arg33: memref<1x128xf32, #tpu.memory_space<vmem>>, %arg34: memref<48x128xf32, #tpu.memory_space<vmem>>) attributes {dimension_semantics = [], scalar_prefetch = 0 : i64, scratch_operands = 0 : i64, tpu.core_type = #tpu.core_type<tc>} {
    %c0 = arith.constant 0 : index
    %c0_0 = arith.constant 0 : index
    %0 = vector.load %arg2[%c0, %c0_0] : memref<16x1xf32, #tpu.memory_space<vmem>>, vector<16x1xf32>
    %c0_1 = arith.constant 0 : index
    %c0_2 = arith.constant 0 : index
    %1 = vector.load %arg3[%c0_1, %c0_2] : memref<1x32xf32, #tpu.memory_space<vmem>>, vector<1x32xf32>
    %cst = arith.constant dense<0.000000e+00> : vector<16x32xf32>
    %2 = tpu.matmul %0, %1, %cst {dimension_numbers = #tpu.dot_dimension_numbers<[1], [0], [0], [1], [0, 0, 1, 1], [], []>} : vector<16x1xf32>, vector<1x32xf32>, vector<16x32xf32> -> vector<16x32xf32>
    %c0_3 = arith.constant 0 : index
    %c0_4 = arith.constant 0 : index
    %3 = vector.load %arg4[%c0_3, %c0_4] : memref<1x32xf32, #tpu.memory_space<vmem>>, vector<1x32xf32>
    %4 = vector.broadcast %3 : vector<1x32xf32> to vector<16x32xf32>
    %5 = arith.addf %2, %4 : vector<16x32xf32>
    %c0_5 = arith.constant 0 : index
    %c0_6 = arith.constant 0 : index
    %6 = vector.load %arg0[%c0_5, %c0_6] : memref<16x6xf32, #tpu.memory_space<vmem>>, vector<16x6xf32>
    %c0_7 = arith.constant 0 : index
    %c0_8 = arith.constant 0 : index
    %7 = vector.load %arg5[%c0_7, %c0_8] : memref<6x32xf32, #tpu.memory_space<vmem>>, vector<6x32xf32>
    %cst_9 = arith.constant dense<0.000000e+00> : vector<16x32xf32>
    %8 = tpu.matmul %6, %7, %cst_9 {dimension_numbers = #tpu.dot_dimension_numbers<[1], [0], [0], [1], [0, 0, 1, 1], [], []>} : vector<16x6xf32>, vector<6x32xf32>, vector<16x32xf32> -> vector<16x32xf32>
    %c0_10 = arith.constant 0 : index
    %c0_11 = arith.constant 0 : index
    %9 = vector.load %arg6[%c0_10, %c0_11] : memref<1x32xf32, #tpu.memory_space<vmem>>, vector<1x32xf32>
    %10 = vector.broadcast %9 : vector<1x32xf32> to vector<16x32xf32>
    %11 = arith.addf %8, %10 : vector<16x32xf32>
    %c0_12 = arith.constant 0 : index
    %c0_13 = arith.constant 0 : index
    %12 = vector.load %arg1[%c0_12, %c0_13] : memref<16x3xf32, #tpu.memory_space<vmem>>, vector<16x3xf32>
    %c0_14 = arith.constant 0 : index
    %c0_15 = arith.constant 0 : index
    %13 = vector.load %arg7[%c0_14, %c0_15] : memref<3x32xf32, #tpu.memory_space<vmem>>, vector<3x32xf32>
    %cst_16 = arith.constant dense<0.000000e+00> : vector<16x32xf32>
    %14 = tpu.matmul %12, %13, %cst_16 {dimension_numbers = #tpu.dot_dimension_numbers<[1], [0], [0], [1], [0, 0, 1, 1], [], []>} : vector<16x3xf32>, vector<3x32xf32>, vector<16x32xf32> -> vector<16x32xf32>
    %c0_17 = arith.constant 0 : index
    %c0_18 = arith.constant 0 : index
    %15 = vector.load %arg8[%c0_17, %c0_18] : memref<1x32xf32, #tpu.memory_space<vmem>>, vector<1x32xf32>
    %16 = vector.broadcast %15 : vector<1x32xf32> to vector<16x32xf32>
    %17 = arith.addf %14, %16 : vector<16x32xf32>
    %18 = vector.extract_strided_slice %5 {offsets = [0, 0], sizes = [8, 32], strides = [1, 1]} : vector<16x32xf32> to vector<8x32xf32>
    %19 = vector.extract_strided_slice %11 {offsets = [0, 0], sizes = [8, 32], strides = [1, 1]} : vector<16x32xf32> to vector<8x32xf32>
    %20 = vector.extract_strided_slice %17 {offsets = [0, 0], sizes = [8, 32], strides = [1, 1]} : vector<16x32xf32> to vector<8x32xf32>
    %21 = vector.extract_strided_slice %5 {offsets = [8, 0], sizes = [8, 32], strides = [1, 1]} : vector<16x32xf32> to vector<8x32xf32>
    %22 = vector.extract_strided_slice %11 {offsets = [8, 0], sizes = [8, 32], strides = [1, 1]} : vector<16x32xf32> to vector<8x32xf32>
    %23 = vector.extract_strided_slice %17 {offsets = [8, 0], sizes = [8, 32], strides = [1, 1]} : vector<16x32xf32> to vector<8x32xf32>
    %24 = tpu.concatenate %18, %19, %20, %21, %22, %23 in 0 : vector<8x32xf32>, vector<8x32xf32>, vector<8x32xf32>, vector<8x32xf32>, vector<8x32xf32>, vector<8x32xf32> -> vector<48x32xf32>
    %c0_19 = arith.constant 0 : index
    %c0_20 = arith.constant 0 : index
    %25 = vector.load %arg9[%c0_19, %c0_20] : memref<1x32xf32, #tpu.memory_space<vmem>>, vector<1x32xf32>
    %c0_21 = arith.constant 0 : index
    %c0_22 = arith.constant 0 : index
    %26 = vector.load %arg10[%c0_21, %c0_22] : memref<1x32xf32, #tpu.memory_space<vmem>>, vector<1x32xf32>
    %cst_23 = arith.constant dense<0.000000e+00> : vector<48xf32>
    %27 = vector.multi_reduction <add>, %24, %cst_23 [1] : vector<48x32xf32> to vector<48xf32>
    %28 = vector.shape_cast %27 : vector<48xf32> to vector<48x1xf32>
    %cst_24 = arith.constant 3.200000e+01 : f32
    %29 = vector.broadcast %cst_24 : f32 to vector<48x1xf32>
    %30 = arith.divf %28, %29 : vector<48x1xf32>
    %31 = vector.broadcast %30 : vector<48x1xf32> to vector<48x32xf32>
    %32 = arith.subf %24, %31 : vector<48x32xf32>
    %33 = arith.mulf %32, %32 : vector<48x32xf32>
    %cst_25 = arith.constant dense<0.000000e+00> : vector<48xf32>
    %34 = vector.multi_reduction <add>, %33, %cst_25 [1] : vector<48x32xf32> to vector<48xf32>
    %35 = vector.shape_cast %34 : vector<48xf32> to vector<48x1xf32>
    %cst_26 = arith.constant 3.200000e+01 : f32
    %36 = vector.broadcast %cst_26 : f32 to vector<48x1xf32>
    %37 = arith.divf %35, %36 : vector<48x1xf32>
    %38 = vector.broadcast %30 : vector<48x1xf32> to vector<48x32xf32>
    %39 = arith.subf %24, %38 : vector<48x32xf32>
    %cst_27 = arith.constant 9.99999974E-6 : f32
    %40 = vector.broadcast %cst_27 : f32 to vector<48x1xf32>
    %41 = arith.addf %37, %40 : vector<48x1xf32>
    %42 = math.rsqrt %41 : vector<48x1xf32>
    %43 = vector.broadcast %42 : vector<48x1xf32> to vector<48x32xf32>
    %44 = arith.mulf %39, %43 : vector<48x32xf32>
    %45 = vector.broadcast %25 : vector<1x32xf32> to vector<48x32xf32>
    %46 = arith.mulf %44, %45 : vector<48x32xf32>
    %47 = vector.broadcast %26 : vector<1x32xf32> to vector<48x32xf32>
    %48 = arith.addf %46, %47 : vector<48x32xf32>
    %c0_28 = arith.constant 0 : index
    %c0_29 = arith.constant 0 : index
    %49 = vector.load %arg11[%c0_28, %c0_29] : memref<24x32xf32, #tpu.memory_space<vmem>>, vector<24x32xf32>
    %50 = tpu.concatenate %49, %49 in 0 : vector<24x32xf32>, vector<24x32xf32> -> vector<48x32xf32>
    %51 = arith.addf %48, %50 : vector<48x32xf32>
    %c0_30 = arith.constant 0 : index
    %c0_31 = arith.constant 0 : index
    %52 = vector.load %arg12[%c0_30, %c0_31] : memref<1x24xi32, #tpu.memory_space<vmem>>, vector<1x24xi32>
    %c0_32 = arith.constant 0 : index
    %c0_33 = arith.constant 0 : index
    %53 = vector.load %arg13[%c0_32, %c0_33] : memref<24x1xi32, #tpu.memory_space<vmem>>, vector<24x1xi32>
    %54 = vector.broadcast %52 : vector<1x24xi32> to vector<24x24xi32>
    %55 = vector.broadcast %53 : vector<24x1xi32> to vector<24x24xi32>
    %56 = arith.cmpi sle, %54, %55 : vector<24x24xi32>
    %c0_34 = arith.constant 0 : index
    %c0_35 = arith.constant 0 : index
    %c0_36 = arith.constant 0 : index
    %57 = vector.load %arg14[%c0_34, %c0_35, %c0_36] : memref<2x1x32xf32, #tpu.memory_space<vmem>>, vector<1x1x32xf32>
    %58 = vector.shape_cast %57 : vector<1x1x32xf32> to vector<1x32xf32>
    %c0_37 = arith.constant 0 : index
    %c0_38 = arith.constant 0 : index
    %c0_39 = arith.constant 0 : index
    %59 = vector.load %arg15[%c0_37, %c0_38, %c0_39] : memref<2x1x32xf32, #tpu.memory_space<vmem>>, vector<1x1x32xf32>
    %60 = vector.shape_cast %59 : vector<1x1x32xf32> to vector<1x32xf32>
    %cst_40 = arith.constant dense<0.000000e+00> : vector<48xf32>
    %61 = vector.multi_reduction <add>, %51, %cst_40 [1] : vector<48x32xf32> to vector<48xf32>
    %62 = vector.shape_cast %61 : vector<48xf32> to vector<48x1xf32>
    %cst_41 = arith.constant 3.200000e+01 : f32
    %63 = vector.broadcast %cst_41 : f32 to vector<48x1xf32>
    %64 = arith.divf %62, %63 : vector<48x1xf32>
    %65 = vector.broadcast %64 : vector<48x1xf32> to vector<48x32xf32>
    %66 = arith.subf %51, %65 : vector<48x32xf32>
    %67 = arith.mulf %66, %66 : vector<48x32xf32>
    %cst_42 = arith.constant dense<0.000000e+00> : vector<48xf32>
    %68 = vector.multi_reduction <add>, %67, %cst_42 [1] : vector<48x32xf32> to vector<48xf32>
    %69 = vector.shape_cast %68 : vector<48xf32> to vector<48x1xf32>
    %cst_43 = arith.constant 3.200000e+01 : f32
    %70 = vector.broadcast %cst_43 : f32 to vector<48x1xf32>
    %71 = arith.divf %69, %70 : vector<48x1xf32>
    %72 = vector.broadcast %64 : vector<48x1xf32> to vector<48x32xf32>
    %73 = arith.subf %51, %72 : vector<48x32xf32>
    %cst_44 = arith.constant 9.99999974E-6 : f32
    %74 = vector.broadcast %cst_44 : f32 to vector<48x1xf32>
    %75 = arith.addf %71, %74 : vector<48x1xf32>
    %76 = math.rsqrt %75 : vector<48x1xf32>
    %77 = vector.broadcast %76 : vector<48x1xf32> to vector<48x32xf32>
    %78 = arith.mulf %73, %77 : vector<48x32xf32>
    %79 = vector.broadcast %58 : vector<1x32xf32> to vector<48x32xf32>
    %80 = arith.mulf %78, %79 : vector<48x32xf32>
    %81 = vector.broadcast %60 : vector<1x32xf32> to vector<48x32xf32>
    %82 = arith.addf %80, %81 : vector<48x32xf32>
    %cst_45 = arith.constant 0.000000e+00 : f32
    %83 = vector.broadcast %cst_45 : f32 to vector<24x32xf32>
    %cst_46 = arith.constant 0.000000e+00 : f32
    %84 = vector.broadcast %cst_46 : f32 to vector<24x32xf32>
    %c0_47 = arith.constant 0 : index
    %c0_48 = arith.constant 0 : index
    %c0_49 = arith.constant 0 : index
    %85 = vector.load %arg16[%c0_47, %c0_48, %c0_49] : memref<8x32x8xf32, #tpu.memory_space<vmem>>, vector<1x32x8xf32>
    %86 = vector.shape_cast %85 : vector<1x32x8xf32> to vector<32x8xf32>
    %cst_50 = arith.constant dense<0.000000e+00> : vector<48x8xf32>
    %87 = tpu.matmul %82, %86, %cst_50 {dimension_numbers = #tpu.dot_dimension_numbers<[1], [0], [0], [1], [0, 0, 1, 1], [], []>} : vector<48x32xf32>, vector<32x8xf32>, vector<48x8xf32> -> vector<48x8xf32>
    %c0_51 = arith.constant 0 : index
    %c0_52 = arith.constant 0 : index
    %c0_53 = arith.constant 0 : index
    %88 = vector.load %arg17[%c0_51, %c0_52, %c0_53] : memref<8x1x8xf32, #tpu.memory_space<vmem>>, vector<1x1x8xf32>
    %89 = vector.shape_cast %88 : vector<1x1x8xf32> to vector<1x8xf32>
    %90 = vector.broadcast %89 : vector<1x8xf32> to vector<48x8xf32>
    %91 = arith.addf %87, %90 : vector<48x8xf32>
    %c0_54 = arith.constant 0 : index
    %c0_55 = arith.constant 0 : index
    %c0_56 = arith.constant 0 : index
    %92 = vector.load %arg18[%c0_54, %c0_55, %c0_56] : memref<8x32x8xf32, #tpu.memory_space<vmem>>, vector<1x32x8xf32>
    %93 = vector.shape_cast %92 : vector<1x32x8xf32> to vector<32x8xf32>
    %cst_57 = arith.constant dense<0.000000e+00> : vector<48x8xf32>
    %94 = tpu.matmul %82, %93, %cst_57 {dimension_numbers = #tpu.dot_dimension_numbers<[1], [0], [0], [1], [0, 0, 1, 1], [], []>} : vector<48x32xf32>, vector<32x8xf32>, vector<48x8xf32> -> vector<48x8xf32>
    %c0_58 = arith.constant 0 : index
    %c0_59 = arith.constant 0 : index
    %c0_60 = arith.constant 0 : index
    %95 = vector.load %arg19[%c0_58, %c0_59, %c0_60] : memref<8x1x8xf32, #tpu.memory_space<vmem>>, vector<1x1x8xf32>
    %96 = vector.shape_cast %95 : vector<1x1x8xf32> to vector<1x8xf32>
    %97 = vector.broadcast %96 : vector<1x8xf32> to vector<48x8xf32>
    %98 = arith.addf %94, %97 : vector<48x8xf32>
    %c0_61 = arith.constant 0 : index
    %c0_62 = arith.constant 0 : index
    %c0_63 = arith.constant 0 : index
    %99 = vector.load %arg20[%c0_61, %c0_62, %c0_63] : memref<8x32x8xf32, #tpu.memory_space<vmem>>, vector<1x32x8xf32>
    %100 = vector.shape_cast %99 : vector<1x32x8xf32> to vector<32x8xf32>
    %cst_64 = arith.constant dense<0.000000e+00> : vector<48x8xf32>
    %101 = tpu.matmul %82, %100, %cst_64 {dimension_numbers = #tpu.dot_dimension_numbers<[1], [0], [0], [1], [0, 0, 1, 1], [], []>} : vector<48x32xf32>, vector<32x8xf32>, vector<48x8xf32> -> vector<48x8xf32>
    %c0_65 = arith.constant 0 : index
    %c0_66 = arith.constant 0 : index
    %c0_67 = arith.constant 0 : index
    %102 = vector.load %arg21[%c0_65, %c0_66, %c0_67] : memref<8x1x8xf32, #tpu.memory_space<vmem>>, vector<1x1x8xf32>
    %103 = vector.shape_cast %102 : vector<1x1x8xf32> to vector<1x8xf32>
    %104 = vector.broadcast %103 : vector<1x8xf32> to vector<48x8xf32>
    %105 = arith.addf %101, %104 : vector<48x8xf32>
    %106 = vector.extract_strided_slice %91 {offsets = [0, 0], sizes = [24, 8], strides = [1, 1]} : vector<48x8xf32> to vector<24x8xf32>
    %107 = vector.extract_strided_slice %98 {offsets = [0, 0], sizes = [24, 8], strides = [1, 1]} : vector<48x8xf32> to vector<24x8xf32>
    %108 = vector.extract_strided_slice %105 {offsets = [0, 0], sizes = [24, 8], strides = [1, 1]} : vector<48x8xf32> to vector<24x8xf32>
    %109 = tpu.transpose %107, [1, 0] : vector<24x8xf32> -> vector<8x24xf32>
    %cst_68 = arith.constant dense<0.000000e+00> : vector<24x24xf32>
    %110 = tpu.matmul %106, %109, %cst_68 {dimension_numbers = #tpu.dot_dimension_numbers<[1], [0], [0], [1], [0, 0, 1, 1], [], []>} : vector<24x8xf32>, vector<8x24xf32>, vector<24x24xf32> -> vector<24x24xf32>
    %cst_69 = arith.constant 0.353553385 : f32
    %111 = vector.broadcast %cst_69 : f32 to vector<24x24xf32>
    %112 = arith.mulf %110, %111 : vector<24x24xf32>
    %cst_70 = arith.constant -1.000000e+30 : f32
    %113 = vector.broadcast %cst_70 : f32 to vector<24x24xf32>
    %114 = arith.select %56, %112, %113 : vector<24x24xi1>, vector<24x24xf32>
    %cst_71 = arith.constant dense<0xFF800000> : vector<24xf32>
    %115 = vector.multi_reduction <maximumf>, %114, %cst_71 [1] : vector<24x24xf32> to vector<24xf32>
    %116 = vector.shape_cast %115 : vector<24xf32> to vector<24x1xf32>
    %117 = vector.broadcast %116 : vector<24x1xf32> to vector<24x24xf32>
    %118 = arith.subf %114, %117 : vector<24x24xf32>
    %119 = math.exp %118 : vector<24x24xf32>
    %cst_72 = arith.constant dense<0.000000e+00> : vector<24xf32>
    %120 = vector.multi_reduction <add>, %119, %cst_72 [1] : vector<24x24xf32> to vector<24xf32>
    %121 = vector.shape_cast %120 : vector<24xf32> to vector<24x1xf32>
    %122 = tpu.reciprocal %121 {approx = true} : vector<24x1xf32> -> vector<24x1xf32>
    %123 = vector.broadcast %122 : vector<24x1xf32> to vector<24x24xf32>
    %124 = arith.mulf %119, %123 : vector<24x24xf32>
    %cst_73 = arith.constant dense<0.000000e+00> : vector<24x8xf32>
    %125 = tpu.matmul %124, %108, %cst_73 {dimension_numbers = #tpu.dot_dimension_numbers<[1], [0], [0], [1], [0, 0, 1, 1], [], []>} : vector<24x24xf32>, vector<24x8xf32>, vector<24x8xf32> -> vector<24x8xf32>
    %c0_74 = arith.constant 0 : index
    %c0_75 = arith.constant 0 : index
    %c0_76 = arith.constant 0 : index
    %126 = vector.load %arg22[%c0_74, %c0_75, %c0_76] : memref<8x8x32xf32, #tpu.memory_space<vmem>>, vector<1x8x32xf32>
    %127 = vector.shape_cast %126 : vector<1x8x32xf32> to vector<8x32xf32>
    %cst_77 = arith.constant dense<0.000000e+00> : vector<24x32xf32>
    %128 = tpu.matmul %125, %127, %cst_77 {dimension_numbers = #tpu.dot_dimension_numbers<[1], [0], [0], [1], [0, 0, 1, 1], [], []>} : vector<24x8xf32>, vector<8x32xf32>, vector<24x32xf32> -> vector<24x32xf32>
    %129 = arith.addf %83, %128 : vector<24x32xf32>
    %130 = vector.extract_strided_slice %91 {offsets = [24, 0], sizes = [24, 8], strides = [1, 1]} : vector<48x8xf32> to vector<24x8xf32>
    %131 = vector.extract_strided_slice %98 {offsets = [24, 0], sizes = [24, 8], strides = [1, 1]} : vector<48x8xf32> to vector<24x8xf32>
    %132 = vector.extract_strided_slice %105 {offsets = [24, 0], sizes = [24, 8], strides = [1, 1]} : vector<48x8xf32> to vector<24x8xf32>
    %133 = tpu.transpose %131, [1, 0] : vector<24x8xf32> -> vector<8x24xf32>
    %cst_78 = arith.constant dense<0.000000e+00> : vector<24x24xf32>
    %134 = tpu.matmul %130, %133, %cst_78 {dimension_numbers = #tpu.dot_dimension_numbers<[1], [0], [0], [1], [0, 0, 1, 1], [], []>} : vector<24x8xf32>, vector<8x24xf32>, vector<24x24xf32> -> vector<24x24xf32>
    %cst_79 = arith.constant 0.353553385 : f32
    %135 = vector.broadcast %cst_79 : f32 to vector<24x24xf32>
    %136 = arith.mulf %134, %135 : vector<24x24xf32>
    %cst_80 = arith.constant -1.000000e+30 : f32
    %137 = vector.broadcast %cst_80 : f32 to vector<24x24xf32>
    %138 = arith.select %56, %136, %137 : vector<24x24xi1>, vector<24x24xf32>
    %cst_81 = arith.constant dense<0xFF800000> : vector<24xf32>
    %139 = vector.multi_reduction <maximumf>, %138, %cst_81 [1] : vector<24x24xf32> to vector<24xf32>
    %140 = vector.shape_cast %139 : vector<24xf32> to vector<24x1xf32>
    %141 = vector.broadcast %140 : vector<24x1xf32> to vector<24x24xf32>
    %142 = arith.subf %138, %141 : vector<24x24xf32>
    %143 = math.exp %142 : vector<24x24xf32>
    %cst_82 = arith.constant dense<0.000000e+00> : vector<24xf32>
    %144 = vector.multi_reduction <add>, %143, %cst_82 [1] : vector<24x24xf32> to vector<24xf32>
    %145 = vector.shape_cast %144 : vector<24xf32> to vector<24x1xf32>
    %146 = tpu.reciprocal %145 {approx = true} : vector<24x1xf32> -> vector<24x1xf32>
    %147 = vector.broadcast %146 : vector<24x1xf32> to vector<24x24xf32>
    %148 = arith.mulf %143, %147 : vector<24x24xf32>
    %cst_83 = arith.constant dense<0.000000e+00> : vector<24x8xf32>
    %149 = tpu.matmul %148, %132, %cst_83 {dimension_numbers = #tpu.dot_dimension_numbers<[1], [0], [0], [1], [0, 0, 1, 1], [], []>} : vector<24x24xf32>, vector<24x8xf32>, vector<24x8xf32> -> vector<24x8xf32>
    %c0_84 = arith.constant 0 : index
    %c0_85 = arith.constant 0 : index
    %c0_86 = arith.constant 0 : index
    %150 = vector.load %arg22[%c0_84, %c0_85, %c0_86] : memref<8x8x32xf32, #tpu.memory_space<vmem>>, vector<1x8x32xf32>
    %151 = vector.shape_cast %150 : vector<1x8x32xf32> to vector<8x32xf32>
    %cst_87 = arith.constant dense<0.000000e+00> : vector<24x32xf32>
    %152 = tpu.matmul %149, %151, %cst_87 {dimension_numbers = #tpu.dot_dimension_numbers<[1], [0], [0], [1], [0, 0, 1, 1], [], []>} : vector<24x8xf32>, vector<8x32xf32>, vector<24x32xf32> -> vector<24x32xf32>
    %153 = arith.addf %84, %152 : vector<24x32xf32>
    %c1 = arith.constant 1 : index
    %c0_88 = arith.constant 0 : index
    %c0_89 = arith.constant 0 : index
    %154 = vector.load %arg16[%c1, %c0_88, %c0_89] : memref<8x32x8xf32, #tpu.memory_space<vmem>>, vector<1x32x8xf32>
    %155 = vector.shape_cast %154 : vector<1x32x8xf32> to vector<32x8xf32>
    %cst_90 = arith.constant dense<0.000000e+00> : vector<48x8xf32>
    %156 = tpu.matmul %82, %155, %cst_90 {dimension_numbers = #tpu.dot_dimension_numbers<[1], [0], [0], [1], [0, 0, 1, 1], [], []>} : vector<48x32xf32>, vector<32x8xf32>, vector<48x8xf32> -> vector<48x8xf32>
    %c1_91 = arith.constant 1 : index
    %c0_92 = arith.constant 0 : index
    %c0_93 = arith.constant 0 : index
    %157 = vector.load %arg17[%c1_91, %c0_92, %c0_93] : memref<8x1x8xf32, #tpu.memory_space<vmem>>, vector<1x1x8xf32>
    %158 = vector.shape_cast %157 : vector<1x1x8xf32> to vector<1x8xf32>
    %159 = vector.broadcast %158 : vector<1x8xf32> to vector<48x8xf32>
    %160 = arith.addf %156, %159 : vector<48x8xf32>
    %c1_94 = arith.constant 1 : index
    %c0_95 = arith.constant 0 : index
    %c0_96 = arith.constant 0 : index
    %161 = vector.load %arg18[%c1_94, %c0_95, %c0_96] : memref<8x32x8xf32, #tpu.memory_space<vmem>>, vector<1x32x8xf32>
    %162 = vector.shape_cast %161 : vector<1x32x8xf32> to vector<32x8xf32>
    %cst_97 = arith.constant dense<0.000000e+00> : vector<48x8xf32>
    %163 = tpu.matmul %82, %162, %cst_97 {dimension_numbers = #tpu.dot_dimension_numbers<[1], [0], [0], [1], [0, 0, 1, 1], [], []>} : vector<48x32xf32>, vector<32x8xf32>, vector<48x8xf32> -> vector<48x8xf32>
    %c1_98 = arith.constant 1 : index
    %c0_99 = arith.constant 0 : index
    %c0_100 = arith.constant 0 : index
    %164 = vector.load %arg19[%c1_98, %c0_99, %c0_100] : memref<8x1x8xf32, #tpu.memory_space<vmem>>, vector<1x1x8xf32>
    %165 = vector.shape_cast %164 : vector<1x1x8xf32> to vector<1x8xf32>
    %166 = vector.broadcast %165 : vector<1x8xf32> to vector<48x8xf32>
    %167 = arith.addf %163, %166 : vector<48x8xf32>
    %c1_101 = arith.constant 1 : index
    %c0_102 = arith.constant 0 : index
    %c0_103 = arith.constant 0 : index
    %168 = vector.load %arg20[%c1_101, %c0_102, %c0_103] : memref<8x32x8xf32, #tpu.memory_space<vmem>>, vector<1x32x8xf32>
    %169 = vector.shape_cast %168 : vector<1x32x8xf32> to vector<32x8xf32>
    %cst_104 = arith.constant dense<0.000000e+00> : vector<48x8xf32>
    %170 = tpu.matmul %82, %169, %cst_104 {dimension_numbers = #tpu.dot_dimension_numbers<[1], [0], [0], [1], [0, 0, 1, 1], [], []>} : vector<48x32xf32>, vector<32x8xf32>, vector<48x8xf32> -> vector<48x8xf32>
    %c1_105 = arith.constant 1 : index
    %c0_106 = arith.constant 0 : index
    %c0_107 = arith.constant 0 : index
    %171 = vector.load %arg21[%c1_105, %c0_106, %c0_107] : memref<8x1x8xf32, #tpu.memory_space<vmem>>, vector<1x1x8xf32>
    %172 = vector.shape_cast %171 : vector<1x1x8xf32> to vector<1x8xf32>
    %173 = vector.broadcast %172 : vector<1x8xf32> to vector<48x8xf32>
    %174 = arith.addf %170, %173 : vector<48x8xf32>
    %175 = vector.extract_strided_slice %160 {offsets = [0, 0], sizes = [24, 8], strides = [1, 1]} : vector<48x8xf32> to vector<24x8xf32>
    %176 = vector.extract_strided_slice %167 {offsets = [0, 0], sizes = [24, 8], strides = [1, 1]} : vector<48x8xf32> to vector<24x8xf32>
    %177 = vector.extract_strided_slice %174 {offsets = [0, 0], sizes = [24, 8], strides = [1, 1]} : vector<48x8xf32> to vector<24x8xf32>
    %178 = tpu.transpose %176, [1, 0] : vector<24x8xf32> -> vector<8x24xf32>
    %cst_108 = arith.constant dense<0.000000e+00> : vector<24x24xf32>
    %179 = tpu.matmul %175, %178, %cst_108 {dimension_numbers = #tpu.dot_dimension_numbers<[1], [0], [0], [1], [0, 0, 1, 1], [], []>} : vector<24x8xf32>, vector<8x24xf32>, vector<24x24xf32> -> vector<24x24xf32>
    %cst_109 = arith.constant 0.353553385 : f32
    %180 = vector.broadcast %cst_109 : f32 to vector<24x24xf32>
    %181 = arith.mulf %179, %180 : vector<24x24xf32>
    %cst_110 = arith.constant -1.000000e+30 : f32
    %182 = vector.broadcast %cst_110 : f32 to vector<24x24xf32>
    %183 = arith.select %56, %181, %182 : vector<24x24xi1>, vector<24x24xf32>
    %cst_111 = arith.constant dense<0xFF800000> : vector<24xf32>
    %184 = vector.multi_reduction <maximumf>, %183, %cst_111 [1] : vector<24x24xf32> to vector<24xf32>
    %185 = vector.shape_cast %184 : vector<24xf32> to vector<24x1xf32>
    %186 = vector.broadcast %185 : vector<24x1xf32> to vector<24x24xf32>
    %187 = arith.subf %183, %186 : vector<24x24xf32>
    %188 = math.exp %187 : vector<24x24xf32>
    %cst_112 = arith.constant dense<0.000000e+00> : vector<24xf32>
    %189 = vector.multi_reduction <add>, %188, %cst_112 [1] : vector<24x24xf32> to vector<24xf32>
    %190 = vector.shape_cast %189 : vector<24xf32> to vector<24x1xf32>
    %191 = tpu.reciprocal %190 {approx = true} : vector<24x1xf32> -> vector<24x1xf32>
    %192 = vector.broadcast %191 : vector<24x1xf32> to vector<24x24xf32>
    %193 = arith.mulf %188, %192 : vector<24x24xf32>
    %cst_113 = arith.constant dense<0.000000e+00> : vector<24x8xf32>
    %194 = tpu.matmul %193, %177, %cst_113 {dimension_numbers = #tpu.dot_dimension_numbers<[1], [0], [0], [1], [0, 0, 1, 1], [], []>} : vector<24x24xf32>, vector<24x8xf32>, vector<24x8xf32> -> vector<24x8xf32>
    %c1_114 = arith.constant 1 : index
    %c0_115 = arith.constant 0 : index
    %c0_116 = arith.constant 0 : index
    %195 = vector.load %arg22[%c1_114, %c0_115, %c0_116] : memref<8x8x32xf32, #tpu.memory_space<vmem>>, vector<1x8x32xf32>
    %196 = vector.shape_cast %195 : vector<1x8x32xf32> to vector<8x32xf32>
    %cst_117 = arith.constant dense<0.000000e+00> : vector<24x32xf32>
    %197 = tpu.matmul %194, %196, %cst_117 {dimension_numbers = #tpu.dot_dimension_numbers<[1], [0], [0], [1], [0, 0, 1, 1], [], []>} : vector<24x8xf32>, vector<8x32xf32>, vector<24x32xf32> -> vector<24x32xf32>
    %198 = arith.addf %129, %197 : vector<24x32xf32>
    %199 = vector.extract_strided_slice %160 {offsets = [24, 0], sizes = [24, 8], strides = [1, 1]} : vector<48x8xf32> to vector<24x8xf32>
    %200 = vector.extract_strided_slice %167 {offsets = [24, 0], sizes = [24, 8], strides = [1, 1]} : vector<48x8xf32> to vector<24x8xf32>
    %201 = vector.extract_strided_slice %174 {offsets = [24, 0], sizes = [24, 8], strides = [1, 1]} : vector<48x8xf32> to vector<24x8xf32>
    %202 = tpu.transpose %200, [1, 0] : vector<24x8xf32> -> vector<8x24xf32>
    %cst_118 = arith.constant dense<0.000000e+00> : vector<24x24xf32>
    %203 = tpu.matmul %199, %202, %cst_118 {dimension_numbers = #tpu.dot_dimension_numbers<[1], [0], [0], [1], [0, 0, 1, 1], [], []>} : vector<24x8xf32>, vector<8x24xf32>, vector<24x24xf32> -> vector<24x24xf32>
    %cst_119 = arith.constant 0.353553385 : f32
    %204 = vector.broadcast %cst_119 : f32 to vector<24x24xf32>
    %205 = arith.mulf %203, %204 : vector<24x24xf32>
    %cst_120 = arith.constant -1.000000e+30 : f32
    %206 = vector.broadcast %cst_120 : f32 to vector<24x24xf32>
    %207 = arith.select %56, %205, %206 : vector<24x24xi1>, vector<24x24xf32>
    %cst_121 = arith.constant dense<0xFF800000> : vector<24xf32>
    %208 = vector.multi_reduction <maximumf>, %207, %cst_121 [1] : vector<24x24xf32> to vector<24xf32>
    %209 = vector.shape_cast %208 : vector<24xf32> to vector<24x1xf32>
    %210 = vector.broadcast %209 : vector<24x1xf32> to vector<24x24xf32>
    %211 = arith.subf %207, %210 : vector<24x24xf32>
    %212 = math.exp %211 : vector<24x24xf32>
    %cst_122 = arith.constant dense<0.000000e+00> : vector<24xf32>
    %213 = vector.multi_reduction <add>, %212, %cst_122 [1] : vector<24x24xf32> to vector<24xf32>
    %214 = vector.shape_cast %213 : vector<24xf32> to vector<24x1xf32>
    %215 = tpu.reciprocal %214 {approx = true} : vector<24x1xf32> -> vector<24x1xf32>
    %216 = vector.broadcast %215 : vector<24x1xf32> to vector<24x24xf32>
    %217 = arith.mulf %212, %216 : vector<24x24xf32>
    %cst_123 = arith.constant dense<0.000000e+00> : vector<24x8xf32>
    %218 = tpu.matmul %217, %201, %cst_123 {dimension_numbers = #tpu.dot_dimension_numbers<[1], [0], [0], [1], [0, 0, 1, 1], [], []>} : vector<24x24xf32>, vector<24x8xf32>, vector<24x8xf32> -> vector<24x8xf32>
    %c1_124 = arith.constant 1 : index
    %c0_125 = arith.constant 0 : index
    %c0_126 = arith.constant 0 : index
    %219 = vector.load %arg22[%c1_124, %c0_125, %c0_126] : memref<8x8x32xf32, #tpu.memory_space<vmem>>, vector<1x8x32xf32>
    %220 = vector.shape_cast %219 : vector<1x8x32xf32> to vector<8x32xf32>
    %cst_127 = arith.constant dense<0.000000e+00> : vector<24x32xf32>
    %221 = tpu.matmul %218, %220, %cst_127 {dimension_numbers = #tpu.dot_dimension_numbers<[1], [0], [0], [1], [0, 0, 1, 1], [], []>} : vector<24x8xf32>, vector<8x32xf32>, vector<24x32xf32> -> vector<24x32xf32>
    %222 = arith.addf %153, %221 : vector<24x32xf32>
    %c2 = arith.constant 2 : index
    %c0_128 = arith.constant 0 : index
    %c0_129 = arith.constant 0 : index
    %223 = vector.load %arg16[%c2, %c0_128, %c0_129] : memref<8x32x8xf32, #tpu.memory_space<vmem>>, vector<1x32x8xf32>
    %224 = vector.shape_cast %223 : vector<1x32x8xf32> to vector<32x8xf32>
    %cst_130 = arith.constant dense<0.000000e+00> : vector<48x8xf32>
    %225 = tpu.matmul %82, %224, %cst_130 {dimension_numbers = #tpu.dot_dimension_numbers<[1], [0], [0], [1], [0, 0, 1, 1], [], []>} : vector<48x32xf32>, vector<32x8xf32>, vector<48x8xf32> -> vector<48x8xf32>
    %c2_131 = arith.constant 2 : index
    %c0_132 = arith.constant 0 : index
    %c0_133 = arith.constant 0 : index
    %226 = vector.load %arg17[%c2_131, %c0_132, %c0_133] : memref<8x1x8xf32, #tpu.memory_space<vmem>>, vector<1x1x8xf32>
    %227 = vector.shape_cast %226 : vector<1x1x8xf32> to vector<1x8xf32>
    %228 = vector.broadcast %227 : vector<1x8xf32> to vector<48x8xf32>
    %229 = arith.addf %225, %228 : vector<48x8xf32>
    %c2_134 = arith.constant 2 : index
    %c0_135 = arith.constant 0 : index
    %c0_136 = arith.constant 0 : index
    %230 = vector.load %arg18[%c2_134, %c0_135, %c0_136] : memref<8x32x8xf32, #tpu.memory_space<vmem>>, vector<1x32x8xf32>
    %231 = vector.shape_cast %230 : vector<1x32x8xf32> to vector<32x8xf32>
    %cst_137 = arith.constant dense<0.000000e+00> : vector<48x8xf32>
    %232 = tpu.matmul %82, %231, %cst_137 {dimension_numbers = #tpu.dot_dimension_numbers<[1], [0], [0], [1], [0, 0, 1, 1], [], []>} : vector<48x32xf32>, vector<32x8xf32>, vector<48x8xf32> -> vector<48x8xf32>
    %c2_138 = arith.constant 2 : index
    %c0_139 = arith.constant 0 : index
    %c0_140 = arith.constant 0 : index
    %233 = vector.load %arg19[%c2_138, %c0_139, %c0_140] : memref<8x1x8xf32, #tpu.memory_space<vmem>>, vector<1x1x8xf32>
    %234 = vector.shape_cast %233 : vector<1x1x8xf32> to vector<1x8xf32>
    %235 = vector.broadcast %234 : vector<1x8xf32> to vector<48x8xf32>
    %236 = arith.addf %232, %235 : vector<48x8xf32>
    %c2_141 = arith.constant 2 : index
    %c0_142 = arith.constant 0 : index
    %c0_143 = arith.constant 0 : index
    %237 = vector.load %arg20[%c2_141, %c0_142, %c0_143] : memref<8x32x8xf32, #tpu.memory_space<vmem>>, vector<1x32x8xf32>
    %238 = vector.shape_cast %237 : vector<1x32x8xf32> to vector<32x8xf32>
    %cst_144 = arith.constant dense<0.000000e+00> : vector<48x8xf32>
    %239 = tpu.matmul %82, %238, %cst_144 {dimension_numbers = #tpu.dot_dimension_numbers<[1], [0], [0], [1], [0, 0, 1, 1], [], []>} : vector<48x32xf32>, vector<32x8xf32>, vector<48x8xf32> -> vector<48x8xf32>
    %c2_145 = arith.constant 2 : index
    %c0_146 = arith.constant 0 : index
    %c0_147 = arith.constant 0 : index
    %240 = vector.load %arg21[%c2_145, %c0_146, %c0_147] : memref<8x1x8xf32, #tpu.memory_space<vmem>>, vector<1x1x8xf32>
    %241 = vector.shape_cast %240 : vector<1x1x8xf32> to vector<1x8xf32>
    %242 = vector.broadcast %241 : vector<1x8xf32> to vector<48x8xf32>
    %243 = arith.addf %239, %242 : vector<48x8xf32>
    %244 = vector.extract_strided_slice %229 {offsets = [0, 0], sizes = [24, 8], strides = [1, 1]} : vector<48x8xf32> to vector<24x8xf32>
    %245 = vector.extract_strided_slice %236 {offsets = [0, 0], sizes = [24, 8], strides = [1, 1]} : vector<48x8xf32> to vector<24x8xf32>
    %246 = vector.extract_strided_slice %243 {offsets = [0, 0], sizes = [24, 8], strides = [1, 1]} : vector<48x8xf32> to vector<24x8xf32>
    %247 = tpu.transpose %245, [1, 0] : vector<24x8xf32> -> vector<8x24xf32>
    %cst_148 = arith.constant dense<0.000000e+00> : vector<24x24xf32>
    %248 = tpu.matmul %244, %247, %cst_148 {dimension_numbers = #tpu.dot_dimension_numbers<[1], [0], [0], [1], [0, 0, 1, 1], [], []>} : vector<24x8xf32>, vector<8x24xf32>, vector<24x24xf32> -> vector<24x24xf32>
    %cst_149 = arith.constant 0.353553385 : f32
    %249 = vector.broadcast %cst_149 : f32 to vector<24x24xf32>
    %250 = arith.mulf %248, %249 : vector<24x24xf32>
    %cst_150 = arith.constant -1.000000e+30 : f32
    %251 = vector.broadcast %cst_150 : f32 to vector<24x24xf32>
    %252 = arith.select %56, %250, %251 : vector<24x24xi1>, vector<24x24xf32>
    %cst_151 = arith.constant dense<0xFF800000> : vector<24xf32>
    %253 = vector.multi_reduction <maximumf>, %252, %cst_151 [1] : vector<24x24xf32> to vector<24xf32>
    %254 = vector.shape_cast %253 : vector<24xf32> to vector<24x1xf32>
    %255 = vector.broadcast %254 : vector<24x1xf32> to vector<24x24xf32>
    %256 = arith.subf %252, %255 : vector<24x24xf32>
    %257 = math.exp %256 : vector<24x24xf32>
    %cst_152 = arith.constant dense<0.000000e+00> : vector<24xf32>
    %258 = vector.multi_reduction <add>, %257, %cst_152 [1] : vector<24x24xf32> to vector<24xf32>
    %259 = vector.shape_cast %258 : vector<24xf32> to vector<24x1xf32>
    %260 = tpu.reciprocal %259 {approx = true} : vector<24x1xf32> -> vector<24x1xf32>
    %261 = vector.broadcast %260 : vector<24x1xf32> to vector<24x24xf32>
    %262 = arith.mulf %257, %261 : vector<24x24xf32>
    %cst_153 = arith.constant dense<0.000000e+00> : vector<24x8xf32>
    %263 = tpu.matmul %262, %246, %cst_153 {dimension_numbers = #tpu.dot_dimension_numbers<[1], [0], [0], [1], [0, 0, 1, 1], [], []>} : vector<24x24xf32>, vector<24x8xf32>, vector<24x8xf32> -> vector<24x8xf32>
    %c2_154 = arith.constant 2 : index
    %c0_155 = arith.constant 0 : index
    %c0_156 = arith.constant 0 : index
    %264 = vector.load %arg22[%c2_154, %c0_155, %c0_156] : memref<8x8x32xf32, #tpu.memory_space<vmem>>, vector<1x8x32xf32>
    %265 = vector.shape_cast %264 : vector<1x8x32xf32> to vector<8x32xf32>
    %cst_157 = arith.constant dense<0.000000e+00> : vector<24x32xf32>
    %266 = tpu.matmul %263, %265, %cst_157 {dimension_numbers = #tpu.dot_dimension_numbers<[1], [0], [0], [1], [0, 0, 1, 1], [], []>} : vector<24x8xf32>, vector<8x32xf32>, vector<24x32xf32> -> vector<24x32xf32>
    %267 = arith.addf %198, %266 : vector<24x32xf32>
    %268 = vector.extract_strided_slice %229 {offsets = [24, 0], sizes = [24, 8], strides = [1, 1]} : vector<48x8xf32> to vector<24x8xf32>
    %269 = vector.extract_strided_slice %236 {offsets = [24, 0], sizes = [24, 8], strides = [1, 1]} : vector<48x8xf32> to vector<24x8xf32>
    %270 = vector.extract_strided_slice %243 {offsets = [24, 0], sizes = [24, 8], strides = [1, 1]} : vector<48x8xf32> to vector<24x8xf32>
    %271 = tpu.transpose %269, [1, 0] : vector<24x8xf32> -> vector<8x24xf32>
    %cst_158 = arith.constant dense<0.000000e+00> : vector<24x24xf32>
    %272 = tpu.matmul %268, %271, %cst_158 {dimension_numbers = #tpu.dot_dimension_numbers<[1], [0], [0], [1], [0, 0, 1, 1], [], []>} : vector<24x8xf32>, vector<8x24xf32>, vector<24x24xf32> -> vector<24x24xf32>
    %cst_159 = arith.constant 0.353553385 : f32
    %273 = vector.broadcast %cst_159 : f32 to vector<24x24xf32>
    %274 = arith.mulf %272, %273 : vector<24x24xf32>
    %cst_160 = arith.constant -1.000000e+30 : f32
    %275 = vector.broadcast %cst_160 : f32 to vector<24x24xf32>
    %276 = arith.select %56, %274, %275 : vector<24x24xi1>, vector<24x24xf32>
    %cst_161 = arith.constant dense<0xFF800000> : vector<24xf32>
    %277 = vector.multi_reduction <maximumf>, %276, %cst_161 [1] : vector<24x24xf32> to vector<24xf32>
    %278 = vector.shape_cast %277 : vector<24xf32> to vector<24x1xf32>
    %279 = vector.broadcast %278 : vector<24x1xf32> to vector<24x24xf32>
    %280 = arith.subf %276, %279 : vector<24x24xf32>
    %281 = math.exp %280 : vector<24x24xf32>
    %cst_162 = arith.constant dense<0.000000e+00> : vector<24xf32>
    %282 = vector.multi_reduction <add>, %281, %cst_162 [1] : vector<24x24xf32> to vector<24xf32>
    %283 = vector.shape_cast %282 : vector<24xf32> to vector<24x1xf32>
    %284 = tpu.reciprocal %283 {approx = true} : vector<24x1xf32> -> vector<24x1xf32>
    %285 = vector.broadcast %284 : vector<24x1xf32> to vector<24x24xf32>
    %286 = arith.mulf %281, %285 : vector<24x24xf32>
    %cst_163 = arith.constant dense<0.000000e+00> : vector<24x8xf32>
    %287 = tpu.matmul %286, %270, %cst_163 {dimension_numbers = #tpu.dot_dimension_numbers<[1], [0], [0], [1], [0, 0, 1, 1], [], []>} : vector<24x24xf32>, vector<24x8xf32>, vector<24x8xf32> -> vector<24x8xf32>
    %c2_164 = arith.constant 2 : index
    %c0_165 = arith.constant 0 : index
    %c0_166 = arith.constant 0 : index
    %288 = vector.load %arg22[%c2_164, %c0_165, %c0_166] : memref<8x8x32xf32, #tpu.memory_space<vmem>>, vector<1x8x32xf32>
    %289 = vector.shape_cast %288 : vector<1x8x32xf32> to vector<8x32xf32>
    %cst_167 = arith.constant dense<0.000000e+00> : vector<24x32xf32>
    %290 = tpu.matmul %287, %289, %cst_167 {dimension_numbers = #tpu.dot_dimension_numbers<[1], [0], [0], [1], [0, 0, 1, 1], [], []>} : vector<24x8xf32>, vector<8x32xf32>, vector<24x32xf32> -> vector<24x32xf32>
    %291 = arith.addf %222, %290 : vector<24x32xf32>
    %c3 = arith.constant 3 : index
    %c0_168 = arith.constant 0 : index
    %c0_169 = arith.constant 0 : index
    %292 = vector.load %arg16[%c3, %c0_168, %c0_169] : memref<8x32x8xf32, #tpu.memory_space<vmem>>, vector<1x32x8xf32>
    %293 = vector.shape_cast %292 : vector<1x32x8xf32> to vector<32x8xf32>
    %cst_170 = arith.constant dense<0.000000e+00> : vector<48x8xf32>
    %294 = tpu.matmul %82, %293, %cst_170 {dimension_numbers = #tpu.dot_dimension_numbers<[1], [0], [0], [1], [0, 0, 1, 1], [], []>} : vector<48x32xf32>, vector<32x8xf32>, vector<48x8xf32> -> vector<48x8xf32>
    %c3_171 = arith.constant 3 : index
    %c0_172 = arith.constant 0 : index
    %c0_173 = arith.constant 0 : index
    %295 = vector.load %arg17[%c3_171, %c0_172, %c0_173] : memref<8x1x8xf32, #tpu.memory_space<vmem>>, vector<1x1x8xf32>
    %296 = vector.shape_cast %295 : vector<1x1x8xf32> to vector<1x8xf32>
    %297 = vector.broadcast %296 : vector<1x8xf32> to vector<48x8xf32>
    %298 = arith.addf %294, %297 : vector<48x8xf32>
    %c3_174 = arith.constant 3 : index
    %c0_175 = arith.constant 0 : index
    %c0_176 = arith.constant 0 : index
    %299 = vector.load %arg18[%c3_174, %c0_175, %c0_176] : memref<8x32x8xf32, #tpu.memory_space<vmem>>, vector<1x32x8xf32>
    %300 = vector.shape_cast %299 : vector<1x32x8xf32> to vector<32x8xf32>
    %cst_177 = arith.constant dense<0.000000e+00> : vector<48x8xf32>
    %301 = tpu.matmul %82, %300, %cst_177 {dimension_numbers = #tpu.dot_dimension_numbers<[1], [0], [0], [1], [0, 0, 1, 1], [], []>} : vector<48x32xf32>, vector<32x8xf32>, vector<48x8xf32> -> vector<48x8xf32>
    %c3_178 = arith.constant 3 : index
    %c0_179 = arith.constant 0 : index
    %c0_180 = arith.constant 0 : index
    %302 = vector.load %arg19[%c3_178, %c0_179, %c0_180] : memref<8x1x8xf32, #tpu.memory_space<vmem>>, vector<1x1x8xf32>
    %303 = vector.shape_cast %302 : vector<1x1x8xf32> to vector<1x8xf32>
    %304 = vector.broadcast %303 : vector<1x8xf32> to vector<48x8xf32>
    %305 = arith.addf %301, %304 : vector<48x8xf32>
    %c3_181 = arith.constant 3 : index
    %c0_182 = arith.constant 0 : index
    %c0_183 = arith.constant 0 : index
    %306 = vector.load %arg20[%c3_181, %c0_182, %c0_183] : memref<8x32x8xf32, #tpu.memory_space<vmem>>, vector<1x32x8xf32>
    %307 = vector.shape_cast %306 : vector<1x32x8xf32> to vector<32x8xf32>
    %cst_184 = arith.constant dense<0.000000e+00> : vector<48x8xf32>
    %308 = tpu.matmul %82, %307, %cst_184 {dimension_numbers = #tpu.dot_dimension_numbers<[1], [0], [0], [1], [0, 0, 1, 1], [], []>} : vector<48x32xf32>, vector<32x8xf32>, vector<48x8xf32> -> vector<48x8xf32>
    %c3_185 = arith.constant 3 : index
    %c0_186 = arith.constant 0 : index
    %c0_187 = arith.constant 0 : index
    %309 = vector.load %arg21[%c3_185, %c0_186, %c0_187] : memref<8x1x8xf32, #tpu.memory_space<vmem>>, vector<1x1x8xf32>
    %310 = vector.shape_cast %309 : vector<1x1x8xf32> to vector<1x8xf32>
    %311 = vector.broadcast %310 : vector<1x8xf32> to vector<48x8xf32>
    %312 = arith.addf %308, %311 : vector<48x8xf32>
    %313 = vector.extract_strided_slice %298 {offsets = [0, 0], sizes = [24, 8], strides = [1, 1]} : vector<48x8xf32> to vector<24x8xf32>
    %314 = vector.extract_strided_slice %305 {offsets = [0, 0], sizes = [24, 8], strides = [1, 1]} : vector<48x8xf32> to vector<24x8xf32>
    %315 = vector.extract_strided_slice %312 {offsets = [0, 0], sizes = [24, 8], strides = [1, 1]} : vector<48x8xf32> to vector<24x8xf32>
    %316 = tpu.transpose %314, [1, 0] : vector<24x8xf32> -> vector<8x24xf32>
    %cst_188 = arith.constant dense<0.000000e+00> : vector<24x24xf32>
    %317 = tpu.matmul %313, %316, %cst_188 {dimension_numbers = #tpu.dot_dimension_numbers<[1], [0], [0], [1], [0, 0, 1, 1], [], []>} : vector<24x8xf32>, vector<8x24xf32>, vector<24x24xf32> -> vector<24x24xf32>
    %cst_189 = arith.constant 0.353553385 : f32
    %318 = vector.broadcast %cst_189 : f32 to vector<24x24xf32>
    %319 = arith.mulf %317, %318 : vector<24x24xf32>
    %cst_190 = arith.constant -1.000000e+30 : f32
    %320 = vector.broadcast %cst_190 : f32 to vector<24x24xf32>
    %321 = arith.select %56, %319, %320 : vector<24x24xi1>, vector<24x24xf32>
    %cst_191 = arith.constant dense<0xFF800000> : vector<24xf32>
    %322 = vector.multi_reduction <maximumf>, %321, %cst_191 [1] : vector<24x24xf32> to vector<24xf32>
    %323 = vector.shape_cast %322 : vector<24xf32> to vector<24x1xf32>
    %324 = vector.broadcast %323 : vector<24x1xf32> to vector<24x24xf32>
    %325 = arith.subf %321, %324 : vector<24x24xf32>
    %326 = math.exp %325 : vector<24x24xf32>
    %cst_192 = arith.constant dense<0.000000e+00> : vector<24xf32>
    %327 = vector.multi_reduction <add>, %326, %cst_192 [1] : vector<24x24xf32> to vector<24xf32>
    %328 = vector.shape_cast %327 : vector<24xf32> to vector<24x1xf32>
    %329 = tpu.reciprocal %328 {approx = true} : vector<24x1xf32> -> vector<24x1xf32>
    %330 = vector.broadcast %329 : vector<24x1xf32> to vector<24x24xf32>
    %331 = arith.mulf %326, %330 : vector<24x24xf32>
    %cst_193 = arith.constant dense<0.000000e+00> : vector<24x8xf32>
    %332 = tpu.matmul %331, %315, %cst_193 {dimension_numbers = #tpu.dot_dimension_numbers<[1], [0], [0], [1], [0, 0, 1, 1], [], []>} : vector<24x24xf32>, vector<24x8xf32>, vector<24x8xf32> -> vector<24x8xf32>
    %c3_194 = arith.constant 3 : index
    %c0_195 = arith.constant 0 : index
    %c0_196 = arith.constant 0 : index
    %333 = vector.load %arg22[%c3_194, %c0_195, %c0_196] : memref<8x8x32xf32, #tpu.memory_space<vmem>>, vector<1x8x32xf32>
    %334 = vector.shape_cast %333 : vector<1x8x32xf32> to vector<8x32xf32>
    %cst_197 = arith.constant dense<0.000000e+00> : vector<24x32xf32>
    %335 = tpu.matmul %332, %334, %cst_197 {dimension_numbers = #tpu.dot_dimension_numbers<[1], [0], [0], [1], [0, 0, 1, 1], [], []>} : vector<24x8xf32>, vector<8x32xf32>, vector<24x32xf32> -> vector<24x32xf32>
    %336 = arith.addf %267, %335 : vector<24x32xf32>
    %337 = vector.extract_strided_slice %298 {offsets = [24, 0], sizes = [24, 8], strides = [1, 1]} : vector<48x8xf32> to vector<24x8xf32>
    %338 = vector.extract_strided_slice %305 {offsets = [24, 0], sizes = [24, 8], strides = [1, 1]} : vector<48x8xf32> to vector<24x8xf32>
    %339 = vector.extract_strided_slice %312 {offsets = [24, 0], sizes = [24, 8], strides = [1, 1]} : vector<48x8xf32> to vector<24x8xf32>
    %340 = tpu.transpose %338, [1, 0] : vector<24x8xf32> -> vector<8x24xf32>
    %cst_198 = arith.constant dense<0.000000e+00> : vector<24x24xf32>
    %341 = tpu.matmul %337, %340, %cst_198 {dimension_numbers = #tpu.dot_dimension_numbers<[1], [0], [0], [1], [0, 0, 1, 1], [], []>} : vector<24x8xf32>, vector<8x24xf32>, vector<24x24xf32> -> vector<24x24xf32>
    %cst_199 = arith.constant 0.353553385 : f32
    %342 = vector.broadcast %cst_199 : f32 to vector<24x24xf32>
    %343 = arith.mulf %341, %342 : vector<24x24xf32>
    %cst_200 = arith.constant -1.000000e+30 : f32
    %344 = vector.broadcast %cst_200 : f32 to vector<24x24xf32>
    %345 = arith.select %56, %343, %344 : vector<24x24xi1>, vector<24x24xf32>
    %cst_201 = arith.constant dense<0xFF800000> : vector<24xf32>
    %346 = vector.multi_reduction <maximumf>, %345, %cst_201 [1] : vector<24x24xf32> to vector<24xf32>
    %347 = vector.shape_cast %346 : vector<24xf32> to vector<24x1xf32>
    %348 = vector.broadcast %347 : vector<24x1xf32> to vector<24x24xf32>
    %349 = arith.subf %345, %348 : vector<24x24xf32>
    %350 = math.exp %349 : vector<24x24xf32>
    %cst_202 = arith.constant dense<0.000000e+00> : vector<24xf32>
    %351 = vector.multi_reduction <add>, %350, %cst_202 [1] : vector<24x24xf32> to vector<24xf32>
    %352 = vector.shape_cast %351 : vector<24xf32> to vector<24x1xf32>
    %353 = tpu.reciprocal %352 {approx = true} : vector<24x1xf32> -> vector<24x1xf32>
    %354 = vector.broadcast %353 : vector<24x1xf32> to vector<24x24xf32>
    %355 = arith.mulf %350, %354 : vector<24x24xf32>
    %cst_203 = arith.constant dense<0.000000e+00> : vector<24x8xf32>
    %356 = tpu.matmul %355, %339, %cst_203 {dimension_numbers = #tpu.dot_dimension_numbers<[1], [0], [0], [1], [0, 0, 1, 1], [], []>} : vector<24x24xf32>, vector<24x8xf32>, vector<24x8xf32> -> vector<24x8xf32>
    %c3_204 = arith.constant 3 : index
    %c0_205 = arith.constant 0 : index
    %c0_206 = arith.constant 0 : index
    %357 = vector.load %arg22[%c3_204, %c0_205, %c0_206] : memref<8x8x32xf32, #tpu.memory_space<vmem>>, vector<1x8x32xf32>
    %358 = vector.shape_cast %357 : vector<1x8x32xf32> to vector<8x32xf32>
    %cst_207 = arith.constant dense<0.000000e+00> : vector<24x32xf32>
    %359 = tpu.matmul %356, %358, %cst_207 {dimension_numbers = #tpu.dot_dimension_numbers<[1], [0], [0], [1], [0, 0, 1, 1], [], []>} : vector<24x8xf32>, vector<8x32xf32>, vector<24x32xf32> -> vector<24x32xf32>
    %360 = arith.addf %291, %359 : vector<24x32xf32>
    %361 = tpu.concatenate %336, %360 in 0 : vector<24x32xf32>, vector<24x32xf32> -> vector<48x32xf32>
    %c0_208 = arith.constant 0 : index
    %c0_209 = arith.constant 0 : index
    %c0_210 = arith.constant 0 : index
    %362 = vector.load %arg23[%c0_208, %c0_209, %c0_210] : memref<2x1x32xf32, #tpu.memory_space<vmem>>, vector<1x1x32xf32>
    %363 = vector.shape_cast %362 : vector<1x1x32xf32> to vector<1x32xf32>
    %364 = vector.broadcast %363 : vector<1x32xf32> to vector<48x32xf32>
    %365 = arith.addf %361, %364 : vector<48x32xf32>
    %366 = arith.addf %51, %365 : vector<48x32xf32>
    %c0_211 = arith.constant 0 : index
    %c0_212 = arith.constant 0 : index
    %c0_213 = arith.constant 0 : index
    %367 = vector.load %arg24[%c0_211, %c0_212, %c0_213] : memref<2x1x32xf32, #tpu.memory_space<vmem>>, vector<1x1x32xf32>
    %368 = vector.shape_cast %367 : vector<1x1x32xf32> to vector<1x32xf32>
    %c0_214 = arith.constant 0 : index
    %c0_215 = arith.constant 0 : index
    %c0_216 = arith.constant 0 : index
    %369 = vector.load %arg25[%c0_214, %c0_215, %c0_216] : memref<2x1x32xf32, #tpu.memory_space<vmem>>, vector<1x1x32xf32>
    %370 = vector.shape_cast %369 : vector<1x1x32xf32> to vector<1x32xf32>
    %cst_217 = arith.constant dense<0.000000e+00> : vector<48xf32>
    %371 = vector.multi_reduction <add>, %366, %cst_217 [1] : vector<48x32xf32> to vector<48xf32>
    %372 = vector.shape_cast %371 : vector<48xf32> to vector<48x1xf32>
    %cst_218 = arith.constant 3.200000e+01 : f32
    %373 = vector.broadcast %cst_218 : f32 to vector<48x1xf32>
    %374 = arith.divf %372, %373 : vector<48x1xf32>
    %375 = vector.broadcast %374 : vector<48x1xf32> to vector<48x32xf32>
    %376 = arith.subf %366, %375 : vector<48x32xf32>
    %377 = arith.mulf %376, %376 : vector<48x32xf32>
    %cst_219 = arith.constant dense<0.000000e+00> : vector<48xf32>
    %378 = vector.multi_reduction <add>, %377, %cst_219 [1] : vector<48x32xf32> to vector<48xf32>
    %379 = vector.shape_cast %378 : vector<48xf32> to vector<48x1xf32>
    %cst_220 = arith.constant 3.200000e+01 : f32
    %380 = vector.broadcast %cst_220 : f32 to vector<48x1xf32>
    %381 = arith.divf %379, %380 : vector<48x1xf32>
    %382 = vector.broadcast %374 : vector<48x1xf32> to vector<48x32xf32>
    %383 = arith.subf %366, %382 : vector<48x32xf32>
    %cst_221 = arith.constant 9.99999974E-6 : f32
    %384 = vector.broadcast %cst_221 : f32 to vector<48x1xf32>
    %385 = arith.addf %381, %384 : vector<48x1xf32>
    %386 = math.rsqrt %385 : vector<48x1xf32>
    %387 = vector.broadcast %386 : vector<48x1xf32> to vector<48x32xf32>
    %388 = arith.mulf %383, %387 : vector<48x32xf32>
    %389 = vector.broadcast %368 : vector<1x32xf32> to vector<48x32xf32>
    %390 = arith.mulf %388, %389 : vector<48x32xf32>
    %391 = vector.broadcast %370 : vector<1x32xf32> to vector<48x32xf32>
    %392 = arith.addf %390, %391 : vector<48x32xf32>
    %c0_222 = arith.constant 0 : index
    %c0_223 = arith.constant 0 : index
    %c0_224 = arith.constant 0 : index
    %393 = vector.load %arg26[%c0_222, %c0_223, %c0_224] : memref<2x32x128xf32, #tpu.memory_space<vmem>>, vector<1x32x128xf32>
    %394 = vector.shape_cast %393 : vector<1x32x128xf32> to vector<32x128xf32>
    %cst_225 = arith.constant dense<0.000000e+00> : vector<48x128xf32>
    %395 = tpu.matmul %392, %394, %cst_225 {dimension_numbers = #tpu.dot_dimension_numbers<[1], [0], [0], [1], [0, 0, 1, 1], [], []>} : vector<48x32xf32>, vector<32x128xf32>, vector<48x128xf32> -> vector<48x128xf32>
    %c0_226 = arith.constant 0 : index
    %c0_227 = arith.constant 0 : index
    %c0_228 = arith.constant 0 : index
    %396 = vector.load %arg27[%c0_226, %c0_227, %c0_228] : memref<2x1x128xf32, #tpu.memory_space<vmem>>, vector<1x1x128xf32>
    %397 = vector.shape_cast %396 : vector<1x1x128xf32> to vector<1x128xf32>
    %398 = vector.broadcast %397 : vector<1x128xf32> to vector<48x128xf32>
    %399 = arith.addf %395, %398 : vector<48x128xf32>
    %cst_229 = arith.constant 5.000000e-01 : f32
    %400 = vector.broadcast %cst_229 : f32 to vector<48x128xf32>
    %401 = arith.mulf %400, %399 : vector<48x128xf32>
    %cst_230 = arith.constant 4.471500e-02 : f32
    %402 = vector.broadcast %cst_230 : f32 to vector<48x128xf32>
    %403 = arith.mulf %402, %399 : vector<48x128xf32>
    %404 = arith.mulf %403, %399 : vector<48x128xf32>
    %405 = arith.mulf %404, %399 : vector<48x128xf32>
    %406 = arith.addf %399, %405 : vector<48x128xf32>
    %cst_231 = arith.constant 0.797884583 : f32
    %407 = vector.broadcast %cst_231 : f32 to vector<48x128xf32>
    %408 = arith.mulf %407, %406 : vector<48x128xf32>
    %409 = math.tanh %408 : vector<48x128xf32>
    %cst_232 = arith.constant 1.000000e+00 : f32
    %410 = vector.broadcast %cst_232 : f32 to vector<48x128xf32>
    %411 = arith.addf %410, %409 : vector<48x128xf32>
    %412 = arith.mulf %401, %411 : vector<48x128xf32>
    %c0_233 = arith.constant 0 : index
    %c0_234 = arith.constant 0 : index
    %c0_235 = arith.constant 0 : index
    %413 = vector.load %arg28[%c0_233, %c0_234, %c0_235] : memref<2x128x32xf32, #tpu.memory_space<vmem>>, vector<1x128x32xf32>
    %414 = vector.shape_cast %413 : vector<1x128x32xf32> to vector<128x32xf32>
    %cst_236 = arith.constant dense<0.000000e+00> : vector<48x32xf32>
    %415 = tpu.matmul %412, %414, %cst_236 {dimension_numbers = #tpu.dot_dimension_numbers<[1], [0], [0], [1], [0, 0, 1, 1], [], []>} : vector<48x128xf32>, vector<128x32xf32>, vector<48x32xf32> -> vector<48x32xf32>
    %c0_237 = arith.constant 0 : index
    %c0_238 = arith.constant 0 : index
    %c0_239 = arith.constant 0 : index
    %416 = vector.load %arg29[%c0_237, %c0_238, %c0_239] : memref<2x1x32xf32, #tpu.memory_space<vmem>>, vector<1x1x32xf32>
    %417 = vector.shape_cast %416 : vector<1x1x32xf32> to vector<1x32xf32>
    %418 = vector.broadcast %417 : vector<1x32xf32> to vector<48x32xf32>
    %419 = arith.addf %415, %418 : vector<48x32xf32>
    %420 = arith.addf %366, %419 : vector<48x32xf32>
    %c1_240 = arith.constant 1 : index
    %c0_241 = arith.constant 0 : index
    %c0_242 = arith.constant 0 : index
    %421 = vector.load %arg14[%c1_240, %c0_241, %c0_242] : memref<2x1x32xf32, #tpu.memory_space<vmem>>, vector<1x1x32xf32>
    %422 = vector.shape_cast %421 : vector<1x1x32xf32> to vector<1x32xf32>
    %c1_243 = arith.constant 1 : index
    %c0_244 = arith.constant 0 : index
    %c0_245 = arith.constant 0 : index
    %423 = vector.load %arg15[%c1_243, %c0_244, %c0_245] : memref<2x1x32xf32, #tpu.memory_space<vmem>>, vector<1x1x32xf32>
    %424 = vector.shape_cast %423 : vector<1x1x32xf32> to vector<1x32xf32>
    %cst_246 = arith.constant dense<0.000000e+00> : vector<48xf32>
    %425 = vector.multi_reduction <add>, %420, %cst_246 [1] : vector<48x32xf32> to vector<48xf32>
    %426 = vector.shape_cast %425 : vector<48xf32> to vector<48x1xf32>
    %cst_247 = arith.constant 3.200000e+01 : f32
    %427 = vector.broadcast %cst_247 : f32 to vector<48x1xf32>
    %428 = arith.divf %426, %427 : vector<48x1xf32>
    %429 = vector.broadcast %428 : vector<48x1xf32> to vector<48x32xf32>
    %430 = arith.subf %420, %429 : vector<48x32xf32>
    %431 = arith.mulf %430, %430 : vector<48x32xf32>
    %cst_248 = arith.constant dense<0.000000e+00> : vector<48xf32>
    %432 = vector.multi_reduction <add>, %431, %cst_248 [1] : vector<48x32xf32> to vector<48xf32>
    %433 = vector.shape_cast %432 : vector<48xf32> to vector<48x1xf32>
    %cst_249 = arith.constant 3.200000e+01 : f32
    %434 = vector.broadcast %cst_249 : f32 to vector<48x1xf32>
    %435 = arith.divf %433, %434 : vector<48x1xf32>
    %436 = vector.broadcast %428 : vector<48x1xf32> to vector<48x32xf32>
    %437 = arith.subf %420, %436 : vector<48x32xf32>
    %cst_250 = arith.constant 9.99999974E-6 : f32
    %438 = vector.broadcast %cst_250 : f32 to vector<48x1xf32>
    %439 = arith.addf %435, %438 : vector<48x1xf32>
    %440 = math.rsqrt %439 : vector<48x1xf32>
    %441 = vector.broadcast %440 : vector<48x1xf32> to vector<48x32xf32>
    %442 = arith.mulf %437, %441 : vector<48x32xf32>
    %443 = vector.broadcast %422 : vector<1x32xf32> to vector<48x32xf32>
    %444 = arith.mulf %442, %443 : vector<48x32xf32>
    %445 = vector.broadcast %424 : vector<1x32xf32> to vector<48x32xf32>
    %446 = arith.addf %444, %445 : vector<48x32xf32>
    %cst_251 = arith.constant 0.000000e+00 : f32
    %447 = vector.broadcast %cst_251 : f32 to vector<24x32xf32>
    %cst_252 = arith.constant 0.000000e+00 : f32
    %448 = vector.broadcast %cst_252 : f32 to vector<24x32xf32>
    %c4 = arith.constant 4 : index
    %c0_253 = arith.constant 0 : index
    %c0_254 = arith.constant 0 : index
    %449 = vector.load %arg16[%c4, %c0_253, %c0_254] : memref<8x32x8xf32, #tpu.memory_space<vmem>>, vector<1x32x8xf32>
    %450 = vector.shape_cast %449 : vector<1x32x8xf32> to vector<32x8xf32>
    %cst_255 = arith.constant dense<0.000000e+00> : vector<48x8xf32>
    %451 = tpu.matmul %446, %450, %cst_255 {dimension_numbers = #tpu.dot_dimension_numbers<[1], [0], [0], [1], [0, 0, 1, 1], [], []>} : vector<48x32xf32>, vector<32x8xf32>, vector<48x8xf32> -> vector<48x8xf32>
    %c4_256 = arith.constant 4 : index
    %c0_257 = arith.constant 0 : index
    %c0_258 = arith.constant 0 : index
    %452 = vector.load %arg17[%c4_256, %c0_257, %c0_258] : memref<8x1x8xf32, #tpu.memory_space<vmem>>, vector<1x1x8xf32>
    %453 = vector.shape_cast %452 : vector<1x1x8xf32> to vector<1x8xf32>
    %454 = vector.broadcast %453 : vector<1x8xf32> to vector<48x8xf32>
    %455 = arith.addf %451, %454 : vector<48x8xf32>
    %c4_259 = arith.constant 4 : index
    %c0_260 = arith.constant 0 : index
    %c0_261 = arith.constant 0 : index
    %456 = vector.load %arg18[%c4_259, %c0_260, %c0_261] : memref<8x32x8xf32, #tpu.memory_space<vmem>>, vector<1x32x8xf32>
    %457 = vector.shape_cast %456 : vector<1x32x8xf32> to vector<32x8xf32>
    %cst_262 = arith.constant dense<0.000000e+00> : vector<48x8xf32>
    %458 = tpu.matmul %446, %457, %cst_262 {dimension_numbers = #tpu.dot_dimension_numbers<[1], [0], [0], [1], [0, 0, 1, 1], [], []>} : vector<48x32xf32>, vector<32x8xf32>, vector<48x8xf32> -> vector<48x8xf32>
    %c4_263 = arith.constant 4 : index
    %c0_264 = arith.constant 0 : index
    %c0_265 = arith.constant 0 : index
    %459 = vector.load %arg19[%c4_263, %c0_264, %c0_265] : memref<8x1x8xf32, #tpu.memory_space<vmem>>, vector<1x1x8xf32>
    %460 = vector.shape_cast %459 : vector<1x1x8xf32> to vector<1x8xf32>
    %461 = vector.broadcast %460 : vector<1x8xf32> to vector<48x8xf32>
    %462 = arith.addf %458, %461 : vector<48x8xf32>
    %c4_266 = arith.constant 4 : index
    %c0_267 = arith.constant 0 : index
    %c0_268 = arith.constant 0 : index
    %463 = vector.load %arg20[%c4_266, %c0_267, %c0_268] : memref<8x32x8xf32, #tpu.memory_space<vmem>>, vector<1x32x8xf32>
    %464 = vector.shape_cast %463 : vector<1x32x8xf32> to vector<32x8xf32>
    %cst_269 = arith.constant dense<0.000000e+00> : vector<48x8xf32>
    %465 = tpu.matmul %446, %464, %cst_269 {dimension_numbers = #tpu.dot_dimension_numbers<[1], [0], [0], [1], [0, 0, 1, 1], [], []>} : vector<48x32xf32>, vector<32x8xf32>, vector<48x8xf32> -> vector<48x8xf32>
    %c4_270 = arith.constant 4 : index
    %c0_271 = arith.constant 0 : index
    %c0_272 = arith.constant 0 : index
    %466 = vector.load %arg21[%c4_270, %c0_271, %c0_272] : memref<8x1x8xf32, #tpu.memory_space<vmem>>, vector<1x1x8xf32>
    %467 = vector.shape_cast %466 : vector<1x1x8xf32> to vector<1x8xf32>
    %468 = vector.broadcast %467 : vector<1x8xf32> to vector<48x8xf32>
    %469 = arith.addf %465, %468 : vector<48x8xf32>
    %470 = vector.extract_strided_slice %455 {offsets = [0, 0], sizes = [24, 8], strides = [1, 1]} : vector<48x8xf32> to vector<24x8xf32>
    %471 = vector.extract_strided_slice %462 {offsets = [0, 0], sizes = [24, 8], strides = [1, 1]} : vector<48x8xf32> to vector<24x8xf32>
    %472 = vector.extract_strided_slice %469 {offsets = [0, 0], sizes = [24, 8], strides = [1, 1]} : vector<48x8xf32> to vector<24x8xf32>
    %473 = tpu.transpose %471, [1, 0] : vector<24x8xf32> -> vector<8x24xf32>
    %cst_273 = arith.constant dense<0.000000e+00> : vector<24x24xf32>
    %474 = tpu.matmul %470, %473, %cst_273 {dimension_numbers = #tpu.dot_dimension_numbers<[1], [0], [0], [1], [0, 0, 1, 1], [], []>} : vector<24x8xf32>, vector<8x24xf32>, vector<24x24xf32> -> vector<24x24xf32>
    %cst_274 = arith.constant 0.353553385 : f32
    %475 = vector.broadcast %cst_274 : f32 to vector<24x24xf32>
    %476 = arith.mulf %474, %475 : vector<24x24xf32>
    %cst_275 = arith.constant -1.000000e+30 : f32
    %477 = vector.broadcast %cst_275 : f32 to vector<24x24xf32>
    %478 = arith.select %56, %476, %477 : vector<24x24xi1>, vector<24x24xf32>
    %cst_276 = arith.constant dense<0xFF800000> : vector<24xf32>
    %479 = vector.multi_reduction <maximumf>, %478, %cst_276 [1] : vector<24x24xf32> to vector<24xf32>
    %480 = vector.shape_cast %479 : vector<24xf32> to vector<24x1xf32>
    %481 = vector.broadcast %480 : vector<24x1xf32> to vector<24x24xf32>
    %482 = arith.subf %478, %481 : vector<24x24xf32>
    %483 = math.exp %482 : vector<24x24xf32>
    %cst_277 = arith.constant dense<0.000000e+00> : vector<24xf32>
    %484 = vector.multi_reduction <add>, %483, %cst_277 [1] : vector<24x24xf32> to vector<24xf32>
    %485 = vector.shape_cast %484 : vector<24xf32> to vector<24x1xf32>
    %486 = tpu.reciprocal %485 {approx = true} : vector<24x1xf32> -> vector<24x1xf32>
    %487 = vector.broadcast %486 : vector<24x1xf32> to vector<24x24xf32>
    %488 = arith.mulf %483, %487 : vector<24x24xf32>
    %cst_278 = arith.constant dense<0.000000e+00> : vector<24x8xf32>
    %489 = tpu.matmul %488, %472, %cst_278 {dimension_numbers = #tpu.dot_dimension_numbers<[1], [0], [0], [1], [0, 0, 1, 1], [], []>} : vector<24x24xf32>, vector<24x8xf32>, vector<24x8xf32> -> vector<24x8xf32>
    %c4_279 = arith.constant 4 : index
    %c0_280 = arith.constant 0 : index
    %c0_281 = arith.constant 0 : index
    %490 = vector.load %arg22[%c4_279, %c0_280, %c0_281] : memref<8x8x32xf32, #tpu.memory_space<vmem>>, vector<1x8x32xf32>
    %491 = vector.shape_cast %490 : vector<1x8x32xf32> to vector<8x32xf32>
    %cst_282 = arith.constant dense<0.000000e+00> : vector<24x32xf32>
    %492 = tpu.matmul %489, %491, %cst_282 {dimension_numbers = #tpu.dot_dimension_numbers<[1], [0], [0], [1], [0, 0, 1, 1], [], []>} : vector<24x8xf32>, vector<8x32xf32>, vector<24x32xf32> -> vector<24x32xf32>
    %493 = arith.addf %447, %492 : vector<24x32xf32>
    %494 = vector.extract_strided_slice %455 {offsets = [24, 0], sizes = [24, 8], strides = [1, 1]} : vector<48x8xf32> to vector<24x8xf32>
    %495 = vector.extract_strided_slice %462 {offsets = [24, 0], sizes = [24, 8], strides = [1, 1]} : vector<48x8xf32> to vector<24x8xf32>
    %496 = vector.extract_strided_slice %469 {offsets = [24, 0], sizes = [24, 8], strides = [1, 1]} : vector<48x8xf32> to vector<24x8xf32>
    %497 = tpu.transpose %495, [1, 0] : vector<24x8xf32> -> vector<8x24xf32>
    %cst_283 = arith.constant dense<0.000000e+00> : vector<24x24xf32>
    %498 = tpu.matmul %494, %497, %cst_283 {dimension_numbers = #tpu.dot_dimension_numbers<[1], [0], [0], [1], [0, 0, 1, 1], [], []>} : vector<24x8xf32>, vector<8x24xf32>, vector<24x24xf32> -> vector<24x24xf32>
    %cst_284 = arith.constant 0.353553385 : f32
    %499 = vector.broadcast %cst_284 : f32 to vector<24x24xf32>
    %500 = arith.mulf %498, %499 : vector<24x24xf32>
    %cst_285 = arith.constant -1.000000e+30 : f32
    %501 = vector.broadcast %cst_285 : f32 to vector<24x24xf32>
    %502 = arith.select %56, %500, %501 : vector<24x24xi1>, vector<24x24xf32>
    %cst_286 = arith.constant dense<0xFF800000> : vector<24xf32>
    %503 = vector.multi_reduction <maximumf>, %502, %cst_286 [1] : vector<24x24xf32> to vector<24xf32>
    %504 = vector.shape_cast %503 : vector<24xf32> to vector<24x1xf32>
    %505 = vector.broadcast %504 : vector<24x1xf32> to vector<24x24xf32>
    %506 = arith.subf %502, %505 : vector<24x24xf32>
    %507 = math.exp %506 : vector<24x24xf32>
    %cst_287 = arith.constant dense<0.000000e+00> : vector<24xf32>
    %508 = vector.multi_reduction <add>, %507, %cst_287 [1] : vector<24x24xf32> to vector<24xf32>
    %509 = vector.shape_cast %508 : vector<24xf32> to vector<24x1xf32>
    %510 = tpu.reciprocal %509 {approx = true} : vector<24x1xf32> -> vector<24x1xf32>
    %511 = vector.broadcast %510 : vector<24x1xf32> to vector<24x24xf32>
    %512 = arith.mulf %507, %511 : vector<24x24xf32>
    %cst_288 = arith.constant dense<0.000000e+00> : vector<24x8xf32>
    %513 = tpu.matmul %512, %496, %cst_288 {dimension_numbers = #tpu.dot_dimension_numbers<[1], [0], [0], [1], [0, 0, 1, 1], [], []>} : vector<24x24xf32>, vector<24x8xf32>, vector<24x8xf32> -> vector<24x8xf32>
    %c4_289 = arith.constant 4 : index
    %c0_290 = arith.constant 0 : index
    %c0_291 = arith.constant 0 : index
    %514 = vector.load %arg22[%c4_289, %c0_290, %c0_291] : memref<8x8x32xf32, #tpu.memory_space<vmem>>, vector<1x8x32xf32>
    %515 = vector.shape_cast %514 : vector<1x8x32xf32> to vector<8x32xf32>
    %cst_292 = arith.constant dense<0.000000e+00> : vector<24x32xf32>
    %516 = tpu.matmul %513, %515, %cst_292 {dimension_numbers = #tpu.dot_dimension_numbers<[1], [0], [0], [1], [0, 0, 1, 1], [], []>} : vector<24x8xf32>, vector<8x32xf32>, vector<24x32xf32> -> vector<24x32xf32>
    %517 = arith.addf %448, %516 : vector<24x32xf32>
    %c5 = arith.constant 5 : index
    %c0_293 = arith.constant 0 : index
    %c0_294 = arith.constant 0 : index
    %518 = vector.load %arg16[%c5, %c0_293, %c0_294] : memref<8x32x8xf32, #tpu.memory_space<vmem>>, vector<1x32x8xf32>
    %519 = vector.shape_cast %518 : vector<1x32x8xf32> to vector<32x8xf32>
    %cst_295 = arith.constant dense<0.000000e+00> : vector<48x8xf32>
    %520 = tpu.matmul %446, %519, %cst_295 {dimension_numbers = #tpu.dot_dimension_numbers<[1], [0], [0], [1], [0, 0, 1, 1], [], []>} : vector<48x32xf32>, vector<32x8xf32>, vector<48x8xf32> -> vector<48x8xf32>
    %c5_296 = arith.constant 5 : index
    %c0_297 = arith.constant 0 : index
    %c0_298 = arith.constant 0 : index
    %521 = vector.load %arg17[%c5_296, %c0_297, %c0_298] : memref<8x1x8xf32, #tpu.memory_space<vmem>>, vector<1x1x8xf32>
    %522 = vector.shape_cast %521 : vector<1x1x8xf32> to vector<1x8xf32>
    %523 = vector.broadcast %522 : vector<1x8xf32> to vector<48x8xf32>
    %524 = arith.addf %520, %523 : vector<48x8xf32>
    %c5_299 = arith.constant 5 : index
    %c0_300 = arith.constant 0 : index
    %c0_301 = arith.constant 0 : index
    %525 = vector.load %arg18[%c5_299, %c0_300, %c0_301] : memref<8x32x8xf32, #tpu.memory_space<vmem>>, vector<1x32x8xf32>
    %526 = vector.shape_cast %525 : vector<1x32x8xf32> to vector<32x8xf32>
    %cst_302 = arith.constant dense<0.000000e+00> : vector<48x8xf32>
    %527 = tpu.matmul %446, %526, %cst_302 {dimension_numbers = #tpu.dot_dimension_numbers<[1], [0], [0], [1], [0, 0, 1, 1], [], []>} : vector<48x32xf32>, vector<32x8xf32>, vector<48x8xf32> -> vector<48x8xf32>
    %c5_303 = arith.constant 5 : index
    %c0_304 = arith.constant 0 : index
    %c0_305 = arith.constant 0 : index
    %528 = vector.load %arg19[%c5_303, %c0_304, %c0_305] : memref<8x1x8xf32, #tpu.memory_space<vmem>>, vector<1x1x8xf32>
    %529 = vector.shape_cast %528 : vector<1x1x8xf32> to vector<1x8xf32>
    %530 = vector.broadcast %529 : vector<1x8xf32> to vector<48x8xf32>
    %531 = arith.addf %527, %530 : vector<48x8xf32>
    %c5_306 = arith.constant 5 : index
    %c0_307 = arith.constant 0 : index
    %c0_308 = arith.constant 0 : index
    %532 = vector.load %arg20[%c5_306, %c0_307, %c0_308] : memref<8x32x8xf32, #tpu.memory_space<vmem>>, vector<1x32x8xf32>
    %533 = vector.shape_cast %532 : vector<1x32x8xf32> to vector<32x8xf32>
    %cst_309 = arith.constant dense<0.000000e+00> : vector<48x8xf32>
    %534 = tpu.matmul %446, %533, %cst_309 {dimension_numbers = #tpu.dot_dimension_numbers<[1], [0], [0], [1], [0, 0, 1, 1], [], []>} : vector<48x32xf32>, vector<32x8xf32>, vector<48x8xf32> -> vector<48x8xf32>
    %c5_310 = arith.constant 5 : index
    %c0_311 = arith.constant 0 : index
    %c0_312 = arith.constant 0 : index
    %535 = vector.load %arg21[%c5_310, %c0_311, %c0_312] : memref<8x1x8xf32, #tpu.memory_space<vmem>>, vector<1x1x8xf32>
    %536 = vector.shape_cast %535 : vector<1x1x8xf32> to vector<1x8xf32>
    %537 = vector.broadcast %536 : vector<1x8xf32> to vector<48x8xf32>
    %538 = arith.addf %534, %537 : vector<48x8xf32>
    %539 = vector.extract_strided_slice %524 {offsets = [0, 0], sizes = [24, 8], strides = [1, 1]} : vector<48x8xf32> to vector<24x8xf32>
    %540 = vector.extract_strided_slice %531 {offsets = [0, 0], sizes = [24, 8], strides = [1, 1]} : vector<48x8xf32> to vector<24x8xf32>
    %541 = vector.extract_strided_slice %538 {offsets = [0, 0], sizes = [24, 8], strides = [1, 1]} : vector<48x8xf32> to vector<24x8xf32>
    %542 = tpu.transpose %540, [1, 0] : vector<24x8xf32> -> vector<8x24xf32>
    %cst_313 = arith.constant dense<0.000000e+00> : vector<24x24xf32>
    %543 = tpu.matmul %539, %542, %cst_313 {dimension_numbers = #tpu.dot_dimension_numbers<[1], [0], [0], [1], [0, 0, 1, 1], [], []>} : vector<24x8xf32>, vector<8x24xf32>, vector<24x24xf32> -> vector<24x24xf32>
    %cst_314 = arith.constant 0.353553385 : f32
    %544 = vector.broadcast %cst_314 : f32 to vector<24x24xf32>
    %545 = arith.mulf %543, %544 : vector<24x24xf32>
    %cst_315 = arith.constant -1.000000e+30 : f32
    %546 = vector.broadcast %cst_315 : f32 to vector<24x24xf32>
    %547 = arith.select %56, %545, %546 : vector<24x24xi1>, vector<24x24xf32>
    %cst_316 = arith.constant dense<0xFF800000> : vector<24xf32>
    %548 = vector.multi_reduction <maximumf>, %547, %cst_316 [1] : vector<24x24xf32> to vector<24xf32>
    %549 = vector.shape_cast %548 : vector<24xf32> to vector<24x1xf32>
    %550 = vector.broadcast %549 : vector<24x1xf32> to vector<24x24xf32>
    %551 = arith.subf %547, %550 : vector<24x24xf32>
    %552 = math.exp %551 : vector<24x24xf32>
    %cst_317 = arith.constant dense<0.000000e+00> : vector<24xf32>
    %553 = vector.multi_reduction <add>, %552, %cst_317 [1] : vector<24x24xf32> to vector<24xf32>
    %554 = vector.shape_cast %553 : vector<24xf32> to vector<24x1xf32>
    %555 = tpu.reciprocal %554 {approx = true} : vector<24x1xf32> -> vector<24x1xf32>
    %556 = vector.broadcast %555 : vector<24x1xf32> to vector<24x24xf32>
    %557 = arith.mulf %552, %556 : vector<24x24xf32>
    %cst_318 = arith.constant dense<0.000000e+00> : vector<24x8xf32>
    %558 = tpu.matmul %557, %541, %cst_318 {dimension_numbers = #tpu.dot_dimension_numbers<[1], [0], [0], [1], [0, 0, 1, 1], [], []>} : vector<24x24xf32>, vector<24x8xf32>, vector<24x8xf32> -> vector<24x8xf32>
    %c5_319 = arith.constant 5 : index
    %c0_320 = arith.constant 0 : index
    %c0_321 = arith.constant 0 : index
    %559 = vector.load %arg22[%c5_319, %c0_320, %c0_321] : memref<8x8x32xf32, #tpu.memory_space<vmem>>, vector<1x8x32xf32>
    %560 = vector.shape_cast %559 : vector<1x8x32xf32> to vector<8x32xf32>
    %cst_322 = arith.constant dense<0.000000e+00> : vector<24x32xf32>
    %561 = tpu.matmul %558, %560, %cst_322 {dimension_numbers = #tpu.dot_dimension_numbers<[1], [0], [0], [1], [0, 0, 1, 1], [], []>} : vector<24x8xf32>, vector<8x32xf32>, vector<24x32xf32> -> vector<24x32xf32>
    %562 = arith.addf %493, %561 : vector<24x32xf32>
    %563 = vector.extract_strided_slice %524 {offsets = [24, 0], sizes = [24, 8], strides = [1, 1]} : vector<48x8xf32> to vector<24x8xf32>
    %564 = vector.extract_strided_slice %531 {offsets = [24, 0], sizes = [24, 8], strides = [1, 1]} : vector<48x8xf32> to vector<24x8xf32>
    %565 = vector.extract_strided_slice %538 {offsets = [24, 0], sizes = [24, 8], strides = [1, 1]} : vector<48x8xf32> to vector<24x8xf32>
    %566 = tpu.transpose %564, [1, 0] : vector<24x8xf32> -> vector<8x24xf32>
    %cst_323 = arith.constant dense<0.000000e+00> : vector<24x24xf32>
    %567 = tpu.matmul %563, %566, %cst_323 {dimension_numbers = #tpu.dot_dimension_numbers<[1], [0], [0], [1], [0, 0, 1, 1], [], []>} : vector<24x8xf32>, vector<8x24xf32>, vector<24x24xf32> -> vector<24x24xf32>
    %cst_324 = arith.constant 0.353553385 : f32
    %568 = vector.broadcast %cst_324 : f32 to vector<24x24xf32>
    %569 = arith.mulf %567, %568 : vector<24x24xf32>
    %cst_325 = arith.constant -1.000000e+30 : f32
    %570 = vector.broadcast %cst_325 : f32 to vector<24x24xf32>
    %571 = arith.select %56, %569, %570 : vector<24x24xi1>, vector<24x24xf32>
    %cst_326 = arith.constant dense<0xFF800000> : vector<24xf32>
    %572 = vector.multi_reduction <maximumf>, %571, %cst_326 [1] : vector<24x24xf32> to vector<24xf32>
    %573 = vector.shape_cast %572 : vector<24xf32> to vector<24x1xf32>
    %574 = vector.broadcast %573 : vector<24x1xf32> to vector<24x24xf32>
    %575 = arith.subf %571, %574 : vector<24x24xf32>
    %576 = math.exp %575 : vector<24x24xf32>
    %cst_327 = arith.constant dense<0.000000e+00> : vector<24xf32>
    %577 = vector.multi_reduction <add>, %576, %cst_327 [1] : vector<24x24xf32> to vector<24xf32>
    %578 = vector.shape_cast %577 : vector<24xf32> to vector<24x1xf32>
    %579 = tpu.reciprocal %578 {approx = true} : vector<24x1xf32> -> vector<24x1xf32>
    %580 = vector.broadcast %579 : vector<24x1xf32> to vector<24x24xf32>
    %581 = arith.mulf %576, %580 : vector<24x24xf32>
    %cst_328 = arith.constant dense<0.000000e+00> : vector<24x8xf32>
    %582 = tpu.matmul %581, %565, %cst_328 {dimension_numbers = #tpu.dot_dimension_numbers<[1], [0], [0], [1], [0, 0, 1, 1], [], []>} : vector<24x24xf32>, vector<24x8xf32>, vector<24x8xf32> -> vector<24x8xf32>
    %c5_329 = arith.constant 5 : index
    %c0_330 = arith.constant 0 : index
    %c0_331 = arith.constant 0 : index
    %583 = vector.load %arg22[%c5_329, %c0_330, %c0_331] : memref<8x8x32xf32, #tpu.memory_space<vmem>>, vector<1x8x32xf32>
    %584 = vector.shape_cast %583 : vector<1x8x32xf32> to vector<8x32xf32>
    %cst_332 = arith.constant dense<0.000000e+00> : vector<24x32xf32>
    %585 = tpu.matmul %582, %584, %cst_332 {dimension_numbers = #tpu.dot_dimension_numbers<[1], [0], [0], [1], [0, 0, 1, 1], [], []>} : vector<24x8xf32>, vector<8x32xf32>, vector<24x32xf32> -> vector<24x32xf32>
    %586 = arith.addf %517, %585 : vector<24x32xf32>
    %c6 = arith.constant 6 : index
    %c0_333 = arith.constant 0 : index
    %c0_334 = arith.constant 0 : index
    %587 = vector.load %arg16[%c6, %c0_333, %c0_334] : memref<8x32x8xf32, #tpu.memory_space<vmem>>, vector<1x32x8xf32>
    %588 = vector.shape_cast %587 : vector<1x32x8xf32> to vector<32x8xf32>
    %cst_335 = arith.constant dense<0.000000e+00> : vector<48x8xf32>
    %589 = tpu.matmul %446, %588, %cst_335 {dimension_numbers = #tpu.dot_dimension_numbers<[1], [0], [0], [1], [0, 0, 1, 1], [], []>} : vector<48x32xf32>, vector<32x8xf32>, vector<48x8xf32> -> vector<48x8xf32>
    %c6_336 = arith.constant 6 : index
    %c0_337 = arith.constant 0 : index
    %c0_338 = arith.constant 0 : index
    %590 = vector.load %arg17[%c6_336, %c0_337, %c0_338] : memref<8x1x8xf32, #tpu.memory_space<vmem>>, vector<1x1x8xf32>
    %591 = vector.shape_cast %590 : vector<1x1x8xf32> to vector<1x8xf32>
    %592 = vector.broadcast %591 : vector<1x8xf32> to vector<48x8xf32>
    %593 = arith.addf %589, %592 : vector<48x8xf32>
    %c6_339 = arith.constant 6 : index
    %c0_340 = arith.constant 0 : index
    %c0_341 = arith.constant 0 : index
    %594 = vector.load %arg18[%c6_339, %c0_340, %c0_341] : memref<8x32x8xf32, #tpu.memory_space<vmem>>, vector<1x32x8xf32>
    %595 = vector.shape_cast %594 : vector<1x32x8xf32> to vector<32x8xf32>
    %cst_342 = arith.constant dense<0.000000e+00> : vector<48x8xf32>
    %596 = tpu.matmul %446, %595, %cst_342 {dimension_numbers = #tpu.dot_dimension_numbers<[1], [0], [0], [1], [0, 0, 1, 1], [], []>} : vector<48x32xf32>, vector<32x8xf32>, vector<48x8xf32> -> vector<48x8xf32>
    %c6_343 = arith.constant 6 : index
    %c0_344 = arith.constant 0 : index
    %c0_345 = arith.constant 0 : index
    %597 = vector.load %arg19[%c6_343, %c0_344, %c0_345] : memref<8x1x8xf32, #tpu.memory_space<vmem>>, vector<1x1x8xf32>
    %598 = vector.shape_cast %597 : vector<1x1x8xf32> to vector<1x8xf32>
    %599 = vector.broadcast %598 : vector<1x8xf32> to vector<48x8xf32>
    %600 = arith.addf %596, %599 : vector<48x8xf32>
    %c6_346 = arith.constant 6 : index
    %c0_347 = arith.constant 0 : index
    %c0_348 = arith.constant 0 : index
    %601 = vector.load %arg20[%c6_346, %c0_347, %c0_348] : memref<8x32x8xf32, #tpu.memory_space<vmem>>, vector<1x32x8xf32>
    %602 = vector.shape_cast %601 : vector<1x32x8xf32> to vector<32x8xf32>
    %cst_349 = arith.constant dense<0.000000e+00> : vector<48x8xf32>
    %603 = tpu.matmul %446, %602, %cst_349 {dimension_numbers = #tpu.dot_dimension_numbers<[1], [0], [0], [1], [0, 0, 1, 1], [], []>} : vector<48x32xf32>, vector<32x8xf32>, vector<48x8xf32> -> vector<48x8xf32>
    %c6_350 = arith.constant 6 : index
    %c0_351 = arith.constant 0 : index
    %c0_352 = arith.constant 0 : index
    %604 = vector.load %arg21[%c6_350, %c0_351, %c0_352] : memref<8x1x8xf32, #tpu.memory_space<vmem>>, vector<1x1x8xf32>
    %605 = vector.shape_cast %604 : vector<1x1x8xf32> to vector<1x8xf32>
    %606 = vector.broadcast %605 : vector<1x8xf32> to vector<48x8xf32>
    %607 = arith.addf %603, %606 : vector<48x8xf32>
    %608 = vector.extract_strided_slice %593 {offsets = [0, 0], sizes = [24, 8], strides = [1, 1]} : vector<48x8xf32> to vector<24x8xf32>
    %609 = vector.extract_strided_slice %600 {offsets = [0, 0], sizes = [24, 8], strides = [1, 1]} : vector<48x8xf32> to vector<24x8xf32>
    %610 = vector.extract_strided_slice %607 {offsets = [0, 0], sizes = [24, 8], strides = [1, 1]} : vector<48x8xf32> to vector<24x8xf32>
    %611 = tpu.transpose %609, [1, 0] : vector<24x8xf32> -> vector<8x24xf32>
    %cst_353 = arith.constant dense<0.000000e+00> : vector<24x24xf32>
    %612 = tpu.matmul %608, %611, %cst_353 {dimension_numbers = #tpu.dot_dimension_numbers<[1], [0], [0], [1], [0, 0, 1, 1], [], []>} : vector<24x8xf32>, vector<8x24xf32>, vector<24x24xf32> -> vector<24x24xf32>
    %cst_354 = arith.constant 0.353553385 : f32
    %613 = vector.broadcast %cst_354 : f32 to vector<24x24xf32>
    %614 = arith.mulf %612, %613 : vector<24x24xf32>
    %cst_355 = arith.constant -1.000000e+30 : f32
    %615 = vector.broadcast %cst_355 : f32 to vector<24x24xf32>
    %616 = arith.select %56, %614, %615 : vector<24x24xi1>, vector<24x24xf32>
    %cst_356 = arith.constant dense<0xFF800000> : vector<24xf32>
    %617 = vector.multi_reduction <maximumf>, %616, %cst_356 [1] : vector<24x24xf32> to vector<24xf32>
    %618 = vector.shape_cast %617 : vector<24xf32> to vector<24x1xf32>
    %619 = vector.broadcast %618 : vector<24x1xf32> to vector<24x24xf32>
    %620 = arith.subf %616, %619 : vector<24x24xf32>
    %621 = math.exp %620 : vector<24x24xf32>
    %cst_357 = arith.constant dense<0.000000e+00> : vector<24xf32>
    %622 = vector.multi_reduction <add>, %621, %cst_357 [1] : vector<24x24xf32> to vector<24xf32>
    %623 = vector.shape_cast %622 : vector<24xf32> to vector<24x1xf32>
    %624 = tpu.reciprocal %623 {approx = true} : vector<24x1xf32> -> vector<24x1xf32>
    %625 = vector.broadcast %624 : vector<24x1xf32> to vector<24x24xf32>
    %626 = arith.mulf %621, %625 : vector<24x24xf32>
    %cst_358 = arith.constant dense<0.000000e+00> : vector<24x8xf32>
    %627 = tpu.matmul %626, %610, %cst_358 {dimension_numbers = #tpu.dot_dimension_numbers<[1], [0], [0], [1], [0, 0, 1, 1], [], []>} : vector<24x24xf32>, vector<24x8xf32>, vector<24x8xf32> -> vector<24x8xf32>
    %c6_359 = arith.constant 6 : index
    %c0_360 = arith.constant 0 : index
    %c0_361 = arith.constant 0 : index
    %628 = vector.load %arg22[%c6_359, %c0_360, %c0_361] : memref<8x8x32xf32, #tpu.memory_space<vmem>>, vector<1x8x32xf32>
    %629 = vector.shape_cast %628 : vector<1x8x32xf32> to vector<8x32xf32>
    %cst_362 = arith.constant dense<0.000000e+00> : vector<24x32xf32>
    %630 = tpu.matmul %627, %629, %cst_362 {dimension_numbers = #tpu.dot_dimension_numbers<[1], [0], [0], [1], [0, 0, 1, 1], [], []>} : vector<24x8xf32>, vector<8x32xf32>, vector<24x32xf32> -> vector<24x32xf32>
    %631 = arith.addf %562, %630 : vector<24x32xf32>
    %632 = vector.extract_strided_slice %593 {offsets = [24, 0], sizes = [24, 8], strides = [1, 1]} : vector<48x8xf32> to vector<24x8xf32>
    %633 = vector.extract_strided_slice %600 {offsets = [24, 0], sizes = [24, 8], strides = [1, 1]} : vector<48x8xf32> to vector<24x8xf32>
    %634 = vector.extract_strided_slice %607 {offsets = [24, 0], sizes = [24, 8], strides = [1, 1]} : vector<48x8xf32> to vector<24x8xf32>
    %635 = tpu.transpose %633, [1, 0] : vector<24x8xf32> -> vector<8x24xf32>
    %cst_363 = arith.constant dense<0.000000e+00> : vector<24x24xf32>
    %636 = tpu.matmul %632, %635, %cst_363 {dimension_numbers = #tpu.dot_dimension_numbers<[1], [0], [0], [1], [0, 0, 1, 1], [], []>} : vector<24x8xf32>, vector<8x24xf32>, vector<24x24xf32> -> vector<24x24xf32>
    %cst_364 = arith.constant 0.353553385 : f32
    %637 = vector.broadcast %cst_364 : f32 to vector<24x24xf32>
    %638 = arith.mulf %636, %637 : vector<24x24xf32>
    %cst_365 = arith.constant -1.000000e+30 : f32
    %639 = vector.broadcast %cst_365 : f32 to vector<24x24xf32>
    %640 = arith.select %56, %638, %639 : vector<24x24xi1>, vector<24x24xf32>
    %cst_366 = arith.constant dense<0xFF800000> : vector<24xf32>
    %641 = vector.multi_reduction <maximumf>, %640, %cst_366 [1] : vector<24x24xf32> to vector<24xf32>
    %642 = vector.shape_cast %641 : vector<24xf32> to vector<24x1xf32>
    %643 = vector.broadcast %642 : vector<24x1xf32> to vector<24x24xf32>
    %644 = arith.subf %640, %643 : vector<24x24xf32>
    %645 = math.exp %644 : vector<24x24xf32>
    %cst_367 = arith.constant dense<0.000000e+00> : vector<24xf32>
    %646 = vector.multi_reduction <add>, %645, %cst_367 [1] : vector<24x24xf32> to vector<24xf32>
    %647 = vector.shape_cast %646 : vector<24xf32> to vector<24x1xf32>
    %648 = tpu.reciprocal %647 {approx = true} : vector<24x1xf32> -> vector<24x1xf32>
    %649 = vector.broadcast %648 : vector<24x1xf32> to vector<24x24xf32>
    %650 = arith.mulf %645, %649 : vector<24x24xf32>
    %cst_368 = arith.constant dense<0.000000e+00> : vector<24x8xf32>
    %651 = tpu.matmul %650, %634, %cst_368 {dimension_numbers = #tpu.dot_dimension_numbers<[1], [0], [0], [1], [0, 0, 1, 1], [], []>} : vector<24x24xf32>, vector<24x8xf32>, vector<24x8xf32> -> vector<24x8xf32>
    %c6_369 = arith.constant 6 : index
    %c0_370 = arith.constant 0 : index
    %c0_371 = arith.constant 0 : index
    %652 = vector.load %arg22[%c6_369, %c0_370, %c0_371] : memref<8x8x32xf32, #tpu.memory_space<vmem>>, vector<1x8x32xf32>
    %653 = vector.shape_cast %652 : vector<1x8x32xf32> to vector<8x32xf32>
    %cst_372 = arith.constant dense<0.000000e+00> : vector<24x32xf32>
    %654 = tpu.matmul %651, %653, %cst_372 {dimension_numbers = #tpu.dot_dimension_numbers<[1], [0], [0], [1], [0, 0, 1, 1], [], []>} : vector<24x8xf32>, vector<8x32xf32>, vector<24x32xf32> -> vector<24x32xf32>
    %655 = arith.addf %586, %654 : vector<24x32xf32>
    %c7 = arith.constant 7 : index
    %c0_373 = arith.constant 0 : index
    %c0_374 = arith.constant 0 : index
    %656 = vector.load %arg16[%c7, %c0_373, %c0_374] : memref<8x32x8xf32, #tpu.memory_space<vmem>>, vector<1x32x8xf32>
    %657 = vector.shape_cast %656 : vector<1x32x8xf32> to vector<32x8xf32>
    %cst_375 = arith.constant dense<0.000000e+00> : vector<48x8xf32>
    %658 = tpu.matmul %446, %657, %cst_375 {dimension_numbers = #tpu.dot_dimension_numbers<[1], [0], [0], [1], [0, 0, 1, 1], [], []>} : vector<48x32xf32>, vector<32x8xf32>, vector<48x8xf32> -> vector<48x8xf32>
    %c7_376 = arith.constant 7 : index
    %c0_377 = arith.constant 0 : index
    %c0_378 = arith.constant 0 : index
    %659 = vector.load %arg17[%c7_376, %c0_377, %c0_378] : memref<8x1x8xf32, #tpu.memory_space<vmem>>, vector<1x1x8xf32>
    %660 = vector.shape_cast %659 : vector<1x1x8xf32> to vector<1x8xf32>
    %661 = vector.broadcast %660 : vector<1x8xf32> to vector<48x8xf32>
    %662 = arith.addf %658, %661 : vector<48x8xf32>
    %c7_379 = arith.constant 7 : index
    %c0_380 = arith.constant 0 : index
    %c0_381 = arith.constant 0 : index
    %663 = vector.load %arg18[%c7_379, %c0_380, %c0_381] : memref<8x32x8xf32, #tpu.memory_space<vmem>>, vector<1x32x8xf32>
    %664 = vector.shape_cast %663 : vector<1x32x8xf32> to vector<32x8xf32>
    %cst_382 = arith.constant dense<0.000000e+00> : vector<48x8xf32>
    %665 = tpu.matmul %446, %664, %cst_382 {dimension_numbers = #tpu.dot_dimension_numbers<[1], [0], [0], [1], [0, 0, 1, 1], [], []>} : vector<48x32xf32>, vector<32x8xf32>, vector<48x8xf32> -> vector<48x8xf32>
    %c7_383 = arith.constant 7 : index
    %c0_384 = arith.constant 0 : index
    %c0_385 = arith.constant 0 : index
    %666 = vector.load %arg19[%c7_383, %c0_384, %c0_385] : memref<8x1x8xf32, #tpu.memory_space<vmem>>, vector<1x1x8xf32>
    %667 = vector.shape_cast %666 : vector<1x1x8xf32> to vector<1x8xf32>
    %668 = vector.broadcast %667 : vector<1x8xf32> to vector<48x8xf32>
    %669 = arith.addf %665, %668 : vector<48x8xf32>
    %c7_386 = arith.constant 7 : index
    %c0_387 = arith.constant 0 : index
    %c0_388 = arith.constant 0 : index
    %670 = vector.load %arg20[%c7_386, %c0_387, %c0_388] : memref<8x32x8xf32, #tpu.memory_space<vmem>>, vector<1x32x8xf32>
    %671 = vector.shape_cast %670 : vector<1x32x8xf32> to vector<32x8xf32>
    %cst_389 = arith.constant dense<0.000000e+00> : vector<48x8xf32>
    %672 = tpu.matmul %446, %671, %cst_389 {dimension_numbers = #tpu.dot_dimension_numbers<[1], [0], [0], [1], [0, 0, 1, 1], [], []>} : vector<48x32xf32>, vector<32x8xf32>, vector<48x8xf32> -> vector<48x8xf32>
    %c7_390 = arith.constant 7 : index
    %c0_391 = arith.constant 0 : index
    %c0_392 = arith.constant 0 : index
    %673 = vector.load %arg21[%c7_390, %c0_391, %c0_392] : memref<8x1x8xf32, #tpu.memory_space<vmem>>, vector<1x1x8xf32>
    %674 = vector.shape_cast %673 : vector<1x1x8xf32> to vector<1x8xf32>
    %675 = vector.broadcast %674 : vector<1x8xf32> to vector<48x8xf32>
    %676 = arith.addf %672, %675 : vector<48x8xf32>
    %677 = vector.extract_strided_slice %662 {offsets = [0, 0], sizes = [24, 8], strides = [1, 1]} : vector<48x8xf32> to vector<24x8xf32>
    %678 = vector.extract_strided_slice %669 {offsets = [0, 0], sizes = [24, 8], strides = [1, 1]} : vector<48x8xf32> to vector<24x8xf32>
    %679 = vector.extract_strided_slice %676 {offsets = [0, 0], sizes = [24, 8], strides = [1, 1]} : vector<48x8xf32> to vector<24x8xf32>
    %680 = tpu.transpose %678, [1, 0] : vector<24x8xf32> -> vector<8x24xf32>
    %cst_393 = arith.constant dense<0.000000e+00> : vector<24x24xf32>
    %681 = tpu.matmul %677, %680, %cst_393 {dimension_numbers = #tpu.dot_dimension_numbers<[1], [0], [0], [1], [0, 0, 1, 1], [], []>} : vector<24x8xf32>, vector<8x24xf32>, vector<24x24xf32> -> vector<24x24xf32>
    %cst_394 = arith.constant 0.353553385 : f32
    %682 = vector.broadcast %cst_394 : f32 to vector<24x24xf32>
    %683 = arith.mulf %681, %682 : vector<24x24xf32>
    %cst_395 = arith.constant -1.000000e+30 : f32
    %684 = vector.broadcast %cst_395 : f32 to vector<24x24xf32>
    %685 = arith.select %56, %683, %684 : vector<24x24xi1>, vector<24x24xf32>
    %cst_396 = arith.constant dense<0xFF800000> : vector<24xf32>
    %686 = vector.multi_reduction <maximumf>, %685, %cst_396 [1] : vector<24x24xf32> to vector<24xf32>
    %687 = vector.shape_cast %686 : vector<24xf32> to vector<24x1xf32>
    %688 = vector.broadcast %687 : vector<24x1xf32> to vector<24x24xf32>
    %689 = arith.subf %685, %688 : vector<24x24xf32>
    %690 = math.exp %689 : vector<24x24xf32>
    %cst_397 = arith.constant dense<0.000000e+00> : vector<24xf32>
    %691 = vector.multi_reduction <add>, %690, %cst_397 [1] : vector<24x24xf32> to vector<24xf32>
    %692 = vector.shape_cast %691 : vector<24xf32> to vector<24x1xf32>
    %693 = tpu.reciprocal %692 {approx = true} : vector<24x1xf32> -> vector<24x1xf32>
    %694 = vector.broadcast %693 : vector<24x1xf32> to vector<24x24xf32>
    %695 = arith.mulf %690, %694 : vector<24x24xf32>
    %cst_398 = arith.constant dense<0.000000e+00> : vector<24x8xf32>
    %696 = tpu.matmul %695, %679, %cst_398 {dimension_numbers = #tpu.dot_dimension_numbers<[1], [0], [0], [1], [0, 0, 1, 1], [], []>} : vector<24x24xf32>, vector<24x8xf32>, vector<24x8xf32> -> vector<24x8xf32>
    %c7_399 = arith.constant 7 : index
    %c0_400 = arith.constant 0 : index
    %c0_401 = arith.constant 0 : index
    %697 = vector.load %arg22[%c7_399, %c0_400, %c0_401] : memref<8x8x32xf32, #tpu.memory_space<vmem>>, vector<1x8x32xf32>
    %698 = vector.shape_cast %697 : vector<1x8x32xf32> to vector<8x32xf32>
    %cst_402 = arith.constant dense<0.000000e+00> : vector<24x32xf32>
    %699 = tpu.matmul %696, %698, %cst_402 {dimension_numbers = #tpu.dot_dimension_numbers<[1], [0], [0], [1], [0, 0, 1, 1], [], []>} : vector<24x8xf32>, vector<8x32xf32>, vector<24x32xf32> -> vector<24x32xf32>
    %700 = arith.addf %631, %699 : vector<24x32xf32>
    %701 = vector.extract_strided_slice %662 {offsets = [24, 0], sizes = [24, 8], strides = [1, 1]} : vector<48x8xf32> to vector<24x8xf32>
    %702 = vector.extract_strided_slice %669 {offsets = [24, 0], sizes = [24, 8], strides = [1, 1]} : vector<48x8xf32> to vector<24x8xf32>
    %703 = vector.extract_strided_slice %676 {offsets = [24, 0], sizes = [24, 8], strides = [1, 1]} : vector<48x8xf32> to vector<24x8xf32>
    %704 = tpu.transpose %702, [1, 0] : vector<24x8xf32> -> vector<8x24xf32>
    %cst_403 = arith.constant dense<0.000000e+00> : vector<24x24xf32>
    %705 = tpu.matmul %701, %704, %cst_403 {dimension_numbers = #tpu.dot_dimension_numbers<[1], [0], [0], [1], [0, 0, 1, 1], [], []>} : vector<24x8xf32>, vector<8x24xf32>, vector<24x24xf32> -> vector<24x24xf32>
    %cst_404 = arith.constant 0.353553385 : f32
    %706 = vector.broadcast %cst_404 : f32 to vector<24x24xf32>
    %707 = arith.mulf %705, %706 : vector<24x24xf32>
    %cst_405 = arith.constant -1.000000e+30 : f32
    %708 = vector.broadcast %cst_405 : f32 to vector<24x24xf32>
    %709 = arith.select %56, %707, %708 : vector<24x24xi1>, vector<24x24xf32>
    %cst_406 = arith.constant dense<0xFF800000> : vector<24xf32>
    %710 = vector.multi_reduction <maximumf>, %709, %cst_406 [1] : vector<24x24xf32> to vector<24xf32>
    %711 = vector.shape_cast %710 : vector<24xf32> to vector<24x1xf32>
    %712 = vector.broadcast %711 : vector<24x1xf32> to vector<24x24xf32>
    %713 = arith.subf %709, %712 : vector<24x24xf32>
    %714 = math.exp %713 : vector<24x24xf32>
    %cst_407 = arith.constant dense<0.000000e+00> : vector<24xf32>
    %715 = vector.multi_reduction <add>, %714, %cst_407 [1] : vector<24x24xf32> to vector<24xf32>
    %716 = vector.shape_cast %715 : vector<24xf32> to vector<24x1xf32>
    %717 = tpu.reciprocal %716 {approx = true} : vector<24x1xf32> -> vector<24x1xf32>
    %718 = vector.broadcast %717 : vector<24x1xf32> to vector<24x24xf32>
    %719 = arith.mulf %714, %718 : vector<24x24xf32>
    %cst_408 = arith.constant dense<0.000000e+00> : vector<24x8xf32>
    %720 = tpu.matmul %719, %703, %cst_408 {dimension_numbers = #tpu.dot_dimension_numbers<[1], [0], [0], [1], [0, 0, 1, 1], [], []>} : vector<24x24xf32>, vector<24x8xf32>, vector<24x8xf32> -> vector<24x8xf32>
    %c7_409 = arith.constant 7 : index
    %c0_410 = arith.constant 0 : index
    %c0_411 = arith.constant 0 : index
    %721 = vector.load %arg22[%c7_409, %c0_410, %c0_411] : memref<8x8x32xf32, #tpu.memory_space<vmem>>, vector<1x8x32xf32>
    %722 = vector.shape_cast %721 : vector<1x8x32xf32> to vector<8x32xf32>
    %cst_412 = arith.constant dense<0.000000e+00> : vector<24x32xf32>
    %723 = tpu.matmul %720, %722, %cst_412 {dimension_numbers = #tpu.dot_dimension_numbers<[1], [0], [0], [1], [0, 0, 1, 1], [], []>} : vector<24x8xf32>, vector<8x32xf32>, vector<24x32xf32> -> vector<24x32xf32>
    %724 = arith.addf %655, %723 : vector<24x32xf32>
    %725 = tpu.concatenate %700, %724 in 0 : vector<24x32xf32>, vector<24x32xf32> -> vector<48x32xf32>
    %c1_413 = arith.constant 1 : index
    %c0_414 = arith.constant 0 : index
    %c0_415 = arith.constant 0 : index
    %726 = vector.load %arg23[%c1_413, %c0_414, %c0_415] : memref<2x1x32xf32, #tpu.memory_space<vmem>>, vector<1x1x32xf32>
    %727 = vector.shape_cast %726 : vector<1x1x32xf32> to vector<1x32xf32>
    %728 = vector.broadcast %727 : vector<1x32xf32> to vector<48x32xf32>
    %729 = arith.addf %725, %728 : vector<48x32xf32>
    %730 = arith.addf %420, %729 : vector<48x32xf32>
    %c1_416 = arith.constant 1 : index
    %c0_417 = arith.constant 0 : index
    %c0_418 = arith.constant 0 : index
    %731 = vector.load %arg24[%c1_416, %c0_417, %c0_418] : memref<2x1x32xf32, #tpu.memory_space<vmem>>, vector<1x1x32xf32>
    %732 = vector.shape_cast %731 : vector<1x1x32xf32> to vector<1x32xf32>
    %c1_419 = arith.constant 1 : index
    %c0_420 = arith.constant 0 : index
    %c0_421 = arith.constant 0 : index
    %733 = vector.load %arg25[%c1_419, %c0_420, %c0_421] : memref<2x1x32xf32, #tpu.memory_space<vmem>>, vector<1x1x32xf32>
    %734 = vector.shape_cast %733 : vector<1x1x32xf32> to vector<1x32xf32>
    %cst_422 = arith.constant dense<0.000000e+00> : vector<48xf32>
    %735 = vector.multi_reduction <add>, %730, %cst_422 [1] : vector<48x32xf32> to vector<48xf32>
    %736 = vector.shape_cast %735 : vector<48xf32> to vector<48x1xf32>
    %cst_423 = arith.constant 3.200000e+01 : f32
    %737 = vector.broadcast %cst_423 : f32 to vector<48x1xf32>
    %738 = arith.divf %736, %737 : vector<48x1xf32>
    %739 = vector.broadcast %738 : vector<48x1xf32> to vector<48x32xf32>
    %740 = arith.subf %730, %739 : vector<48x32xf32>
    %741 = arith.mulf %740, %740 : vector<48x32xf32>
    %cst_424 = arith.constant dense<0.000000e+00> : vector<48xf32>
    %742 = vector.multi_reduction <add>, %741, %cst_424 [1] : vector<48x32xf32> to vector<48xf32>
    %743 = vector.shape_cast %742 : vector<48xf32> to vector<48x1xf32>
    %cst_425 = arith.constant 3.200000e+01 : f32
    %744 = vector.broadcast %cst_425 : f32 to vector<48x1xf32>
    %745 = arith.divf %743, %744 : vector<48x1xf32>
    %746 = vector.broadcast %738 : vector<48x1xf32> to vector<48x32xf32>
    %747 = arith.subf %730, %746 : vector<48x32xf32>
    %cst_426 = arith.constant 9.99999974E-6 : f32
    %748 = vector.broadcast %cst_426 : f32 to vector<48x1xf32>
    %749 = arith.addf %745, %748 : vector<48x1xf32>
    %750 = math.rsqrt %749 : vector<48x1xf32>
    %751 = vector.broadcast %750 : vector<48x1xf32> to vector<48x32xf32>
    %752 = arith.mulf %747, %751 : vector<48x32xf32>
    %753 = vector.broadcast %732 : vector<1x32xf32> to vector<48x32xf32>
    %754 = arith.mulf %752, %753 : vector<48x32xf32>
    %755 = vector.broadcast %734 : vector<1x32xf32> to vector<48x32xf32>
    %756 = arith.addf %754, %755 : vector<48x32xf32>
    %c1_427 = arith.constant 1 : index
    %c0_428 = arith.constant 0 : index
    %c0_429 = arith.constant 0 : index
    %757 = vector.load %arg26[%c1_427, %c0_428, %c0_429] : memref<2x32x128xf32, #tpu.memory_space<vmem>>, vector<1x32x128xf32>
    %758 = vector.shape_cast %757 : vector<1x32x128xf32> to vector<32x128xf32>
    %cst_430 = arith.constant dense<0.000000e+00> : vector<48x128xf32>
    %759 = tpu.matmul %756, %758, %cst_430 {dimension_numbers = #tpu.dot_dimension_numbers<[1], [0], [0], [1], [0, 0, 1, 1], [], []>} : vector<48x32xf32>, vector<32x128xf32>, vector<48x128xf32> -> vector<48x128xf32>
    %c1_431 = arith.constant 1 : index
    %c0_432 = arith.constant 0 : index
    %c0_433 = arith.constant 0 : index
    %760 = vector.load %arg27[%c1_431, %c0_432, %c0_433] : memref<2x1x128xf32, #tpu.memory_space<vmem>>, vector<1x1x128xf32>
    %761 = vector.shape_cast %760 : vector<1x1x128xf32> to vector<1x128xf32>
    %762 = vector.broadcast %761 : vector<1x128xf32> to vector<48x128xf32>
    %763 = arith.addf %759, %762 : vector<48x128xf32>
    %cst_434 = arith.constant 5.000000e-01 : f32
    %764 = vector.broadcast %cst_434 : f32 to vector<48x128xf32>
    %765 = arith.mulf %764, %763 : vector<48x128xf32>
    %cst_435 = arith.constant 4.471500e-02 : f32
    %766 = vector.broadcast %cst_435 : f32 to vector<48x128xf32>
    %767 = arith.mulf %766, %763 : vector<48x128xf32>
    %768 = arith.mulf %767, %763 : vector<48x128xf32>
    %769 = arith.mulf %768, %763 : vector<48x128xf32>
    %770 = arith.addf %763, %769 : vector<48x128xf32>
    %cst_436 = arith.constant 0.797884583 : f32
    %771 = vector.broadcast %cst_436 : f32 to vector<48x128xf32>
    %772 = arith.mulf %771, %770 : vector<48x128xf32>
    %773 = math.tanh %772 : vector<48x128xf32>
    %cst_437 = arith.constant 1.000000e+00 : f32
    %774 = vector.broadcast %cst_437 : f32 to vector<48x128xf32>
    %775 = arith.addf %774, %773 : vector<48x128xf32>
    %776 = arith.mulf %765, %775 : vector<48x128xf32>
    %c1_438 = arith.constant 1 : index
    %c0_439 = arith.constant 0 : index
    %c0_440 = arith.constant 0 : index
    %777 = vector.load %arg28[%c1_438, %c0_439, %c0_440] : memref<2x128x32xf32, #tpu.memory_space<vmem>>, vector<1x128x32xf32>
    %778 = vector.shape_cast %777 : vector<1x128x32xf32> to vector<128x32xf32>
    %cst_441 = arith.constant dense<0.000000e+00> : vector<48x32xf32>
    %779 = tpu.matmul %776, %778, %cst_441 {dimension_numbers = #tpu.dot_dimension_numbers<[1], [0], [0], [1], [0, 0, 1, 1], [], []>} : vector<48x128xf32>, vector<128x32xf32>, vector<48x32xf32> -> vector<48x32xf32>
    %c1_442 = arith.constant 1 : index
    %c0_443 = arith.constant 0 : index
    %c0_444 = arith.constant 0 : index
    %780 = vector.load %arg29[%c1_442, %c0_443, %c0_444] : memref<2x1x32xf32, #tpu.memory_space<vmem>>, vector<1x1x32xf32>
    %781 = vector.shape_cast %780 : vector<1x1x32xf32> to vector<1x32xf32>
    %782 = vector.broadcast %781 : vector<1x32xf32> to vector<48x32xf32>
    %783 = arith.addf %779, %782 : vector<48x32xf32>
    %784 = arith.addf %730, %783 : vector<48x32xf32>
    %c0_445 = arith.constant 0 : index
    %c0_446 = arith.constant 0 : index
    %785 = vector.load %arg30[%c0_445, %c0_446] : memref<1x32xf32, #tpu.memory_space<vmem>>, vector<1x32xf32>
    %c0_447 = arith.constant 0 : index
    %c0_448 = arith.constant 0 : index
    %786 = vector.load %arg31[%c0_447, %c0_448] : memref<1x32xf32, #tpu.memory_space<vmem>>, vector<1x32xf32>
    %cst_449 = arith.constant dense<0.000000e+00> : vector<48xf32>
    %787 = vector.multi_reduction <add>, %784, %cst_449 [1] : vector<48x32xf32> to vector<48xf32>
    %788 = vector.shape_cast %787 : vector<48xf32> to vector<48x1xf32>
    %cst_450 = arith.constant 3.200000e+01 : f32
    %789 = vector.broadcast %cst_450 : f32 to vector<48x1xf32>
    %790 = arith.divf %788, %789 : vector<48x1xf32>
    %791 = vector.broadcast %790 : vector<48x1xf32> to vector<48x32xf32>
    %792 = arith.subf %784, %791 : vector<48x32xf32>
    %793 = arith.mulf %792, %792 : vector<48x32xf32>
    %cst_451 = arith.constant dense<0.000000e+00> : vector<48xf32>
    %794 = vector.multi_reduction <add>, %793, %cst_451 [1] : vector<48x32xf32> to vector<48xf32>
    %795 = vector.shape_cast %794 : vector<48xf32> to vector<48x1xf32>
    %cst_452 = arith.constant 3.200000e+01 : f32
    %796 = vector.broadcast %cst_452 : f32 to vector<48x1xf32>
    %797 = arith.divf %795, %796 : vector<48x1xf32>
    %798 = vector.broadcast %790 : vector<48x1xf32> to vector<48x32xf32>
    %799 = arith.subf %784, %798 : vector<48x32xf32>
    %cst_453 = arith.constant 9.99999974E-6 : f32
    %800 = vector.broadcast %cst_453 : f32 to vector<48x1xf32>
    %801 = arith.addf %797, %800 : vector<48x1xf32>
    %802 = math.rsqrt %801 : vector<48x1xf32>
    %803 = vector.broadcast %802 : vector<48x1xf32> to vector<48x32xf32>
    %804 = arith.mulf %799, %803 : vector<48x32xf32>
    %805 = vector.broadcast %785 : vector<1x32xf32> to vector<48x32xf32>
    %806 = arith.mulf %804, %805 : vector<48x32xf32>
    %807 = vector.broadcast %786 : vector<1x32xf32> to vector<48x32xf32>
    %808 = arith.addf %806, %807 : vector<48x32xf32>
    %c0_454 = arith.constant 0 : index
    %c0_455 = arith.constant 0 : index
    %809 = vector.load %arg32[%c0_454, %c0_455] : memref<32x128xf32, #tpu.memory_space<vmem>>, vector<32x128xf32>
    %cst_456 = arith.constant dense<0.000000e+00> : vector<48x128xf32>
    %810 = tpu.matmul %808, %809, %cst_456 {dimension_numbers = #tpu.dot_dimension_numbers<[1], [0], [0], [1], [0, 0, 1, 1], [], []>} : vector<48x32xf32>, vector<32x128xf32>, vector<48x128xf32> -> vector<48x128xf32>
    %c0_457 = arith.constant 0 : index
    %c0_458 = arith.constant 0 : index
    %811 = vector.load %arg33[%c0_457, %c0_458] : memref<1x128xf32, #tpu.memory_space<vmem>>, vector<1x128xf32>
    %812 = vector.broadcast %811 : vector<1x128xf32> to vector<48x128xf32>
    %813 = arith.addf %810, %812 : vector<48x128xf32>
    %814 = tpu.iota {dimensions = array<i32: 1>} : vector<48x128xi32>
    %c7_i32 = arith.constant 7 : i32
    %815 = vector.broadcast %c7_i32 : i32 to vector<48x128xi32>
    %816 = arith.cmpi sge, %814, %815 : vector<48x128xi32>
    %c10_i32 = arith.constant 10 : i32
    %817 = vector.broadcast %c10_i32 : i32 to vector<48x128xi32>
    %818 = arith.cmpi slt, %814, %817 : vector<48x128xi32>
    %819 = arith.andi %816, %818 : vector<48x128xi1>
    %820 = math.tanh %813 : vector<48x128xf32>
    %821 = arith.select %819, %820, %813 : vector<48x128xi1>, vector<48x128xf32>
    %c0_459 = arith.constant 0 : index
    %c0_460 = arith.constant 0 : index
    %822 = vector.load %arg34[%c0_459, %c0_460] : memref<48x128xf32, #tpu.memory_space<vmem>>, vector<48x128xf32>
    tpu.vector_store %arg34[%c0_459, %c0_460], %821 {strides = array<i32>} : memref<48x128xf32, #tpu.memory_space<vmem>>, vector<48x128xf32>,
    return
  }
}

</mosaic_0001>

<llo_original>
// kernel: decision_transformer_forward.1
$region0: #{decision_transformer_forward.1}
  #allocation0 [shape = 'u32[]', space=smem, size = 0x4, offset = 0x4, fixed_abs, tag = 'smem constant byte address 0x4 - core index']
  #allocation1 [shape = 'u32[72,128]{1,0:T(1,128)}', space=vmem, size = 0x9000, scoped, tag = 'internal scratch']
  %s0 = inlined_call_operand.smem [shape: u32[35], index: -1, kind: input, shape index: {}]
  %s1 = sld [smem:[%s0]]
  %s2 = scalar_lea.smem %s0, 1
  %s3 = sld [smem:[%s2]]
  %s4 = scalar_lea.smem %s0, 2
  %s5 = sld [smem:[%s4]]
  %s6 = scalar_lea.smem %s0, 3
  %s7 = sld [smem:[%s6]]
  %s8 = scalar_lea.smem %s0, 4
  %s9 = sld [smem:[%s8]]
  %s10 = scalar_lea.smem %s0, 5
  %s11 = sld [smem:[%s10]]
  %s12 = scalar_lea.smem %s0, 6
  %s13 = sld [smem:[%s12]]
  %s14 = scalar_lea.smem %s0, 7
  %s15 = sld [smem:[%s14]]
  %s16 = scalar_lea.smem %s0, 8
  %s17 = sld [smem:[%s16]]
  %s18 = scalar_lea.smem %s0, 9
  %s19 = sld [smem:[%s18]]
  %s20 = scalar_lea.smem %s0, 10
  %s21 = sld [smem:[%s20]]
  %s22 = scalar_lea.smem %s0, 11
  %s23 = sld [smem:[%s22]]
  %s24 = scalar_lea.smem %s0, 12
  %s25 = sld [smem:[%s24]]
  %s26 = scalar_lea.smem %s0, 13
  %s27 = sld [smem:[%s26]]
  %s28 = scalar_lea.smem %s0, 14
  %s29 = sld [smem:[%s28]]
  %s30 = scalar_lea.smem %s0, 15
  %s31 = sld [smem:[%s30]]
  %s32 = scalar_lea.smem %s0, 16
  %s33 = sld [smem:[%s32]]
  %s34 = scalar_lea.smem %s0, 17
  %s35 = sld [smem:[%s34]]
  %s36 = scalar_lea.smem %s0, 18
  %s37 = sld [smem:[%s36]]
  %s38 = scalar_lea.smem %s0, 19
  %s39 = sld [smem:[%s38]]
  %s40 = scalar_lea.smem %s0, 20
  %s41 = sld [smem:[%s40]]
  %s42 = scalar_lea.smem %s0, 21
  %s43 = sld [smem:[%s42]]
  %s44 = scalar_lea.smem %s0, 22
  %s45 = sld [smem:[%s44]]
  %s46 = scalar_lea.smem %s0, 23
  %s47 = sld [smem:[%s46]]
  %s48 = scalar_lea.smem %s0, 24
  %s49 = sld [smem:[%s48]]
  %s50 = scalar_lea.smem %s0, 25
  %s51 = sld [smem:[%s50]]
  %s52 = scalar_lea.smem %s0, 26
  %s53 = sld [smem:[%s52]]
  %s54 = scalar_lea.smem %s0, 27
  %s55 = sld [smem:[%s54]]
  %s56 = scalar_lea.smem %s0, 28
  %s57 = sld [smem:[%s56]]
  %s58 = scalar_lea.smem %s0, 29
  %s59 = sld [smem:[%s58]]
  %s60 = scalar_lea.smem %s0, 30
  %s61 = sld [smem:[%s60]]
  %s62 = scalar_lea.smem %s0, 31
  %s63 = sld [smem:[%s62]]
  %s64 = scalar_lea.smem %s0, 32
  %s65 = sld [smem:[%s64]]
  %s66 = scalar_lea.smem %s0, 33
  %s67 = sld [smem:[%s66]]
  %s68 = scalar_lea.smem %s0, 34
  %s69 = sld [smem:[%s68]]
  %s70 = sld [smem:[#allocation0]]
  $region146: #{decision_transformer_forward.1} parent=0
    _
  %s72 = ssub.s32 1, %s70
  %s73 = scalar_select 0, %s72, %s70
  // Predicated region
  $region2: #{decision_transformer_forward.1} parent=0 // pred_check
    _
  $region3: #{decision_transformer_forward.1} parent=0 // pred_check_branch
    %75 = sbr.rel (0) target = $region5
  $region4: #{decision_transformer_forward.1} parent=0 // pred_region
    _
  $region5: #{decision_transformer_forward.1} parent=0 // pred_fallthru
    _
  // Predicated region
  $region6: #{decision_transformer_forward.1} parent=0 // pred_check
    _
  $region7: #{decision_transformer_forward.1} parent=0 // pred_check_branch
    %77 = sbr.rel (0) target = $region9
  $region8: #{decision_transformer_forward.1} parent=0 // pred_region
    _
  $region9: #{decision_transformer_forward.1} parent=0 // pred_fallthru
    _
  // Predicated region
  $region10: #{decision_transformer_forward.1} parent=0 // pred_check
    _
  $region11: #{decision_transformer_forward.1} parent=0 // pred_check_branch
    %79 = sbr.rel (0) target = $region13
  $region12: #{decision_transformer_forward.1} parent=0 // pred_region
    _
  $region13: #{decision_transformer_forward.1} parent=0 // pred_fallthru
    _
  // Predicated region
  $region14: #{decision_transformer_forward.1} parent=0 // pred_check
    _
  $region15: #{decision_transformer_forward.1} parent=0 // pred_check_branch
    %81 = sbr.rel (0) target = $region17
  $region16: #{decision_transformer_forward.1} parent=0 // pred_region
    _
  $region17: #{decision_transformer_forward.1} parent=0 // pred_fallthru
    _
  // Predicated region
  $region18: #{decision_transformer_forward.1} parent=0 // pred_check
    _
  $region19: #{decision_transformer_forward.1} parent=0 // pred_check_branch
    %83 = sbr.rel (0) target = $region21
  $region20: #{decision_transformer_forward.1} parent=0 // pred_region
    _
  $region21: #{decision_transformer_forward.1} parent=0 // pred_fallthru
    _
  // Predicated region
  $region22: #{decision_transformer_forward.1} parent=0 // pred_check
    _
  $region23: #{decision_transformer_forward.1} parent=0 // pred_check_branch
    %85 = sbr.rel (0) target = $region25
  $region24: #{decision_transformer_forward.1} parent=0 // pred_region
    _
  $region25: #{decision_transformer_forward.1} parent=0 // pred_fallthru
    _
  // Predicated region
  $region26: #{decision_transformer_forward.1} parent=0 // pred_check
    _
  $region27: #{decision_transformer_forward.1} parent=0 // pred_check_branch
    %87 = sbr.rel (0) target = $region29
  $region28: #{decision_transformer_forward.1} parent=0 // pred_region
    _
  $region29: #{decision_transformer_forward.1} parent=0 // pred_fallthru
    _
  // Predicated region
  $region30: #{decision_transformer_forward.1} parent=0 // pred_check
    _
  $region31: #{decision_transformer_forward.1} parent=0 // pred_check_branch
    %89 = sbr.rel (0) target = $region33
  $region32: #{decision_transformer_forward.1} parent=0 // pred_region
    _
  $region33: #{decision_transformer_forward.1} parent=0 // pred_fallthru
    _
  // Predicated region
  $region34: #{decision_transformer_forward.1} parent=0 // pred_check
    _
  $region35: #{decision_transformer_forward.1} parent=0 // pred_check_branch
    %91 = sbr.rel (0) target = $region37
  $region36: #{decision_transformer_forward.1} parent=0 // pred_region
    _
  $region37: #{decision_transformer_forward.1} parent=0 // pred_fallthru
    _
  // Predicated region
  $region38: #{decision_transformer_forward.1} parent=0 // pred_check
    _
  $region39: #{decision_transformer_forward.1} parent=0 // pred_check_branch
    %93 = sbr.rel (0) target = $region41
  $region40: #{decision_transformer_forward.1} parent=0 // pred_region
    _
  $region41: #{decision_transformer_forward.1} parent=0 // pred_fallthru
    _
  // Predicated region
  $region42: #{decision_transformer_forward.1} parent=0 // pred_check
    _
  $region43: #{decision_transformer_forward.1} parent=0 // pred_check_branch
    %95 = sbr.rel (0) target = $region45
  $region44: #{decision_transformer_forward.1} parent=0 // pred_region
    _
  $region45: #{decision_transformer_forward.1} parent=0 // pred_fallthru
    _
  // Predicated region
  $region46: #{decision_transformer_forward.1} parent=0 // pred_check
    _
  $region47: #{decision_transformer_forward.1} parent=0 // pred_check_branch
    %97 = sbr.rel (0) target = $region49
  $region48: #{decision_transformer_forward.1} parent=0 // pred_region
    _
  $region49: #{decision_transformer_forward.1} parent=0 // pred_fallthru
    _
  // Predicated region
  $region50: #{decision_transformer_forward.1} parent=0 // pred_check
    _
  $region51: #{decision_transformer_forward.1} parent=0 // pred_check_branch
    %99 = sbr.rel (0) target = $region53
  $region52: #{decision_transformer_forward.1} parent=0 // pred_region
    _
  $region53: #{decision_transformer_forward.1} parent=0 // pred_fallthru
    _
  // Predicated region
  $region54: #{decision_transformer_forward.1} parent=0 // pred_check
    _
  $region55: #{decision_transformer_forward.1} parent=0 // pred_check_branch
    %101 = sbr.rel (0) target = $region57
  $region56: #{decision_transformer_forward.1} parent=0 // pred_region
    _
  $region57: #{decision_transformer_forward.1} parent=0 // pred_fallthru
    _
  // Predicated region
  $region58: #{decision_transformer_forward.1} parent=0 // pred_check
    _
  $region59: #{decision_transformer_forward.1} parent=0 // pred_check_branch
    %103 = sbr.rel (0) target = $region61
  $region60: #{decision_transformer_forward.1} parent=0 // pred_region
    _
  $region61: #{decision_transformer_forward.1} parent=0 // pred_fallthru
    _
  // Predicated region
  $region62: #{decision_transformer_forward.1} parent=0 // pred_check
    _
  $region63: #{decision_transformer_forward.1} parent=0 // pred_check_branch
    %105 = sbr.rel (0) target = $region65
  $region64: #{decision_transformer_forward.1} parent=0 // pred_region
    _
  $region65: #{decision_transformer_forward.1} parent=0 // pred_fallthru
    _
  // Predicated region
  $region66: #{decision_transformer_forward.1} parent=0 // pred_check
    _
  $region67: #{decision_transformer_forward.1} parent=0 // pred_check_branch
    %107 = sbr.rel (0) target = $region69
  $region68: #{decision_transformer_forward.1} parent=0 // pred_region
    _
  $region69: #{decision_transformer_forward.1} parent=0 // pred_fallthru
    _
  // Predicated region
  $region70: #{decision_transformer_forward.1} parent=0 // pred_check
    _
  $region71: #{decision_transformer_forward.1} parent=0 // pred_check_branch
    %109 = sbr.rel (0) target = $region73
  $region72: #{decision_transformer_forward.1} parent=0 // pred_region
    _
  $region73: #{decision_transformer_forward.1} parent=0 // pred_fallthru
    _
  // Predicated region
  $region74: #{decision_transformer_forward.1} parent=0 // pred_check
    _
  $region75: #{decision_transformer_forward.1} parent=0 // pred_check_branch
    %111 = sbr.rel (0) target = $region77
  $region76: #{decision_transformer_forward.1} parent=0 // pred_region
    _
  $region77: #{decision_transformer_forward.1} parent=0 // pred_fallthru
    _
  // Predicated region
  $region78: #{decision_transformer_forward.1} parent=0 // pred_check
    _
  $region79: #{decision_transformer_forward.1} parent=0 // pred_check_branch
    %113 = sbr.rel (0) target = $region81
  $region80: #{decision_transformer_forward.1} parent=0 // pred_region
    _
  $region81: #{decision_transformer_forward.1} parent=0 // pred_fallthru
    _
  // Predicated region
  $region82: #{decision_transformer_forward.1} parent=0 // pred_check
    _
  $region83: #{decision_transformer_forward.1} parent=0 // pred_check_branch
    %115 = sbr.rel (0) target = $region85
  $region84: #{decision_transformer_forward.1} parent=0 // pred_region
    _
  $region85: #{decision_transformer_forward.1} parent=0 // pred_fallthru
    _
  // Predicated region
  $region86: #{decision_transformer_forward.1} parent=0 // pred_check
    _
  $region87: #{decision_transformer_forward.1} parent=0 // pred_check_branch
    %117 = sbr.rel (0) target = $region89
  $region88: #{decision_transformer_forward.1} parent=0 // pred_region
    _
  $region89: #{decision_transformer_forward.1} parent=0 // pred_fallthru
    _
  // Predicated region
  $region90: #{decision_transformer_forward.1} parent=0 // pred_check
    _
  $region91: #{decision_transformer_forward.1} parent=0 // pred_check_branch
    %119 = sbr.rel (0) target = $region93
  $region92: #{decision_transformer_forward.1} parent=0 // pred_region
    _
  $region93: #{decision_transformer_forward.1} parent=0 // pred_fallthru
    _
  // Predicated region
  $region94: #{decision_transformer_forward.1} parent=0 // pred_check
    _
  $region95: #{decision_transformer_forward.1} parent=0 // pred_check_branch
    %121 = sbr.rel (0) target = $region97
  $region96: #{decision_transformer_forward.1} parent=0 // pred_region
    _
  $region97: #{decision_transformer_forward.1} parent=0 // pred_fallthru
    _
  // Predicated region
  $region98: #{decision_transformer_forward.1} parent=0 // pred_check
    _
  $region99: #{decision_transformer_forward.1} parent=0 // pred_check_branch
    %123 = sbr.rel (0) target = $region101
  $region100: #{decision_transformer_forward.1} parent=0 // pred_region
    _
  $region101: #{decision_transformer_forward.1} parent=0 // pred_fallthru
    _
  // Predicated region
  $region102: #{decision_transformer_forward.1} parent=0 // pred_check
    _
  $region103: #{decision_transformer_forward.1} parent=0 // pred_check_branch
    %125 = sbr.rel (0) target = $region105
  $region104: #{decision_transformer_forward.1} parent=0 // pred_region
    _
  $region105: #{decision_transformer_forward.1} parent=0 // pred_fallthru
    _
  // Predicated region
  $region106: #{decision_transformer_forward.1} parent=0 // pred_check
    _
  $region107: #{decision_transformer_forward.1} parent=0 // pred_check_branch
    %127 = sbr.rel (0) target = $region109
  $region108: #{decision_transformer_forward.1} parent=0 // pred_region
    _
  $region109: #{decision_transformer_forward.1} parent=0 // pred_fallthru
    _
  // Predicated region
  $region110: #{decision_transformer_forward.1} parent=0 // pred_check
    _
  $region111: #{decision_transformer_forward.1} parent=0 // pred_check_branch
    %129 = sbr.rel (0) target = $region113
  $region112: #{decision_transformer_forward.1} parent=0 // pred_region
    _
  $region113: #{decision_transformer_forward.1} parent=0 // pred_fallthru
    _
  // Predicated region
  $region114: #{decision_transformer_forward.1} parent=0 // pred_check
    _
  $region115: #{decision_transformer_forward.1} parent=0 // pred_check_branch
    %131 = sbr.rel (0) target = $region117
  $region116: #{decision_transformer_forward.1} parent=0 // pred_region
    _
  $region117: #{decision_transformer_forward.1} parent=0 // pred_fallthru
    _
  // Predicated region
  $region118: #{decision_transformer_forward.1} parent=0 // pred_check
    _
  $region119: #{decision_transformer_forward.1} parent=0 // pred_check_branch
    %133 = sbr.rel (0) target = $region121
  $region120: #{decision_transformer_forward.1} parent=0 // pred_region
    _
  $region121: #{decision_transformer_forward.1} parent=0 // pred_fallthru
    _
  // Predicated region
  $region122: #{decision_transformer_forward.1} parent=0 // pred_check
    _
  $region123: #{decision_transformer_forward.1} parent=0 // pred_check_branch
    %135 = sbr.rel (0) target = $region125
  $region124: #{decision_transformer_forward.1} parent=0 // pred_region
    _
  $region125: #{decision_transformer_forward.1} parent=0 // pred_fallthru
    _
  // Predicated region
  $region126: #{decision_transformer_forward.1} parent=0 // pred_check
    _
  $region127: #{decision_transformer_forward.1} parent=0 // pred_check_branch
    %137 = sbr.rel (0) target = $region129
  $region128: #{decision_transformer_forward.1} parent=0 // pred_region
    _
  $region129: #{decision_transformer_forward.1} parent=0 // pred_fallthru
    _
  // Predicated region
  $region130: #{decision_transformer_forward.1} parent=0 // pred_check
    _
  $region131: #{decision_transformer_forward.1} parent=0 // pred_check_branch
    %139 = sbr.rel (0) target = $region133
  $region132: #{decision_transformer_forward.1} parent=0 // pred_region
    _
  $region133: #{decision_transformer_forward.1} parent=0 // pred_fallthru
    _
  // Predicated region
  $region134: #{decision_transformer_forward.1} parent=0 // pred_check
    _
  $region135: #{decision_transformer_forward.1} parent=0 // pred_check_branch
    %141 = sbr.rel (0) target = $region137
  $region136: #{decision_transformer_forward.1} parent=0 // pred_region
    _
  $region137: #{decision_transformer_forward.1} parent=0 // pred_fallthru
    _
  %v142 = vld [vmem:[%s5] sm:$0xff]
  %v143 = vld [vmem:[%s5 + $0x8] sm:$0xff]
  %v144 = vld [vmem:[%s7] sm:$0x1]
  %v145 = vld [vmem:[%s9] sm:$0x1]
  %v147 = vperm.slane %v145, 0
  %vm149 = vcmask 7168
  %v151 = vsel %vm149, %v142, 0
  %v154 = vsel %vm149, %v143, 0
  %vm156 = vcmask 1040384
  %v158 = vsel %vm156, %v144, 0
  %160 = vmatpush.msra.mxu0 0.0
  %161 = vmatpush.msra.mxu0 0.0
  %162 = vmatpush.msra.mxu0 0.0
  %163 = vmatpush.msra.mxu0 0.0
  %164 = vmatpush.msra.mxu0 0.0
  %165 = vmatpush.msra.mxu0 0.0
  %166 = vmatpush.msra.mxu0 0.0
  %167 = vmatpush.msra.mxu0 0.0
  %168 = vmatpush.msra.mxu0 0.0
  %169 = vmatpush.msra.mxu0 0.0
  %170 = vmatpush.msra.mxu0 0.0
  %171 = vmatpush.msra.mxu0 0.0
  %172 = vmatpush.msra.mxu0 0.0
  %173 = vmatpush.msra.mxu0 0.0
  %174 = vmatpush.msra.mxu0 0.0
  %175 = vmatpush.msra.mxu0 %v158
  %176 = vmatmul.f32.gmra.mxu0 %v151
  %v177 = vpop.f32.mrf.mxu0
  %v178 = vadd.f32 %v147, %v177
  %179 = vmatmul.f32.gmra.mxu0 %v154
  %v180 = vpop.f32.mrf.mxu0
  %v181 = vadd.f32 %v147, %v180
  %182 = vdwg.mxu0
  %v183 = vld [vmem:[%s1] sm:$0xff]
  %v184 = vld [vmem:[%s1 + $0x8] sm:$0xff]
  %v185 = vld [vmem:[%s11] sm:$0x3f]
  %v186 = vld [vmem:[%s13] sm:$0x1]
  %v188 = vperm.slane %v186, 0
  %vm190 = vcmask 48128
  %v192 = vsel %vm190, %v183, 0
  %v195 = vsel %vm190, %v184, 0
  %vm197 = vcmask 1045504
  %v199 = vsel %vm197, %v185, 0
  %201 = vmatpush.msra.mxu0 0.0
  %202 = vmatpush.msra.mxu0 0.0
  %203 = vmatpush.msra.mxu0 0.0
  %204 = vmatpush.msra.mxu0 0.0
  %205 = vmatpush.msra.mxu0 0.0
  %206 = vmatpush.msra.mxu0 0.0
  %207 = vmatpush.msra.mxu0 0.0
  %208 = vmatpush.msra.mxu0 0.0
  %209 = vmatpush.msra.mxu0 0.0
  %210 = vmatpush.msra.mxu0 0.0
  %211 = vmatpush.msra.mxu0 0.0
  %212 = vmatpush.msra.mxu0 0.0
  %213 = vmatpush.msra.mxu0 0.0
  %214 = vmatpush.msra.mxu0 0.0
  %215 = vmatpush.msra.mxu0 0.0
  %216 = vmatpush.msra.mxu0 %v199
  %217 = vmatmul.f32.gmra.mxu0 %v192
  %v218 = vpop.f32.mrf.mxu0
  %v219 = vadd.f32 %v188, %v218
  %220 = vmatmul.f32.gmra.mxu0 %v195
  %v221 = vpop.f32.mrf.mxu0
  %v222 = vadd.f32 %v188, %v221
  %223 = vdwg.mxu0
  %v224 = vld [vmem:[%s3] sm:$0xff]
  %v225 = vld [vmem:[%s3 + $0x8] sm:$0xff]
  %v226 = vld [vmem:[%s15] sm:$0x7]
  %v227 = vld [vmem:[%s17] sm:$0x1]
  %v229 = vperm.slane %v227, 0
  %vm231 = vcmask 23552
  %v233 = vsel %vm231, %v224, 0
  %v236 = vsel %vm231, %v225, 0
  %vm238 = vcmask 1042432
  %v240 = vsel %vm238, %v226, 0
  %242 = vmatpush.msra.mxu0 0.0
  %243 = vmatpush.msra.mxu0 0.0
  %244 = vmatpush.msra.mxu0 0.0
  %245 = vmatpush.msra.mxu0 0.0
  %246 = vmatpush.msra.mxu0 0.0
  %247 = vmatpush.msra.mxu0 0.0
  %248 = vmatpush.msra.mxu0 0.0
  %249 = vmatpush.msra.mxu0 0.0
  %250 = vmatpush.msra.mxu0 0.0
  %251 = vmatpush.msra.mxu0 0.0
  %252 = vmatpush.msra.mxu0 0.0
  %253 = vmatpush.msra.mxu0 0.0
  %254 = vmatpush.msra.mxu0 0.0
  %255 = vmatpush.msra.mxu0 0.0
  %256 = vmatpush.msra.mxu0 0.0
  %257 = vmatpush.msra.mxu0 %v240
  %258 = vmatmul.f32.gmra.mxu0 %v233
  %v259 = vpop.f32.mrf.mxu0
  %v260 = vadd.f32 %v229, %v259
  %261 = vmatmul.f32.gmra.mxu0 %v236
  %v262 = vpop.f32.mrf.mxu0
  %v263 = vadd.f32 %v229, %v262
  %264 = vdwg.mxu0
  %v265 = vld [vmem:[%s19] sm:$0x1]
  %v266 = vld [vmem:[%s21] sm:$0x1]
  %vm267 = vcmask 261120
  %v268 = vsel %vm267, %v178, 0.0
  %269 = vadd.xlane.f32.xlu0 %v268
  %v270 = vpop.xlane.xlu0 %269
  %v271 = vsel %vm267, %v219, 0.0
  %272 = vadd.xlane.f32.xlu0 %v271
  %v273 = vpop.xlane.xlu0 %272
  %v274 = vsel %vm267, %v260, 0.0
  %275 = vadd.xlane.f32.xlu0 %v274
  %v276 = vpop.xlane.xlu0 %275
  %v277 = vsel %vm267, %v181, 0.0
  %278 = vadd.xlane.f32.xlu0 %v277
  %v279 = vpop.xlane.xlu0 %278
  %v280 = vsel %vm267, %v222, 0.0
  %281 = vadd.xlane.f32.xlu0 %v280
  %v282 = vpop.xlane.xlu0 %281
  %v283 = vsel %vm267, %v263, 0.0
  %284 = vadd.xlane.f32.xlu0 %v283
  %v285 = vpop.xlane.xlu0 %284
  %v286 = vrcp.pop 32.0
  %v287 = vmul.f32 32.0, %v286
  %v288 = vsub.f32 1.0, %v287
  %v289 = vmul.f32 %v286, %v288
  %v290 = vadd.f32 %v286, %v289
  %vm291 = vweird.f32 %v286
  %v292 = vsel %vm291, %v286, %v290
  %v293 = vmul.f32 %v270, %v292
  %v294 = vmul.f32 %v273, %v292
  %v295 = vmul.f32 %v276, %v292
  %v296 = vmul.f32 %v279, %v292
  %v297 = vmul.f32 %v282, %v292
  %v298 = vmul.f32 %v285, %v292
  %v299 = vsub.f32 %v178, %v293
  %v300 = vsub.f32 %v219, %v294
  %v301 = vsub.f32 %v260, %v295
  %v302 = vsub.f32 %v181, %v296
  %v303 = vsub.f32 %v222, %v297
  %v304 = vsub.f32 %v263, %v298
  %v305 = vmul.f32 %v299, %v299
  %v306 = vmul.f32 %v300, %v300
  %v307 = vmul.f32 %v301, %v301
  %v308 = vmul.f32 %v302, %v302
  %v309 = vmul.f32 %v303, %v303
  %v310 = vmul.f32 %v304, %v304
  %v311 = vsel %vm267, %v305, 0.0
  %312 = vadd.xlane.f32.xlu0 %v311
  %v313 = vpop.xlane.xlu0 %312
  %v314 = vsel %vm267, %v306, 0.0
  %315 = vadd.xlane.f32.xlu0 %v314
  %v316 = vpop.xlane.xlu0 %315
  %v317 = vsel %vm267, %v307, 0.0
  %318 = vadd.xlane.f32.xlu0 %v317
  %v319 = vpop.xlane.xlu0 %318
  %v320 = vsel %vm267, %v308, 0.0
  %321 = vadd.xlane.f32.xlu0 %v320
  %v322 = vpop.xlane.xlu0 %321
  %v323 = vsel %vm267, %v309, 0.0
  %324 = vadd.xlane.f32.xlu0 %v323
  %v325 = vpop.xlane.xlu0 %324
  %v326 = vsel %vm267, %v310, 0.0
  %327 = vadd.xlane.f32.xlu0 %v326
  %v328 = vpop.xlane.xlu0 %327
  %v329 = vmul.f32 %v313, %v292
  %v330 = vmul.f32 %v316, %v292
  %v331 = vmul.f32 %v319, %v292
  %v332 = vmul.f32 %v322, %v292
  %v333 = vmul.f32 %v325, %v292
  %v334 = vmul.f32 %v328, %v292
  %v335 = vadd.f32 %v329, 1e-05
  %v336 = vadd.f32 %v330, 1e-05
  %v337 = vadd.f32 %v331, 1e-05
  %v338 = vadd.f32 %v332, 1e-05
  %v339 = vadd.f32 %v333, 1e-05
  %v340 = vadd.f32 %v334, 1e-05
  %v341 = vrsqrt.pop %v335
  %v342 = vmul.f32 %v341, %v335
  %v343 = vmul.f32 %v342, %v341
  %v344 = vmul.f32 0.5, %v343
  %v345 = vsub.f32 1.5, %v344
  %v346 = vmul.f32 %v341, %v345
  %vm347 = vweird.f32 %v335
  %vm348 = vweird.f32 %v341
  %vm349 = vmor %vm347, %vm348
  %v350 = vsel %vm349, %v341, %v346
  %v351 = vrsqrt.pop %v336
  %v352 = vmul.f32 %v351, %v336
  %v353 = vmul.f32 %v352, %v351
  %v354 = vmul.f32 0.5, %v353
  %v355 = vsub.f32 1.5, %v354
  %v356 = vmul.f32 %v351, %v355
  %vm357 = vweird.f32 %v336
  %vm358 = vweird.f32 %v351
  %vm359 = vmor %vm357, %vm358
  %v360 = vsel %vm359, %v351, %v356
  %v361 = vrsqrt.pop %v337
  %v362 = vmul.f32 %v361, %v337
  %v363 = vmul.f32 %v362, %v361
  %v364 = vmul.f32 0.5, %v363
  %v365 = vsub.f32 1.5, %v364
  %v366 = vmul.f32 %v361, %v365
  %vm367 = vweird.f32 %v337
  %vm368 = vweird.f32 %v361
  %vm369 = vmor %vm367, %vm368
  %v370 = vsel %vm369, %v361, %v366
  %v371 = vrsqrt.pop %v338
  %v372 = vmul.f32 %v371, %v338
  %v373 = vmul.f32 %v372, %v371
  %v374 = vmul.f32 0.5, %v373
  %v375 = vsub.f32 1.5, %v374
  %v376 = vmul.f32 %v371, %v375
  %vm377 = vweird.f32 %v338
  %vm378 = vweird.f32 %v371
  %vm379 = vmor %vm377, %vm378
  %v380 = vsel %vm379, %v371, %v376
  %v381 = vrsqrt.pop %v339
  %v382 = vmul.f32 %v381, %v339
  %v383 = vmul.f32 %v382, %v381
  %v384 = vmul.f32 0.5, %v383
  %v385 = vsub.f32 1.5, %v384
  %v386 = vmul.f32 %v381, %v385
  %vm387 = vweird.f32 %v339
  %vm388 = vweird.f32 %v381
  %vm389 = vmor %vm387, %vm388
  %v390 = vsel %vm389, %v381, %v386
  %v391 = vrsqrt.pop %v340
  %v392 = vmul.f32 %v391, %v340
  %v393 = vmul.f32 %v392, %v391
  %v394 = vmul.f32 0.5, %v393
  %v395 = vsub.f32 1.5, %v394
  %v396 = vmul.f32 %v391, %v395
  %vm397 = vweird.f32 %v340
  %vm398 = vweird.f32 %v391
  %vm399 = vmor %vm397, %vm398
  %v400 = vsel %vm399, %v391, %v396
  %v401 = vmul.f32 %v299, %v350
  %v402 = vmul.f32 %v300, %v360
  %v403 = vmul.f32 %v301, %v370
  %v404 = vmul.f32 %v302, %v380
  %v405 = vmul.f32 %v303, %v390
  %v406 = vmul.f32 %v304, %v400
  %v408 = vperm.slane %v265, 0
  %v410 = vmul.f32 %v401, %v408
  %v411 = vmul.f32 %v402, %v408
  %v412 = vmul.f32 %v403, %v408
  %v413 = vmul.f32 %v404, %v408
  %v414 = vmul.f32 %v405, %v408
  %v415 = vmul.f32 %v406, %v408
  %v417 = vperm.slane %v266, 0
  %v419 = vadd.f32 %v410, %v417
  %v420 = vadd.f32 %v411, %v417
  %v421 = vadd.f32 %v412, %v417
  %v422 = vadd.f32 %v413, %v417
  %v423 = vadd.f32 %v414, %v417
  %v424 = vadd.f32 %v415, %v417
  %v425 = vld [vmem:[%s23] sm:$0xff]
  %v426 = vld [vmem:[%s23 + $0x8] sm:$0xff]
  %v427 = vld [vmem:[%s23 + $0x10] sm:$0xff]
  %v428 = vadd.f32 %v419, %v425
  %v429 = vadd.f32 %v420, %v426
  %v430 = vadd.f32 %v421, %v427
  %v431 = vadd.f32 %v422, %v425
  %v432 = vadd.f32 %v423, %v426
  %v433 = vadd.f32 %v424, %v427
  %v434 = vld [vmem:[%s25] sm:$0x1]
  %v435 = vld [vmem:[%s27] sm:$0xff]
  %v436 = vld [vmem:[%s27 + $0x8] sm:$0xff]
  %v437 = vld [vmem:[%s27 + $0x10] sm:$0xff]
  %v438 = vperm.slane %v434, 0
  %439 = vset.pattern.permute.xlu0 0
  %440 = vperm.xlu0 %439, %v435
  %v441 = vpop.permute.xlu0 %440
  %442 = vset.pattern.permute.xlu0 0
  %443 = vperm.xlu0 %442, %v436
  %v444 = vpop.permute.xlu0 %443
  %445 = vset.pattern.permute.xlu0 0
  %446 = vperm.xlu0 %445, %v437
  %v447 = vpop.permute.xlu0 %446
  %vm448 = vcmp.le.s32.totalorder %v438, %v441
  %vm449 = vcmp.le.s32.totalorder %v438, %v444
  %vm450 = vcmp.le.s32.totalorder %v438, %v447
  %v451 = vld [vmem:[%s29] sm:$0x1]
  %v452 = vld [vmem:[%s31] sm:$0x1]
  %v453 = vsel %vm267, %v428, 0.0
  %454 = vadd.xlane.f32.xlu0 %v453
  %v455 = vpop.xlane.xlu0 %454
  %v456 = vsel %vm267, %v429, 0.0
  %457 = vadd.xlane.f32.xlu0 %v456
  %v458 = vpop.xlane.xlu0 %457
  %v459 = vsel %vm267, %v430, 0.0
  %460 = vadd.xlane.f32.xlu0 %v459
  %v461 = vpop.xlane.xlu0 %460
  %v462 = vsel %vm267, %v431, 0.0
  %463 = vadd.xlane.f32.xlu0 %v462
  %v464 = vpop.xlane.xlu0 %463
  %v465 = vsel %vm267, %v432, 0.0
  %466 = vadd.xlane.f32.xlu0 %v465
  %v467 = vpop.xlane.xlu0 %466
  %v468 = vsel %vm267, %v433, 0.0
  %469 = vadd.xlane.f32.xlu0 %v468
  %v470 = vpop.xlane.xlu0 %469
  %v471 = vmul.f32 %v455, %v292
  %v472 = vmul.f32 %v458, %v292
  %v473 = vmul.f32 %v461, %v292
  %v474 = vmul.f32 %v464, %v292
  %v475 = vmul.f32 %v467, %v292
  %v476 = vmul.f32 %v470, %v292
  %v477 = vsub.f32 %v428, %v471
  %v478 = vsub.f32 %v429, %v472
  %v479 = vsub.f32 %v430, %v473
  %v480 = vsub.f32 %v431, %v474
  %v481 = vsub.f32 %v432, %v475
  %v482 = vsub.f32 %v433, %v476
  %v483 = vmul.f32 %v477, %v477
  %v484 = vmul.f32 %v478, %v478
  %v485 = vmul.f32 %v479, %v479
  %v486 = vmul.f32 %v480, %v480
  %v487 = vmul.f32 %v481, %v481
  %v488 = vmul.f32 %v482, %v482
  %v489 = vsel %vm267, %v483, 0.0
  %490 = vadd.xlane.f32.xlu0 %v489
  %v491 = vpop.xlane.xlu0 %490
  %v492 = vsel %vm267, %v484, 0.0
  %493 = vadd.xlane.f32.xlu0 %v492
  %v494 = vpop.xlane.xlu0 %493
  %v495 = vsel %vm267, %v485, 0.0
  %496 = vadd.xlane.f32.xlu0 %v495
  %v497 = vpop.xlane.xlu0 %496
  %v498 = vsel %vm267, %v486, 0.0
  %499 = vadd.xlane.f32.xlu0 %v498
  %v500 = vpop.xlane.xlu0 %499
  %v501 = vsel %vm267, %v487, 0.0
  %502 = vadd.xlane.f32.xlu0 %v501
  %v503 = vpop.xlane.xlu0 %502
  %v504 = vsel %vm267, %v488, 0.0
  %505 = vadd.xlane.f32.xlu0 %v504
  %v506 = vpop.xlane.xlu0 %505
  %v507 = vmul.f32 %v491, %v292
  %v508 = vmul.f32 %v494, %v292
  %v509 = vmul.f32 %v497, %v292
  %v510 = vmul.f32 %v500, %v292
  %v511 = vmul.f32 %v503, %v292
  %v512 = vmul.f32 %v506, %v292
  %v513 = vadd.f32 %v507, 1e-05
  %v514 = vadd.f32 %v508, 1e-05
  %v515 = vadd.f32 %v509, 1e-05
  %v516 = vadd.f32 %v510, 1e-05
  %v517 = vadd.f32 %v511, 1e-05
  %v518 = vadd.f32 %v512, 1e-05
  %v519 = vrsqrt.pop %v513
  %v520 = vmul.f32 %v519, %v513
  %v521 = vmul.f32 %v520, %v519
  %v522 = vmul.f32 0.5, %v521
  %v523 = vsub.f32 1.5, %v522
  %v524 = vmul.f32 %v519, %v523
  %vm525 = vweird.f32 %v513
  %vm526 = vweird.f32 %v519
  %vm527 = vmor %vm525, %vm526
  %v528 = vsel %vm527, %v519, %v524
  %v529 = vrsqrt.pop %v514
  %v530 = vmul.f32 %v529, %v514
  %v531 = vmul.f32 %v530, %v529
  %v532 = vmul.f32 0.5, %v531
  %v533 = vsub.f32 1.5, %v532
  %v534 = vmul.f32 %v529, %v533
  %vm535 = vweird.f32 %v514
  %vm536 = vweird.f32 %v529
  %vm537 = vmor %vm535, %vm536
  %v538 = vsel %vm537, %v529, %v534
  %v539 = vrsqrt.pop %v515
  %v540 = vmul.f32 %v539, %v515
  %v541 = vmul.f32 %v540, %v539
  %v542 = vmul.f32 0.5, %v541
  %v543 = vsub.f32 1.5, %v542
  %v544 = vmul.f32 %v539, %v543
  %vm545 = vweird.f32 %v515
  %vm546 = vweird.f32 %v539
  %vm547 = vmor %vm545, %vm546
  %v548 = vsel %vm547, %v539, %v544
  %v549 = vrsqrt.pop %v516
  %v550 = vmul.f32 %v549, %v516
  %v551 = vmul.f32 %v550, %v549
  %v552 = vmul.f32 0.5, %v551
  %v553 = vsub.f32 1.5, %v552
  %v554 = vmul.f32 %v549, %v553
  %vm555 = vweird.f32 %v516
  %vm556 = vweird.f32 %v549
  %vm557 = vmor %vm555, %vm556
  %v558 = vsel %vm557, %v549, %v554
  %v559 = vrsqrt.pop %v517
  %v560 = vmul.f32 %v559, %v517
  %v561 = vmul.f32 %v560, %v559
  %v562 = vmul.f32 0.5, %v561
  %v563 = vsub.f32 1.5, %v562
  %v564 = vmul.f32 %v559, %v563
  %vm565 = vweird.f32 %v517
  %vm566 = vweird.f32 %v559
  %vm567 = vmor %vm565, %vm566
  %v568 = vsel %vm567, %v559, %v564
  %v569 = vrsqrt.pop %v518
  %v570 = vmul.f32 %v569, %v518
  %v571 = vmul.f32 %v570, %v569
  %v572 = vmul.f32 0.5, %v571
  %v573 = vsub.f32 1.5, %v572
  %v574 = vmul.f32 %v569, %v573
  %vm575 = vweird.f32 %v518
  %vm576 = vweird.f32 %v569
  %vm577 = vmor %vm575, %vm576
  %v578 = vsel %vm577, %v569, %v574
  %v579 = vmul.f32 %v477, %v528
  %v580 = vmul.f32 %v478, %v538
  %v581 = vmul.f32 %v479, %v548
  %v582 = vmul.f32 %v480, %v558
  %v583 = vmul.f32 %v481, %v568
  %v584 = vmul.f32 %v482, %v578
  %v586 = vperm.slane %v451, 0
  %v588 = vmul.f32 %v579, %v586
  %v589 = vmul.f32 %v580, %v586
  %v590 = vmul.f32 %v581, %v586
  %v591 = vmul.f32 %v582, %v586
  %v592 = vmul.f32 %v583, %v586
  %v593 = vmul.f32 %v584, %v586
  %v595 = vperm.slane %v452, 0
  %v597 = vadd.f32 %v588, %v595
  %v598 = vadd.f32 %v589, %v595
  %v599 = vadd.f32 %v590, %v595
  %v600 = vadd.f32 %v591, %v595
  %v601 = vadd.f32 %v592, %v595
  %v602 = vadd.f32 %v593, %v595
  %v603 = vld [vmem:[%s33] sm:$0xff]
  %v604 = vld [vmem:[%s33 + $0x8] sm:$0xff]
  %v605 = vld [vmem:[%s33 + $0x10] sm:$0xff]
  %v606 = vld [vmem:[%s33 + $0x18] sm:$0xff]
  %v607 = vld [vmem:[%s35] sm:$0x1]
  %v609 = vperm.slane %v607, 0
  %v612 = vsel %vm267, %v597, 0
  %v615 = vsel %vm267, %v598, 0
  %v618 = vsel %vm267, %v599, 0
  %v621 = vsel %vm267, %v600, 0
  %v624 = vsel %vm267, %v601, 0
  %v627 = vsel %vm267, %v602, 0
  %629 = vmatpush.msra.mxu0 0.0
  %630 = vmatpush.msra.mxu0 0.0
  %631 = vmatpush.msra.mxu0 0.0
  %632 = vmatpush.msra.mxu0 0.0
  %633 = vmatpush.msra.mxu0 0.0
  %634 = vmatpush.msra.mxu0 0.0
  %635 = vmatpush.msra.mxu0 0.0
  %636 = vmatpush.msra.mxu0 0.0
  %637 = vmatpush.msra.mxu0 0.0
  %638 = vmatpush.msra.mxu0 0.0
  %639 = vmatpush.msra.mxu0 0.0
  %640 = vmatpush.msra.mxu0 0.0
  %641 = vmatpush.msra.mxu0 %v606
  %642 = vmatpush.msra.mxu0 %v605
  %643 = vmatpush.msra.mxu0 %v604
  %644 = vmatpush.msra.mxu0 %v603
  %645 = vmatmul.f32.gmra.mxu0 %v612
  %v646 = vpop.f32.mrf.mxu0
  %v647 = vadd.f32 %v609, %v646
  %648 = vmatmul.f32.gmra.mxu0 %v615
  %v649 = vpop.f32.mrf.mxu0
  %v650 = vadd.f32 %v609, %v649
  %651 = vmatmul.f32.gmra.mxu0 %v618
  %v652 = vpop.f32.mrf.mxu0
  %v653 = vadd.f32 %v609, %v652
  %654 = vmatmul.f32.gmra.mxu0 %v621
  %v655 = vpop.f32.mrf.mxu0
  %v656 = vadd.f32 %v609, %v655
  %657 = vmatmul.f32.gmra.mxu0 %v624
  %v658 = vpop.f32.mrf.mxu0
  %v659 = vadd.f32 %v609, %v658
  %660 = vmatmul.f32.gmra.mxu0 %v627
  %v661 = vpop.f32.mrf.mxu0
  %v662 = vadd.f32 %v609, %v661
  %663 = vdwg.mxu0
  %v664 = vld [vmem:[%s37] sm:$0xff]
  %v665 = vld [vmem:[%s37 + $0x8] sm:$0xff]
  %v666 = vld [vmem:[%s37 + $0x10] sm:$0xff]
  %v667 = vld [vmem:[%s37 + $0x18] sm:$0xff]
  %v668 = vld [vmem:[%s39] sm:$0x1]
  %v670 = vperm.slane %v668, 0
  %672 = vmatpush.msra.mxu0 0.0
  %673 = vmatpush.msra.mxu0 0.0
  %674 = vmatpush.msra.mxu0 0.0
  %675 = vmatpush.msra.mxu0 0.0
  %676 = vmatpush.msra.mxu0 0.0
  %677 = vmatpush.msra.mxu0 0.0
  %678 = vmatpush.msra.mxu0 0.0
  %679 = vmatpush.msra.mxu0 0.0
  %680 = vmatpush.msra.mxu0 0.0
  %681 = vmatpush.msra.mxu0 0.0
  %682 = vmatpush.msra.mxu0 0.0
  %683 = vmatpush.msra.mxu0 0.0
  %684 = vmatpush.msra.mxu0 %v667
  %685 = vmatpush.msra.mxu0 %v666
  %686 = vmatpush.msra.mxu0 %v665
  %687 = vmatpush.msra.mxu0 %v664
  %688 = vmatmul.f32.gmra.mxu0 %v612
  %v689 = vpop.f32.mrf.mxu0
  %v690 = vadd.f32 %v670, %v689
  %691 = vmatmul.f32.gmra.mxu0 %v615
  %v692 = vpop.f32.mrf.mxu0
  %v693 = vadd.f32 %v670, %v692
  %694 = vmatmul.f32.gmra.mxu0 %v618
  %v695 = vpop.f32.mrf.mxu0
  %v696 = vadd.f32 %v670, %v695
  %697 = vmatmul.f32.gmra.mxu0 %v621
  %v698 = vpop.f32.mrf.mxu0
  %v699 = vadd.f32 %v670, %v698
  %700 = vmatmul.f32.gmra.mxu0 %v624
  %v701 = vpop.f32.mrf.mxu0
  %v702 = vadd.f32 %v670, %v701
  %703 = vmatmul.f32.gmra.mxu0 %v627
  %v704 = vpop.f32.mrf.mxu0
  %v705 = vadd.f32 %v670, %v704
  %706 = vdwg.mxu0
  %v707 = vld [vmem:[%s41] sm:$0xff]
  %v708 = vld [vmem:[%s41 + $0x8] sm:$0xff]
  %v709 = vld [vmem:[%s41 + $0x10] sm:$0xff]
  %v710 = vld [vmem:[%s41 + $0x18] sm:$0xff]
  %v711 = vld [vmem:[%s43] sm:$0x1]
  %v713 = vperm.slane %v711, 0
  %715 = vmatpush.msra.mxu0 0.0
  %716 = vmatpush.msra.mxu0 0.0
  %717 = vmatpush.msra.mxu0 0.0
  %718 = vmatpush.msra.mxu0 0.0
  %719 = vmatpush.msra.mxu0 0.0
  %720 = vmatpush.msra.mxu0 0.0
  %721 = vmatpush.msra.mxu0 0.0
  %722 = vmatpush.msra.mxu0 0.0
  %723 = vmatpush.msra.mxu0 0.0
  %724 = vmatpush.msra.mxu0 0.0
  %725 = vmatpush.msra.mxu0 0.0
  %726 = vmatpush.msra.mxu0 0.0
  %727 = vmatpush.msra.mxu0 %v710
  %728 = vmatpush.msra.mxu0 %v709
  %729 = vmatpush.msra.mxu0 %v708
  %730 = vmatpush.msra.mxu0 %v707
  %731 = vmatmul.f32.gmra.mxu0 %v612
  %v732 = vpop.f32.mrf.mxu0
  %v733 = vadd.f32 %v713, %v732
  %734 = vmatmul.f32.gmra.mxu0 %v615
  %v735 = vpop.f32.mrf.mxu0
  %v736 = vadd.f32 %v713, %v735
  %737 = vmatmul.f32.gmra.mxu0 %v618
  %v738 = vpop.f32.mrf.mxu0
  %v739 = vadd.f32 %v713, %v738
  %740 = vmatmul.f32.gmra.mxu0 %v621
  %v741 = vpop.f32.mrf.mxu0
  %v742 = vadd.f32 %v713, %v741
  %743 = vmatmul.f32.gmra.mxu0 %v624
  %v744 = vpop.f32.mrf.mxu0
  %v745 = vadd.f32 %v713, %v744
  %746 = vmatmul.f32.gmra.mxu0 %v627
  %v747 = vpop.f32.mrf.mxu0
  %v748 = vadd.f32 %v713, %v747
  %749 = vdwg.mxu0
  %vm750 = vcmask 64512
  %v752 = vsel %vm750, %v647, 0
  %v755 = vsel %vm750, %v650, 0
  %v758 = vsel %vm750, %v653, 0
  %v761 = vsel %vm750, %v690, 0
  %v764 = vsel %vm750, %v693, 0
  %v767 = vsel %vm750, %v696, 0
  %769 = vmatpush.xpose.msra.mxu0 0.0
  %770 = vmatpush.xpose.msra.mxu0 0.0
  %771 = vmatpush.xpose.msra.mxu0 0.0
  %772 = vmatpush.xpose.msra.mxu0 0.0
  %773 = vmatpush.xpose.msra.mxu0 0.0
  %774 = vmatpush.xpose.msra.mxu0 0.0
  %775 = vmatpush.xpose.msra.mxu0 0.0
  %776 = vmatpush.xpose.msra.mxu0 0.0
  %777 = vmatpush.xpose.msra.mxu0 0.0
  %778 = vmatpush.xpose.msra.mxu0 0.0
  %779 = vmatpush.xpose.msra.mxu0 0.0
  %780 = vmatpush.xpose.msra.mxu0 0.0
  %781 = vmatpush.xpose.msra.mxu0 0.0
  %782 = vmatpush.xpose.msra.mxu0 %v767
  %783 = vmatpush.xpose.msra.mxu0 %v764
  %784 = vmatpush.xpose.msra.mxu0 %v761
  %785 = vmatmul.f32.gmra.mxu0 %v752
  %v786 = vpop.f32.mrf.mxu0
  %v787 = vadd.f32 0.0, %v786
  %788 = vmatmul.f32.gmra.mxu0 %v755
  %v789 = vpop.f32.mrf.mxu0
  %v790 = vadd.f32 0.0, %v789
  %791 = vmatmul.f32.gmra.mxu0 %v758
  %v792 = vpop.f32.mrf.mxu0
  %v793 = vadd.f32 0.0, %v792
  %794 = vdwg.mxu0
  %v795 = vmul.f32 %v787, 0.35355338
  %v796 = vmul.f32 %v790, 0.35355338
  %v797 = vmul.f32 %v793, 0.35355338
  %v798 = vsel %vm448, %v795, -1e+30
  %v799 = vsel %vm449, %v796, -1e+30
  %v800 = vsel %vm450, %v797, -1e+30
  %vm801 = vcmask 195584
  %v802 = vsel %vm801, %v798, -inf
  %803 = vmax.xlane.f32.xlu0 %v802
  %v804 = vpop.xlane.xlu0 %803
  %v805 = vsel %vm801, %v799, -inf
  %806 = vmax.xlane.f32.xlu0 %v805
  %v807 = vpop.xlane.xlu0 %806
  %v808 = vsel %vm801, %v800, -inf
  %809 = vmax.xlane.f32.xlu0 %v808
  %v810 = vpop.xlane.xlu0 %809
  %v811 = vsub.f32 %v798, %v804
  %v812 = vsub.f32 %v799, %v807
  %v813 = vsub.f32 %v800, %v810
  %v814 = vmul.f32 %v811, 1.442695
  %v815 = vpow.pop %v814
  %v816 = vmul.f32 %v812, 1.442695
  %v817 = vpow.pop %v816
  %v818 = vmul.f32 %v813, 1.442695
  %v819 = vpow.pop %v818
  %v820 = vsel %vm801, %v815, 0.0
  %821 = vadd.xlane.f32.xlu0 %v820
  %v822 = vpop.xlane.xlu0 %821
  %v823 = vsel %vm801, %v817, 0.0
  %824 = vadd.xlane.f32.xlu0 %v823
  %v825 = vpop.xlane.xlu0 %824
  %v826 = vsel %vm801, %v819, 0.0
  %827 = vadd.xlane.f32.xlu0 %v826
  %v828 = vpop.xlane.xlu0 %827
  %v829 = vrcp.pop %v822
  %v830 = vrcp.pop %v825
  %v831 = vrcp.pop %v828
  %v832 = vmul.f32 %v815, %v829
  %v833 = vmul.f32 %v817, %v830
  %v834 = vmul.f32 %v819, %v831
  %v836 = vsel %vm801, %v832, 0
  %v839 = vsel %vm801, %v833, 0
  %v842 = vsel %vm801, %v834, 0
  %844 = vmatpush.msra.mxu0 0.0
  %845 = vmatpush.msra.mxu0 0.0
  %846 = vmatpush.msra.mxu0 0.0
  %847 = vmatpush.msra.mxu0 0.0
  %848 = vmatpush.msra.mxu0 0.0
  %849 = vmatpush.msra.mxu0 0.0
  %850 = vmatpush.msra.mxu0 0.0
  %851 = vmatpush.msra.mxu0 0.0
  %852 = vmatpush.msra.mxu0 0.0
  %853 = vmatpush.msra.mxu0 0.0
  %854 = vmatpush.msra.mxu0 0.0
  %855 = vmatpush.msra.mxu0 0.0
  %856 = vmatpush.msra.mxu0 0.0
  %857 = vmatpush.msra.mxu0 %v739
  %858 = vmatpush.msra.mxu0 %v736
  %859 = vmatpush.msra.mxu0 %v733
  %860 = vmatmul.f32.gmra.mxu0 %v836
  %v861 = vpop.f32.mrf.mxu0
  %v862 = vadd.f32 0.0, %v861
  %863 = vmatmul.f32.gmra.mxu0 %v839
  %v864 = vpop.f32.mrf.mxu0
  %v865 = vadd.f32 0.0, %v864
  %866 = vmatmul.f32.gmra.mxu0 %v842
  %v867 = vpop.f32.mrf.mxu0
  %v868 = vadd.f32 0.0, %v867
  %869 = vdwg.mxu0
  %v870 = vld [vmem:[%s45] sm:$0xff]
  %v872 = vsel %vm750, %v656, 0
  %v875 = vsel %vm750, %v659, 0
  %v878 = vsel %vm750, %v662, 0
  %v881 = vsel %vm750, %v699, 0
  %v884 = vsel %vm750, %v702, 0
  %v887 = vsel %vm750, %v705, 0
  %889 = vmatpush.xpose.msra.mxu0 0.0
  %890 = vmatpush.xpose.msra.mxu0 0.0
  %891 = vmatpush.xpose.msra.mxu0 0.0
  %892 = vmatpush.xpose.msra.mxu0 0.0
  %893 = vmatpush.xpose.msra.mxu0 0.0
  %894 = vmatpush.xpose.msra.mxu0 0.0
  %895 = vmatpush.xpose.msra.mxu0 0.0
  %896 = vmatpush.xpose.msra.mxu0 0.0
  %897 = vmatpush.xpose.msra.mxu0 0.0
  %898 = vmatpush.xpose.msra.mxu0 0.0
  %899 = vmatpush.xpose.msra.mxu0 0.0
  %900 = vmatpush.xpose.msra.mxu0 0.0
  %901 = vmatpush.xpose.msra.mxu0 0.0
  %902 = vmatpush.xpose.msra.mxu0 %v887
  %903 = vmatpush.xpose.msra.mxu0 %v884
  %904 = vmatpush.xpose.msra.mxu0 %v881
  %905 = vmatmul.f32.gmra.mxu0 %v872
  %v906 = vpop.f32.mrf.mxu0
  %v907 = vadd.f32 0.0, %v906
  %908 = vmatmul.f32.gmra.mxu0 %v875
  %v909 = vpop.f32.mrf.mxu0
  %v910 = vadd.f32 0.0, %v909
  %911 = vmatmul.f32.gmra.mxu0 %v878
  %v912 = vpop.f32.mrf.mxu0
  %v913 = vadd.f32 0.0, %v912
  %914 = vdwg.mxu0
  %v915 = vmul.f32 %v907, 0.35355338
  %v916 = vmul.f32 %v910, 0.35355338
  %v917 = vmul.f32 %v913, 0.35355338
  %v918 = vsel %vm448, %v915, -1e+30
  %v919 = vsel %vm449, %v916, -1e+30
  %v920 = vsel %vm450, %v917, -1e+30
  %v921 = vsel %vm801, %v918, -inf
  %922 = vmax.xlane.f32.xlu0 %v921
  %v923 = vpop.xlane.xlu0 %922
  %v924 = vsel %vm801, %v919, -inf
  %925 = vmax.xlane.f32.xlu0 %v924
  %v926 = vpop.xlane.xlu0 %925
  %v927 = vsel %vm801, %v920, -inf
  %928 = vmax.xlane.f32.xlu0 %v927
  %v929 = vpop.xlane.xlu0 %928
  %v930 = vsub.f32 %v918, %v923
  %v931 = vsub.f32 %v919, %v926
  %v932 = vsub.f32 %v920, %v929
  %v933 = vmul.f32 %v930, 1.442695
  %v934 = vpow.pop %v933
  %v935 = vmul.f32 %v931, 1.442695
  %v936 = vpow.pop %v935
  %v937 = vmul.f32 %v932, 1.442695
  %v938 = vpow.pop %v937
  %v939 = vsel %vm801, %v934, 0.0
  %940 = vadd.xlane.f32.xlu0 %v939
  %v941 = vpop.xlane.xlu0 %940
  %v942 = vsel %vm801, %v936, 0.0
  %943 = vadd.xlane.f32.xlu0 %v942
  %v944 = vpop.xlane.xlu0 %943
  %v945 = vsel %vm801, %v938, 0.0
  %946 = vadd.xlane.f32.xlu0 %v945
  %v947 = vpop.xlane.xlu0 %946
  %v948 = vrcp.pop %v941
  %v949 = vrcp.pop %v944
  %v950 = vrcp.pop %v947
  %v951 = vmul.f32 %v934, %v948
  %v952 = vmul.f32 %v936, %v949
  %v953 = vmul.f32 %v938, %v950
  %v955 = vsel %vm801, %v951, 0
  %v958 = vsel %vm801, %v952, 0
  %v961 = vsel %vm801, %v953, 0
  %963 = vmatpush.msra.mxu0 0.0
  %964 = vmatpush.msra.mxu0 0.0
  %965 = vmatpush.msra.mxu0 0.0
  %966 = vmatpush.msra.mxu0 0.0
  %967 = vmatpush.msra.mxu0 0.0
  %968 = vmatpush.msra.mxu0 0.0
  %969 = vmatpush.msra.mxu0 0.0
  %970 = vmatpush.msra.mxu0 0.0
  %971 = vmatpush.msra.mxu0 0.0
  %972 = vmatpush.msra.mxu0 0.0
  %973 = vmatpush.msra.mxu0 0.0
  %974 = vmatpush.msra.mxu0 0.0
  %975 = vmatpush.msra.mxu0 0.0
  %976 = vmatpush.msra.mxu0 %v748
  %977 = vmatpush.msra.mxu0 %v745
  %978 = vmatpush.msra.mxu0 %v742
  %979 = vmatmul.f32.gmra.mxu0 %v955
  %v980 = vpop.f32.mrf.mxu0
  %v981 = vadd.f32 0.0, %v980
  %982 = vmatmul.f32.gmra.mxu0 %v958
  %v983 = vpop.f32.mrf.mxu0
  %v984 = vadd.f32 0.0, %v983
  %985 = vmatmul.f32.gmra.mxu0 %v961
  %v986 = vpop.f32.mrf.mxu0
  %v987 = vadd.f32 0.0, %v986
  %988 = vdwg.mxu0
  %s989 = scalar_lea.vmem %s33, 32
  %v990 = vld [vmem:[%s989] sm:$0xff]
  %v991 = vld [vmem:[%s989 + $0x8] sm:$0xff]
  %v992 = vld [vmem:[%s989 + $0x10] sm:$0xff]
  %v993 = vld [vmem:[%s989 + $0x18] sm:$0xff]
  %s994 = scalar_lea.vmem %s35, 1
  %v995 = vld [vmem:[%s994] sm:$0x1]
  %v997 = vperm.slane %v995, 0
  %999 = vmatpush.msra.mxu0 0.0
  %1000 = vmatpush.msra.mxu0 0.0
  %1001 = vmatpush.msra.mxu0 0.0
  %1002 = vmatpush.msra.mxu0 0.0
  %1003 = vmatpush.msra.mxu0 0.0
  %1004 = vmatpush.msra.mxu0 0.0
  %1005 = vmatpush.msra.mxu0 0.0
  %1006 = vmatpush.msra.mxu0 0.0
  %1007 = vmatpush.msra.mxu0 0.0
  %1008 = vmatpush.msra.mxu0 0.0
  %1009 = vmatpush.msra.mxu0 0.0
  %1010 = vmatpush.msra.mxu0 0.0
  %1011 = vmatpush.msra.mxu0 %v993
  %1012 = vmatpush.msra.mxu0 %v992
  %1013 = vmatpush.msra.mxu0 %v991
  %1014 = vmatpush.msra.mxu0 %v990
  %1015 = vmatmul.f32.gmra.mxu0 %v612
  %v1016 = vpop.f32.mrf.mxu0
  %v1017 = vadd.f32 %v997, %v1016
  %1018 = vmatmul.f32.gmra.mxu0 %v615
  %v1019 = vpop.f32.mrf.mxu0
  %v1020 = vadd.f32 %v997, %v1019
  %1021 = vmatmul.f32.gmra.mxu0 %v618
  %v1022 = vpop.f32.mrf.mxu0
  %v1023 = vadd.f32 %v997, %v1022
  %1024 = vmatmul.f32.gmra.mxu0 %v621
  %v1025 = vpop.f32.mrf.mxu0
  %v1026 = vadd.f32 %v997, %v1025
  %1027 = vmatmul.f32.gmra.mxu0 %v624
  %v1028 = vpop.f32.mrf.mxu0
  %v1029 = vadd.f32 %v997, %v1028
  %1030 = vmatmul.f32.gmra.mxu0 %v627
  %v1031 = vpop.f32.mrf.mxu0
  %v1032 = vadd.f32 %v997, %v1031
  %1033 = vdwg.mxu0
  %s1034 = scalar_lea.vmem %s37, 32
  %v1035 = vld [vmem:[%s1034] sm:$0xff]
  %v1036 = vld [vmem:[%s1034 + $0x8] sm:$0xff]
  %v1037 = vld [vmem:[%s1034 + $0x10] sm:$0xff]
  %v1038 = vld [vmem:[%s1034 + $0x18] sm:$0xff]
  %s1039 = scalar_lea.vmem %s39, 1
  %v1040 = vld [vmem:[%s1039] sm:$0x1]
  %v1042 = vperm.slane %v1040, 0
  %1044 = vmatpush.msra.mxu0 0.0
  %1045 = vmatpush.msra.mxu0 0.0
  %1046 = vmatpush.msra.mxu0 0.0
  %1047 = vmatpush.msra.mxu0 0.0
  %1048 = vmatpush.msra.mxu0 0.0
  %1049 = vmatpush.msra.mxu0 0.0
  %1050 = vmatpush.msra.mxu0 0.0
  %1051 = vmatpush.msra.mxu0 0.0
  %1052 = vmatpush.msra.mxu0 0.0
  %1053 = vmatpush.msra.mxu0 0.0
  %1054 = vmatpush.msra.mxu0 0.0
  %1055 = vmatpush.msra.mxu0 0.0
  %1056 = vmatpush.msra.mxu0 %v1038
  %1057 = vmatpush.msra.mxu0 %v1037
  %1058 = vmatpush.msra.mxu0 %v1036
  %1059 = vmatpush.msra.mxu0 %v1035
  %1060 = vmatmul.f32.gmra.mxu0 %v612
  %v1061 = vpop.f32.mrf.mxu0
  %v1062 = vadd.f32 %v1042, %v1061
  %1063 = vmatmul.f32.gmra.mxu0 %v615
  %v1064 = vpop.f32.mrf.mxu0
  %v1065 = vadd.f32 %v1042, %v1064
  %1066 = vmatmul.f32.gmra.mxu0 %v618
  %v1067 = vpop.f32.mrf.mxu0
  %v1068 = vadd.f32 %v1042, %v1067
  %1069 = vmatmul.f32.gmra.mxu0 %v621
  %v1070 = vpop.f32.mrf.mxu0
  %v1071 = vadd.f32 %v1042, %v1070
  %1072 = vmatmul.f32.gmra.mxu0 %v624
  %v1073 = vpop.f32.mrf.mxu0
  %v1074 = vadd.f32 %v1042, %v1073
  %1075 = vmatmul.f32.gmra.mxu0 %v627
  %v1076 = vpop.f32.mrf.mxu0
  %v1077 = vadd.f32 %v1042, %v1076
  %1078 = vdwg.mxu0
  %s1079 = scalar_lea.vmem %s41, 32
  %v1080 = vld [vmem:[%s1079] sm:$0xff]
  %v1081 = vld [vmem:[%s1079 + $0x8] sm:$0xff]
  %v1082 = vld [vmem:[%s1079 + $0x10] sm:$0xff]
  %v1083 = vld [vmem:[%s1079 + $0x18] sm:$0xff]
  %s1084 = scalar_lea.vmem %s43, 1
  %v1085 = vld [vmem:[%s1084] sm:$0x1]
  %v1087 = vperm.slane %v1085, 0
  %1089 = vmatpush.msra.mxu0 0.0
  %1090 = vmatpush.msra.mxu0 0.0
  %1091 = vmatpush.msra.mxu0 0.0
  %1092 = vmatpush.msra.mxu0 0.0
  %1093 = vmatpush.msra.mxu0 0.0
  %1094 = vmatpush.msra.mxu0 0.0
  %1095 = vmatpush.msra.mxu0 0.0
  %1096 = vmatpush.msra.mxu0 0.0
  %1097 = vmatpush.msra.mxu0 0.0
  %1098 = vmatpush.msra.mxu0 0.0
  %1099 = vmatpush.msra.mxu0 0.0
  %1100 = vmatpush.msra.mxu0 0.0
  %1101 = vmatpush.msra.mxu0 %v1083
  %1102 = vmatpush.msra.mxu0 %v1082
  %1103 = vmatpush.msra.mxu0 %v1081
  %1104 = vmatpush.msra.mxu0 %v1080
  %1105 = vmatmul.f32.gmra.mxu0 %v612
  %v1106 = vpop.f32.mrf.mxu0
  %v1107 = vadd.f32 %v1087, %v1106
  %1108 = vmatmul.f32.gmra.mxu0 %v615
  %v1109 = vpop.f32.mrf.mxu0
  %v1110 = vadd.f32 %v1087, %v1109
  %1111 = vmatmul.f32.gmra.mxu0 %v618
  %v1112 = vpop.f32.mrf.mxu0
  %v1113 = vadd.f32 %v1087, %v1112
  %1114 = vmatmul.f32.gmra.mxu0 %v621
  %v1115 = vpop.f32.mrf.mxu0
  %v1116 = vadd.f32 %v1087, %v1115
  %1117 = vmatmul.f32.gmra.mxu0 %v624
  %v1118 = vpop.f32.mrf.mxu0
  %v1119 = vadd.f32 %v1087, %v1118
  %1120 = vmatmul.f32.gmra.mxu0 %v627
  %v1121 = vpop.f32.mrf.mxu0
  %v1122 = vadd.f32 %v1087, %v1121
  %1123 = vdwg.mxu0
  %v1125 = vsel %vm750, %v1017, 0
  %v1128 = vsel %vm750, %v1020, 0
  %v1131 = vsel %vm750, %v1023, 0
  %v1134 = vsel %vm750, %v1062, 0
  %v1137 = vsel %vm750, %v1065, 0
  %v1140 = vsel %vm750, %v1068, 0
  %1142 = vmatpush.xpose.msra.mxu0 0.0
  %1143 = vmatpush.xpose.msra.mxu0 0.0
  %1144 = vmatpush.xpose.msra.mxu0 0.0
  %1145 = vmatpush.xpose.msra.mxu0 0.0
  %1146 = vmatpush.xpose.msra.mxu0 0.0
  %1147 = vmatpush.xpose.msra.mxu0 0.0
  %1148 = vmatpush.xpose.msra.mxu0 0.0
  %1149 = vmatpush.xpose.msra.mxu0 0.0
  %1150 = vmatpush.xpose.msra.mxu0 0.0
  %1151 = vmatpush.xpose.msra.mxu0 0.0
  %1152 = vmatpush.xpose.msra.mxu0 0.0
  %1153 = vmatpush.xpose.msra.mxu0 0.0
  %1154 = vmatpush.xpose.msra.mxu0 0.0
  %1155 = vmatpush.xpose.msra.mxu0 %v1140
  %1156 = vmatpush.xpose.msra.mxu0 %v1137
  %1157 = vmatpush.xpose.msra.mxu0 %v1134
  %1158 = vmatmul.f32.gmra.mxu0 %v1125
  %v1159 = vpop.f32.mrf.mxu0
  %v1160 = vadd.f32 0.0, %v1159
  %1161 = vmatmul.f32.gmra.mxu0 %v1128
  %v1162 = vpop.f32.mrf.mxu0
  %v1163 = vadd.f32 0.0, %v1162
  %1164 = vmatmul.f32.gmra.mxu0 %v1131
  %v1165 = vpop.f32.mrf.mxu0
  %v1166 = vadd.f32 0.0, %v1165
  %1167 = vdwg.mxu0
  %v1168 = vmul.f32 %v1160, 0.35355338
  %v1169 = vmul.f32 %v1163, 0.35355338
  %v1170 = vmul.f32 %v1166, 0.35355338
  %v1171 = vsel %vm448, %v1168, -1e+30
  %v1172 = vsel %vm449, %v1169, -1e+30
  %v1173 = vsel %vm450, %v1170, -1e+30
  %v1174 = vsel %vm801, %v1171, -inf
  %1175 = vmax.xlane.f32.xlu0 %v1174
  %v1176 = vpop.xlane.xlu0 %1175
  %v1177 = vsel %vm801, %v1172, -inf
  %1178 = vmax.xlane.f32.xlu0 %v1177
  %v1179 = vpop.xlane.xlu0 %1178
  %v1180 = vsel %vm801, %v1173, -inf
  %1181 = vmax.xlane.f32.xlu0 %v1180
  %v1182 = vpop.xlane.xlu0 %1181
  %v1183 = vsub.f32 %v1171, %v1176
  %v1184 = vsub.f32 %v1172, %v1179
  %v1185 = vsub.f32 %v1173, %v1182
  %v1186 = vmul.f32 %v1183, 1.442695
  %v1187 = vpow.pop %v1186
  %v1188 = vmul.f32 %v1184, 1.442695
  %v1189 = vpow.pop %v1188
  %v1190 = vmul.f32 %v1185, 1.442695
  %v1191 = vpow.pop %v1190
  %v1192 = vsel %vm801, %v1187, 0.0
  %1193 = vadd.xlane.f32.xlu0 %v1192
  %v1194 = vpop.xlane.xlu0 %1193
  %v1195 = vsel %vm801, %v1189, 0.0
  %1196 = vadd.xlane.f32.xlu0 %v1195
  %v1197 = vpop.xlane.xlu0 %1196
  %v1198 = vsel %vm801, %v1191, 0.0
  %1199 = vadd.xlane.f32.xlu0 %v1198
  %v1200 = vpop.xlane.xlu0 %1199
  %v1201 = vrcp.pop %v1194
  %v1202 = vrcp.pop %v1197
  %v1203 = vrcp.pop %v1200
  %v1204 = vmul.f32 %v1187, %v1201
  %v1205 = vmul.f32 %v1189, %v1202
  %v1206 = vmul.f32 %v1191, %v1203
  %v1208 = vsel %vm801, %v1204, 0
  %v1211 = vsel %vm801, %v1205, 0
  %v1214 = vsel %vm801, %v1206, 0
  %1216 = vmatpush.msra.mxu0 0.0
  %1217 = vmatpush.msra.mxu0 0.0
  %1218 = vmatpush.msra.mxu0 0.0
  %1219 = vmatpush.msra.mxu0 0.0
  %1220 = vmatpush.msra.mxu0 0.0
  %1221 = vmatpush.msra.mxu0 0.0
  %1222 = vmatpush.msra.mxu0 0.0
  %1223 = vmatpush.msra.mxu0 0.0
  %1224 = vmatpush.msra.mxu0 0.0
  %1225 = vmatpush.msra.mxu0 0.0
  %1226 = vmatpush.msra.mxu0 0.0
  %1227 = vmatpush.msra.mxu0 0.0
  %1228 = vmatpush.msra.mxu0 0.0
  %1229 = vmatpush.msra.mxu0 %v1113
  %1230 = vmatpush.msra.mxu0 %v1110
  %1231 = vmatpush.msra.mxu0 %v1107
  %1232 = vmatmul.f32.gmra.mxu0 %v1208
  %v1233 = vpop.f32.mrf.mxu0
  %v1234 = vadd.f32 0.0, %v1233
  %1235 = vmatmul.f32.gmra.mxu0 %v1211
  %v1236 = vpop.f32.mrf.mxu0
  %v1237 = vadd.f32 0.0, %v1236
  %1238 = vmatmul.f32.gmra.mxu0 %v1214
  %v1239 = vpop.f32.mrf.mxu0
  %v1240 = vadd.f32 0.0, %v1239
  %1241 = vdwg.mxu0
  %s1242 = scalar_lea.vmem %s45, 8
  %v1243 = vld [vmem:[%s1242] sm:$0xff]
  %v1245 = vsel %vm750, %v1234, 0
  %v1248 = vsel %vm750, %v1237, 0
  %v1251 = vsel %vm750, %v1240, 0
  %1253 = vmatpush.msra.mxu0 0.0
  %1254 = vmatpush.msra.mxu0 0.0
  %1255 = vmatpush.msra.mxu0 0.0
  %1256 = vmatpush.msra.mxu0 0.0
  %1257 = vmatpush.msra.mxu0 0.0
  %1258 = vmatpush.msra.mxu0 0.0
  %1259 = vmatpush.msra.mxu0 0.0
  %1260 = vmatpush.msra.mxu0 0.0
  %1261 = vmatpush.msra.mxu0 0.0
  %1262 = vmatpush.msra.mxu0 0.0
  %1263 = vmatpush.msra.mxu0 0.0
  %1264 = vmatpush.msra.mxu0 0.0
  %1265 = vmatpush.msra.mxu0 0.0
  %1266 = vmatpush.msra.mxu0 0.0
  %1267 = vmatpush.msra.mxu0 0.0
  %1268 = vmatpush.msra.mxu0 %v1243
  %1269 = vmatmul.f32.gmra.mxu0 %v1245
  %v1270 = vpop.f32.mrf.mxu0
  %v1271 = vadd.f32 0.0, %v1270
  %1272 = vmatmul.f32.gmra.mxu0 %v1248
  %v1273 = vpop.f32.mrf.mxu0
  %v1274 = vadd.f32 0.0, %v1273
  %1275 = vmatmul.f32.gmra.mxu0 %v1251
  %v1276 = vpop.f32.mrf.mxu0
  %v1277 = vadd.f32 0.0, %v1276
  %1278 = vdwg.mxu0
  %v1280 = vsel %vm750, %v862, 0
  %v1283 = vsel %vm750, %v865, 0
  %v1286 = vsel %vm750, %v868, 0
  %1288 = vmatpush.msra.mxu0 0.0
  %1289 = vmatpush.msra.mxu0 0.0
  %1290 = vmatpush.msra.mxu0 0.0
  %1291 = vmatpush.msra.mxu0 0.0
  %1292 = vmatpush.msra.mxu0 0.0
  %1293 = vmatpush.msra.mxu0 0.0
  %1294 = vmatpush.msra.mxu0 0.0
  %1295 = vmatpush.msra.mxu0 0.0
  %1296 = vmatpush.msra.mxu0 0.0
  %1297 = vmatpush.msra.mxu0 0.0
  %1298 = vmatpush.msra.mxu0 0.0
  %1299 = vmatpush.msra.mxu0 0.0
  %1300 = vmatpush.msra.mxu0 0.0
  %1301 = vmatpush.msra.mxu0 0.0
  %1302 = vmatpush.msra.mxu0 0.0
  %1303 = vmatpush.msra.mxu0 %v870
  %1304 = vmatmul.f32.gmra.mxu0 %v1280
  %v1305 = vpop.f32.mrf.mxu0
  %v1306 = vadd.f32 %v1271, %v1305
  %1307 = vmatmul.f32.gmra.mxu0 %v1283
  %v1308 = vpop.f32.mrf.mxu0
  %v1309 = vadd.f32 %v1274, %v1308
  %1310 = vmatmul.f32.gmra.mxu0 %v1286
  %v1311 = vpop.f32.mrf.mxu0
  %v1312 = vadd.f32 %v1277, %v1311
  %1313 = vdwg.mxu0
  %v1315 = vsel %vm750, %v1026, 0
  %v1318 = vsel %vm750, %v1029, 0
  %v1321 = vsel %vm750, %v1032, 0
  %v1324 = vsel %vm750, %v1071, 0
  %v1327 = vsel %vm750, %v1074, 0
  %v1330 = vsel %vm750, %v1077, 0
  %1332 = vmatpush.xpose.msra.mxu0 0.0
  %1333 = vmatpush.xpose.msra.mxu0 0.0
  %1334 = vmatpush.xpose.msra.mxu0 0.0
  %1335 = vmatpush.xpose.msra.mxu0 0.0
  %1336 = vmatpush.xpose.msra.mxu0 0.0
  %1337 = vmatpush.xpose.msra.mxu0 0.0
  %1338 = vmatpush.xpose.msra.mxu0 0.0
  %1339 = vmatpush.xpose.msra.mxu0 0.0
  %1340 = vmatpush.xpose.msra.mxu0 0.0
  %1341 = vmatpush.xpose.msra.mxu0 0.0
  %1342 = vmatpush.xpose.msra.mxu0 0.0
  %1343 = vmatpush.xpose.msra.mxu0 0.0
  %1344 = vmatpush.xpose.msra.mxu0 0.0
  %1345 = vmatpush.xpose.msra.mxu0 %v1330
  %1346 = vmatpush.xpose.msra.mxu0 %v1327
  %1347 = vmatpush.xpose.msra.mxu0 %v1324
  %1348 = vmatmul.f32.gmra.mxu0 %v1315
  %v1349 = vpop.f32.mrf.mxu0
  %v1350 = vadd.f32 0.0, %v1349
  %1351 = vmatmul.f32.gmra.mxu0 %v1318
  %v1352 = vpop.f32.mrf.mxu0
  %v1353 = vadd.f32 0.0, %v1352
  %1354 = vmatmul.f32.gmra.mxu0 %v1321
  %v1355 = vpop.f32.mrf.mxu0
  %v1356 = vadd.f32 0.0, %v1355
  %1357 = vdwg.mxu0
  %v1358 = vmul.f32 %v1350, 0.35355338
  %v1359 = vmul.f32 %v1353, 0.35355338
  %v1360 = vmul.f32 %v1356, 0.35355338
  %v1361 = vsel %vm448, %v1358, -1e+30
  %v1362 = vsel %vm449, %v1359, -1e+30
  %v1363 = vsel %vm450, %v1360, -1e+30
  %v1364 = vsel %vm801, %v1361, -inf
  %1365 = vmax.xlane.f32.xlu0 %v1364
  %v1366 = vpop.xlane.xlu0 %1365
  %v1367 = vsel %vm801, %v1362, -inf
  %1368 = vmax.xlane.f32.xlu0 %v1367
  %v1369 = vpop.xlane.xlu0 %1368
  %v1370 = vsel %vm801, %v1363, -inf
  %1371 = vmax.xlane.f32.xlu0 %v1370
  %v1372 = vpop.xlane.xlu0 %1371
  %v1373 = vsub.f32 %v1361, %v1366
  %v1374 = vsub.f32 %v1362, %v1369
  %v1375 = vsub.f32 %v1363, %v1372
  %v1376 = vmul.f32 %v1373, 1.442695
  %v1377 = vpow.pop %v1376
  %v1378 = vmul.f32 %v1374, 1.442695
  %v1379 = vpow.pop %v1378
  %v1380 = vmul.f32 %v1375, 1.442695
  %v1381 = vpow.pop %v1380
  %v1382 = vsel %vm801, %v1377, 0.0
  %1383 = vadd.xlane.f32.xlu0 %v1382
  %v1384 = vpop.xlane.xlu0 %1383
  %v1385 = vsel %vm801, %v1379, 0.0
  %1386 = vadd.xlane.f32.xlu0 %v1385
  %v1387 = vpop.xlane.xlu0 %1386
  %v1388 = vsel %vm801, %v1381, 0.0
  %1389 = vadd.xlane.f32.xlu0 %v1388
  %v1390 = vpop.xlane.xlu0 %1389
  %v1391 = vrcp.pop %v1384
  %v1392 = vrcp.pop %v1387
  %v1393 = vrcp.pop %v1390
  %v1394 = vmul.f32 %v1377, %v1391
  %v1395 = vmul.f32 %v1379, %v1392
  %v1396 = vmul.f32 %v1381, %v1393
  %v1398 = vsel %vm801, %v1394, 0
  %v1401 = vsel %vm801, %v1395, 0
  %v1404 = vsel %vm801, %v1396, 0
  %1406 = vmatpush.msra.mxu0 0.0
  %1407 = vmatpush.msra.mxu0 0.0
  %1408 = vmatpush.msra.mxu0 0.0
  %1409 = vmatpush.msra.mxu0 0.0
  %1410 = vmatpush.msra.mxu0 0.0
  %1411 = vmatpush.msra.mxu0 0.0
  %1412 = vmatpush.msra.mxu0 0.0
  %1413 = vmatpush.msra.mxu0 0.0
  %1414 = vmatpush.msra.mxu0 0.0
  %1415 = vmatpush.msra.mxu0 0.0
  %1416 = vmatpush.msra.mxu0 0.0
  %1417 = vmatpush.msra.mxu0 0.0
  %1418 = vmatpush.msra.mxu0 0.0
  %1419 = vmatpush.msra.mxu0 %v1122
  %1420 = vmatpush.msra.mxu0 %v1119
  %1421 = vmatpush.msra.mxu0 %v1116
  %1422 = vmatmul.f32.gmra.mxu0 %v1398
  %v1423 = vpop.f32.mrf.mxu0
  %v1424 = vadd.f32 0.0, %v1423
  %1425 = vmatmul.f32.gmra.mxu0 %v1401
  %v1426 = vpop.f32.mrf.mxu0
  %v1427 = vadd.f32 0.0, %v1426
  %1428 = vmatmul.f32.gmra.mxu0 %v1404
  %v1429 = vpop.f32.mrf.mxu0
  %v1430 = vadd.f32 0.0, %v1429
  %1431 = vdwg.mxu0
  %v1433 = vsel %vm750, %v1424, 0
  %v1436 = vsel %vm750, %v1427, 0
  %v1439 = vsel %vm750, %v1430, 0
  %1441 = vmatpush.msra.mxu0 0.0
  %1442 = vmatpush.msra.mxu0 0.0
  %1443 = vmatpush.msra.mxu0 0.0
  %1444 = vmatpush.msra.mxu0 0.0
  %1445 = vmatpush.msra.mxu0 0.0
  %1446 = vmatpush.msra.mxu0 0.0
  %1447 = vmatpush.msra.mxu0 0.0
  %1448 = vmatpush.msra.mxu0 0.0
  %1449 = vmatpush.msra.mxu0 0.0
  %1450 = vmatpush.msra.mxu0 0.0
  %1451 = vmatpush.msra.mxu0 0.0
  %1452 = vmatpush.msra.mxu0 0.0
  %1453 = vmatpush.msra.mxu0 0.0
  %1454 = vmatpush.msra.mxu0 0.0
  %1455 = vmatpush.msra.mxu0 0.0
  %1456 = vmatpush.msra.mxu0 %v1243
  %1457 = vmatmul.f32.gmra.mxu0 %v1433
  %v1458 = vpop.f32.mrf.mxu0
  %v1459 = vadd.f32 0.0, %v1458
  %1460 = vmatmul.f32.gmra.mxu0 %v1436
  %v1461 = vpop.f32.mrf.mxu0
  %v1462 = vadd.f32 0.0, %v1461
  %1463 = vmatmul.f32.gmra.mxu0 %v1439
  %v1464 = vpop.f32.mrf.mxu0
  %v1465 = vadd.f32 0.0, %v1464
  %1466 = vdwg.mxu0
  %v1468 = vsel %vm750, %v981, 0
  %v1471 = vsel %vm750, %v984, 0
  %v1474 = vsel %vm750, %v987, 0
  %1476 = vmatpush.msra.mxu0 0.0
  %1477 = vmatpush.msra.mxu0 0.0
  %1478 = vmatpush.msra.mxu0 0.0
  %1479 = vmatpush.msra.mxu0 0.0
  %1480 = vmatpush.msra.mxu0 0.0
  %1481 = vmatpush.msra.mxu0 0.0
  %1482 = vmatpush.msra.mxu0 0.0
  %1483 = vmatpush.msra.mxu0 0.0
  %1484 = vmatpush.msra.mxu0 0.0
  %1485 = vmatpush.msra.mxu0 0.0
  %1486 = vmatpush.msra.mxu0 0.0
  %1487 = vmatpush.msra.mxu0 0.0
  %1488 = vmatpush.msra.mxu0 0.0
  %1489 = vmatpush.msra.mxu0 0.0
  %1490 = vmatpush.msra.mxu0 0.0
  %1491 = vmatpush.msra.mxu0 %v870
  %1492 = vmatmul.f32.gmra.mxu0 %v1468
  %v1493 = vpop.f32.mrf.mxu0
  %v1494 = vadd.f32 %v1459, %v1493
  %1495 = vmatmul.f32.gmra.mxu0 %v1471
  %v1496 = vpop.f32.mrf.mxu0
  %v1497 = vadd.f32 %v1462, %v1496
  %1498 = vmatmul.f32.gmra.mxu0 %v1474
  %v1499 = vpop.f32.mrf.mxu0
  %v1500 = vadd.f32 %v1465, %v1499
  %1501 = vdwg.mxu0
  %s1502 = scalar_lea.vmem %s33, 64
  %v1503 = vld [vmem:[%s1502] sm:$0xff]
  %v1504 = vld [vmem:[%s1502 + $0x8] sm:$0xff]
  %v1505 = vld [vmem:[%s1502 + $0x10] sm:$0xff]
  %v1506 = vld [vmem:[%s1502 + $0x18] sm:$0xff]
  %s1507 = scalar_lea.vmem %s35, 2
  %v1508 = vld [vmem:[%s1507] sm:$0x1]
  %v1510 = vperm.slane %v1508, 0
  %1512 = vmatpush.msra.mxu0 0.0
  %1513 = vmatpush.msra.mxu0 0.0
  %1514 = vmatpush.msra.mxu0 0.0
  %1515 = vmatpush.msra.mxu0 0.0
  %1516 = vmatpush.msra.mxu0 0.0
  %1517 = vmatpush.msra.mxu0 0.0
  %1518 = vmatpush.msra.mxu0 0.0
  %1519 = vmatpush.msra.mxu0 0.0
  %1520 = vmatpush.msra.mxu0 0.0
  %1521 = vmatpush.msra.mxu0 0.0
  %1522 = vmatpush.msra.mxu0 0.0
  %1523 = vmatpush.msra.mxu0 0.0
  %1524 = vmatpush.msra.mxu0 %v1506
  %1525 = vmatpush.msra.mxu0 %v1505
  %1526 = vmatpush.msra.mxu0 %v1504
  %1527 = vmatpush.msra.mxu0 %v1503
  %1528 = vmatmul.f32.gmra.mxu0 %v612
  %v1529 = vpop.f32.mrf.mxu0
  %v1530 = vadd.f32 %v1510, %v1529
  %1531 = vmatmul.f32.gmra.mxu0 %v615
  %v1532 = vpop.f32.mrf.mxu0
  %v1533 = vadd.f32 %v1510, %v1532
  %1534 = vmatmul.f32.gmra.mxu0 %v618
  %v1535 = vpop.f32.mrf.mxu0
  %v1536 = vadd.f32 %v1510, %v1535
  %1537 = vmatmul.f32.gmra.mxu0 %v621
  %v1538 = vpop.f32.mrf.mxu0
  %v1539 = vadd.f32 %v1510, %v1538
  %1540 = vmatmul.f32.gmra.mxu0 %v624
  %v1541 = vpop.f32.mrf.mxu0
  %v1542 = vadd.f32 %v1510, %v1541
  %1543 = vmatmul.f32.gmra.mxu0 %v627
  %v1544 = vpop.f32.mrf.mxu0
  %v1545 = vadd.f32 %v1510, %v1544
  %1546 = vdwg.mxu0
  %s1547 = scalar_lea.vmem %s37, 64
  %v1548 = vld [vmem:[%s1547] sm:$0xff]
  %v1549 = vld [vmem:[%s1547 + $0x8] sm:$0xff]
  %v1550 = vld [vmem:[%s1547 + $0x10] sm:$0xff]
  %v1551 = vld [vmem:[%s1547 + $0x18] sm:$0xff]
  %s1552 = scalar_lea.vmem %s39, 2
  %v1553 = vld [vmem:[%s1552] sm:$0x1]
  %v1555 = vperm.slane %v1553, 0
  %1557 = vmatpush.msra.mxu0 0.0
  %1558 = vmatpush.msra.mxu0 0.0
  %1559 = vmatpush.msra.mxu0 0.0
  %1560 = vmatpush.msra.mxu0 0.0
  %1561 = vmatpush.msra.mxu0 0.0
  %1562 = vmatpush.msra.mxu0 0.0
  %1563 = vmatpush.msra.mxu0 0.0
  %1564 = vmatpush.msra.mxu0 0.0
  %1565 = vmatpush.msra.mxu0 0.0
  %1566 = vmatpush.msra.mxu0 0.0
  %1567 = vmatpush.msra.mxu0 0.0
  %1568 = vmatpush.msra.mxu0 0.0
  %1569 = vmatpush.msra.mxu0 %v1551
  %1570 = vmatpush.msra.mxu0 %v1550
  %1571 = vmatpush.msra.mxu0 %v1549
  %1572 = vmatpush.msra.mxu0 %v1548
  %1573 = vmatmul.f32.gmra.mxu0 %v612
  %v1574 = vpop.f32.mrf.mxu0
  %v1575 = vadd.f32 %v1555, %v1574
  %1576 = vmatmul.f32.gmra.mxu0 %v615
  %v1577 = vpop.f32.mrf.mxu0
  %v1578 = vadd.f32 %v1555, %v1577
  %1579 = vmatmul.f32.gmra.mxu0 %v618
  %v1580 = vpop.f32.mrf.mxu0
  %v1581 = vadd.f32 %v1555, %v1580
  %1582 = vmatmul.f32.gmra.mxu0 %v621
  %v1583 = vpop.f32.mrf.mxu0
  %v1584 = vadd.f32 %v1555, %v1583
  %1585 = vmatmul.f32.gmra.mxu0 %v624
  %v1586 = vpop.f32.mrf.mxu0
  %v1587 = vadd.f32 %v1555, %v1586
  %1588 = vmatmul.f32.gmra.mxu0 %v627
  %v1589 = vpop.f32.mrf.mxu0
  %v1590 = vadd.f32 %v1555, %v1589
  %1591 = vdwg.mxu0
  %s1592 = scalar_lea.vmem %s41, 64
  %v1593 = vld [vmem:[%s1592] sm:$0xff]
  %v1594 = vld [vmem:[%s1592 + $0x8] sm:$0xff]
  %v1595 = vld [vmem:[%s1592 + $0x10] sm:$0xff]
  %v1596 = vld [vmem:[%s1592 + $0x18] sm:$0xff]
  %s1597 = scalar_lea.vmem %s43, 2
  %v1598 = vld [vmem:[%s1597] sm:$0x1]
  %v1600 = vperm.slane %v1598, 0
  %1602 = vmatpush.msra.mxu0 0.0
  %1603 = vmatpush.msra.mxu0 0.0
  %1604 = vmatpush.msra.mxu0 0.0
  %1605 = vmatpush.msra.mxu0 0.0
  %1606 = vmatpush.msra.mxu0 0.0
  %1607 = vmatpush.msra.mxu0 0.0
  %1608 = vmatpush.msra.mxu0 0.0
  %1609 = vmatpush.msra.mxu0 0.0
  %1610 = vmatpush.msra.mxu0 0.0
  %1611 = vmatpush.msra.mxu0 0.0
  %1612 = vmatpush.msra.mxu0 0.0
  %1613 = vmatpush.msra.mxu0 0.0
  %1614 = vmatpush.msra.mxu0 %v1596
  %1615 = vmatpush.msra.mxu0 %v1595
  %1616 = vmatpush.msra.mxu0 %v1594
  %1617 = vmatpush.msra.mxu0 %v1593
  %1618 = vmatmul.f32.gmra.mxu0 %v612
  %v1619 = vpop.f32.mrf.mxu0
  %v1620 = vadd.f32 %v1600, %v1619
  %1621 = vmatmul.f32.gmra.mxu0 %v615
  %v1622 = vpop.f32.mrf.mxu0
  %v1623 = vadd.f32 %v1600, %v1622
  %1624 = vmatmul.f32.gmra.mxu0 %v618
  %v1625 = vpop.f32.mrf.mxu0
  %v1626 = vadd.f32 %v1600, %v1625
  %1627 = vmatmul.f32.gmra.mxu0 %v621
  %v1628 = vpop.f32.mrf.mxu0
  %v1629 = vadd.f32 %v1600, %v1628
  %1630 = vmatmul.f32.gmra.mxu0 %v624
  %v1631 = vpop.f32.mrf.mxu0
  %v1632 = vadd.f32 %v1600, %v1631
  %1633 = vmatmul.f32.gmra.mxu0 %v627
  %v1634 = vpop.f32.mrf.mxu0
  %v1635 = vadd.f32 %v1600, %v1634
  %1636 = vdwg.mxu0
  %v1638 = vsel %vm750, %v1530, 0
  %v1641 = vsel %vm750, %v1533, 0
  %v1644 = vsel %vm750, %v1536, 0
  %v1647 = vsel %vm750, %v1575, 0
  %v1650 = vsel %vm750, %v1578, 0
  %v1653 = vsel %vm750, %v1581, 0
  %1655 = vmatpush.xpose.msra.mxu0 0.0
  %1656 = vmatpush.xpose.msra.mxu0 0.0
  %1657 = vmatpush.xpose.msra.mxu0 0.0
  %1658 = vmatpush.xpose.msra.mxu0 0.0
  %1659 = vmatpush.xpose.msra.mxu0 0.0
  %1660 = vmatpush.xpose.msra.mxu0 0.0
  %1661 = vmatpush.xpose.msra.mxu0 0.0
  %1662 = vmatpush.xpose.msra.mxu0 0.0
  %1663 = vmatpush.xpose.msra.mxu0 0.0
  %1664 = vmatpush.xpose.msra.mxu0 0.0
  %1665 = vmatpush.xpose.msra.mxu0 0.0
  %1666 = vmatpush.xpose.msra.mxu0 0.0
  %1667 = vmatpush.xpose.msra.mxu0 0.0
  %1668 = vmatpush.xpose.msra.mxu0 %v1653
  %1669 = vmatpush.xpose.msra.mxu0 %v1650
  %1670 = vmatpush.xpose.msra.mxu0 %v1647
  %1671 = vmatmul.f32.gmra.mxu0 %v1638
  %v1672 = vpop.f32.mrf.mxu0
  %v1673 = vadd.f32 0.0, %v1672
  %1674 = vmatmul.f32.gmra.mxu0 %v1641
  %v1675 = vpop.f32.mrf.mxu0
  %v1676 = vadd.f32 0.0, %v1675
  %1677 = vmatmul.f32.gmra.mxu0 %v1644
  %v1678 = vpop.f32.mrf.mxu0
  %v1679 = vadd.f32 0.0, %v1678
  %1680 = vdwg.mxu0
  %v1681 = vmul.f32 %v1673, 0.35355338
  %v1682 = vmul.f32 %v1676, 0.35355338
  %v1683 = vmul.f32 %v1679, 0.35355338
  %v1684 = vsel %vm448, %v1681, -1e+30
  %v1685 = vsel %vm449, %v1682, -1e+30
  %v1686 = vsel %vm450, %v1683, -1e+30
  %v1687 = vsel %vm801, %v1684, -inf
  %1688 = vmax.xlane.f32.xlu0 %v1687
  %v1689 = vpop.xlane.xlu0 %1688
  %v1690 = vsel %vm801, %v1685, -inf
  %1691 = vmax.xlane.f32.xlu0 %v1690
  %v1692 = vpop.xlane.xlu0 %1691
  %v1693 = vsel %vm801, %v1686, -inf
  %1694 = vmax.xlane.f32.xlu0 %v1693
  %v1695 = vpop.xlane.xlu0 %1694
  %v1696 = vsub.f32 %v1684, %v1689
  %v1697 = vsub.f32 %v1685, %v1692
  %v1698 = vsub.f32 %v1686, %v1695
  %v1699 = vmul.f32 %v1696, 1.442695
  %v1700 = vpow.pop %v1699
  %v1701 = vmul.f32 %v1697, 1.442695
  %v1702 = vpow.pop %v1701
  %v1703 = vmul.f32 %v1698, 1.442695
  %v1704 = vpow.pop %v1703
  %v1705 = vsel %vm801, %v1700, 0.0
  %1706 = vadd.xlane.f32.xlu0 %v1705
  %v1707 = vpop.xlane.xlu0 %1706
  %v1708 = vsel %vm801, %v1702, 0.0
  %1709 = vadd.xlane.f32.xlu0 %v1708
  %v1710 = vpop.xlane.xlu0 %1709
  %v1711 = vsel %vm801, %v1704, 0.0
  %1712 = vadd.xlane.f32.xlu0 %v1711
  %v1713 = vpop.xlane.xlu0 %1712
  %v1714 = vrcp.pop %v1707
  %v1715 = vrcp.pop %v1710
  %v1716 = vrcp.pop %v1713
  %v1717 = vmul.f32 %v1700, %v1714
  %v1718 = vmul.f32 %v1702, %v1715
  %v1719 = vmul.f32 %v1704, %v1716
  %v1721 = vsel %vm801, %v1717, 0
  %v1724 = vsel %vm801, %v1718, 0
  %v1727 = vsel %vm801, %v1719, 0
  %1729 = vmatpush.msra.mxu0 0.0
  %1730 = vmatpush.msra.mxu0 0.0
  %1731 = vmatpush.msra.mxu0 0.0
  %1732 = vmatpush.msra.mxu0 0.0
  %1733 = vmatpush.msra.mxu0 0.0
  %1734 = vmatpush.msra.mxu0 0.0
  %1735 = vmatpush.msra.mxu0 0.0
  %1736 = vmatpush.msra.mxu0 0.0
  %1737 = vmatpush.msra.mxu0 0.0
  %1738 = vmatpush.msra.mxu0 0.0
  %1739 = vmatpush.msra.mxu0 0.0
  %1740 = vmatpush.msra.mxu0 0.0
  %1741 = vmatpush.msra.mxu0 0.0
  %1742 = vmatpush.msra.mxu0 %v1626
  %1743 = vmatpush.msra.mxu0 %v1623
  %1744 = vmatpush.msra.mxu0 %v1620
  %1745 = vmatmul.f32.gmra.mxu0 %v1721
  %v1746 = vpop.f32.mrf.mxu0
  %v1747 = vadd.f32 0.0, %v1746
  %1748 = vmatmul.f32.gmra.mxu0 %v1724
  %v1749 = vpop.f32.mrf.mxu0
  %v1750 = vadd.f32 0.0, %v1749
  %1751 = vmatmul.f32.gmra.mxu0 %v1727
  %v1752 = vpop.f32.mrf.mxu0
  %v1753 = vadd.f32 0.0, %v1752
  %1754 = vdwg.mxu0
  %s1755 = scalar_lea.vmem %s45, 16
  %v1756 = vld [vmem:[%s1755] sm:$0xff]
  %v1758 = vsel %vm750, %v1747, 0
  %v1761 = vsel %vm750, %v1750, 0
  %v1764 = vsel %vm750, %v1753, 0
  %1766 = vmatpush.msra.mxu0 0.0
  %1767 = vmatpush.msra.mxu0 0.0
  %1768 = vmatpush.msra.mxu0 0.0
  %1769 = vmatpush.msra.mxu0 0.0
  %1770 = vmatpush.msra.mxu0 0.0
  %1771 = vmatpush.msra.mxu0 0.0
  %1772 = vmatpush.msra.mxu0 0.0
  %1773 = vmatpush.msra.mxu0 0.0
  %1774 = vmatpush.msra.mxu0 0.0
  %1775 = vmatpush.msra.mxu0 0.0
  %1776 = vmatpush.msra.mxu0 0.0
  %1777 = vmatpush.msra.mxu0 0.0
  %1778 = vmatpush.msra.mxu0 0.0
  %1779 = vmatpush.msra.mxu0 0.0
  %1780 = vmatpush.msra.mxu0 0.0
  %1781 = vmatpush.msra.mxu0 %v1756
  %1782 = vmatmul.f32.gmra.mxu0 %v1758
  %v1783 = vpop.f32.mrf.mxu0
  %v1784 = vadd.f32 0.0, %v1783
  %1785 = vmatmul.f32.gmra.mxu0 %v1761
  %v1786 = vpop.f32.mrf.mxu0
  %v1787 = vadd.f32 0.0, %v1786
  %1788 = vmatmul.f32.gmra.mxu0 %v1764
  %v1789 = vpop.f32.mrf.mxu0
  %v1790 = vadd.f32 0.0, %v1789
  %1791 = vdwg.mxu0
  %v1792 = vadd.f32 %v1306, %v1784
  %v1793 = vadd.f32 %v1309, %v1787
  %v1794 = vadd.f32 %v1312, %v1790
  %v1796 = vsel %vm750, %v1539, 0
  %v1799 = vsel %vm750, %v1542, 0
  %v1802 = vsel %vm750, %v1545, 0
  %v1805 = vsel %vm750, %v1584, 0
  %v1808 = vsel %vm750, %v1587, 0
  %v1811 = vsel %vm750, %v1590, 0
  %1813 = vmatpush.xpose.msra.mxu0 0.0
  %1814 = vmatpush.xpose.msra.mxu0 0.0
  %1815 = vmatpush.xpose.msra.mxu0 0.0
  %1816 = vmatpush.xpose.msra.mxu0 0.0
  %1817 = vmatpush.xpose.msra.mxu0 0.0
  %1818 = vmatpush.xpose.msra.mxu0 0.0
  %1819 = vmatpush.xpose.msra.mxu0 0.0
  %1820 = vmatpush.xpose.msra.mxu0 0.0
  %1821 = vmatpush.xpose.msra.mxu0 0.0
  %1822 = vmatpush.xpose.msra.mxu0 0.0
  %1823 = vmatpush.xpose.msra.mxu0 0.0
  %1824 = vmatpush.xpose.msra.mxu0 0.0
  %1825 = vmatpush.xpose.msra.mxu0 0.0
  %1826 = vmatpush.xpose.msra.mxu0 %v1811
  %1827 = vmatpush.xpose.msra.mxu0 %v1808
  %1828 = vmatpush.xpose.msra.mxu0 %v1805
  %1829 = vmatmul.f32.gmra.mxu0 %v1796
  %v1830 = vpop.f32.mrf.mxu0
  %v1831 = vadd.f32 0.0, %v1830
  %1832 = vmatmul.f32.gmra.mxu0 %v1799
  %v1833 = vpop.f32.mrf.mxu0
  %v1834 = vadd.f32 0.0, %v1833
  %1835 = vmatmul.f32.gmra.mxu0 %v1802
  %v1836 = vpop.f32.mrf.mxu0
  %v1837 = vadd.f32 0.0, %v1836
  %1838 = vdwg.mxu0
  %v1839 = vmul.f32 %v1831, 0.35355338
  %v1840 = vmul.f32 %v1834, 0.35355338
  %v1841 = vmul.f32 %v1837, 0.35355338
  %v1842 = vsel %vm448, %v1839, -1e+30
  %v1843 = vsel %vm449, %v1840, -1e+30
  %v1844 = vsel %vm450, %v1841, -1e+30
  %v1845 = vsel %vm801, %v1842, -inf
  %1846 = vmax.xlane.f32.xlu0 %v1845
  %v1847 = vpop.xlane.xlu0 %1846
  %v1848 = vsel %vm801, %v1843, -inf
  %1849 = vmax.xlane.f32.xlu0 %v1848
  %v1850 = vpop.xlane.xlu0 %1849
  %v1851 = vsel %vm801, %v1844, -inf
  %1852 = vmax.xlane.f32.xlu0 %v1851
  %v1853 = vpop.xlane.xlu0 %1852
  %v1854 = vsub.f32 %v1842, %v1847
  %v1855 = vsub.f32 %v1843, %v1850
  %v1856 = vsub.f32 %v1844, %v1853
  %v1857 = vmul.f32 %v1854, 1.442695
  %v1858 = vpow.pop %v1857
  %v1859 = vmul.f32 %v1855, 1.442695
  %v1860 = vpow.pop %v1859
  %v1861 = vmul.f32 %v1856, 1.442695
  %v1862 = vpow.pop %v1861
  %v1863 = vsel %vm801, %v1858, 0.0
  %1864 = vadd.xlane.f32.xlu0 %v1863
  %v1865 = vpop.xlane.xlu0 %1864
  %v1866 = vsel %vm801, %v1860, 0.0
  %1867 = vadd.xlane.f32.xlu0 %v1866
  %v1868 = vpop.xlane.xlu0 %1867
  %v1869 = vsel %vm801, %v1862, 0.0
  %1870 = vadd.xlane.f32.xlu0 %v1869
  %v1871 = vpop.xlane.xlu0 %1870
  %v1872 = vrcp.pop %v1865
  %v1873 = vrcp.pop %v1868
  %v1874 = vrcp.pop %v1871
  %v1875 = vmul.f32 %v1858, %v1872
  %v1876 = vmul.f32 %v1860, %v1873
  %v1877 = vmul.f32 %v1862, %v1874
  %v1879 = vsel %vm801, %v1875, 0
  %v1882 = vsel %vm801, %v1876, 0
  %v1885 = vsel %vm801, %v1877, 0
  %1887 = vmatpush.msra.mxu0 0.0
  %1888 = vmatpush.msra.mxu0 0.0
  %1889 = vmatpush.msra.mxu0 0.0
  %1890 = vmatpush.msra.mxu0 0.0
  %1891 = vmatpush.msra.mxu0 0.0
  %1892 = vmatpush.msra.mxu0 0.0
  %1893 = vmatpush.msra.mxu0 0.0
  %1894 = vmatpush.msra.mxu0 0.0
  %1895 = vmatpush.msra.mxu0 0.0
  %1896 = vmatpush.msra.mxu0 0.0
  %1897 = vmatpush.msra.mxu0 0.0
  %1898 = vmatpush.msra.mxu0 0.0
  %1899 = vmatpush.msra.mxu0 0.0
  %1900 = vmatpush.msra.mxu0 %v1635
  %1901 = vmatpush.msra.mxu0 %v1632
  %1902 = vmatpush.msra.mxu0 %v1629
  %1903 = vmatmul.f32.gmra.mxu0 %v1879
  %v1904 = vpop.f32.mrf.mxu0
  %v1905 = vadd.f32 0.0, %v1904
  %1906 = vmatmul.f32.gmra.mxu0 %v1882
  %v1907 = vpop.f32.mrf.mxu0
  %v1908 = vadd.f32 0.0, %v1907
  %1909 = vmatmul.f32.gmra.mxu0 %v1885
  %v1910 = vpop.f32.mrf.mxu0
  %v1911 = vadd.f32 0.0, %v1910
  %1912 = vdwg.mxu0
  %v1914 = vsel %vm750, %v1905, 0
  %v1917 = vsel %vm750, %v1908, 0
  %v1920 = vsel %vm750, %v1911, 0
  %1922 = vmatpush.msra.mxu0 0.0
  %1923 = vmatpush.msra.mxu0 0.0
  %1924 = vmatpush.msra.mxu0 0.0
  %1925 = vmatpush.msra.mxu0 0.0
  %1926 = vmatpush.msra.mxu0 0.0
  %1927 = vmatpush.msra.mxu0 0.0
  %1928 = vmatpush.msra.mxu0 0.0
  %1929 = vmatpush.msra.mxu0 0.0
  %1930 = vmatpush.msra.mxu0 0.0
  %1931 = vmatpush.msra.mxu0 0.0
  %1932 = vmatpush.msra.mxu0 0.0
  %1933 = vmatpush.msra.mxu0 0.0
  %1934 = vmatpush.msra.mxu0 0.0
  %1935 = vmatpush.msra.mxu0 0.0
  %1936 = vmatpush.msra.mxu0 0.0
  %1937 = vmatpush.msra.mxu0 %v1756
  %1938 = vmatmul.f32.gmra.mxu0 %v1914
  %v1939 = vpop.f32.mrf.mxu0
  %v1940 = vadd.f32 0.0, %v1939
  %1941 = vmatmul.f32.gmra.mxu0 %v1917
  %v1942 = vpop.f32.mrf.mxu0
  %v1943 = vadd.f32 0.0, %v1942
  %1944 = vmatmul.f32.gmra.mxu0 %v1920
  %v1945 = vpop.f32.mrf.mxu0
  %v1946 = vadd.f32 0.0, %v1945
  %1947 = vdwg.mxu0
  %v1948 = vadd.f32 %v1494, %v1940
  %v1949 = vadd.f32 %v1497, %v1943
  %v1950 = vadd.f32 %v1500, %v1946
  %s1951 = scalar_lea.vmem %s33, 96
  %v1952 = vld [vmem:[%s1951] sm:$0xff]
  %v1953 = vld [vmem:[%s1951 + $0x8] sm:$0xff]
  %v1954 = vld [vmem:[%s1951 + $0x10] sm:$0xff]
  %v1955 = vld [vmem:[%s1951 + $0x18] sm:$0xff]
  %s1956 = scalar_lea.vmem %s35, 3
  %v1957 = vld [vmem:[%s1956] sm:$0x1]
  %v1959 = vperm.slane %v1957, 0
  %1961 = vmatpush.msra.mxu0 0.0
  %1962 = vmatpush.msra.mxu0 0.0
  %1963 = vmatpush.msra.mxu0 0.0
  %1964 = vmatpush.msra.mxu0 0.0
  %1965 = vmatpush.msra.mxu0 0.0
  %1966 = vmatpush.msra.mxu0 0.0
  %1967 = vmatpush.msra.mxu0 0.0
  %1968 = vmatpush.msra.mxu0 0.0
  %1969 = vmatpush.msra.mxu0 0.0
  %1970 = vmatpush.msra.mxu0 0.0
  %1971 = vmatpush.msra.mxu0 0.0
  %1972 = vmatpush.msra.mxu0 0.0
  %1973 = vmatpush.msra.mxu0 %v1955
  %1974 = vmatpush.msra.mxu0 %v1954
  %1975 = vmatpush.msra.mxu0 %v1953
  %1976 = vmatpush.msra.mxu0 %v1952
  %1977 = vmatmul.f32.gmra.mxu0 %v612
  %v1978 = vpop.f32.mrf.mxu0
  %v1979 = vadd.f32 %v1959, %v1978
  %1980 = vmatmul.f32.gmra.mxu0 %v615
  %v1981 = vpop.f32.mrf.mxu0
  %v1982 = vadd.f32 %v1959, %v1981
  %1983 = vmatmul.f32.gmra.mxu0 %v618
  %v1984 = vpop.f32.mrf.mxu0
  %v1985 = vadd.f32 %v1959, %v1984
  %1986 = vmatmul.f32.gmra.mxu0 %v621
  %v1987 = vpop.f32.mrf.mxu0
  %v1988 = vadd.f32 %v1959, %v1987
  %1989 = vmatmul.f32.gmra.mxu0 %v624
  %v1990 = vpop.f32.mrf.mxu0
  %v1991 = vadd.f32 %v1959, %v1990
  %1992 = vmatmul.f32.gmra.mxu0 %v627
  %v1993 = vpop.f32.mrf.mxu0
  %v1994 = vadd.f32 %v1959, %v1993
  %1995 = vdwg.mxu0
  %s1996 = scalar_lea.vmem %s37, 96
  %v1997 = vld [vmem:[%s1996] sm:$0xff]
  %v1998 = vld [vmem:[%s1996 + $0x8] sm:$0xff]
  %v1999 = vld [vmem:[%s1996 + $0x10] sm:$0xff]
  %v2000 = vld [vmem:[%s1996 + $0x18] sm:$0xff]
  %s2001 = scalar_lea.vmem %s39, 3
  %v2002 = vld [vmem:[%s2001] sm:$0x1]
  %v2004 = vperm.slane %v2002, 0
  %2006 = vmatpush.msra.mxu0 0.0
  %2007 = vmatpush.msra.mxu0 0.0
  %2008 = vmatpush.msra.mxu0 0.0
  %2009 = vmatpush.msra.mxu0 0.0
  %2010 = vmatpush.msra.mxu0 0.0
  %2011 = vmatpush.msra.mxu0 0.0
  %2012 = vmatpush.msra.mxu0 0.0
  %2013 = vmatpush.msra.mxu0 0.0
  %2014 = vmatpush.msra.mxu0 0.0
  %2015 = vmatpush.msra.mxu0 0.0
  %2016 = vmatpush.msra.mxu0 0.0
  %2017 = vmatpush.msra.mxu0 0.0
  %2018 = vmatpush.msra.mxu0 %v2000
  %2019 = vmatpush.msra.mxu0 %v1999
  %2020 = vmatpush.msra.mxu0 %v1998
  %2021 = vmatpush.msra.mxu0 %v1997
  %2022 = vmatmul.f32.gmra.mxu0 %v612
  %v2023 = vpop.f32.mrf.mxu0
  %v2024 = vadd.f32 %v2004, %v2023
  %2025 = vmatmul.f32.gmra.mxu0 %v615
  %v2026 = vpop.f32.mrf.mxu0
  %v2027 = vadd.f32 %v2004, %v2026
  %2028 = vmatmul.f32.gmra.mxu0 %v618
  %v2029 = vpop.f32.mrf.mxu0
  %v2030 = vadd.f32 %v2004, %v2029
  %2031 = vmatmul.f32.gmra.mxu0 %v621
  %v2032 = vpop.f32.mrf.mxu0
  %v2033 = vadd.f32 %v2004, %v2032
  %2034 = vmatmul.f32.gmra.mxu0 %v624
  %v2035 = vpop.f32.mrf.mxu0
  %v2036 = vadd.f32 %v2004, %v2035
  %2037 = vmatmul.f32.gmra.mxu0 %v627
  %v2038 = vpop.f32.mrf.mxu0
  %v2039 = vadd.f32 %v2004, %v2038
  %2040 = vdwg.mxu0
  %s2041 = scalar_lea.vmem %s41, 96
  %v2042 = vld [vmem:[%s2041] sm:$0xff]
  %v2043 = vld [vmem:[%s2041 + $0x8] sm:$0xff]
  %v2044 = vld [vmem:[%s2041 + $0x10] sm:$0xff]
  %v2045 = vld [vmem:[%s2041 + $0x18] sm:$0xff]
  %s2046 = scalar_lea.vmem %s43, 3
  %v2047 = vld [vmem:[%s2046] sm:$0x1]
  %v2049 = vperm.slane %v2047, 0
  %2051 = vmatpush.msra.mxu0 0.0
  %2052 = vmatpush.msra.mxu0 0.0
  %2053 = vmatpush.msra.mxu0 0.0
  %2054 = vmatpush.msra.mxu0 0.0
  %2055 = vmatpush.msra.mxu0 0.0
  %2056 = vmatpush.msra.mxu0 0.0
  %2057 = vmatpush.msra.mxu0 0.0
  %2058 = vmatpush.msra.mxu0 0.0
  %2059 = vmatpush.msra.mxu0 0.0
  %2060 = vmatpush.msra.mxu0 0.0
  %2061 = vmatpush.msra.mxu0 0.0
  %2062 = vmatpush.msra.mxu0 0.0
  %2063 = vmatpush.msra.mxu0 %v2045
  %2064 = vmatpush.msra.mxu0 %v2044
  %2065 = vmatpush.msra.mxu0 %v2043
  %2066 = vmatpush.msra.mxu0 %v2042
  %2067 = vmatmul.f32.gmra.mxu0 %v612
  %v2068 = vpop.f32.mrf.mxu0
  %v2069 = vadd.f32 %v2049, %v2068
  %2070 = vmatmul.f32.gmra.mxu0 %v615
  %v2071 = vpop.f32.mrf.mxu0
  %v2072 = vadd.f32 %v2049, %v2071
  %2073 = vmatmul.f32.gmra.mxu0 %v618
  %v2074 = vpop.f32.mrf.mxu0
  %v2075 = vadd.f32 %v2049, %v2074
  %2076 = vmatmul.f32.gmra.mxu0 %v621
  %v2077 = vpop.f32.mrf.mxu0
  %v2078 = vadd.f32 %v2049, %v2077
  %2079 = vmatmul.f32.gmra.mxu0 %v624
  %v2080 = vpop.f32.mrf.mxu0
  %v2081 = vadd.f32 %v2049, %v2080
  %2082 = vmatmul.f32.gmra.mxu0 %v627
  %v2083 = vpop.f32.mrf.mxu0
  %v2084 = vadd.f32 %v2049, %v2083
  %2085 = vdwg.mxu0
  %v2087 = vsel %vm750, %v1979, 0
  %v2090 = vsel %vm750, %v1982, 0
  %v2093 = vsel %vm750, %v1985, 0
  %v2096 = vsel %vm750, %v2024, 0
  %v2099 = vsel %vm750, %v2027, 0
  %v2102 = vsel %vm750, %v2030, 0
  %2104 = vmatpush.xpose.msra.mxu0 0.0
  %2105 = vmatpush.xpose.msra.mxu0 0.0
  %2106 = vmatpush.xpose.msra.mxu0 0.0
  %2107 = vmatpush.xpose.msra.mxu0 0.0
  %2108 = vmatpush.xpose.msra.mxu0 0.0
  %2109 = vmatpush.xpose.msra.mxu0 0.0
  %2110 = vmatpush.xpose.msra.mxu0 0.0
  %2111 = vmatpush.xpose.msra.mxu0 0.0
  %2112 = vmatpush.xpose.msra.mxu0 0.0
  %2113 = vmatpush.xpose.msra.mxu0 0.0
  %2114 = vmatpush.xpose.msra.mxu0 0.0
  %2115 = vmatpush.xpose.msra.mxu0 0.0
  %2116 = vmatpush.xpose.msra.mxu0 0.0
  %2117 = vmatpush.xpose.msra.mxu0 %v2102
  %2118 = vmatpush.xpose.msra.mxu0 %v2099
  %2119 = vmatpush.xpose.msra.mxu0 %v2096
  %2120 = vmatmul.f32.gmra.mxu0 %v2087
  %v2121 = vpop.f32.mrf.mxu0
  %v2122 = vadd.f32 0.0, %v2121
  %2123 = vmatmul.f32.gmra.mxu0 %v2090
  %v2124 = vpop.f32.mrf.mxu0
  %v2125 = vadd.f32 0.0, %v2124
  %2126 = vmatmul.f32.gmra.mxu0 %v2093
  %v2127 = vpop.f32.mrf.mxu0
  %v2128 = vadd.f32 0.0, %v2127
  %2129 = vdwg.mxu0
  %v2130 = vmul.f32 %v2122, 0.35355338
  %v2131 = vmul.f32 %v2125, 0.35355338
  %v2132 = vmul.f32 %v2128, 0.35355338
  %v2133 = vsel %vm448, %v2130, -1e+30
  %v2134 = vsel %vm449, %v2131, -1e+30
  %v2135 = vsel %vm450, %v2132, -1e+30
  %v2136 = vsel %vm801, %v2133, -inf
  %2137 = vmax.xlane.f32.xlu0 %v2136
  %v2138 = vpop.xlane.xlu0 %2137
  %v2139 = vsel %vm801, %v2134, -inf
  %2140 = vmax.xlane.f32.xlu0 %v2139
  %v2141 = vpop.xlane.xlu0 %2140
  %v2142 = vsel %vm801, %v2135, -inf
  %2143 = vmax.xlane.f32.xlu0 %v2142
  %v2144 = vpop.xlane.xlu0 %2143
  %v2145 = vsub.f32 %v2133, %v2138
  %v2146 = vsub.f32 %v2134, %v2141
  %v2147 = vsub.f32 %v2135, %v2144
  %v2148 = vmul.f32 %v2145, 1.442695
  %v2149 = vpow.pop %v2148
  %v2150 = vmul.f32 %v2146, 1.442695
  %v2151 = vpow.pop %v2150
  %v2152 = vmul.f32 %v2147, 1.442695
  %v2153 = vpow.pop %v2152
  %v2154 = vsel %vm801, %v2149, 0.0
  %2155 = vadd.xlane.f32.xlu0 %v2154
  %v2156 = vpop.xlane.xlu0 %2155
  %v2157 = vsel %vm801, %v2151, 0.0
  %2158 = vadd.xlane.f32.xlu0 %v2157
  %v2159 = vpop.xlane.xlu0 %2158
  %v2160 = vsel %vm801, %v2153, 0.0
  %2161 = vadd.xlane.f32.xlu0 %v2160
  %v2162 = vpop.xlane.xlu0 %2161
  %v2163 = vrcp.pop %v2156
  %v2164 = vrcp.pop %v2159
  %v2165 = vrcp.pop %v2162
  %v2166 = vmul.f32 %v2149, %v2163
  %v2167 = vmul.f32 %v2151, %v2164
  %v2168 = vmul.f32 %v2153, %v2165
  %v2170 = vsel %vm801, %v2166, 0
  %v2173 = vsel %vm801, %v2167, 0
  %v2176 = vsel %vm801, %v2168, 0
  %2178 = vmatpush.msra.mxu0 0.0
  %2179 = vmatpush.msra.mxu0 0.0
  %2180 = vmatpush.msra.mxu0 0.0
  %2181 = vmatpush.msra.mxu0 0.0
  %2182 = vmatpush.msra.mxu0 0.0
  %2183 = vmatpush.msra.mxu0 0.0
  %2184 = vmatpush.msra.mxu0 0.0
  %2185 = vmatpush.msra.mxu0 0.0
  %2186 = vmatpush.msra.mxu0 0.0
  %2187 = vmatpush.msra.mxu0 0.0
  %2188 = vmatpush.msra.mxu0 0.0
  %2189 = vmatpush.msra.mxu0 0.0
  %2190 = vmatpush.msra.mxu0 0.0
  %2191 = vmatpush.msra.mxu0 %v2075
  %2192 = vmatpush.msra.mxu0 %v2072
  %2193 = vmatpush.msra.mxu0 %v2069
  %2194 = vmatmul.f32.gmra.mxu0 %v2170
  %v2195 = vpop.f32.mrf.mxu0
  %v2196 = vadd.f32 0.0, %v2195
  %2197 = vmatmul.f32.gmra.mxu0 %v2173
  %v2198 = vpop.f32.mrf.mxu0
  %v2199 = vadd.f32 0.0, %v2198
  %2200 = vmatmul.f32.gmra.mxu0 %v2176
  %v2201 = vpop.f32.mrf.mxu0
  %v2202 = vadd.f32 0.0, %v2201
  %2203 = vdwg.mxu0
  %s2204 = scalar_lea.vmem %s45, 24
  %v2205 = vld [vmem:[%s2204] sm:$0xff]
  %v2207 = vsel %vm750, %v2196, 0
  %v2210 = vsel %vm750, %v2199, 0
  %v2213 = vsel %vm750, %v2202, 0
  %2215 = vmatpush.msra.mxu0 0.0
  %2216 = vmatpush.msra.mxu0 0.0
  %2217 = vmatpush.msra.mxu0 0.0
  %2218 = vmatpush.msra.mxu0 0.0
  %2219 = vmatpush.msra.mxu0 0.0
  %2220 = vmatpush.msra.mxu0 0.0
  %2221 = vmatpush.msra.mxu0 0.0
  %2222 = vmatpush.msra.mxu0 0.0
  %2223 = vmatpush.msra.mxu0 0.0
  %2224 = vmatpush.msra.mxu0 0.0
  %2225 = vmatpush.msra.mxu0 0.0
  %2226 = vmatpush.msra.mxu0 0.0
  %2227 = vmatpush.msra.mxu0 0.0
  %2228 = vmatpush.msra.mxu0 0.0
  %2229 = vmatpush.msra.mxu0 0.0
  %2230 = vmatpush.msra.mxu0 %v2205
  %2231 = vmatmul.f32.gmra.mxu0 %v2207
  %v2232 = vpop.f32.mrf.mxu0
  %v2233 = vadd.f32 0.0, %v2232
  %2234 = vmatmul.f32.gmra.mxu0 %v2210
  %v2235 = vpop.f32.mrf.mxu0
  %v2236 = vadd.f32 0.0, %v2235
  %2237 = vmatmul.f32.gmra.mxu0 %v2213
  %v2238 = vpop.f32.mrf.mxu0
  %v2239 = vadd.f32 0.0, %v2238
  %2240 = vdwg.mxu0
  %v2241 = vadd.f32 %v1792, %v2233
  %v2242 = vadd.f32 %v1793, %v2236
  %v2243 = vadd.f32 %v1794, %v2239
  %v2245 = vsel %vm750, %v1988, 0
  %v2248 = vsel %vm750, %v1991, 0
  %v2251 = vsel %vm750, %v1994, 0
  %v2254 = vsel %vm750, %v2033, 0
  %v2257 = vsel %vm750, %v2036, 0
  %v2260 = vsel %vm750, %v2039, 0
  %2262 = vmatpush.xpose.msra.mxu0 0.0
  %2263 = vmatpush.xpose.msra.mxu0 0.0
  %2264 = vmatpush.xpose.msra.mxu0 0.0
  %2265 = vmatpush.xpose.msra.mxu0 0.0
  %2266 = vmatpush.xpose.msra.mxu0 0.0
  %2267 = vmatpush.xpose.msra.mxu0 0.0
  %2268 = vmatpush.xpose.msra.mxu0 0.0
  %2269 = vmatpush.xpose.msra.mxu0 0.0
  %2270 = vmatpush.xpose.msra.mxu0 0.0
  %2271 = vmatpush.xpose.msra.mxu0 0.0
  %2272 = vmatpush.xpose.msra.mxu0 0.0
  %2273 = vmatpush.xpose.msra.mxu0 0.0
  %2274 = vmatpush.xpose.msra.mxu0 0.0
  %2275 = vmatpush.xpose.msra.mxu0 %v2260
  %2276 = vmatpush.xpose.msra.mxu0 %v2257
  %2277 = vmatpush.xpose.msra.mxu0 %v2254
  %2278 = vmatmul.f32.gmra.mxu0 %v2245
  %v2279 = vpop.f32.mrf.mxu0
  %v2280 = vadd.f32 0.0, %v2279
  %2281 = vmatmul.f32.gmra.mxu0 %v2248
  %v2282 = vpop.f32.mrf.mxu0
  %v2283 = vadd.f32 0.0, %v2282
  %2284 = vmatmul.f32.gmra.mxu0 %v2251
  %v2285 = vpop.f32.mrf.mxu0
  %v2286 = vadd.f32 0.0, %v2285
  %2287 = vdwg.mxu0
  %v2288 = vmul.f32 %v2280, 0.35355338
  %v2289 = vmul.f32 %v2283, 0.35355338
  %v2290 = vmul.f32 %v2286, 0.35355338
  %v2291 = vsel %vm448, %v2288, -1e+30
  %v2292 = vsel %vm449, %v2289, -1e+30
  %v2293 = vsel %vm450, %v2290, -1e+30
  %v2294 = vsel %vm801, %v2291, -inf
  %2295 = vmax.xlane.f32.xlu0 %v2294
  %v2296 = vpop.xlane.xlu0 %2295
  %v2297 = vsel %vm801, %v2292, -inf
  %2298 = vmax.xlane.f32.xlu0 %v2297
  %v2299 = vpop.xlane.xlu0 %2298
  %v2300 = vsel %vm801, %v2293, -inf
  %2301 = vmax.xlane.f32.xlu0 %v2300
  %v2302 = vpop.xlane.xlu0 %2301
  %v2303 = vsub.f32 %v2291, %v2296
  %v2304 = vsub.f32 %v2292, %v2299
  %v2305 = vsub.f32 %v2293, %v2302
  %v2306 = vmul.f32 %v2303, 1.442695
  %v2307 = vpow.pop %v2306
  %v2308 = vmul.f32 %v2304, 1.442695
  %v2309 = vpow.pop %v2308
  %v2310 = vmul.f32 %v2305, 1.442695
  %v2311 = vpow.pop %v2310
  %v2312 = vsel %vm801, %v2307, 0.0
  %2313 = vadd.xlane.f32.xlu0 %v2312
  %v2314 = vpop.xlane.xlu0 %2313
  %v2315 = vsel %vm801, %v2309, 0.0
  %2316 = vadd.xlane.f32.xlu0 %v2315
  %v2317 = vpop.xlane.xlu0 %2316
  %v2318 = vsel %vm801, %v2311, 0.0
  %2319 = vadd.xlane.f32.xlu0 %v2318
  %v2320 = vpop.xlane.xlu0 %2319
  %v2321 = vrcp.pop %v2314
  %v2322 = vrcp.pop %v2317
  %v2323 = vrcp.pop %v2320
  %v2324 = vmul.f32 %v2307, %v2321
  %v2325 = vmul.f32 %v2309, %v2322
  %v2326 = vmul.f32 %v2311, %v2323
  %v2328 = vsel %vm801, %v2324, 0
  %v2331 = vsel %vm801, %v2325, 0
  %v2334 = vsel %vm801, %v2326, 0
  %2336 = vmatpush.msra.mxu0 0.0
  %2337 = vmatpush.msra.mxu0 0.0
  %2338 = vmatpush.msra.mxu0 0.0
  %2339 = vmatpush.msra.mxu0 0.0
  %2340 = vmatpush.msra.mxu0 0.0
  %2341 = vmatpush.msra.mxu0 0.0
  %2342 = vmatpush.msra.mxu0 0.0
  %2343 = vmatpush.msra.mxu0 0.0
  %2344 = vmatpush.msra.mxu0 0.0
  %2345 = vmatpush.msra.mxu0 0.0
  %2346 = vmatpush.msra.mxu0 0.0
  %2347 = vmatpush.msra.mxu0 0.0
  %2348 = vmatpush.msra.mxu0 0.0
  %2349 = vmatpush.msra.mxu0 %v2084
  %2350 = vmatpush.msra.mxu0 %v2081
  %2351 = vmatpush.msra.mxu0 %v2078
  %2352 = vmatmul.f32.gmra.mxu0 %v2328
  %v2353 = vpop.f32.mrf.mxu0
  %v2354 = vadd.f32 0.0, %v2353
  %2355 = vmatmul.f32.gmra.mxu0 %v2331
  %v2356 = vpop.f32.mrf.mxu0
  %v2357 = vadd.f32 0.0, %v2356
  %2358 = vmatmul.f32.gmra.mxu0 %v2334
  %v2359 = vpop.f32.mrf.mxu0
  %v2360 = vadd.f32 0.0, %v2359
  %2361 = vdwg.mxu0
  %v2363 = vsel %vm750, %v2354, 0
  %v2366 = vsel %vm750, %v2357, 0
  %v2369 = vsel %vm750, %v2360, 0
  %2371 = vmatpush.msra.mxu0 0.0
  %2372 = vmatpush.msra.mxu0 0.0
  %2373 = vmatpush.msra.mxu0 0.0
  %2374 = vmatpush.msra.mxu0 0.0
  %2375 = vmatpush.msra.mxu0 0.0
  %2376 = vmatpush.msra.mxu0 0.0
  %2377 = vmatpush.msra.mxu0 0.0
  %2378 = vmatpush.msra.mxu0 0.0
  %2379 = vmatpush.msra.mxu0 0.0
  %2380 = vmatpush.msra.mxu0 0.0
  %2381 = vmatpush.msra.mxu0 0.0
  %2382 = vmatpush.msra.mxu0 0.0
  %2383 = vmatpush.msra.mxu0 0.0
  %2384 = vmatpush.msra.mxu0 0.0
  %2385 = vmatpush.msra.mxu0 0.0
  %2386 = vmatpush.msra.mxu0 %v2205
  %2387 = vmatmul.f32.gmra.mxu0 %v2363
  %v2388 = vpop.f32.mrf.mxu0
  %v2389 = vadd.f32 0.0, %v2388
  %2390 = vmatmul.f32.gmra.mxu0 %v2366
  %v2391 = vpop.f32.mrf.mxu0
  %v2392 = vadd.f32 0.0, %v2391
  %2393 = vmatmul.f32.gmra.mxu0 %v2369
  %v2394 = vpop.f32.mrf.mxu0
  %v2395 = vadd.f32 0.0, %v2394
  %2396 = vdwg.mxu0
  %v2397 = vadd.f32 %v1948, %v2389
  %v2398 = vadd.f32 %v1949, %v2392
  %v2399 = vadd.f32 %v1950, %v2395
  %v2400 = vld [vmem:[%s47] sm:$0x1]
  %v2402 = vperm.slane %v2400, 0
  %v2404 = vadd.f32 %v2241, %v2402
  %v2405 = vadd.f32 %v2242, %v2402
  %v2406 = vadd.f32 %v2243, %v2402
  %v2407 = vadd.f32 %v2397, %v2402
  %v2408 = vadd.f32 %v2398, %v2402
  %v2409 = vadd.f32 %v2399, %v2402
  %v2410 = vadd.f32 %v428, %v2404
  %v2411 = vadd.f32 %v429, %v2405
  %v2412 = vadd.f32 %v430, %v2406
  %v2413 = vadd.f32 %v431, %v2407
  %v2414 = vadd.f32 %v432, %v2408
  %v2415 = vadd.f32 %v433, %v2409
  %v2416 = vld [vmem:[%s49] sm:$0x1]
  %v2417 = vld [vmem:[%s51] sm:$0x1]
  %v2418 = vsel %vm267, %v2410, 0.0
  %2419 = vadd.xlane.f32.xlu0 %v2418
  %v2420 = vpop.xlane.xlu0 %2419
  %v2421 = vsel %vm267, %v2411, 0.0
  %2422 = vadd.xlane.f32.xlu0 %v2421
  %v2423 = vpop.xlane.xlu0 %2422
  %v2424 = vsel %vm267, %v2412, 0.0
  %2425 = vadd.xlane.f32.xlu0 %v2424
  %v2426 = vpop.xlane.xlu0 %2425
  %v2427 = vsel %vm267, %v2413, 0.0
  %2428 = vadd.xlane.f32.xlu0 %v2427
  %v2429 = vpop.xlane.xlu0 %2428
  %v2430 = vsel %vm267, %v2414, 0.0
  %2431 = vadd.xlane.f32.xlu0 %v2430
  %v2432 = vpop.xlane.xlu0 %2431
  %v2433 = vsel %vm267, %v2415, 0.0
  %2434 = vadd.xlane.f32.xlu0 %v2433
  %v2435 = vpop.xlane.xlu0 %2434
  %v2436 = vmul.f32 %v2420, %v292
  %v2437 = vmul.f32 %v2423, %v292
  %v2438 = vmul.f32 %v2426, %v292
  %v2439 = vmul.f32 %v2429, %v292
  %v2440 = vmul.f32 %v2432, %v292
  %v2441 = vmul.f32 %v2435, %v292
  %v2442 = vsub.f32 %v2410, %v2436
  %v2443 = vsub.f32 %v2411, %v2437
  %v2444 = vsub.f32 %v2412, %v2438
  %v2445 = vsub.f32 %v2413, %v2439
  %v2446 = vsub.f32 %v2414, %v2440
  %v2447 = vsub.f32 %v2415, %v2441
  %v2448 = vmul.f32 %v2442, %v2442
  %v2449 = vmul.f32 %v2443, %v2443
  %v2450 = vmul.f32 %v2444, %v2444
  %v2451 = vmul.f32 %v2445, %v2445
  %v2452 = vmul.f32 %v2446, %v2446
  %v2453 = vmul.f32 %v2447, %v2447
  %v2454 = vsel %vm267, %v2448, 0.0
  %2455 = vadd.xlane.f32.xlu0 %v2454
  %v2456 = vpop.xlane.xlu0 %2455
  %v2457 = vsel %vm267, %v2449, 0.0
  %2458 = vadd.xlane.f32.xlu0 %v2457
  %v2459 = vpop.xlane.xlu0 %2458
  %v2460 = vsel %vm267, %v2450, 0.0
  %2461 = vadd.xlane.f32.xlu0 %v2460
  %v2462 = vpop.xlane.xlu0 %2461
  %v2463 = vsel %vm267, %v2451, 0.0
  %2464 = vadd.xlane.f32.xlu0 %v2463
  %v2465 = vpop.xlane.xlu0 %2464
  %v2466 = vsel %vm267, %v2452, 0.0
  %2467 = vadd.xlane.f32.xlu0 %v2466
  %v2468 = vpop.xlane.xlu0 %2467
  %v2469 = vsel %vm267, %v2453, 0.0
  %2470 = vadd.xlane.f32.xlu0 %v2469
  %v2471 = vpop.xlane.xlu0 %2470
  %v2472 = vmul.f32 %v2456, %v292
  %v2473 = vmul.f32 %v2459, %v292
  %v2474 = vmul.f32 %v2462, %v292
  %v2475 = vmul.f32 %v2465, %v292
  %v2476 = vmul.f32 %v2468, %v292
  %v2477 = vmul.f32 %v2471, %v292
  %v2478 = vadd.f32 %v2472, 1e-05
  %v2479 = vadd.f32 %v2473, 1e-05
  %v2480 = vadd.f32 %v2474, 1e-05
  %v2481 = vadd.f32 %v2475, 1e-05
  %v2482 = vadd.f32 %v2476, 1e-05
  %v2483 = vadd.f32 %v2477, 1e-05
  %v2484 = vrsqrt.pop %v2478
  %v2485 = vmul.f32 %v2484, %v2478
  %v2486 = vmul.f32 %v2485, %v2484
  %v2487 = vmul.f32 0.5, %v2486
  %v2488 = vsub.f32 1.5, %v2487
  %v2489 = vmul.f32 %v2484, %v2488
  %vm2490 = vweird.f32 %v2478
  %vm2491 = vweird.f32 %v2484
  %vm2492 = vmor %vm2490, %vm2491
  %v2493 = vsel %vm2492, %v2484, %v2489
  %v2494 = vrsqrt.pop %v2479
  %v2495 = vmul.f32 %v2494, %v2479
  %v2496 = vmul.f32 %v2495, %v2494
  %v2497 = vmul.f32 0.5, %v2496
  %v2498 = vsub.f32 1.5, %v2497
  %v2499 = vmul.f32 %v2494, %v2498
  %vm2500 = vweird.f32 %v2479
  %vm2501 = vweird.f32 %v2494
  %vm2502 = vmor %vm2500, %vm2501
  %v2503 = vsel %vm2502, %v2494, %v2499
  %v2504 = vrsqrt.pop %v2480
  %v2505 = vmul.f32 %v2504, %v2480
  %v2506 = vmul.f32 %v2505, %v2504
  %v2507 = vmul.f32 0.5, %v2506
  %v2508 = vsub.f32 1.5, %v2507
  %v2509 = vmul.f32 %v2504, %v2508
  %vm2510 = vweird.f32 %v2480
  %vm2511 = vweird.f32 %v2504
  %vm2512 = vmor %vm2510, %vm2511
  %v2513 = vsel %vm2512, %v2504, %v2509
  %v2514 = vrsqrt.pop %v2481
  %v2515 = vmul.f32 %v2514, %v2481
  %v2516 = vmul.f32 %v2515, %v2514
  %v2517 = vmul.f32 0.5, %v2516
  %v2518 = vsub.f32 1.5, %v2517
  %v2519 = vmul.f32 %v2514, %v2518
  %vm2520 = vweird.f32 %v2481
  %vm2521 = vweird.f32 %v2514
  %vm2522 = vmor %vm2520, %vm2521
  %v2523 = vsel %vm2522, %v2514, %v2519
  %v2524 = vrsqrt.pop %v2482
  %v2525 = vmul.f32 %v2524, %v2482
  %v2526 = vmul.f32 %v2525, %v2524
  %v2527 = vmul.f32 0.5, %v2526
  %v2528 = vsub.f32 1.5, %v2527
  %v2529 = vmul.f32 %v2524, %v2528
  %vm2530 = vweird.f32 %v2482
  %vm2531 = vweird.f32 %v2524
  %vm2532 = vmor %vm2530, %vm2531
  %v2533 = vsel %vm2532, %v2524, %v2529
  %v2534 = vrsqrt.pop %v2483
  %v2535 = vmul.f32 %v2534, %v2483
  %v2536 = vmul.f32 %v2535, %v2534
  %v2537 = vmul.f32 0.5, %v2536
  %v2538 = vsub.f32 1.5, %v2537
  %v2539 = vmul.f32 %v2534, %v2538
  %vm2540 = vweird.f32 %v2483
  %vm2541 = vweird.f32 %v2534
  %vm2542 = vmor %vm2540, %vm2541
  %v2543 = vsel %vm2542, %v2534, %v2539
  %v2544 = vmul.f32 %v2442, %v2493
  %v2545 = vmul.f32 %v2443, %v2503
  %v2546 = vmul.f32 %v2444, %v2513
  %v2547 = vmul.f32 %v2445, %v2523
  %v2548 = vmul.f32 %v2446, %v2533
  %v2549 = vmul.f32 %v2447, %v2543
  %v2551 = vperm.slane %v2416, 0
  %v2553 = vmul.f32 %v2544, %v2551
  %v2554 = vmul.f32 %v2545, %v2551
  %v2555 = vmul.f32 %v2546, %v2551
  %v2556 = vmul.f32 %v2547, %v2551
  %v2557 = vmul.f32 %v2548, %v2551
  %v2558 = vmul.f32 %v2549, %v2551
  %v2560 = vperm.slane %v2417, 0
  %v2562 = vadd.f32 %v2553, %v2560
  %v2563 = vadd.f32 %v2554, %v2560
  %v2564 = vadd.f32 %v2555, %v2560
  %v2565 = vadd.f32 %v2556, %v2560
  %v2566 = vadd.f32 %v2557, %v2560
  %v2567 = vadd.f32 %v2558, %v2560
  %v2568 = vld [vmem:[%s53] sm:$0xff]
  %v2569 = vld [vmem:[%s53 + $0x8] sm:$0xff]
  %v2570 = vld [vmem:[%s53 + $0x10] sm:$0xff]
  %v2571 = vld [vmem:[%s53 + $0x18] sm:$0xff]
  %v2572 = vld [vmem:[%s55] sm:$0x1]
  %v2574 = vperm.slane %v2572, 0
  %v2577 = vsel %vm267, %v2562, 0
  %v2580 = vsel %vm267, %v2563, 0
  %v2583 = vsel %vm267, %v2564, 0
  %v2586 = vsel %vm267, %v2565, 0
  %v2589 = vsel %vm267, %v2566, 0
  %v2592 = vsel %vm267, %v2567, 0
  %2594 = vmatpush.msra.mxu0 0.0
  %2595 = vmatpush.msra.mxu0 0.0
  %2596 = vmatpush.msra.mxu0 0.0
  %2597 = vmatpush.msra.mxu0 0.0
  %2598 = vmatpush.msra.mxu0 0.0
  %2599 = vmatpush.msra.mxu0 0.0
  %2600 = vmatpush.msra.mxu0 0.0
  %2601 = vmatpush.msra.mxu0 0.0
  %2602 = vmatpush.msra.mxu0 0.0
  %2603 = vmatpush.msra.mxu0 0.0
  %2604 = vmatpush.msra.mxu0 0.0
  %2605 = vmatpush.msra.mxu0 0.0
  %2606 = vmatpush.msra.mxu0 %v2571
  %2607 = vmatpush.msra.mxu0 %v2570
  %2608 = vmatpush.msra.mxu0 %v2569
  %2609 = vmatpush.msra.mxu0 %v2568
  %2610 = vmatmul.f32.gmra.mxu0 %v2577
  %v2611 = vpop.f32.mrf.mxu0
  %v2612 = vadd.f32 %v2574, %v2611
  %2613 = vmatmul.f32.gmra.mxu0 %v2580
  %v2614 = vpop.f32.mrf.mxu0
  %v2615 = vadd.f32 %v2574, %v2614
  %2616 = vmatmul.f32.gmra.mxu0 %v2583
  %v2617 = vpop.f32.mrf.mxu0
  %v2618 = vadd.f32 %v2574, %v2617
  %2619 = vmatmul.f32.gmra.mxu0 %v2586
  %v2620 = vpop.f32.mrf.mxu0
  %v2621 = vadd.f32 %v2574, %v2620
  %2622 = vmatmul.f32.gmra.mxu0 %v2589
  %v2623 = vpop.f32.mrf.mxu0
  %v2624 = vadd.f32 %v2574, %v2623
  %2625 = vmatmul.f32.gmra.mxu0 %v2592
  %v2626 = vpop.f32.mrf.mxu0
  %v2627 = vadd.f32 %v2574, %v2626
  %2628 = vdwg.mxu0
  %v2629 = vmul.f32 %v2612, 0.5
  %v2630 = vmul.f32 %v2615, 0.5
  %v2631 = vmul.f32 %v2618, 0.5
  %v2632 = vmul.f32 %v2621, 0.5
  %v2633 = vmul.f32 %v2624, 0.5
  %v2634 = vmul.f32 %v2627, 0.5
  %v2635 = vmul.f32 %v2612, 0.044715
  %v2636 = vmul.f32 %v2615, 0.044715
  %v2637 = vmul.f32 %v2618, 0.044715
  %v2638 = vmul.f32 %v2621, 0.044715
  %v2639 = vmul.f32 %v2624, 0.044715
  %v2640 = vmul.f32 %v2627, 0.044715
  %v2641 = vmul.f32 %v2635, %v2612
  %v2642 = vmul.f32 %v2636, %v2615
  %v2643 = vmul.f32 %v2637, %v2618
  %v2644 = vmul.f32 %v2638, %v2621
  %v2645 = vmul.f32 %v2639, %v2624
  %v2646 = vmul.f32 %v2640, %v2627
  %v2647 = vmul.f32 %v2641, %v2612
  %v2648 = vmul.f32 %v2642, %v2615
  %v2649 = vmul.f32 %v2643, %v2618
  %v2650 = vmul.f32 %v2644, %v2621
  %v2651 = vmul.f32 %v2645, %v2624
  %v2652 = vmul.f32 %v2646, %v2627
  %v2653 = vadd.f32 %v2612, %v2647
  %v2654 = vadd.f32 %v2615, %v2648
  %v2655 = vadd.f32 %v2618, %v2649
  %v2656 = vadd.f32 %v2621, %v2650
  %v2657 = vadd.f32 %v2624, %v2651
  %v2658 = vadd.f32 %v2627, %v2652
  %v2659 = vmul.f32 %v2653, 0.7978846
  %v2660 = vmul.f32 %v2654, 0.7978846
  %v2661 = vmul.f32 %v2655, 0.7978846
  %v2662 = vmul.f32 %v2656, 0.7978846
  %v2663 = vmul.f32 %v2657, 0.7978846
  %v2664 = vmul.f32 %v2658, 0.7978846
  %v2665 = vtanh.pop %v2659
  %v2666 = vtanh.pop %v2660
  %v2667 = vtanh.pop %v2661
  %v2668 = vtanh.pop %v2662
  %v2669 = vtanh.pop %v2663
  %v2670 = vtanh.pop %v2664
  %v2671 = vadd.f32 %v2665, 1.0
  %v2672 = vadd.f32 %v2666, 1.0
  %v2673 = vadd.f32 %v2667, 1.0
  %v2674 = vadd.f32 %v2668, 1.0
  %v2675 = vadd.f32 %v2669, 1.0
  %v2676 = vadd.f32 %v2670, 1.0
  %v2677 = vmul.f32 %v2629, %v2671
  %v2678 = vmul.f32 %v2630, %v2672
  %v2679 = vmul.f32 %v2631, %v2673
  %v2680 = vmul.f32 %v2632, %v2674
  %v2681 = vmul.f32 %v2633, %v2675
  %v2682 = vmul.f32 %v2634, %v2676
  %v2683 = vld [vmem:[%s57] sm:$0xff]
  %v2684 = vld [vmem:[%s57 + $0x8] sm:$0xff]
  %v2685 = vld [vmem:[%s57 + $0x10] sm:$0xff]
  %v2686 = vld [vmem:[%s57 + $0x18] sm:$0xff]
  %v2687 = vld [vmem:[%s57 + $0x20] sm:$0xff]
  %v2688 = vld [vmem:[%s57 + $0x28] sm:$0xff]
  %v2689 = vld [vmem:[%s57 + $0x30] sm:$0xff]
  %v2690 = vld [vmem:[%s57 + $0x38] sm:$0xff]
  %v2691 = vld [vmem:[%s57 + $0x40] sm:$0xff]
  %v2692 = vld [vmem:[%s57 + $0x48] sm:$0xff]
  %v2693 = vld [vmem:[%s57 + $0x50] sm:$0xff]
  %v2694 = vld [vmem:[%s57 + $0x58] sm:$0xff]
  %v2695 = vld [vmem:[%s57 + $0x60] sm:$0xff]
  %v2696 = vld [vmem:[%s57 + $0x68] sm:$0xff]
  %v2697 = vld [vmem:[%s57 + $0x70] sm:$0xff]
  %v2698 = vld [vmem:[%s57 + $0x78] sm:$0xff]
  %v2699 = vld [vmem:[%s59] sm:$0x1]
  %v2701 = vperm.slane %v2699, 0
  %2703 = vmatpush.msra.mxu0 %v2698
  %2704 = vmatpush.msra.mxu0 %v2697
  %2705 = vmatpush.msra.mxu0 %v2696
  %2706 = vmatpush.msra.mxu0 %v2695
  %2707 = vmatpush.msra.mxu0 %v2694
  %2708 = vmatpush.msra.mxu0 %v2693
  %2709 = vmatpush.msra.mxu0 %v2692
  %2710 = vmatpush.msra.mxu0 %v2691
  %2711 = vmatpush.msra.mxu0 %v2690
  %2712 = vmatpush.msra.mxu0 %v2689
  %2713 = vmatpush.msra.mxu0 %v2688
  %2714 = vmatpush.msra.mxu0 %v2687
  %2715 = vmatpush.msra.mxu0 %v2686
  %2716 = vmatpush.msra.mxu0 %v2685
  %2717 = vmatpush.msra.mxu0 %v2684
  %2718 = vmatpush.msra.mxu0 %v2683
  %2719 = vmatmul.f32.gmra.mxu0 %v2677
  %v2720 = vpop.f32.mrf.mxu0
  %v2721 = vadd.f32 %v2701, %v2720
  %2722 = vmatmul.f32.gmra.mxu0 %v2678
  %v2723 = vpop.f32.mrf.mxu0
  %v2724 = vadd.f32 %v2701, %v2723
  %2725 = vmatmul.f32.gmra.mxu0 %v2679
  %v2726 = vpop.f32.mrf.mxu0
  %v2727 = vadd.f32 %v2701, %v2726
  %2728 = vmatmul.f32.gmra.mxu0 %v2680
  %v2729 = vpop.f32.mrf.mxu0
  %v2730 = vadd.f32 %v2701, %v2729
  %2731 = vmatmul.f32.gmra.mxu0 %v2681
  %v2732 = vpop.f32.mrf.mxu0
  %v2733 = vadd.f32 %v2701, %v2732
  %2734 = vmatmul.f32.gmra.mxu0 %v2682
  %v2735 = vpop.f32.mrf.mxu0
  %v2736 = vadd.f32 %v2701, %v2735
  %2737 = vdwg.mxu0
  %v2738 = vadd.f32 %v2410, %v2721
  %v2739 = vadd.f32 %v2411, %v2724
  %v2740 = vadd.f32 %v2412, %v2727
  %v2741 = vadd.f32 %v2413, %v2730
  %v2742 = vadd.f32 %v2414, %v2733
  %v2743 = vadd.f32 %v2415, %v2736
  %s2744 = scalar_lea.vmem %s29, 1
  %v2745 = vld [vmem:[%s2744] sm:$0x1]
  %s2746 = scalar_lea.vmem %s31, 1
  %v2747 = vld [vmem:[%s2746] sm:$0x1]
  %v2748 = vsel %vm267, %v2738, 0.0
  %2749 = vadd.xlane.f32.xlu0 %v2748
  %v2750 = vpop.xlane.xlu0 %2749
  %v2751 = vsel %vm267, %v2739, 0.0
  %2752 = vadd.xlane.f32.xlu0 %v2751
  %v2753 = vpop.xlane.xlu0 %2752
  %v2754 = vsel %vm267, %v2740, 0.0
  %2755 = vadd.xlane.f32.xlu0 %v2754
  %v2756 = vpop.xlane.xlu0 %2755
  %v2757 = vsel %vm267, %v2741, 0.0
  %2758 = vadd.xlane.f32.xlu0 %v2757
  %v2759 = vpop.xlane.xlu0 %2758
  %v2760 = vsel %vm267, %v2742, 0.0
  %2761 = vadd.xlane.f32.xlu0 %v2760
  %v2762 = vpop.xlane.xlu0 %2761
  %v2763 = vsel %vm267, %v2743, 0.0
  %2764 = vadd.xlane.f32.xlu0 %v2763
  %v2765 = vpop.xlane.xlu0 %2764
  %v2766 = vmul.f32 %v2750, %v292
  %v2767 = vmul.f32 %v2753, %v292
  %v2768 = vmul.f32 %v2756, %v292
  %v2769 = vmul.f32 %v2759, %v292
  %v2770 = vmul.f32 %v2762, %v292
  %v2771 = vmul.f32 %v2765, %v292
  %v2772 = vsub.f32 %v2738, %v2766
  %v2773 = vsub.f32 %v2739, %v2767
  %v2774 = vsub.f32 %v2740, %v2768
  %v2775 = vsub.f32 %v2741, %v2769
  %v2776 = vsub.f32 %v2742, %v2770
  %v2777 = vsub.f32 %v2743, %v2771
  %v2778 = vmul.f32 %v2772, %v2772
  %v2779 = vmul.f32 %v2773, %v2773
  %v2780 = vmul.f32 %v2774, %v2774
  %v2781 = vmul.f32 %v2775, %v2775
  %v2782 = vmul.f32 %v2776, %v2776
  %v2783 = vmul.f32 %v2777, %v2777
  %v2784 = vsel %vm267, %v2778, 0.0
  %2785 = vadd.xlane.f32.xlu0 %v2784
  %v2786 = vpop.xlane.xlu0 %2785
  %v2787 = vsel %vm267, %v2779, 0.0
  %2788 = vadd.xlane.f32.xlu0 %v2787
  %v2789 = vpop.xlane.xlu0 %2788
  %v2790 = vsel %vm267, %v2780, 0.0
  %2791 = vadd.xlane.f32.xlu0 %v2790
  %v2792 = vpop.xlane.xlu0 %2791
  %v2793 = vsel %vm267, %v2781, 0.0
  %2794 = vadd.xlane.f32.xlu0 %v2793
  %v2795 = vpop.xlane.xlu0 %2794
  %v2796 = vsel %vm267, %v2782, 0.0
  %2797 = vadd.xlane.f32.xlu0 %v2796
  %v2798 = vpop.xlane.xlu0 %2797
  %v2799 = vsel %vm267, %v2783, 0.0
  %2800 = vadd.xlane.f32.xlu0 %v2799
  %v2801 = vpop.xlane.xlu0 %2800
  %v2802 = vmul.f32 %v2786, %v292
  %v2803 = vmul.f32 %v2789, %v292
  %v2804 = vmul.f32 %v2792, %v292
  %v2805 = vmul.f32 %v2795, %v292
  %v2806 = vmul.f32 %v2798, %v292
  %v2807 = vmul.f32 %v2801, %v292
  %v2808 = vadd.f32 %v2802, 1e-05
  %v2809 = vadd.f32 %v2803, 1e-05
  %v2810 = vadd.f32 %v2804, 1e-05
  %v2811 = vadd.f32 %v2805, 1e-05
  %v2812 = vadd.f32 %v2806, 1e-05
  %v2813 = vadd.f32 %v2807, 1e-05
  %v2814 = vrsqrt.pop %v2808
  %v2815 = vmul.f32 %v2814, %v2808
  %v2816 = vmul.f32 %v2815, %v2814
  %v2817 = vmul.f32 0.5, %v2816
  %v2818 = vsub.f32 1.5, %v2817
  %v2819 = vmul.f32 %v2814, %v2818
  %vm2820 = vweird.f32 %v2808
  %vm2821 = vweird.f32 %v2814
  %vm2822 = vmor %vm2820, %vm2821
  %v2823 = vsel %vm2822, %v2814, %v2819
  %v2824 = vrsqrt.pop %v2809
  %v2825 = vmul.f32 %v2824, %v2809
  %v2826 = vmul.f32 %v2825, %v2824
  %v2827 = vmul.f32 0.5, %v2826
  %v2828 = vsub.f32 1.5, %v2827
  %v2829 = vmul.f32 %v2824, %v2828
  %vm2830 = vweird.f32 %v2809
  %vm2831 = vweird.f32 %v2824
  %vm2832 = vmor %vm2830, %vm2831
  %v2833 = vsel %vm2832, %v2824, %v2829
  %v2834 = vrsqrt.pop %v2810
  %v2835 = vmul.f32 %v2834, %v2810
  %v2836 = vmul.f32 %v2835, %v2834
  %v2837 = vmul.f32 0.5, %v2836
  %v2838 = vsub.f32 1.5, %v2837
  %v2839 = vmul.f32 %v2834, %v2838
  %vm2840 = vweird.f32 %v2810
  %vm2841 = vweird.f32 %v2834
  %vm2842 = vmor %vm2840, %vm2841
  %v2843 = vsel %vm2842, %v2834, %v2839
  %v2844 = vrsqrt.pop %v2811
  %v2845 = vmul.f32 %v2844, %v2811
  %v2846 = vmul.f32 %v2845, %v2844
  %v2847 = vmul.f32 0.5, %v2846
  %v2848 = vsub.f32 1.5, %v2847
  %v2849 = vmul.f32 %v2844, %v2848
  %vm2850 = vweird.f32 %v2811
  %vm2851 = vweird.f32 %v2844
  %vm2852 = vmor %vm2850, %vm2851
  %v2853 = vsel %vm2852, %v2844, %v2849
  %v2854 = vrsqrt.pop %v2812
  %v2855 = vmul.f32 %v2854, %v2812
  %v2856 = vmul.f32 %v2855, %v2854
  %v2857 = vmul.f32 0.5, %v2856
  %v2858 = vsub.f32 1.5, %v2857
  %v2859 = vmul.f32 %v2854, %v2858
  %vm2860 = vweird.f32 %v2812
  %vm2861 = vweird.f32 %v2854
  %vm2862 = vmor %vm2860, %vm2861
  %v2863 = vsel %vm2862, %v2854, %v2859
  %v2864 = vrsqrt.pop %v2813
  %v2865 = vmul.f32 %v2864, %v2813
  %v2866 = vmul.f32 %v2865, %v2864
  %v2867 = vmul.f32 0.5, %v2866
  %v2868 = vsub.f32 1.5, %v2867
  %v2869 = vmul.f32 %v2864, %v2868
  %vm2870 = vweird.f32 %v2813
  %vm2871 = vweird.f32 %v2864
  %vm2872 = vmor %vm2870, %vm2871
  %v2873 = vsel %vm2872, %v2864, %v2869
  %v2874 = vmul.f32 %v2772, %v2823
  %v2875 = vmul.f32 %v2773, %v2833
  %v2876 = vmul.f32 %v2774, %v2843
  %v2877 = vmul.f32 %v2775, %v2853
  %v2878 = vmul.f32 %v2776, %v2863
  %v2879 = vmul.f32 %v2777, %v2873
  %v2881 = vperm.slane %v2745, 0
  %v2883 = vmul.f32 %v2874, %v2881
  %v2884 = vmul.f32 %v2875, %v2881
  %v2885 = vmul.f32 %v2876, %v2881
  %v2886 = vmul.f32 %v2877, %v2881
  %v2887 = vmul.f32 %v2878, %v2881
  %v2888 = vmul.f32 %v2879, %v2881
  %v2890 = vperm.slane %v2747, 0
  %v2892 = vadd.f32 %v2883, %v2890
  %v2893 = vadd.f32 %v2884, %v2890
  %v2894 = vadd.f32 %v2885, %v2890
  %v2895 = vadd.f32 %v2886, %v2890
  %v2896 = vadd.f32 %v2887, %v2890
  %v2897 = vadd.f32 %v2888, %v2890
  %s2898 = scalar_lea.vmem %s33, 128
  %v2899 = vld [vmem:[%s2898] sm:$0xff]
  %v2900 = vld [vmem:[%s2898 + $0x8] sm:$0xff]
  %v2901 = vld [vmem:[%s2898 + $0x10] sm:$0xff]
  %v2902 = vld [vmem:[%s2898 + $0x18] sm:$0xff]
  %s2903 = scalar_lea.vmem %s35, 4
  %v2904 = vld [vmem:[%s2903] sm:$0x1]
  %v2906 = vperm.slane %v2904, 0
  %v2909 = vsel %vm267, %v2892, 0
  %v2912 = vsel %vm267, %v2893, 0
  %v2915 = vsel %vm267, %v2894, 0
  %v2918 = vsel %vm267, %v2895, 0
  %v2921 = vsel %vm267, %v2896, 0
  %v2924 = vsel %vm267, %v2897, 0
  %2926 = vmatpush.msra.mxu0 0.0
  %2927 = vmatpush.msra.mxu0 0.0
  %2928 = vmatpush.msra.mxu0 0.0
  %2929 = vmatpush.msra.mxu0 0.0
  %2930 = vmatpush.msra.mxu0 0.0
  %2931 = vmatpush.msra.mxu0 0.0
  %2932 = vmatpush.msra.mxu0 0.0
  %2933 = vmatpush.msra.mxu0 0.0
  %2934 = vmatpush.msra.mxu0 0.0
  %2935 = vmatpush.msra.mxu0 0.0
  %2936 = vmatpush.msra.mxu0 0.0
  %2937 = vmatpush.msra.mxu0 0.0
  %2938 = vmatpush.msra.mxu0 %v2902
  %2939 = vmatpush.msra.mxu0 %v2901
  %2940 = vmatpush.msra.mxu0 %v2900
  %2941 = vmatpush.msra.mxu0 %v2899
  %2942 = vmatmul.f32.gmra.mxu0 %v2909
  %v2943 = vpop.f32.mrf.mxu0
  %v2944 = vadd.f32 %v2906, %v2943
  %2945 = vmatmul.f32.gmra.mxu0 %v2912
  %v2946 = vpop.f32.mrf.mxu0
  %v2947 = vadd.f32 %v2906, %v2946
  %2948 = vmatmul.f32.gmra.mxu0 %v2915
  %v2949 = vpop.f32.mrf.mxu0
  %v2950 = vadd.f32 %v2906, %v2949
  %2951 = vmatmul.f32.gmra.mxu0 %v2918
  %v2952 = vpop.f32.mrf.mxu0
  %v2953 = vadd.f32 %v2906, %v2952
  %2954 = vmatmul.f32.gmra.mxu0 %v2921
  %v2955 = vpop.f32.mrf.mxu0
  %v2956 = vadd.f32 %v2906, %v2955
  %2957 = vmatmul.f32.gmra.mxu0 %v2924
  %v2958 = vpop.f32.mrf.mxu0
  %v2959 = vadd.f32 %v2906, %v2958
  %2960 = vdwg.mxu0
  %s2961 = scalar_lea.vmem %s37, 128
  %v2962 = vld [vmem:[%s2961] sm:$0xff]
  %v2963 = vld [vmem:[%s2961 + $0x8] sm:$0xff]
  %v2964 = vld [vmem:[%s2961 + $0x10] sm:$0xff]
  %v2965 = vld [vmem:[%s2961 + $0x18] sm:$0xff]
  %s2966 = scalar_lea.vmem %s39, 4
  %v2967 = vld [vmem:[%s2966] sm:$0x1]
  %v2969 = vperm.slane %v2967, 0
  %2971 = vmatpush.msra.mxu0 0.0
  %2972 = vmatpush.msra.mxu0 0.0
  %2973 = vmatpush.msra.mxu0 0.0
  %2974 = vmatpush.msra.mxu0 0.0
  %2975 = vmatpush.msra.mxu0 0.0
  %2976 = vmatpush.msra.mxu0 0.0
  %2977 = vmatpush.msra.mxu0 0.0
  %2978 = vmatpush.msra.mxu0 0.0
  %2979 = vmatpush.msra.mxu0 0.0
  %2980 = vmatpush.msra.mxu0 0.0
  %2981 = vmatpush.msra.mxu0 0.0
  %2982 = vmatpush.msra.mxu0 0.0
  %2983 = vmatpush.msra.mxu0 %v2965
  %2984 = vmatpush.msra.mxu0 %v2964
  %2985 = vmatpush.msra.mxu0 %v2963
  %2986 = vmatpush.msra.mxu0 %v2962
  %2987 = vmatmul.f32.gmra.mxu0 %v2909
  %v2988 = vpop.f32.mrf.mxu0
  %v2989 = vadd.f32 %v2969, %v2988
  %2990 = vmatmul.f32.gmra.mxu0 %v2912
  %v2991 = vpop.f32.mrf.mxu0
  %v2992 = vadd.f32 %v2969, %v2991
  %2993 = vmatmul.f32.gmra.mxu0 %v2915
  %v2994 = vpop.f32.mrf.mxu0
  %v2995 = vadd.f32 %v2969, %v2994
  %2996 = vmatmul.f32.gmra.mxu0 %v2918
  %v2997 = vpop.f32.mrf.mxu0
  %v2998 = vadd.f32 %v2969, %v2997
  %2999 = vmatmul.f32.gmra.mxu0 %v2921
  %v3000 = vpop.f32.mrf.mxu0
  %v3001 = vadd.f32 %v2969, %v3000
  %3002 = vmatmul.f32.gmra.mxu0 %v2924
  %v3003 = vpop.f32.mrf.mxu0
  %v3004 = vadd.f32 %v2969, %v3003
  %3005 = vdwg.mxu0
  %s3006 = scalar_lea.vmem %s41, 128
  %v3007 = vld [vmem:[%s3006] sm:$0xff]
  %v3008 = vld [vmem:[%s3006 + $0x8] sm:$0xff]
  %v3009 = vld [vmem:[%s3006 + $0x10] sm:$0xff]
  %v3010 = vld [vmem:[%s3006 + $0x18] sm:$0xff]
  %s3011 = scalar_lea.vmem %s43, 4
  %v3012 = vld [vmem:[%s3011] sm:$0x1]
  %v3014 = vperm.slane %v3012, 0
  %3016 = vmatpush.msra.mxu0 0.0
  %3017 = vmatpush.msra.mxu0 0.0
  %3018 = vmatpush.msra.mxu0 0.0
  %3019 = vmatpush.msra.mxu0 0.0
  %3020 = vmatpush.msra.mxu0 0.0
  %3021 = vmatpush.msra.mxu0 0.0
  %3022 = vmatpush.msra.mxu0 0.0
  %3023 = vmatpush.msra.mxu0 0.0
  %3024 = vmatpush.msra.mxu0 0.0
  %3025 = vmatpush.msra.mxu0 0.0
  %3026 = vmatpush.msra.mxu0 0.0
  %3027 = vmatpush.msra.mxu0 0.0
  %3028 = vmatpush.msra.mxu0 %v3010
  %3029 = vmatpush.msra.mxu0 %v3009
  %3030 = vmatpush.msra.mxu0 %v3008
  %3031 = vmatpush.msra.mxu0 %v3007
  %3032 = vmatmul.f32.gmra.mxu0 %v2909
  %v3033 = vpop.f32.mrf.mxu0
  %v3034 = vadd.f32 %v3014, %v3033
  %3035 = vmatmul.f32.gmra.mxu0 %v2912
  %v3036 = vpop.f32.mrf.mxu0
  %v3037 = vadd.f32 %v3014, %v3036
  %3038 = vmatmul.f32.gmra.mxu0 %v2915
  %v3039 = vpop.f32.mrf.mxu0
  %v3040 = vadd.f32 %v3014, %v3039
  %3041 = vmatmul.f32.gmra.mxu0 %v2918
  %v3042 = vpop.f32.mrf.mxu0
  %v3043 = vadd.f32 %v3014, %v3042
  %3044 = vmatmul.f32.gmra.mxu0 %v2921
  %v3045 = vpop.f32.mrf.mxu0
  %v3046 = vadd.f32 %v3014, %v3045
  %3047 = vmatmul.f32.gmra.mxu0 %v2924
  %v3048 = vpop.f32.mrf.mxu0
  %v3049 = vadd.f32 %v3014, %v3048
  %3050 = vdwg.mxu0
  %v3052 = vsel %vm750, %v2944, 0
  %v3055 = vsel %vm750, %v2947, 0
  %v3058 = vsel %vm750, %v2950, 0
  %v3061 = vsel %vm750, %v2989, 0
  %v3064 = vsel %vm750, %v2992, 0
  %v3067 = vsel %vm750, %v2995, 0
  %3069 = vmatpush.xpose.msra.mxu0 0.0
  %3070 = vmatpush.xpose.msra.mxu0 0.0
  %3071 = vmatpush.xpose.msra.mxu0 0.0
  %3072 = vmatpush.xpose.msra.mxu0 0.0
  %3073 = vmatpush.xpose.msra.mxu0 0.0
  %3074 = vmatpush.xpose.msra.mxu0 0.0
  %3075 = vmatpush.xpose.msra.mxu0 0.0
  %3076 = vmatpush.xpose.msra.mxu0 0.0
  %3077 = vmatpush.xpose.msra.mxu0 0.0
  %3078 = vmatpush.xpose.msra.mxu0 0.0
  %3079 = vmatpush.xpose.msra.mxu0 0.0
  %3080 = vmatpush.xpose.msra.mxu0 0.0
  %3081 = vmatpush.xpose.msra.mxu0 0.0
  %3082 = vmatpush.xpose.msra.mxu0 %v3067
  %3083 = vmatpush.xpose.msra.mxu0 %v3064
  %3084 = vmatpush.xpose.msra.mxu0 %v3061
  %3085 = vmatmul.f32.gmra.mxu0 %v3052
  %v3086 = vpop.f32.mrf.mxu0
  %v3087 = vadd.f32 0.0, %v3086
  %3088 = vmatmul.f32.gmra.mxu0 %v3055
  %v3089 = vpop.f32.mrf.mxu0
  %v3090 = vadd.f32 0.0, %v3089
  %3091 = vmatmul.f32.gmra.mxu0 %v3058
  %v3092 = vpop.f32.mrf.mxu0
  %v3093 = vadd.f32 0.0, %v3092
  %3094 = vdwg.mxu0
  %v3095 = vmul.f32 %v3087, 0.35355338
  %v3096 = vmul.f32 %v3090, 0.35355338
  %v3097 = vmul.f32 %v3093, 0.35355338
  %v3098 = vsel %vm448, %v3095, -1e+30
  %v3099 = vsel %vm449, %v3096, -1e+30
  %v3100 = vsel %vm450, %v3097, -1e+30
  %v3101 = vsel %vm801, %v3098, -inf
  %3102 = vmax.xlane.f32.xlu0 %v3101
  %v3103 = vpop.xlane.xlu0 %3102
  %v3104 = vsel %vm801, %v3099, -inf
  %3105 = vmax.xlane.f32.xlu0 %v3104
  %v3106 = vpop.xlane.xlu0 %3105
  %v3107 = vsel %vm801, %v3100, -inf
  %3108 = vmax.xlane.f32.xlu0 %v3107
  %v3109 = vpop.xlane.xlu0 %3108
  %v3110 = vsub.f32 %v3098, %v3103
  %v3111 = vsub.f32 %v3099, %v3106
  %v3112 = vsub.f32 %v3100, %v3109
  %v3113 = vmul.f32 %v3110, 1.442695
  %v3114 = vpow.pop %v3113
  %v3115 = vmul.f32 %v3111, 1.442695
  %v3116 = vpow.pop %v3115
  %v3117 = vmul.f32 %v3112, 1.442695
  %v3118 = vpow.pop %v3117
  %v3119 = vsel %vm801, %v3114, 0.0
  %3120 = vadd.xlane.f32.xlu0 %v3119
  %v3121 = vpop.xlane.xlu0 %3120
  %v3122 = vsel %vm801, %v3116, 0.0
  %3123 = vadd.xlane.f32.xlu0 %v3122
  %v3124 = vpop.xlane.xlu0 %3123
  %v3125 = vsel %vm801, %v3118, 0.0
  %3126 = vadd.xlane.f32.xlu0 %v3125
  %v3127 = vpop.xlane.xlu0 %3126
  %v3128 = vrcp.pop %v3121
  %v3129 = vrcp.pop %v3124
  %v3130 = vrcp.pop %v3127
  %v3131 = vmul.f32 %v3114, %v3128
  %v3132 = vmul.f32 %v3116, %v3129
  %v3133 = vmul.f32 %v3118, %v3130
  %v3135 = vsel %vm801, %v3131, 0
  %v3138 = vsel %vm801, %v3132, 0
  %v3141 = vsel %vm801, %v3133, 0
  %3143 = vmatpush.msra.mxu0 0.0
  %3144 = vmatpush.msra.mxu0 0.0
  %3145 = vmatpush.msra.mxu0 0.0
  %3146 = vmatpush.msra.mxu0 0.0
  %3147 = vmatpush.msra.mxu0 0.0
  %3148 = vmatpush.msra.mxu0 0.0
  %3149 = vmatpush.msra.mxu0 0.0
  %3150 = vmatpush.msra.mxu0 0.0
  %3151 = vmatpush.msra.mxu0 0.0
  %3152 = vmatpush.msra.mxu0 0.0
  %3153 = vmatpush.msra.mxu0 0.0
  %3154 = vmatpush.msra.mxu0 0.0
  %3155 = vmatpush.msra.mxu0 0.0
  %3156 = vmatpush.msra.mxu0 %v3040
  %3157 = vmatpush.msra.mxu0 %v3037
  %3158 = vmatpush.msra.mxu0 %v3034
  %3159 = vmatmul.f32.gmra.mxu0 %v3135
  %v3160 = vpop.f32.mrf.mxu0
  %v3161 = vadd.f32 0.0, %v3160
  %3162 = vmatmul.f32.gmra.mxu0 %v3138
  %v3163 = vpop.f32.mrf.mxu0
  %v3164 = vadd.f32 0.0, %v3163
  %3165 = vmatmul.f32.gmra.mxu0 %v3141
  %v3166 = vpop.f32.mrf.mxu0
  %v3167 = vadd.f32 0.0, %v3166
  %3168 = vdwg.mxu0
  %s3169 = scalar_lea.vmem %s45, 32
  %v3170 = vld [vmem:[%s3169] sm:$0xff]
  %v3172 = vsel %vm750, %v2953, 0
  %v3175 = vsel %vm750, %v2956, 0
  %v3178 = vsel %vm750, %v2959, 0
  %v3181 = vsel %vm750, %v2998, 0
  %v3184 = vsel %vm750, %v3001, 0
  %v3187 = vsel %vm750, %v3004, 0
  %3189 = vmatpush.xpose.msra.mxu0 0.0
  %3190 = vmatpush.xpose.msra.mxu0 0.0
  %3191 = vmatpush.xpose.msra.mxu0 0.0
  %3192 = vmatpush.xpose.msra.mxu0 0.0
  %3193 = vmatpush.xpose.msra.mxu0 0.0
  %3194 = vmatpush.xpose.msra.mxu0 0.0
  %3195 = vmatpush.xpose.msra.mxu0 0.0
  %3196 = vmatpush.xpose.msra.mxu0 0.0
  %3197 = vmatpush.xpose.msra.mxu0 0.0
  %3198 = vmatpush.xpose.msra.mxu0 0.0
  %3199 = vmatpush.xpose.msra.mxu0 0.0
  %3200 = vmatpush.xpose.msra.mxu0 0.0
  %3201 = vmatpush.xpose.msra.mxu0 0.0
  %3202 = vmatpush.xpose.msra.mxu0 %v3187
  %3203 = vmatpush.xpose.msra.mxu0 %v3184
  %3204 = vmatpush.xpose.msra.mxu0 %v3181
  %3205 = vmatmul.f32.gmra.mxu0 %v3172
  %v3206 = vpop.f32.mrf.mxu0
  %v3207 = vadd.f32 0.0, %v3206
  %3208 = vmatmul.f32.gmra.mxu0 %v3175
  %v3209 = vpop.f32.mrf.mxu0
  %v3210 = vadd.f32 0.0, %v3209
  %3211 = vmatmul.f32.gmra.mxu0 %v3178
  %v3212 = vpop.f32.mrf.mxu0
  %v3213 = vadd.f32 0.0, %v3212
  %3214 = vdwg.mxu0
  %v3215 = vmul.f32 %v3207, 0.35355338
  %v3216 = vmul.f32 %v3210, 0.35355338
  %v3217 = vmul.f32 %v3213, 0.35355338
  %v3218 = vsel %vm448, %v3215, -1e+30
  %v3219 = vsel %vm449, %v3216, -1e+30
  %v3220 = vsel %vm450, %v3217, -1e+30
  %v3221 = vsel %vm801, %v3218, -inf
  %3222 = vmax.xlane.f32.xlu0 %v3221
  %v3223 = vpop.xlane.xlu0 %3222
  %v3224 = vsel %vm801, %v3219, -inf
  %3225 = vmax.xlane.f32.xlu0 %v3224
  %v3226 = vpop.xlane.xlu0 %3225
  %v3227 = vsel %vm801, %v3220, -inf
  %3228 = vmax.xlane.f32.xlu0 %v3227
  %v3229 = vpop.xlane.xlu0 %3228
  %v3230 = vsub.f32 %v3218, %v3223
  %v3231 = vsub.f32 %v3219, %v3226
  %v3232 = vsub.f32 %v3220, %v3229
  %v3233 = vmul.f32 %v3230, 1.442695
  %v3234 = vpow.pop %v3233
  %v3235 = vmul.f32 %v3231, 1.442695
  %v3236 = vpow.pop %v3235
  %v3237 = vmul.f32 %v3232, 1.442695
  %v3238 = vpow.pop %v3237
  %v3239 = vsel %vm801, %v3234, 0.0
  %3240 = vadd.xlane.f32.xlu0 %v3239
  %v3241 = vpop.xlane.xlu0 %3240
  %v3242 = vsel %vm801, %v3236, 0.0
  %3243 = vadd.xlane.f32.xlu0 %v3242
  %v3244 = vpop.xlane.xlu0 %3243
  %v3245 = vsel %vm801, %v3238, 0.0
  %3246 = vadd.xlane.f32.xlu0 %v3245
  %v3247 = vpop.xlane.xlu0 %3246
  %v3248 = vrcp.pop %v3241
  %v3249 = vrcp.pop %v3244
  %v3250 = vrcp.pop %v3247
  %v3251 = vmul.f32 %v3234, %v3248
  %v3252 = vmul.f32 %v3236, %v3249
  %v3253 = vmul.f32 %v3238, %v3250
  %v3255 = vsel %vm801, %v3251, 0
  %v3258 = vsel %vm801, %v3252, 0
  %v3261 = vsel %vm801, %v3253, 0
  %3263 = vmatpush.msra.mxu0 0.0
  %3264 = vmatpush.msra.mxu0 0.0
  %3265 = vmatpush.msra.mxu0 0.0
  %3266 = vmatpush.msra.mxu0 0.0
  %3267 = vmatpush.msra.mxu0 0.0
  %3268 = vmatpush.msra.mxu0 0.0
  %3269 = vmatpush.msra.mxu0 0.0
  %3270 = vmatpush.msra.mxu0 0.0
  %3271 = vmatpush.msra.mxu0 0.0
  %3272 = vmatpush.msra.mxu0 0.0
  %3273 = vmatpush.msra.mxu0 0.0
  %3274 = vmatpush.msra.mxu0 0.0
  %3275 = vmatpush.msra.mxu0 0.0
  %3276 = vmatpush.msra.mxu0 %v3049
  %3277 = vmatpush.msra.mxu0 %v3046
  %3278 = vmatpush.msra.mxu0 %v3043
  %3279 = vmatmul.f32.gmra.mxu0 %v3255
  %v3280 = vpop.f32.mrf.mxu0
  %v3281 = vadd.f32 0.0, %v3280
  %3282 = vmatmul.f32.gmra.mxu0 %v3258
  %v3283 = vpop.f32.mrf.mxu0
  %v3284 = vadd.f32 0.0, %v3283
  %3285 = vmatmul.f32.gmra.mxu0 %v3261
  %v3286 = vpop.f32.mrf.mxu0
  %v3287 = vadd.f32 0.0, %v3286
  %3288 = vdwg.mxu0
  %s3289 = scalar_lea.vmem %s33, 160
  %v3290 = vld [vmem:[%s3289] sm:$0xff]
  %v3291 = vld [vmem:[%s3289 + $0x8] sm:$0xff]
  %v3292 = vld [vmem:[%s3289 + $0x10] sm:$0xff]
  %v3293 = vld [vmem:[%s3289 + $0x18] sm:$0xff]
  %s3294 = scalar_lea.vmem %s35, 5
  %v3295 = vld [vmem:[%s3294] sm:$0x1]
  %v3297 = vperm.slane %v3295, 0
  %3299 = vmatpush.msra.mxu0 0.0
  %3300 = vmatpush.msra.mxu0 0.0
  %3301 = vmatpush.msra.mxu0 0.0
  %3302 = vmatpush.msra.mxu0 0.0
  %3303 = vmatpush.msra.mxu0 0.0
  %3304 = vmatpush.msra.mxu0 0.0
  %3305 = vmatpush.msra.mxu0 0.0
  %3306 = vmatpush.msra.mxu0 0.0
  %3307 = vmatpush.msra.mxu0 0.0
  %3308 = vmatpush.msra.mxu0 0.0
  %3309 = vmatpush.msra.mxu0 0.0
  %3310 = vmatpush.msra.mxu0 0.0
  %3311 = vmatpush.msra.mxu0 %v3293
  %3312 = vmatpush.msra.mxu0 %v3292
  %3313 = vmatpush.msra.mxu0 %v3291
  %3314 = vmatpush.msra.mxu0 %v3290
  %3315 = vmatmul.f32.gmra.mxu0 %v2909
  %v3316 = vpop.f32.mrf.mxu0
  %v3317 = vadd.f32 %v3297, %v3316
  %3318 = vmatmul.f32.gmra.mxu0 %v2912
  %v3319 = vpop.f32.mrf.mxu0
  %v3320 = vadd.f32 %v3297, %v3319
  %3321 = vmatmul.f32.gmra.mxu0 %v2915
  %v3322 = vpop.f32.mrf.mxu0
  %v3323 = vadd.f32 %v3297, %v3322
  %3324 = vmatmul.f32.gmra.mxu0 %v2918
  %v3325 = vpop.f32.mrf.mxu0
  %v3326 = vadd.f32 %v3297, %v3325
  %3327 = vmatmul.f32.gmra.mxu0 %v2921
  %v3328 = vpop.f32.mrf.mxu0
  %v3329 = vadd.f32 %v3297, %v3328
  %3330 = vmatmul.f32.gmra.mxu0 %v2924
  %v3331 = vpop.f32.mrf.mxu0
  %v3332 = vadd.f32 %v3297, %v3331
  %3333 = vdwg.mxu0
  %s3334 = scalar_lea.vmem %s37, 160
  %v3335 = vld [vmem:[%s3334] sm:$0xff]
  %v3336 = vld [vmem:[%s3334 + $0x8] sm:$0xff]
  %v3337 = vld [vmem:[%s3334 + $0x10] sm:$0xff]
  %v3338 = vld [vmem:[%s3334 + $0x18] sm:$0xff]
  %s3339 = scalar_lea.vmem %s39, 5
  %v3340 = vld [vmem:[%s3339] sm:$0x1]
  %v3342 = vperm.slane %v3340, 0
  %3344 = vmatpush.msra.mxu0 0.0
  %3345 = vmatpush.msra.mxu0 0.0
  %3346 = vmatpush.msra.mxu0 0.0
  %3347 = vmatpush.msra.mxu0 0.0
  %3348 = vmatpush.msra.mxu0 0.0
  %3349 = vmatpush.msra.mxu0 0.0
  %3350 = vmatpush.msra.mxu0 0.0
  %3351 = vmatpush.msra.mxu0 0.0
  %3352 = vmatpush.msra.mxu0 0.0
  %3353 = vmatpush.msra.mxu0 0.0
  %3354 = vmatpush.msra.mxu0 0.0
  %3355 = vmatpush.msra.mxu0 0.0
  %3356 = vmatpush.msra.mxu0 %v3338
  %3357 = vmatpush.msra.mxu0 %v3337
  %3358 = vmatpush.msra.mxu0 %v3336
  %3359 = vmatpush.msra.mxu0 %v3335
  %3360 = vmatmul.f32.gmra.mxu0 %v2909
  %v3361 = vpop.f32.mrf.mxu0
  %v3362 = vadd.f32 %v3342, %v3361
  %3363 = vmatmul.f32.gmra.mxu0 %v2912
  %v3364 = vpop.f32.mrf.mxu0
  %v3365 = vadd.f32 %v3342, %v3364
  %3366 = vmatmul.f32.gmra.mxu0 %v2915
  %v3367 = vpop.f32.mrf.mxu0
  %v3368 = vadd.f32 %v3342, %v3367
  %3369 = vmatmul.f32.gmra.mxu0 %v2918
  %v3370 = vpop.f32.mrf.mxu0
  %v3371 = vadd.f32 %v3342, %v3370
  %3372 = vmatmul.f32.gmra.mxu0 %v2921
  %v3373 = vpop.f32.mrf.mxu0
  %v3374 = vadd.f32 %v3342, %v3373
  %3375 = vmatmul.f32.gmra.mxu0 %v2924
  %v3376 = vpop.f32.mrf.mxu0
  %v3377 = vadd.f32 %v3342, %v3376
  %3378 = vdwg.mxu0
  %s3379 = scalar_lea.vmem %s41, 160
  %v3380 = vld [vmem:[%s3379] sm:$0xff]
  %v3381 = vld [vmem:[%s3379 + $0x8] sm:$0xff]
  %v3382 = vld [vmem:[%s3379 + $0x10] sm:$0xff]
  %v3383 = vld [vmem:[%s3379 + $0x18] sm:$0xff]
  %s3384 = scalar_lea.vmem %s43, 5
  %v3385 = vld [vmem:[%s3384] sm:$0x1]
  %v3387 = vperm.slane %v3385, 0
  %3389 = vmatpush.msra.mxu0 0.0
  %3390 = vmatpush.msra.mxu0 0.0
  %3391 = vmatpush.msra.mxu0 0.0
  %3392 = vmatpush.msra.mxu0 0.0
  %3393 = vmatpush.msra.mxu0 0.0
  %3394 = vmatpush.msra.mxu0 0.0
  %3395 = vmatpush.msra.mxu0 0.0
  %3396 = vmatpush.msra.mxu0 0.0
  %3397 = vmatpush.msra.mxu0 0.0
  %3398 = vmatpush.msra.mxu0 0.0
  %3399 = vmatpush.msra.mxu0 0.0
  %3400 = vmatpush.msra.mxu0 0.0
  %3401 = vmatpush.msra.mxu0 %v3383
  %3402 = vmatpush.msra.mxu0 %v3382
  %3403 = vmatpush.msra.mxu0 %v3381
  %3404 = vmatpush.msra.mxu0 %v3380
  %3405 = vmatmul.f32.gmra.mxu0 %v2909
  %v3406 = vpop.f32.mrf.mxu0
  %v3407 = vadd.f32 %v3387, %v3406
  %3408 = vmatmul.f32.gmra.mxu0 %v2912
  %v3409 = vpop.f32.mrf.mxu0
  %v3410 = vadd.f32 %v3387, %v3409
  %3411 = vmatmul.f32.gmra.mxu0 %v2915
  %v3412 = vpop.f32.mrf.mxu0
  %v3413 = vadd.f32 %v3387, %v3412
  %3414 = vmatmul.f32.gmra.mxu0 %v2918
  %v3415 = vpop.f32.mrf.mxu0
  %v3416 = vadd.f32 %v3387, %v3415
  %3417 = vmatmul.f32.gmra.mxu0 %v2921
  %v3418 = vpop.f32.mrf.mxu0
  %v3419 = vadd.f32 %v3387, %v3418
  %3420 = vmatmul.f32.gmra.mxu0 %v2924
  %v3421 = vpop.f32.mrf.mxu0
  %v3422 = vadd.f32 %v3387, %v3421
  %3423 = vdwg.mxu0
  %v3425 = vsel %vm750, %v3317, 0
  %v3428 = vsel %vm750, %v3320, 0
  %v3431 = vsel %vm750, %v3323, 0
  %v3434 = vsel %vm750, %v3362, 0
  %v3437 = vsel %vm750, %v3365, 0
  %v3440 = vsel %vm750, %v3368, 0
  %3442 = vmatpush.xpose.msra.mxu0 0.0
  %3443 = vmatpush.xpose.msra.mxu0 0.0
  %3444 = vmatpush.xpose.msra.mxu0 0.0
  %3445 = vmatpush.xpose.msra.mxu0 0.0
  %3446 = vmatpush.xpose.msra.mxu0 0.0
  %3447 = vmatpush.xpose.msra.mxu0 0.0
  %3448 = vmatpush.xpose.msra.mxu0 0.0
  %3449 = vmatpush.xpose.msra.mxu0 0.0
  %3450 = vmatpush.xpose.msra.mxu0 0.0
  %3451 = vmatpush.xpose.msra.mxu0 0.0
  %3452 = vmatpush.xpose.msra.mxu0 0.0
  %3453 = vmatpush.xpose.msra.mxu0 0.0
  %3454 = vmatpush.xpose.msra.mxu0 0.0
  %3455 = vmatpush.xpose.msra.mxu0 %v3440
  %3456 = vmatpush.xpose.msra.mxu0 %v3437
  %3457 = vmatpush.xpose.msra.mxu0 %v3434
  %3458 = vmatmul.f32.gmra.mxu0 %v3425
  %v3459 = vpop.f32.mrf.mxu0
  %v3460 = vadd.f32 0.0, %v3459
  %3461 = vmatmul.f32.gmra.mxu0 %v3428
  %v3462 = vpop.f32.mrf.mxu0
  %v3463 = vadd.f32 0.0, %v3462
  %3464 = vmatmul.f32.gmra.mxu0 %v3431
  %v3465 = vpop.f32.mrf.mxu0
  %v3466 = vadd.f32 0.0, %v3465
  %3467 = vdwg.mxu0
  %v3468 = vmul.f32 %v3460, 0.35355338
  %v3469 = vmul.f32 %v3463, 0.35355338
  %v3470 = vmul.f32 %v3466, 0.35355338
  %v3471 = vsel %vm448, %v3468, -1e+30
  %v3472 = vsel %vm449, %v3469, -1e+30
  %v3473 = vsel %vm450, %v3470, -1e+30
  %v3474 = vsel %vm801, %v3471, -inf
  %3475 = vmax.xlane.f32.xlu0 %v3474
  %v3476 = vpop.xlane.xlu0 %3475
  %v3477 = vsel %vm801, %v3472, -inf
  %3478 = vmax.xlane.f32.xlu0 %v3477
  %v3479 = vpop.xlane.xlu0 %3478
  %v3480 = vsel %vm801, %v3473, -inf
  %3481 = vmax.xlane.f32.xlu0 %v3480
  %v3482 = vpop.xlane.xlu0 %3481
  %v3483 = vsub.f32 %v3471, %v3476
  %v3484 = vsub.f32 %v3472, %v3479
  %v3485 = vsub.f32 %v3473, %v3482
  %v3486 = vmul.f32 %v3483, 1.442695
  %v3487 = vpow.pop %v3486
  %v3488 = vmul.f32 %v3484, 1.442695
  %v3489 = vpow.pop %v3488
  %v3490 = vmul.f32 %v3485, 1.442695
  %v3491 = vpow.pop %v3490
  %v3492 = vsel %vm801, %v3487, 0.0
  %3493 = vadd.xlane.f32.xlu0 %v3492
  %v3494 = vpop.xlane.xlu0 %3493
  %v3495 = vsel %vm801, %v3489, 0.0
  %3496 = vadd.xlane.f32.xlu0 %v3495
  %v3497 = vpop.xlane.xlu0 %3496
  %v3498 = vsel %vm801, %v3491, 0.0
  %3499 = vadd.xlane.f32.xlu0 %v3498
  %v3500 = vpop.xlane.xlu0 %3499
  %v3501 = vrcp.pop %v3494
  %v3502 = vrcp.pop %v3497
  %v3503 = vrcp.pop %v3500
  %v3504 = vmul.f32 %v3487, %v3501
  %v3505 = vmul.f32 %v3489, %v3502
  %v3506 = vmul.f32 %v3491, %v3503
  %v3508 = vsel %vm801, %v3504, 0
  %v3511 = vsel %vm801, %v3505, 0
  %v3514 = vsel %vm801, %v3506, 0
  %3516 = vmatpush.msra.mxu0 0.0
  %3517 = vmatpush.msra.mxu0 0.0
  %3518 = vmatpush.msra.mxu0 0.0
  %3519 = vmatpush.msra.mxu0 0.0
  %3520 = vmatpush.msra.mxu0 0.0
  %3521 = vmatpush.msra.mxu0 0.0
  %3522 = vmatpush.msra.mxu0 0.0
  %3523 = vmatpush.msra.mxu0 0.0
  %3524 = vmatpush.msra.mxu0 0.0
  %3525 = vmatpush.msra.mxu0 0.0
  %3526 = vmatpush.msra.mxu0 0.0
  %3527 = vmatpush.msra.mxu0 0.0
  %3528 = vmatpush.msra.mxu0 0.0
  %3529 = vmatpush.msra.mxu0 %v3413
  %3530 = vmatpush.msra.mxu0 %v3410
  %3531 = vmatpush.msra.mxu0 %v3407
  %3532 = vmatmul.f32.gmra.mxu0 %v3508
  %v3533 = vpop.f32.mrf.mxu0
  %v3534 = vadd.f32 0.0, %v3533
  %3535 = vmatmul.f32.gmra.mxu0 %v3511
  %v3536 = vpop.f32.mrf.mxu0
  %v3537 = vadd.f32 0.0, %v3536
  %3538 = vmatmul.f32.gmra.mxu0 %v3514
  %v3539 = vpop.f32.mrf.mxu0
  %v3540 = vadd.f32 0.0, %v3539
  %3541 = vdwg.mxu0
  %s3542 = scalar_lea.vmem %s45, 40
  %v3543 = vld [vmem:[%s3542] sm:$0xff]
  %v3545 = vsel %vm750, %v3534, 0
  %v3548 = vsel %vm750, %v3537, 0
  %v3551 = vsel %vm750, %v3540, 0
  %3553 = vmatpush.msra.mxu0 0.0
  %3554 = vmatpush.msra.mxu0 0.0
  %3555 = vmatpush.msra.mxu0 0.0
  %3556 = vmatpush.msra.mxu0 0.0
  %3557 = vmatpush.msra.mxu0 0.0
  %3558 = vmatpush.msra.mxu0 0.0
  %3559 = vmatpush.msra.mxu0 0.0
  %3560 = vmatpush.msra.mxu0 0.0
  %3561 = vmatpush.msra.mxu0 0.0
  %3562 = vmatpush.msra.mxu0 0.0
  %3563 = vmatpush.msra.mxu0 0.0
  %3564 = vmatpush.msra.mxu0 0.0
  %3565 = vmatpush.msra.mxu0 0.0
  %3566 = vmatpush.msra.mxu0 0.0
  %3567 = vmatpush.msra.mxu0 0.0
  %3568 = vmatpush.msra.mxu0 %v3543
  %3569 = vmatmul.f32.gmra.mxu0 %v3545
  %v3570 = vpop.f32.mrf.mxu0
  %v3571 = vadd.f32 0.0, %v3570
  %3572 = vmatmul.f32.gmra.mxu0 %v3548
  %v3573 = vpop.f32.mrf.mxu0
  %v3574 = vadd.f32 0.0, %v3573
  %3575 = vmatmul.f32.gmra.mxu0 %v3551
  %v3576 = vpop.f32.mrf.mxu0
  %v3577 = vadd.f32 0.0, %v3576
  %3578 = vdwg.mxu0
  %v3580 = vsel %vm750, %v3161, 0
  %v3583 = vsel %vm750, %v3164, 0
  %v3586 = vsel %vm750, %v3167, 0
  %3588 = vmatpush.msra.mxu0 0.0
  %3589 = vmatpush.msra.mxu0 0.0
  %3590 = vmatpush.msra.mxu0 0.0
  %3591 = vmatpush.msra.mxu0 0.0
  %3592 = vmatpush.msra.mxu0 0.0
  %3593 = vmatpush.msra.mxu0 0.0
  %3594 = vmatpush.msra.mxu0 0.0
  %3595 = vmatpush.msra.mxu0 0.0
  %3596 = vmatpush.msra.mxu0 0.0
  %3597 = vmatpush.msra.mxu0 0.0
  %3598 = vmatpush.msra.mxu0 0.0
  %3599 = vmatpush.msra.mxu0 0.0
  %3600 = vmatpush.msra.mxu0 0.0
  %3601 = vmatpush.msra.mxu0 0.0
  %3602 = vmatpush.msra.mxu0 0.0
  %3603 = vmatpush.msra.mxu0 %v3170
  %3604 = vmatmul.f32.gmra.mxu0 %v3580
  %v3605 = vpop.f32.mrf.mxu0
  %v3606 = vadd.f32 %v3571, %v3605
  %3607 = vmatmul.f32.gmra.mxu0 %v3583
  %v3608 = vpop.f32.mrf.mxu0
  %v3609 = vadd.f32 %v3574, %v3608
  %3610 = vmatmul.f32.gmra.mxu0 %v3586
  %v3611 = vpop.f32.mrf.mxu0
  %v3612 = vadd.f32 %v3577, %v3611
  %3613 = vdwg.mxu0
  %v3615 = vsel %vm750, %v3326, 0
  %v3618 = vsel %vm750, %v3329, 0
  %v3621 = vsel %vm750, %v3332, 0
  %v3624 = vsel %vm750, %v3371, 0
  %v3627 = vsel %vm750, %v3374, 0
  %v3630 = vsel %vm750, %v3377, 0
  %3632 = vmatpush.xpose.msra.mxu0 0.0
  %3633 = vmatpush.xpose.msra.mxu0 0.0
  %3634 = vmatpush.xpose.msra.mxu0 0.0
  %3635 = vmatpush.xpose.msra.mxu0 0.0
  %3636 = vmatpush.xpose.msra.mxu0 0.0
  %3637 = vmatpush.xpose.msra.mxu0 0.0
  %3638 = vmatpush.xpose.msra.mxu0 0.0
  %3639 = vmatpush.xpose.msra.mxu0 0.0
  %3640 = vmatpush.xpose.msra.mxu0 0.0
  %3641 = vmatpush.xpose.msra.mxu0 0.0
  %3642 = vmatpush.xpose.msra.mxu0 0.0
  %3643 = vmatpush.xpose.msra.mxu0 0.0
  %3644 = vmatpush.xpose.msra.mxu0 0.0
  %3645 = vmatpush.xpose.msra.mxu0 %v3630
  %3646 = vmatpush.xpose.msra.mxu0 %v3627
  %3647 = vmatpush.xpose.msra.mxu0 %v3624
  %3648 = vmatmul.f32.gmra.mxu0 %v3615
  %v3649 = vpop.f32.mrf.mxu0
  %v3650 = vadd.f32 0.0, %v3649
  %3651 = vmatmul.f32.gmra.mxu0 %v3618
  %v3652 = vpop.f32.mrf.mxu0
  %v3653 = vadd.f32 0.0, %v3652
  %3654 = vmatmul.f32.gmra.mxu0 %v3621
  %v3655 = vpop.f32.mrf.mxu0
  %v3656 = vadd.f32 0.0, %v3655
  %3657 = vdwg.mxu0
  %v3658 = vmul.f32 %v3650, 0.35355338
  %v3659 = vmul.f32 %v3653, 0.35355338
  %v3660 = vmul.f32 %v3656, 0.35355338
  %v3661 = vsel %vm448, %v3658, -1e+30
  %v3662 = vsel %vm449, %v3659, -1e+30
  %v3663 = vsel %vm450, %v3660, -1e+30
  %v3664 = vsel %vm801, %v3661, -inf
  %3665 = vmax.xlane.f32.xlu0 %v3664
  %v3666 = vpop.xlane.xlu0 %3665
  %v3667 = vsel %vm801, %v3662, -inf
  %3668 = vmax.xlane.f32.xlu0 %v3667
  %v3669 = vpop.xlane.xlu0 %3668
  %v3670 = vsel %vm801, %v3663, -inf
  %3671 = vmax.xlane.f32.xlu0 %v3670
  %v3672 = vpop.xlane.xlu0 %3671
  %v3673 = vsub.f32 %v3661, %v3666
  %v3674 = vsub.f32 %v3662, %v3669
  %v3675 = vsub.f32 %v3663, %v3672
  %v3676 = vmul.f32 %v3673, 1.442695
  %v3677 = vpow.pop %v3676
  %v3678 = vmul.f32 %v3674, 1.442695
  %v3679 = vpow.pop %v3678
  %v3680 = vmul.f32 %v3675, 1.442695
  %v3681 = vpow.pop %v3680
  %v3682 = vsel %vm801, %v3677, 0.0
  %3683 = vadd.xlane.f32.xlu0 %v3682
  %v3684 = vpop.xlane.xlu0 %3683
  %v3685 = vsel %vm801, %v3679, 0.0
  %3686 = vadd.xlane.f32.xlu0 %v3685
  %v3687 = vpop.xlane.xlu0 %3686
  %v3688 = vsel %vm801, %v3681, 0.0
  %3689 = vadd.xlane.f32.xlu0 %v3688
  %v3690 = vpop.xlane.xlu0 %3689
  %v3691 = vrcp.pop %v3684
  %v3692 = vrcp.pop %v3687
  %v3693 = vrcp.pop %v3690
  %v3694 = vmul.f32 %v3677, %v3691
  %v3695 = vmul.f32 %v3679, %v3692
  %v3696 = vmul.f32 %v3681, %v3693
  %v3698 = vsel %vm801, %v3694, 0
  %v3701 = vsel %vm801, %v3695, 0
  %v3704 = vsel %vm801, %v3696, 0
  %3706 = vmatpush.msra.mxu0 0.0
  %3707 = vmatpush.msra.mxu0 0.0
  %3708 = vmatpush.msra.mxu0 0.0
  %3709 = vmatpush.msra.mxu0 0.0
  %3710 = vmatpush.msra.mxu0 0.0
  %3711 = vmatpush.msra.mxu0 0.0
  %3712 = vmatpush.msra.mxu0 0.0
  %3713 = vmatpush.msra.mxu0 0.0
  %3714 = vmatpush.msra.mxu0 0.0
  %3715 = vmatpush.msra.mxu0 0.0
  %3716 = vmatpush.msra.mxu0 0.0
  %3717 = vmatpush.msra.mxu0 0.0
  %3718 = vmatpush.msra.mxu0 0.0
  %3719 = vmatpush.msra.mxu0 %v3422
  %3720 = vmatpush.msra.mxu0 %v3419
  %3721 = vmatpush.msra.mxu0 %v3416
  %3722 = vmatmul.f32.gmra.mxu0 %v3698
  %v3723 = vpop.f32.mrf.mxu0
  %v3724 = vadd.f32 0.0, %v3723
  %3725 = vmatmul.f32.gmra.mxu0 %v3701
  %v3726 = vpop.f32.mrf.mxu0
  %v3727 = vadd.f32 0.0, %v3726
  %3728 = vmatmul.f32.gmra.mxu0 %v3704
  %v3729 = vpop.f32.mrf.mxu0
  %v3730 = vadd.f32 0.0, %v3729
  %3731 = vdwg.mxu0
  %v3733 = vsel %vm750, %v3724, 0
  %v3736 = vsel %vm750, %v3727, 0
  %v3739 = vsel %vm750, %v3730, 0
  %3741 = vmatpush.msra.mxu0 0.0
  %3742 = vmatpush.msra.mxu0 0.0
  %3743 = vmatpush.msra.mxu0 0.0
  %3744 = vmatpush.msra.mxu0 0.0
  %3745 = vmatpush.msra.mxu0 0.0
  %3746 = vmatpush.msra.mxu0 0.0
  %3747 = vmatpush.msra.mxu0 0.0
  %3748 = vmatpush.msra.mxu0 0.0
  %3749 = vmatpush.msra.mxu0 0.0
  %3750 = vmatpush.msra.mxu0 0.0
  %3751 = vmatpush.msra.mxu0 0.0
  %3752 = vmatpush.msra.mxu0 0.0
  %3753 = vmatpush.msra.mxu0 0.0
  %3754 = vmatpush.msra.mxu0 0.0
  %3755 = vmatpush.msra.mxu0 0.0
  %3756 = vmatpush.msra.mxu0 %v3543
  %3757 = vmatmul.f32.gmra.mxu0 %v3733
  %v3758 = vpop.f32.mrf.mxu0
  %v3759 = vadd.f32 0.0, %v3758
  %3760 = vmatmul.f32.gmra.mxu0 %v3736
  %v3761 = vpop.f32.mrf.mxu0
  %v3762 = vadd.f32 0.0, %v3761
  %3763 = vmatmul.f32.gmra.mxu0 %v3739
  %v3764 = vpop.f32.mrf.mxu0
  %v3765 = vadd.f32 0.0, %v3764
  %3766 = vdwg.mxu0
  %v3768 = vsel %vm750, %v3281, 0
  %v3771 = vsel %vm750, %v3284, 0
  %v3774 = vsel %vm750, %v3287, 0
  %3776 = vmatpush.msra.mxu0 0.0
  %3777 = vmatpush.msra.mxu0 0.0
  %3778 = vmatpush.msra.mxu0 0.0
  %3779 = vmatpush.msra.mxu0 0.0
  %3780 = vmatpush.msra.mxu0 0.0
  %3781 = vmatpush.msra.mxu0 0.0
  %3782 = vmatpush.msra.mxu0 0.0
  %3783 = vmatpush.msra.mxu0 0.0
  %3784 = vmatpush.msra.mxu0 0.0
  %3785 = vmatpush.msra.mxu0 0.0
  %3786 = vmatpush.msra.mxu0 0.0
  %3787 = vmatpush.msra.mxu0 0.0
  %3788 = vmatpush.msra.mxu0 0.0
  %3789 = vmatpush.msra.mxu0 0.0
  %3790 = vmatpush.msra.mxu0 0.0
  %3791 = vmatpush.msra.mxu0 %v3170
  %3792 = vmatmul.f32.gmra.mxu0 %v3768
  %v3793 = vpop.f32.mrf.mxu0
  %v3794 = vadd.f32 %v3759, %v3793
  %3795 = vmatmul.f32.gmra.mxu0 %v3771
  %v3796 = vpop.f32.mrf.mxu0
  %v3797 = vadd.f32 %v3762, %v3796
  %3798 = vmatmul.f32.gmra.mxu0 %v3774
  %v3799 = vpop.f32.mrf.mxu0
  %v3800 = vadd.f32 %v3765, %v3799
  %3801 = vdwg.mxu0
  %s3802 = scalar_lea.vmem %s33, 192
  %v3803 = vld [vmem:[%s3802] sm:$0xff]
  %v3804 = vld [vmem:[%s3802 + $0x8] sm:$0xff]
  %v3805 = vld [vmem:[%s3802 + $0x10] sm:$0xff]
  %v3806 = vld [vmem:[%s3802 + $0x18] sm:$0xff]
  %s3807 = scalar_lea.vmem %s35, 6
  %v3808 = vld [vmem:[%s3807] sm:$0x1]
  %v3810 = vperm.slane %v3808, 0
  %3812 = vmatpush.msra.mxu0 0.0
  %3813 = vmatpush.msra.mxu0 0.0
  %3814 = vmatpush.msra.mxu0 0.0
  %3815 = vmatpush.msra.mxu0 0.0
  %3816 = vmatpush.msra.mxu0 0.0
  %3817 = vmatpush.msra.mxu0 0.0
  %3818 = vmatpush.msra.mxu0 0.0
  %3819 = vmatpush.msra.mxu0 0.0
  %3820 = vmatpush.msra.mxu0 0.0
  %3821 = vmatpush.msra.mxu0 0.0
  %3822 = vmatpush.msra.mxu0 0.0
  %3823 = vmatpush.msra.mxu0 0.0
  %3824 = vmatpush.msra.mxu0 %v3806
  %3825 = vmatpush.msra.mxu0 %v3805
  %3826 = vmatpush.msra.mxu0 %v3804
  %3827 = vmatpush.msra.mxu0 %v3803
  %3828 = vmatmul.f32.gmra.mxu0 %v2909
  %v3829 = vpop.f32.mrf.mxu0
  %v3830 = vadd.f32 %v3810, %v3829
  %3831 = vmatmul.f32.gmra.mxu0 %v2912
  %v3832 = vpop.f32.mrf.mxu0
  %v3833 = vadd.f32 %v3810, %v3832
  %3834 = vmatmul.f32.gmra.mxu0 %v2915
  %v3835 = vpop.f32.mrf.mxu0
  %v3836 = vadd.f32 %v3810, %v3835
  %3837 = vmatmul.f32.gmra.mxu0 %v2918
  %v3838 = vpop.f32.mrf.mxu0
  %v3839 = vadd.f32 %v3810, %v3838
  %3840 = vmatmul.f32.gmra.mxu0 %v2921
  %v3841 = vpop.f32.mrf.mxu0
  %v3842 = vadd.f32 %v3810, %v3841
  %3843 = vmatmul.f32.gmra.mxu0 %v2924
  %v3844 = vpop.f32.mrf.mxu0
  %v3845 = vadd.f32 %v3810, %v3844
  %3846 = vdwg.mxu0
  %s3847 = scalar_lea.vmem %s37, 192
  %v3848 = vld [vmem:[%s3847] sm:$0xff]
  %v3849 = vld [vmem:[%s3847 + $0x8] sm:$0xff]
  %v3850 = vld [vmem:[%s3847 + $0x10] sm:$0xff]
  %v3851 = vld [vmem:[%s3847 + $0x18] sm:$0xff]
  %s3852 = scalar_lea.vmem %s39, 6
  %v3853 = vld [vmem:[%s3852] sm:$0x1]
  %v3855 = vperm.slane %v3853, 0
  %3857 = vmatpush.msra.mxu0 0.0
  %3858 = vmatpush.msra.mxu0 0.0
  %3859 = vmatpush.msra.mxu0 0.0
  %3860 = vmatpush.msra.mxu0 0.0
  %3861 = vmatpush.msra.mxu0 0.0
  %3862 = vmatpush.msra.mxu0 0.0
  %3863 = vmatpush.msra.mxu0 0.0
  %3864 = vmatpush.msra.mxu0 0.0
  %3865 = vmatpush.msra.mxu0 0.0
  %3866 = vmatpush.msra.mxu0 0.0
  %3867 = vmatpush.msra.mxu0 0.0
  %3868 = vmatpush.msra.mxu0 0.0
  %3869 = vmatpush.msra.mxu0 %v3851
  %3870 = vmatpush.msra.mxu0 %v3850
  %3871 = vmatpush.msra.mxu0 %v3849
  %3872 = vmatpush.msra.mxu0 %v3848
  %3873 = vmatmul.f32.gmra.mxu0 %v2909
  %v3874 = vpop.f32.mrf.mxu0
  %v3875 = vadd.f32 %v3855, %v3874
  %3876 = vmatmul.f32.gmra.mxu0 %v2912
  %v3877 = vpop.f32.mrf.mxu0
  %v3878 = vadd.f32 %v3855, %v3877
  %3879 = vmatmul.f32.gmra.mxu0 %v2915
  %v3880 = vpop.f32.mrf.mxu0
  %v3881 = vadd.f32 %v3855, %v3880
  %3882 = vmatmul.f32.gmra.mxu0 %v2918
  %v3883 = vpop.f32.mrf.mxu0
  %v3884 = vadd.f32 %v3855, %v3883
  %3885 = vmatmul.f32.gmra.mxu0 %v2921
  %v3886 = vpop.f32.mrf.mxu0
  %v3887 = vadd.f32 %v3855, %v3886
  %3888 = vmatmul.f32.gmra.mxu0 %v2924
  %v3889 = vpop.f32.mrf.mxu0
  %v3890 = vadd.f32 %v3855, %v3889
  %3891 = vdwg.mxu0
  %s3892 = scalar_lea.vmem %s41, 192
  %v3893 = vld [vmem:[%s3892] sm:$0xff]
  %v3894 = vld [vmem:[%s3892 + $0x8] sm:$0xff]
  %v3895 = vld [vmem:[%s3892 + $0x10] sm:$0xff]
  %v3896 = vld [vmem:[%s3892 + $0x18] sm:$0xff]
  %s3897 = scalar_lea.vmem %s43, 6
  %v3898 = vld [vmem:[%s3897] sm:$0x1]
  %v3900 = vperm.slane %v3898, 0
  %3902 = vmatpush.msra.mxu0 0.0
  %3903 = vmatpush.msra.mxu0 0.0
  %3904 = vmatpush.msra.mxu0 0.0
  %3905 = vmatpush.msra.mxu0 0.0
  %3906 = vmatpush.msra.mxu0 0.0
  %3907 = vmatpush.msra.mxu0 0.0
  %3908 = vmatpush.msra.mxu0 0.0
  %3909 = vmatpush.msra.mxu0 0.0
  %3910 = vmatpush.msra.mxu0 0.0
  %3911 = vmatpush.msra.mxu0 0.0
  %3912 = vmatpush.msra.mxu0 0.0
  %3913 = vmatpush.msra.mxu0 0.0
  %3914 = vmatpush.msra.mxu0 %v3896
  %3915 = vmatpush.msra.mxu0 %v3895
  %3916 = vmatpush.msra.mxu0 %v3894
  %3917 = vmatpush.msra.mxu0 %v3893
  %3918 = vmatmul.f32.gmra.mxu0 %v2909
  %v3919 = vpop.f32.mrf.mxu0
  %v3920 = vadd.f32 %v3900, %v3919
  %3921 = vmatmul.f32.gmra.mxu0 %v2912
  %v3922 = vpop.f32.mrf.mxu0
  %v3923 = vadd.f32 %v3900, %v3922
  %3924 = vmatmul.f32.gmra.mxu0 %v2915
  %v3925 = vpop.f32.mrf.mxu0
  %v3926 = vadd.f32 %v3900, %v3925
  %3927 = vmatmul.f32.gmra.mxu0 %v2918
  %v3928 = vpop.f32.mrf.mxu0
  %v3929 = vadd.f32 %v3900, %v3928
  %3930 = vmatmul.f32.gmra.mxu0 %v2921
  %v3931 = vpop.f32.mrf.mxu0
  %v3932 = vadd.f32 %v3900, %v3931
  %3933 = vmatmul.f32.gmra.mxu0 %v2924
  %v3934 = vpop.f32.mrf.mxu0
  %v3935 = vadd.f32 %v3900, %v3934
  %3936 = vdwg.mxu0
  %v3938 = vsel %vm750, %v3830, 0
  %v3941 = vsel %vm750, %v3833, 0
  %v3944 = vsel %vm750, %v3836, 0
  %v3947 = vsel %vm750, %v3875, 0
  %v3950 = vsel %vm750, %v3878, 0
  %v3953 = vsel %vm750, %v3881, 0
  %3955 = vmatpush.xpose.msra.mxu0 0.0
  %3956 = vmatpush.xpose.msra.mxu0 0.0
  %3957 = vmatpush.xpose.msra.mxu0 0.0
  %3958 = vmatpush.xpose.msra.mxu0 0.0
  %3959 = vmatpush.xpose.msra.mxu0 0.0
  %3960 = vmatpush.xpose.msra.mxu0 0.0
  %3961 = vmatpush.xpose.msra.mxu0 0.0
  %3962 = vmatpush.xpose.msra.mxu0 0.0
  %3963 = vmatpush.xpose.msra.mxu0 0.0
  %3964 = vmatpush.xpose.msra.mxu0 0.0
  %3965 = vmatpush.xpose.msra.mxu0 0.0
  %3966 = vmatpush.xpose.msra.mxu0 0.0
  %3967 = vmatpush.xpose.msra.mxu0 0.0
  %3968 = vmatpush.xpose.msra.mxu0 %v3953
  %3969 = vmatpush.xpose.msra.mxu0 %v3950
  %3970 = vmatpush.xpose.msra.mxu0 %v3947
  %3971 = vmatmul.f32.gmra.mxu0 %v3938
  %v3972 = vpop.f32.mrf.mxu0
  %v3973 = vadd.f32 0.0, %v3972
  %3974 = vmatmul.f32.gmra.mxu0 %v3941
  %v3975 = vpop.f32.mrf.mxu0
  %v3976 = vadd.f32 0.0, %v3975
  %3977 = vmatmul.f32.gmra.mxu0 %v3944
  %v3978 = vpop.f32.mrf.mxu0
  %v3979 = vadd.f32 0.0, %v3978
  %3980 = vdwg.mxu0
  %v3981 = vmul.f32 %v3973, 0.35355338
  %v3982 = vmul.f32 %v3976, 0.35355338
  %v3983 = vmul.f32 %v3979, 0.35355338
  %v3984 = vsel %vm448, %v3981, -1e+30
  %v3985 = vsel %vm449, %v3982, -1e+30
  %v3986 = vsel %vm450, %v3983, -1e+30
  %v3987 = vsel %vm801, %v3984, -inf
  %3988 = vmax.xlane.f32.xlu0 %v3987
  %v3989 = vpop.xlane.xlu0 %3988
  %v3990 = vsel %vm801, %v3985, -inf
  %3991 = vmax.xlane.f32.xlu0 %v3990
  %v3992 = vpop.xlane.xlu0 %3991
  %v3993 = vsel %vm801, %v3986, -inf
  %3994 = vmax.xlane.f32.xlu0 %v3993
  %v3995 = vpop.xlane.xlu0 %3994
  %v3996 = vsub.f32 %v3984, %v3989
  %v3997 = vsub.f32 %v3985, %v3992
  %v3998 = vsub.f32 %v3986, %v3995
  %v3999 = vmul.f32 %v3996, 1.442695
  %v4000 = vpow.pop %v3999
  %v4001 = vmul.f32 %v3997, 1.442695
  %v4002 = vpow.pop %v4001
  %v4003 = vmul.f32 %v3998, 1.442695
  %v4004 = vpow.pop %v4003
  %v4005 = vsel %vm801, %v4000, 0.0
  %4006 = vadd.xlane.f32.xlu0 %v4005
  %v4007 = vpop.xlane.xlu0 %4006
  %v4008 = vsel %vm801, %v4002, 0.0
  %4009 = vadd.xlane.f32.xlu0 %v4008
  %v4010 = vpop.xlane.xlu0 %4009
  %v4011 = vsel %vm801, %v4004, 0.0
  %4012 = vadd.xlane.f32.xlu0 %v4011
  %v4013 = vpop.xlane.xlu0 %4012
  %v4014 = vrcp.pop %v4007
  %v4015 = vrcp.pop %v4010
  %v4016 = vrcp.pop %v4013
  %v4017 = vmul.f32 %v4000, %v4014
  %v4018 = vmul.f32 %v4002, %v4015
  %v4019 = vmul.f32 %v4004, %v4016
  %v4021 = vsel %vm801, %v4017, 0
  %v4024 = vsel %vm801, %v4018, 0
  %v4027 = vsel %vm801, %v4019, 0
  %4029 = vmatpush.msra.mxu0 0.0
  %4030 = vmatpush.msra.mxu0 0.0
  %4031 = vmatpush.msra.mxu0 0.0
  %4032 = vmatpush.msra.mxu0 0.0
  %4033 = vmatpush.msra.mxu0 0.0
  %4034 = vmatpush.msra.mxu0 0.0
  %4035 = vmatpush.msra.mxu0 0.0
  %4036 = vmatpush.msra.mxu0 0.0
  %4037 = vmatpush.msra.mxu0 0.0
  %4038 = vmatpush.msra.mxu0 0.0
  %4039 = vmatpush.msra.mxu0 0.0
  %4040 = vmatpush.msra.mxu0 0.0
  %4041 = vmatpush.msra.mxu0 0.0
  %4042 = vmatpush.msra.mxu0 %v3926
  %4043 = vmatpush.msra.mxu0 %v3923
  %4044 = vmatpush.msra.mxu0 %v3920
  %4045 = vmatmul.f32.gmra.mxu0 %v4021
  %v4046 = vpop.f32.mrf.mxu0
  %v4047 = vadd.f32 0.0, %v4046
  %4048 = vmatmul.f32.gmra.mxu0 %v4024
  %v4049 = vpop.f32.mrf.mxu0
  %v4050 = vadd.f32 0.0, %v4049
  %4051 = vmatmul.f32.gmra.mxu0 %v4027
  %v4052 = vpop.f32.mrf.mxu0
  %v4053 = vadd.f32 0.0, %v4052
  %4054 = vdwg.mxu0
  %s4055 = scalar_lea.vmem %s45, 48
  %v4056 = vld [vmem:[%s4055] sm:$0xff]
  %v4058 = vsel %vm750, %v4047, 0
  %v4061 = vsel %vm750, %v4050, 0
  %v4064 = vsel %vm750, %v4053, 0
  %4066 = vmatpush.msra.mxu0 0.0
  %4067 = vmatpush.msra.mxu0 0.0
  %4068 = vmatpush.msra.mxu0 0.0
  %4069 = vmatpush.msra.mxu0 0.0
  %4070 = vmatpush.msra.mxu0 0.0
  %4071 = vmatpush.msra.mxu0 0.0
  %4072 = vmatpush.msra.mxu0 0.0
  %4073 = vmatpush.msra.mxu0 0.0
  %4074 = vmatpush.msra.mxu0 0.0
  %4075 = vmatpush.msra.mxu0 0.0
  %4076 = vmatpush.msra.mxu0 0.0
  %4077 = vmatpush.msra.mxu0 0.0
  %4078 = vmatpush.msra.mxu0 0.0
  %4079 = vmatpush.msra.mxu0 0.0
  %4080 = vmatpush.msra.mxu0 0.0
  %4081 = vmatpush.msra.mxu0 %v4056
  %4082 = vmatmul.f32.gmra.mxu0 %v4058
  %v4083 = vpop.f32.mrf.mxu0
  %v4084 = vadd.f32 0.0, %v4083
  %4085 = vmatmul.f32.gmra.mxu0 %v4061
  %v4086 = vpop.f32.mrf.mxu0
  %v4087 = vadd.f32 0.0, %v4086
  %4088 = vmatmul.f32.gmra.mxu0 %v4064
  %v4089 = vpop.f32.mrf.mxu0
  %v4090 = vadd.f32 0.0, %v4089
  %4091 = vdwg.mxu0
  %v4092 = vadd.f32 %v3606, %v4084
  %v4093 = vadd.f32 %v3609, %v4087
  %v4094 = vadd.f32 %v3612, %v4090
  %v4096 = vsel %vm750, %v3839, 0
  %v4099 = vsel %vm750, %v3842, 0
  %v4102 = vsel %vm750, %v3845, 0
  %v4105 = vsel %vm750, %v3884, 0
  %v4108 = vsel %vm750, %v3887, 0
  %v4111 = vsel %vm750, %v3890, 0
  %4113 = vmatpush.xpose.msra.mxu0 0.0
  %4114 = vmatpush.xpose.msra.mxu0 0.0
  %4115 = vmatpush.xpose.msra.mxu0 0.0
  %4116 = vmatpush.xpose.msra.mxu0 0.0
  %4117 = vmatpush.xpose.msra.mxu0 0.0
  %4118 = vmatpush.xpose.msra.mxu0 0.0
  %4119 = vmatpush.xpose.msra.mxu0 0.0
  %4120 = vmatpush.xpose.msra.mxu0 0.0
  %4121 = vmatpush.xpose.msra.mxu0 0.0
  %4122 = vmatpush.xpose.msra.mxu0 0.0
  %4123 = vmatpush.xpose.msra.mxu0 0.0
  %4124 = vmatpush.xpose.msra.mxu0 0.0
  %4125 = vmatpush.xpose.msra.mxu0 0.0
  %4126 = vmatpush.xpose.msra.mxu0 %v4111
  %4127 = vmatpush.xpose.msra.mxu0 %v4108
  %4128 = vmatpush.xpose.msra.mxu0 %v4105
  %4129 = vmatmul.f32.gmra.mxu0 %v4096
  %v4130 = vpop.f32.mrf.mxu0
  %v4131 = vadd.f32 0.0, %v4130
  %4132 = vmatmul.f32.gmra.mxu0 %v4099
  %v4133 = vpop.f32.mrf.mxu0
  %v4134 = vadd.f32 0.0, %v4133
  %4135 = vmatmul.f32.gmra.mxu0 %v4102
  %v4136 = vpop.f32.mrf.mxu0
  %v4137 = vadd.f32 0.0, %v4136
  %4138 = vdwg.mxu0
  %v4139 = vmul.f32 %v4131, 0.35355338
  %v4140 = vmul.f32 %v4134, 0.35355338
  %v4141 = vmul.f32 %v4137, 0.35355338
  %v4142 = vsel %vm448, %v4139, -1e+30
  %v4143 = vsel %vm449, %v4140, -1e+30
  %v4144 = vsel %vm450, %v4141, -1e+30
  %v4145 = vsel %vm801, %v4142, -inf
  %4146 = vmax.xlane.f32.xlu0 %v4145
  %v4147 = vpop.xlane.xlu0 %4146
  %v4148 = vsel %vm801, %v4143, -inf
  %4149 = vmax.xlane.f32.xlu0 %v4148
  %v4150 = vpop.xlane.xlu0 %4149
  %v4151 = vsel %vm801, %v4144, -inf
  %4152 = vmax.xlane.f32.xlu0 %v4151
  %v4153 = vpop.xlane.xlu0 %4152
  %v4154 = vsub.f32 %v4142, %v4147
  %v4155 = vsub.f32 %v4143, %v4150
  %v4156 = vsub.f32 %v4144, %v4153
  %v4157 = vmul.f32 %v4154, 1.442695
  %v4158 = vpow.pop %v4157
  %v4159 = vmul.f32 %v4155, 1.442695
  %v4160 = vpow.pop %v4159
  %v4161 = vmul.f32 %v4156, 1.442695
  %v4162 = vpow.pop %v4161
  %v4163 = vsel %vm801, %v4158, 0.0
  %4164 = vadd.xlane.f32.xlu0 %v4163
  %v4165 = vpop.xlane.xlu0 %4164
  %v4166 = vsel %vm801, %v4160, 0.0
  %4167 = vadd.xlane.f32.xlu0 %v4166
  %v4168 = vpop.xlane.xlu0 %4167
  %v4169 = vsel %vm801, %v4162, 0.0
  %4170 = vadd.xlane.f32.xlu0 %v4169
  %v4171 = vpop.xlane.xlu0 %4170
  %v4172 = vrcp.pop %v4165
  %v4173 = vrcp.pop %v4168
  %v4174 = vrcp.pop %v4171
  %v4175 = vmul.f32 %v4158, %v4172
  %v4176 = vmul.f32 %v4160, %v4173
  %v4177 = vmul.f32 %v4162, %v4174
  %v4179 = vsel %vm801, %v4175, 0
  %v4182 = vsel %vm801, %v4176, 0
  %v4185 = vsel %vm801, %v4177, 0
  %4187 = vmatpush.msra.mxu0 0.0
  %4188 = vmatpush.msra.mxu0 0.0
  %4189 = vmatpush.msra.mxu0 0.0
  %4190 = vmatpush.msra.mxu0 0.0
  %4191 = vmatpush.msra.mxu0 0.0
  %4192 = vmatpush.msra.mxu0 0.0
  %4193 = vmatpush.msra.mxu0 0.0
  %4194 = vmatpush.msra.mxu0 0.0
  %4195 = vmatpush.msra.mxu0 0.0
  %4196 = vmatpush.msra.mxu0 0.0
  %4197 = vmatpush.msra.mxu0 0.0
  %4198 = vmatpush.msra.mxu0 0.0
  %4199 = vmatpush.msra.mxu0 0.0
  %4200 = vmatpush.msra.mxu0 %v3935
  %4201 = vmatpush.msra.mxu0 %v3932
  %4202 = vmatpush.msra.mxu0 %v3929
  %4203 = vmatmul.f32.gmra.mxu0 %v4179
  %v4204 = vpop.f32.mrf.mxu0
  %v4205 = vadd.f32 0.0, %v4204
  %4206 = vmatmul.f32.gmra.mxu0 %v4182
  %v4207 = vpop.f32.mrf.mxu0
  %v4208 = vadd.f32 0.0, %v4207
  %4209 = vmatmul.f32.gmra.mxu0 %v4185
  %v4210 = vpop.f32.mrf.mxu0
  %v4211 = vadd.f32 0.0, %v4210
  %4212 = vdwg.mxu0
  %v4214 = vsel %vm750, %v4205, 0
  %v4217 = vsel %vm750, %v4208, 0
  %v4220 = vsel %vm750, %v4211, 0
  %4222 = vmatpush.msra.mxu0 0.0
  %4223 = vmatpush.msra.mxu0 0.0
  %4224 = vmatpush.msra.mxu0 0.0
  %4225 = vmatpush.msra.mxu0 0.0
  %4226 = vmatpush.msra.mxu0 0.0
  %4227 = vmatpush.msra.mxu0 0.0
  %4228 = vmatpush.msra.mxu0 0.0
  %4229 = vmatpush.msra.mxu0 0.0
  %4230 = vmatpush.msra.mxu0 0.0
  %4231 = vmatpush.msra.mxu0 0.0
  %4232 = vmatpush.msra.mxu0 0.0
  %4233 = vmatpush.msra.mxu0 0.0
  %4234 = vmatpush.msra.mxu0 0.0
  %4235 = vmatpush.msra.mxu0 0.0
  %4236 = vmatpush.msra.mxu0 0.0
  %4237 = vmatpush.msra.mxu0 %v4056
  %4238 = vmatmul.f32.gmra.mxu0 %v4214
  %v4239 = vpop.f32.mrf.mxu0
  %v4240 = vadd.f32 0.0, %v4239
  %4241 = vmatmul.f32.gmra.mxu0 %v4217
  %v4242 = vpop.f32.mrf.mxu0
  %v4243 = vadd.f32 0.0, %v4242
  %4244 = vmatmul.f32.gmra.mxu0 %v4220
  %v4245 = vpop.f32.mrf.mxu0
  %v4246 = vadd.f32 0.0, %v4245
  %4247 = vdwg.mxu0
  %v4248 = vadd.f32 %v3794, %v4240
  %v4249 = vadd.f32 %v3797, %v4243
  %v4250 = vadd.f32 %v3800, %v4246
  %s4251 = scalar_lea.vmem %s33, 224
  %v4252 = vld [vmem:[%s4251] sm:$0xff]
  %v4253 = vld [vmem:[%s4251 + $0x8] sm:$0xff]
  %v4254 = vld [vmem:[%s4251 + $0x10] sm:$0xff]
  %v4255 = vld [vmem:[%s4251 + $0x18] sm:$0xff]
  %s4256 = scalar_lea.vmem %s35, 7
  %v4257 = vld [vmem:[%s4256] sm:$0x1]
  %v4259 = vperm.slane %v4257, 0
  %4261 = vmatpush.msra.mxu0 0.0
  %4262 = vmatpush.msra.mxu0 0.0
  %4263 = vmatpush.msra.mxu0 0.0
  %4264 = vmatpush.msra.mxu0 0.0
  %4265 = vmatpush.msra.mxu0 0.0
  %4266 = vmatpush.msra.mxu0 0.0
  %4267 = vmatpush.msra.mxu0 0.0
  %4268 = vmatpush.msra.mxu0 0.0
  %4269 = vmatpush.msra.mxu0 0.0
  %4270 = vmatpush.msra.mxu0 0.0
  %4271 = vmatpush.msra.mxu0 0.0
  %4272 = vmatpush.msra.mxu0 0.0
  %4273 = vmatpush.msra.mxu0 %v4255
  %4274 = vmatpush.msra.mxu0 %v4254
  %4275 = vmatpush.msra.mxu0 %v4253
  %4276 = vmatpush.msra.mxu0 %v4252
  %4277 = vmatmul.f32.gmra.mxu0 %v2909
  %v4278 = vpop.f32.mrf.mxu0
  %v4279 = vadd.f32 %v4259, %v4278
  %4280 = vmatmul.f32.gmra.mxu0 %v2912
  %v4281 = vpop.f32.mrf.mxu0
  %v4282 = vadd.f32 %v4259, %v4281
  %4283 = vmatmul.f32.gmra.mxu0 %v2915
  %v4284 = vpop.f32.mrf.mxu0
  %v4285 = vadd.f32 %v4259, %v4284
  %4286 = vmatmul.f32.gmra.mxu0 %v2918
  %v4287 = vpop.f32.mrf.mxu0
  %v4288 = vadd.f32 %v4259, %v4287
  %4289 = vmatmul.f32.gmra.mxu0 %v2921
  %v4290 = vpop.f32.mrf.mxu0
  %v4291 = vadd.f32 %v4259, %v4290
  %4292 = vmatmul.f32.gmra.mxu0 %v2924
  %v4293 = vpop.f32.mrf.mxu0
  %v4294 = vadd.f32 %v4259, %v4293
  %4295 = vdwg.mxu0
  %s4296 = scalar_lea.vmem %s37, 224
  %v4297 = vld [vmem:[%s4296] sm:$0xff]
  %v4298 = vld [vmem:[%s4296 + $0x8] sm:$0xff]
  %v4299 = vld [vmem:[%s4296 + $0x10] sm:$0xff]
  %v4300 = vld [vmem:[%s4296 + $0x18] sm:$0xff]
  %s4301 = scalar_lea.vmem %s39, 7
  %v4302 = vld [vmem:[%s4301] sm:$0x1]
  %v4304 = vperm.slane %v4302, 0
  %4306 = vmatpush.msra.mxu0 0.0
  %4307 = vmatpush.msra.mxu0 0.0
  %4308 = vmatpush.msra.mxu0 0.0
  %4309 = vmatpush.msra.mxu0 0.0
  %4310 = vmatpush.msra.mxu0 0.0
  %4311 = vmatpush.msra.mxu0 0.0
  %4312 = vmatpush.msra.mxu0 0.0
  %4313 = vmatpush.msra.mxu0 0.0
  %4314 = vmatpush.msra.mxu0 0.0
  %4315 = vmatpush.msra.mxu0 0.0
  %4316 = vmatpush.msra.mxu0 0.0
  %4317 = vmatpush.msra.mxu0 0.0
  %4318 = vmatpush.msra.mxu0 %v4300
  %4319 = vmatpush.msra.mxu0 %v4299
  %4320 = vmatpush.msra.mxu0 %v4298
  %4321 = vmatpush.msra.mxu0 %v4297
  %4322 = vmatmul.f32.gmra.mxu0 %v2909
  %v4323 = vpop.f32.mrf.mxu0
  %v4324 = vadd.f32 %v4304, %v4323
  %4325 = vmatmul.f32.gmra.mxu0 %v2912
  %v4326 = vpop.f32.mrf.mxu0
  %v4327 = vadd.f32 %v4304, %v4326
  %4328 = vmatmul.f32.gmra.mxu0 %v2915
  %v4329 = vpop.f32.mrf.mxu0
  %v4330 = vadd.f32 %v4304, %v4329
  %4331 = vmatmul.f32.gmra.mxu0 %v2918
  %v4332 = vpop.f32.mrf.mxu0
  %v4333 = vadd.f32 %v4304, %v4332
  %4334 = vmatmul.f32.gmra.mxu0 %v2921
  %v4335 = vpop.f32.mrf.mxu0
  %v4336 = vadd.f32 %v4304, %v4335
  %4337 = vmatmul.f32.gmra.mxu0 %v2924
  %v4338 = vpop.f32.mrf.mxu0
  %v4339 = vadd.f32 %v4304, %v4338
  %4340 = vdwg.mxu0
  %s4341 = scalar_lea.vmem %s41, 224
  %v4342 = vld [vmem:[%s4341] sm:$0xff]
  %v4343 = vld [vmem:[%s4341 + $0x8] sm:$0xff]
  %v4344 = vld [vmem:[%s4341 + $0x10] sm:$0xff]
  %v4345 = vld [vmem:[%s4341 + $0x18] sm:$0xff]
  %s4346 = scalar_lea.vmem %s43, 7
  %v4347 = vld [vmem:[%s4346] sm:$0x1]
  %v4349 = vperm.slane %v4347, 0
  %4351 = vmatpush.msra.mxu0 0.0
  %4352 = vmatpush.msra.mxu0 0.0
  %4353 = vmatpush.msra.mxu0 0.0
  %4354 = vmatpush.msra.mxu0 0.0
  %4355 = vmatpush.msra.mxu0 0.0
  %4356 = vmatpush.msra.mxu0 0.0
  %4357 = vmatpush.msra.mxu0 0.0
  %4358 = vmatpush.msra.mxu0 0.0
  %4359 = vmatpush.msra.mxu0 0.0
  %4360 = vmatpush.msra.mxu0 0.0
  %4361 = vmatpush.msra.mxu0 0.0
  %4362 = vmatpush.msra.mxu0 0.0
  %4363 = vmatpush.msra.mxu0 %v4345
  %4364 = vmatpush.msra.mxu0 %v4344
  %4365 = vmatpush.msra.mxu0 %v4343
  %4366 = vmatpush.msra.mxu0 %v4342
  %4367 = vmatmul.f32.gmra.mxu0 %v2909
  %v4368 = vpop.f32.mrf.mxu0
  %v4369 = vadd.f32 %v4349, %v4368
  %4370 = vmatmul.f32.gmra.mxu0 %v2912
  %v4371 = vpop.f32.mrf.mxu0
  %v4372 = vadd.f32 %v4349, %v4371
  %4373 = vmatmul.f32.gmra.mxu0 %v2915
  %v4374 = vpop.f32.mrf.mxu0
  %v4375 = vadd.f32 %v4349, %v4374
  %4376 = vmatmul.f32.gmra.mxu0 %v2918
  %v4377 = vpop.f32.mrf.mxu0
  %v4378 = vadd.f32 %v4349, %v4377
  %4379 = vmatmul.f32.gmra.mxu0 %v2921
  %v4380 = vpop.f32.mrf.mxu0
  %v4381 = vadd.f32 %v4349, %v4380
  %4382 = vmatmul.f32.gmra.mxu0 %v2924
  %v4383 = vpop.f32.mrf.mxu0
  %v4384 = vadd.f32 %v4349, %v4383
  %4385 = vdwg.mxu0
  %v4387 = vsel %vm750, %v4279, 0
  %v4390 = vsel %vm750, %v4282, 0
  %v4393 = vsel %vm750, %v4285, 0
  %v4396 = vsel %vm750, %v4324, 0
  %v4399 = vsel %vm750, %v4327, 0
  %v4402 = vsel %vm750, %v4330, 0
  %4404 = vmatpush.xpose.msra.mxu0 0.0
  %4405 = vmatpush.xpose.msra.mxu0 0.0
  %4406 = vmatpush.xpose.msra.mxu0 0.0
  %4407 = vmatpush.xpose.msra.mxu0 0.0
  %4408 = vmatpush.xpose.msra.mxu0 0.0
  %4409 = vmatpush.xpose.msra.mxu0 0.0
  %4410 = vmatpush.xpose.msra.mxu0 0.0
  %4411 = vmatpush.xpose.msra.mxu0 0.0
  %4412 = vmatpush.xpose.msra.mxu0 0.0
  %4413 = vmatpush.xpose.msra.mxu0 0.0
  %4414 = vmatpush.xpose.msra.mxu0 0.0
  %4415 = vmatpush.xpose.msra.mxu0 0.0
  %4416 = vmatpush.xpose.msra.mxu0 0.0
  %4417 = vmatpush.xpose.msra.mxu0 %v4402
  %4418 = vmatpush.xpose.msra.mxu0 %v4399
  %4419 = vmatpush.xpose.msra.mxu0 %v4396
  %4420 = vmatmul.f32.gmra.mxu0 %v4387
  %v4421 = vpop.f32.mrf.mxu0
  %v4422 = vadd.f32 0.0, %v4421
  %4423 = vmatmul.f32.gmra.mxu0 %v4390
  %v4424 = vpop.f32.mrf.mxu0
  %v4425 = vadd.f32 0.0, %v4424
  %4426 = vmatmul.f32.gmra.mxu0 %v4393
  %v4427 = vpop.f32.mrf.mxu0
  %v4428 = vadd.f32 0.0, %v4427
  %4429 = vdwg.mxu0
  %v4430 = vmul.f32 %v4422, 0.35355338
  %v4431 = vmul.f32 %v4425, 0.35355338
  %v4432 = vmul.f32 %v4428, 0.35355338
  %v4433 = vsel %vm448, %v4430, -1e+30
  %v4434 = vsel %vm449, %v4431, -1e+30
  %v4435 = vsel %vm450, %v4432, -1e+30
  %v4436 = vsel %vm801, %v4433, -inf
  %4437 = vmax.xlane.f32.xlu0 %v4436
  %v4438 = vpop.xlane.xlu0 %4437
  %v4439 = vsel %vm801, %v4434, -inf
  %4440 = vmax.xlane.f32.xlu0 %v4439
  %v4441 = vpop.xlane.xlu0 %4440
  %v4442 = vsel %vm801, %v4435, -inf
  %4443 = vmax.xlane.f32.xlu0 %v4442
  %v4444 = vpop.xlane.xlu0 %4443
  %v4445 = vsub.f32 %v4433, %v4438
  %v4446 = vsub.f32 %v4434, %v4441
  %v4447 = vsub.f32 %v4435, %v4444
  %v4448 = vmul.f32 %v4445, 1.442695
  %v4449 = vpow.pop %v4448
  %v4450 = vmul.f32 %v4446, 1.442695
  %v4451 = vpow.pop %v4450
  %v4452 = vmul.f32 %v4447, 1.442695
  %v4453 = vpow.pop %v4452
  %v4454 = vsel %vm801, %v4449, 0.0
  %4455 = vadd.xlane.f32.xlu0 %v4454
  %v4456 = vpop.xlane.xlu0 %4455
  %v4457 = vsel %vm801, %v4451, 0.0
  %4458 = vadd.xlane.f32.xlu0 %v4457
  %v4459 = vpop.xlane.xlu0 %4458
  %v4460 = vsel %vm801, %v4453, 0.0
  %4461 = vadd.xlane.f32.xlu0 %v4460
  %v4462 = vpop.xlane.xlu0 %4461
  %v4463 = vrcp.pop %v4456
  %v4464 = vrcp.pop %v4459
  %v4465 = vrcp.pop %v4462
  %v4466 = vmul.f32 %v4449, %v4463
  %v4467 = vmul.f32 %v4451, %v4464
  %v4468 = vmul.f32 %v4453, %v4465
  %v4470 = vsel %vm801, %v4466, 0
  %v4473 = vsel %vm801, %v4467, 0
  %v4476 = vsel %vm801, %v4468, 0
  %4478 = vmatpush.msra.mxu0 0.0
  %4479 = vmatpush.msra.mxu0 0.0
  %4480 = vmatpush.msra.mxu0 0.0
  %4481 = vmatpush.msra.mxu0 0.0
  %4482 = vmatpush.msra.mxu0 0.0
  %4483 = vmatpush.msra.mxu0 0.0
  %4484 = vmatpush.msra.mxu0 0.0
  %4485 = vmatpush.msra.mxu0 0.0
  %4486 = vmatpush.msra.mxu0 0.0
  %4487 = vmatpush.msra.mxu0 0.0
  %4488 = vmatpush.msra.mxu0 0.0
  %4489 = vmatpush.msra.mxu0 0.0
  %4490 = vmatpush.msra.mxu0 0.0
  %4491 = vmatpush.msra.mxu0 %v4375
  %4492 = vmatpush.msra.mxu0 %v4372
  %4493 = vmatpush.msra.mxu0 %v4369
  %4494 = vmatmul.f32.gmra.mxu0 %v4470
  %v4495 = vpop.f32.mrf.mxu0
  %v4496 = vadd.f32 0.0, %v4495
  %4497 = vmatmul.f32.gmra.mxu0 %v4473
  %v4498 = vpop.f32.mrf.mxu0
  %v4499 = vadd.f32 0.0, %v4498
  %4500 = vmatmul.f32.gmra.mxu0 %v4476
  %v4501 = vpop.f32.mrf.mxu0
  %v4502 = vadd.f32 0.0, %v4501
  %4503 = vdwg.mxu0
  %s4504 = scalar_lea.vmem %s45, 56
  %v4505 = vld [vmem:[%s4504] sm:$0xff]
  %v4507 = vsel %vm750, %v4496, 0
  %v4510 = vsel %vm750, %v4499, 0
  %v4513 = vsel %vm750, %v4502, 0
  %4515 = vmatpush.msra.mxu0 0.0
  %4516 = vmatpush.msra.mxu0 0.0
  %4517 = vmatpush.msra.mxu0 0.0
  %4518 = vmatpush.msra.mxu0 0.0
  %4519 = vmatpush.msra.mxu0 0.0
  %4520 = vmatpush.msra.mxu0 0.0
  %4521 = vmatpush.msra.mxu0 0.0
  %4522 = vmatpush.msra.mxu0 0.0
  %4523 = vmatpush.msra.mxu0 0.0
  %4524 = vmatpush.msra.mxu0 0.0
  %4525 = vmatpush.msra.mxu0 0.0
  %4526 = vmatpush.msra.mxu0 0.0
  %4527 = vmatpush.msra.mxu0 0.0
  %4528 = vmatpush.msra.mxu0 0.0
  %4529 = vmatpush.msra.mxu0 0.0
  %4530 = vmatpush.msra.mxu0 %v4505
  %4531 = vmatmul.f32.gmra.mxu0 %v4507
  %v4532 = vpop.f32.mrf.mxu0
  %v4533 = vadd.f32 0.0, %v4532
  %4534 = vmatmul.f32.gmra.mxu0 %v4510
  %v4535 = vpop.f32.mrf.mxu0
  %v4536 = vadd.f32 0.0, %v4535
  %4537 = vmatmul.f32.gmra.mxu0 %v4513
  %v4538 = vpop.f32.mrf.mxu0
  %v4539 = vadd.f32 0.0, %v4538
  %4540 = vdwg.mxu0
  %v4541 = vadd.f32 %v4092, %v4533
  %v4542 = vadd.f32 %v4093, %v4536
  %v4543 = vadd.f32 %v4094, %v4539
  %v4545 = vsel %vm750, %v4288, 0
  %v4548 = vsel %vm750, %v4291, 0
  %v4551 = vsel %vm750, %v4294, 0
  %v4554 = vsel %vm750, %v4333, 0
  %v4557 = vsel %vm750, %v4336, 0
  %v4560 = vsel %vm750, %v4339, 0
  %4562 = vmatpush.xpose.msra.mxu0 0.0
  %4563 = vmatpush.xpose.msra.mxu0 0.0
  %4564 = vmatpush.xpose.msra.mxu0 0.0
  %4565 = vmatpush.xpose.msra.mxu0 0.0
  %4566 = vmatpush.xpose.msra.mxu0 0.0
  %4567 = vmatpush.xpose.msra.mxu0 0.0
  %4568 = vmatpush.xpose.msra.mxu0 0.0
  %4569 = vmatpush.xpose.msra.mxu0 0.0
  %4570 = vmatpush.xpose.msra.mxu0 0.0
  %4571 = vmatpush.xpose.msra.mxu0 0.0
  %4572 = vmatpush.xpose.msra.mxu0 0.0
  %4573 = vmatpush.xpose.msra.mxu0 0.0
  %4574 = vmatpush.xpose.msra.mxu0 0.0
  %4575 = vmatpush.xpose.msra.mxu0 %v4560
  %4576 = vmatpush.xpose.msra.mxu0 %v4557
  %4577 = vmatpush.xpose.msra.mxu0 %v4554
  %4578 = vmatmul.f32.gmra.mxu0 %v4545
  %v4579 = vpop.f32.mrf.mxu0
  %v4580 = vadd.f32 0.0, %v4579
  %4581 = vmatmul.f32.gmra.mxu0 %v4548
  %v4582 = vpop.f32.mrf.mxu0
  %v4583 = vadd.f32 0.0, %v4582
  %4584 = vmatmul.f32.gmra.mxu0 %v4551
  %v4585 = vpop.f32.mrf.mxu0
  %v4586 = vadd.f32 0.0, %v4585
  %4587 = vdwg.mxu0
  %v4588 = vmul.f32 %v4580, 0.35355338
  %v4589 = vmul.f32 %v4583, 0.35355338
  %v4590 = vmul.f32 %v4586, 0.35355338
  %v4591 = vsel %vm448, %v4588, -1e+30
  %v4592 = vsel %vm449, %v4589, -1e+30
  %v4593 = vsel %vm450, %v4590, -1e+30
  %v4594 = vsel %vm801, %v4591, -inf
  %4595 = vmax.xlane.f32.xlu0 %v4594
  %v4596 = vpop.xlane.xlu0 %4595
  %v4597 = vsel %vm801, %v4592, -inf
  %4598 = vmax.xlane.f32.xlu0 %v4597
  %v4599 = vpop.xlane.xlu0 %4598
  %v4600 = vsel %vm801, %v4593, -inf
  %4601 = vmax.xlane.f32.xlu0 %v4600
  %v4602 = vpop.xlane.xlu0 %4601
  %v4603 = vsub.f32 %v4591, %v4596
  %v4604 = vsub.f32 %v4592, %v4599
  %v4605 = vsub.f32 %v4593, %v4602
  %v4606 = vmul.f32 %v4603, 1.442695
  %v4607 = vpow.pop %v4606
  %v4608 = vmul.f32 %v4604, 1.442695
  %v4609 = vpow.pop %v4608
  %v4610 = vmul.f32 %v4605, 1.442695
  %v4611 = vpow.pop %v4610
  %v4612 = vsel %vm801, %v4607, 0.0
  %4613 = vadd.xlane.f32.xlu0 %v4612
  %v4614 = vpop.xlane.xlu0 %4613
  %v4615 = vsel %vm801, %v4609, 0.0
  %4616 = vadd.xlane.f32.xlu0 %v4615
  %v4617 = vpop.xlane.xlu0 %4616
  %v4618 = vsel %vm801, %v4611, 0.0
  %4619 = vadd.xlane.f32.xlu0 %v4618
  %v4620 = vpop.xlane.xlu0 %4619
  %v4621 = vrcp.pop %v4614
  %v4622 = vrcp.pop %v4617
  %v4623 = vrcp.pop %v4620
  %v4624 = vmul.f32 %v4607, %v4621
  %v4625 = vmul.f32 %v4609, %v4622
  %v4626 = vmul.f32 %v4611, %v4623
  %v4628 = vsel %vm801, %v4624, 0
  %v4631 = vsel %vm801, %v4625, 0
  %v4634 = vsel %vm801, %v4626, 0
  %4636 = vmatpush.msra.mxu0 0.0
  %4637 = vmatpush.msra.mxu0 0.0
  %4638 = vmatpush.msra.mxu0 0.0
  %4639 = vmatpush.msra.mxu0 0.0
  %4640 = vmatpush.msra.mxu0 0.0
  %4641 = vmatpush.msra.mxu0 0.0
  %4642 = vmatpush.msra.mxu0 0.0
  %4643 = vmatpush.msra.mxu0 0.0
  %4644 = vmatpush.msra.mxu0 0.0
  %4645 = vmatpush.msra.mxu0 0.0
  %4646 = vmatpush.msra.mxu0 0.0
  %4647 = vmatpush.msra.mxu0 0.0
  %4648 = vmatpush.msra.mxu0 0.0
  %4649 = vmatpush.msra.mxu0 %v4384
  %4650 = vmatpush.msra.mxu0 %v4381
  %4651 = vmatpush.msra.mxu0 %v4378
  %4652 = vmatmul.f32.gmra.mxu0 %v4628
  %v4653 = vpop.f32.mrf.mxu0
  %v4654 = vadd.f32 0.0, %v4653
  %4655 = vmatmul.f32.gmra.mxu0 %v4631
  %v4656 = vpop.f32.mrf.mxu0
  %v4657 = vadd.f32 0.0, %v4656
  %4658 = vmatmul.f32.gmra.mxu0 %v4634
  %v4659 = vpop.f32.mrf.mxu0
  %v4660 = vadd.f32 0.0, %v4659
  %4661 = vdwg.mxu0
  %v4663 = vsel %vm750, %v4654, 0
  %v4666 = vsel %vm750, %v4657, 0
  %v4669 = vsel %vm750, %v4660, 0
  %4671 = vmatpush.msra.mxu0 0.0
  %4672 = vmatpush.msra.mxu0 0.0
  %4673 = vmatpush.msra.mxu0 0.0
  %4674 = vmatpush.msra.mxu0 0.0
  %4675 = vmatpush.msra.mxu0 0.0
  %4676 = vmatpush.msra.mxu0 0.0
  %4677 = vmatpush.msra.mxu0 0.0
  %4678 = vmatpush.msra.mxu0 0.0
  %4679 = vmatpush.msra.mxu0 0.0
  %4680 = vmatpush.msra.mxu0 0.0
  %4681 = vmatpush.msra.mxu0 0.0
  %4682 = vmatpush.msra.mxu0 0.0
  %4683 = vmatpush.msra.mxu0 0.0
  %4684 = vmatpush.msra.mxu0 0.0
  %4685 = vmatpush.msra.mxu0 0.0
  %4686 = vmatpush.msra.mxu0 %v4505
  %4687 = vmatmul.f32.gmra.mxu0 %v4663
  %v4688 = vpop.f32.mrf.mxu0
  %v4689 = vadd.f32 0.0, %v4688
  %4690 = vmatmul.f32.gmra.mxu0 %v4666
  %v4691 = vpop.f32.mrf.mxu0
  %v4692 = vadd.f32 0.0, %v4691
  %4693 = vmatmul.f32.gmra.mxu0 %v4669
  %v4694 = vpop.f32.mrf.mxu0
  %v4695 = vadd.f32 0.0, %v4694
  %4696 = vdwg.mxu0
  %v4697 = vadd.f32 %v4248, %v4689
  %v4698 = vadd.f32 %v4249, %v4692
  %v4699 = vadd.f32 %v4250, %v4695
  %s4700 = scalar_lea.vmem %s47, 1
  %v4701 = vld [vmem:[%s4700] sm:$0x1]
  %v4703 = vperm.slane %v4701, 0
  %v4705 = vadd.f32 %v4541, %v4703
  %v4706 = vadd.f32 %v4542, %v4703
  %v4707 = vadd.f32 %v4543, %v4703
  %v4708 = vadd.f32 %v4697, %v4703
  %v4709 = vadd.f32 %v4698, %v4703
  %v4710 = vadd.f32 %v4699, %v4703
  %v4711 = vadd.f32 %v2738, %v4705
  %v4712 = vadd.f32 %v2739, %v4706
  %v4713 = vadd.f32 %v2740, %v4707
  %v4714 = vadd.f32 %v2741, %v4708
  %v4715 = vadd.f32 %v2742, %v4709
  %v4716 = vadd.f32 %v2743, %v4710
  %s4717 = scalar_lea.vmem %s49, 1
  %v4718 = vld [vmem:[%s4717] sm:$0x1]
  %s4719 = scalar_lea.vmem %s51, 1
  %v4720 = vld [vmem:[%s4719] sm:$0x1]
  %v4721 = vsel %vm267, %v4711, 0.0
  %4722 = vadd.xlane.f32.xlu0 %v4721
  %v4723 = vpop.xlane.xlu0 %4722
  %v4724 = vsel %vm267, %v4712, 0.0
  %4725 = vadd.xlane.f32.xlu0 %v4724
  %v4726 = vpop.xlane.xlu0 %4725
  %v4727 = vsel %vm267, %v4713, 0.0
  %4728 = vadd.xlane.f32.xlu0 %v4727
  %v4729 = vpop.xlane.xlu0 %4728
  %v4730 = vsel %vm267, %v4714, 0.0
  %4731 = vadd.xlane.f32.xlu0 %v4730
  %v4732 = vpop.xlane.xlu0 %4731
  %v4733 = vsel %vm267, %v4715, 0.0
  %4734 = vadd.xlane.f32.xlu0 %v4733
  %v4735 = vpop.xlane.xlu0 %4734
  %v4736 = vsel %vm267, %v4716, 0.0
  %4737 = vadd.xlane.f32.xlu0 %v4736
  %v4738 = vpop.xlane.xlu0 %4737
  %v4739 = vmul.f32 %v4723, %v292
  %v4740 = vmul.f32 %v4726, %v292
  %v4741 = vmul.f32 %v4729, %v292
  %v4742 = vmul.f32 %v4732, %v292
  %v4743 = vmul.f32 %v4735, %v292
  %v4744 = vmul.f32 %v4738, %v292
  %v4745 = vsub.f32 %v4711, %v4739
  %v4746 = vsub.f32 %v4712, %v4740
  %v4747 = vsub.f32 %v4713, %v4741
  %v4748 = vsub.f32 %v4714, %v4742
  %v4749 = vsub.f32 %v4715, %v4743
  %v4750 = vsub.f32 %v4716, %v4744
  %v4751 = vmul.f32 %v4745, %v4745
  %v4752 = vmul.f32 %v4746, %v4746
  %v4753 = vmul.f32 %v4747, %v4747
  %v4754 = vmul.f32 %v4748, %v4748
  %v4755 = vmul.f32 %v4749, %v4749
  %v4756 = vmul.f32 %v4750, %v4750
  %v4757 = vsel %vm267, %v4751, 0.0
  %4758 = vadd.xlane.f32.xlu0 %v4757
  %v4759 = vpop.xlane.xlu0 %4758
  %v4760 = vsel %vm267, %v4752, 0.0
  %4761 = vadd.xlane.f32.xlu0 %v4760
  %v4762 = vpop.xlane.xlu0 %4761
  %v4763 = vsel %vm267, %v4753, 0.0
  %4764 = vadd.xlane.f32.xlu0 %v4763
  %v4765 = vpop.xlane.xlu0 %4764
  %v4766 = vsel %vm267, %v4754, 0.0
  %4767 = vadd.xlane.f32.xlu0 %v4766
  %v4768 = vpop.xlane.xlu0 %4767
  %v4769 = vsel %vm267, %v4755, 0.0
  %4770 = vadd.xlane.f32.xlu0 %v4769
  %v4771 = vpop.xlane.xlu0 %4770
  %v4772 = vsel %vm267, %v4756, 0.0
  %4773 = vadd.xlane.f32.xlu0 %v4772
  %v4774 = vpop.xlane.xlu0 %4773
  %v4775 = vmul.f32 %v4759, %v292
  %v4776 = vmul.f32 %v4762, %v292
  %v4777 = vmul.f32 %v4765, %v292
  %v4778 = vmul.f32 %v4768, %v292
  %v4779 = vmul.f32 %v4771, %v292
  %v4780 = vmul.f32 %v4774, %v292
  %v4781 = vadd.f32 %v4775, 1e-05
  %v4782 = vadd.f32 %v4776, 1e-05
  %v4783 = vadd.f32 %v4777, 1e-05
  %v4784 = vadd.f32 %v4778, 1e-05
  %v4785 = vadd.f32 %v4779, 1e-05
  %v4786 = vadd.f32 %v4780, 1e-05
  %v4787 = vrsqrt.pop %v4781
  %v4788 = vmul.f32 %v4787, %v4781
  %v4789 = vmul.f32 %v4788, %v4787
  %v4790 = vmul.f32 0.5, %v4789
  %v4791 = vsub.f32 1.5, %v4790
  %v4792 = vmul.f32 %v4787, %v4791
  %vm4793 = vweird.f32 %v4781
  %vm4794 = vweird.f32 %v4787
  %vm4795 = vmor %vm4793, %vm4794
  %v4796 = vsel %vm4795, %v4787, %v4792
  %v4797 = vrsqrt.pop %v4782
  %v4798 = vmul.f32 %v4797, %v4782
  %v4799 = vmul.f32 %v4798, %v4797
  %v4800 = vmul.f32 0.5, %v4799
  %v4801 = vsub.f32 1.5, %v4800
  %v4802 = vmul.f32 %v4797, %v4801
  %vm4803 = vweird.f32 %v4782
  %vm4804 = vweird.f32 %v4797
  %vm4805 = vmor %vm4803, %vm4804
  %v4806 = vsel %vm4805, %v4797, %v4802
  %v4807 = vrsqrt.pop %v4783
  %v4808 = vmul.f32 %v4807, %v4783
  %v4809 = vmul.f32 %v4808, %v4807
  %v4810 = vmul.f32 0.5, %v4809
  %v4811 = vsub.f32 1.5, %v4810
  %v4812 = vmul.f32 %v4807, %v4811
  %vm4813 = vweird.f32 %v4783
  %vm4814 = vweird.f32 %v4807
  %vm4815 = vmor %vm4813, %vm4814
  %v4816 = vsel %vm4815, %v4807, %v4812
  %v4817 = vrsqrt.pop %v4784
  %v4818 = vmul.f32 %v4817, %v4784
  %v4819 = vmul.f32 %v4818, %v4817
  %v4820 = vmul.f32 0.5, %v4819
  %v4821 = vsub.f32 1.5, %v4820
  %v4822 = vmul.f32 %v4817, %v4821
  %vm4823 = vweird.f32 %v4784
  %vm4824 = vweird.f32 %v4817
  %vm4825 = vmor %vm4823, %vm4824
  %v4826 = vsel %vm4825, %v4817, %v4822
  %v4827 = vrsqrt.pop %v4785
  %v4828 = vmul.f32 %v4827, %v4785
  %v4829 = vmul.f32 %v4828, %v4827
  %v4830 = vmul.f32 0.5, %v4829
  %v4831 = vsub.f32 1.5, %v4830
  %v4832 = vmul.f32 %v4827, %v4831
  %vm4833 = vweird.f32 %v4785
  %vm4834 = vweird.f32 %v4827
  %vm4835 = vmor %vm4833, %vm4834
  %v4836 = vsel %vm4835, %v4827, %v4832
  %v4837 = vrsqrt.pop %v4786
  %v4838 = vmul.f32 %v4837, %v4786
  %v4839 = vmul.f32 %v4838, %v4837
  %v4840 = vmul.f32 0.5, %v4839
  %v4841 = vsub.f32 1.5, %v4840
  %v4842 = vmul.f32 %v4837, %v4841
  %vm4843 = vweird.f32 %v4786
  %vm4844 = vweird.f32 %v4837
  %vm4845 = vmor %vm4843, %vm4844
  %v4846 = vsel %vm4845, %v4837, %v4842
  %v4847 = vmul.f32 %v4745, %v4796
  %v4848 = vmul.f32 %v4746, %v4806
  %v4849 = vmul.f32 %v4747, %v4816
  %v4850 = vmul.f32 %v4748, %v4826
  %v4851 = vmul.f32 %v4749, %v4836
  %v4852 = vmul.f32 %v4750, %v4846
  %v4854 = vperm.slane %v4718, 0
  %v4856 = vmul.f32 %v4847, %v4854
  %v4857 = vmul.f32 %v4848, %v4854
  %v4858 = vmul.f32 %v4849, %v4854
  %v4859 = vmul.f32 %v4850, %v4854
  %v4860 = vmul.f32 %v4851, %v4854
  %v4861 = vmul.f32 %v4852, %v4854
  %v4863 = vperm.slane %v4720, 0
  %v4865 = vadd.f32 %v4856, %v4863
  %v4866 = vadd.f32 %v4857, %v4863
  %v4867 = vadd.f32 %v4858, %v4863
  %v4868 = vadd.f32 %v4859, %v4863
  %v4869 = vadd.f32 %v4860, %v4863
  %v4870 = vadd.f32 %v4861, %v4863
  %s4871 = scalar_lea.vmem %s53, 32
  %v4872 = vld [vmem:[%s4871] sm:$0xff]
  %v4873 = vld [vmem:[%s4871 + $0x8] sm:$0xff]
  %v4874 = vld [vmem:[%s4871 + $0x10] sm:$0xff]
  %v4875 = vld [vmem:[%s4871 + $0x18] sm:$0xff]
  %s4876 = scalar_lea.vmem %s55, 1
  %v4877 = vld [vmem:[%s4876] sm:$0x1]
  %v4879 = vperm.slane %v4877, 0
  %v4882 = vsel %vm267, %v4865, 0
  %v4885 = vsel %vm267, %v4866, 0
  %v4888 = vsel %vm267, %v4867, 0
  %v4891 = vsel %vm267, %v4868, 0
  %v4894 = vsel %vm267, %v4869, 0
  %v4897 = vsel %vm267, %v4870, 0
  %4899 = vmatpush.msra.mxu0 0.0
  %4900 = vmatpush.msra.mxu0 0.0
  %4901 = vmatpush.msra.mxu0 0.0
  %4902 = vmatpush.msra.mxu0 0.0
  %4903 = vmatpush.msra.mxu0 0.0
  %4904 = vmatpush.msra.mxu0 0.0
  %4905 = vmatpush.msra.mxu0 0.0
  %4906 = vmatpush.msra.mxu0 0.0
  %4907 = vmatpush.msra.mxu0 0.0
  %4908 = vmatpush.msra.mxu0 0.0
  %4909 = vmatpush.msra.mxu0 0.0
  %4910 = vmatpush.msra.mxu0 0.0
  %4911 = vmatpush.msra.mxu0 %v4875
  %4912 = vmatpush.msra.mxu0 %v4874
  %4913 = vmatpush.msra.mxu0 %v4873
  %4914 = vmatpush.msra.mxu0 %v4872
  %4915 = vmatmul.f32.gmra.mxu0 %v4882
  %v4916 = vpop.f32.mrf.mxu0
  %v4917 = vadd.f32 %v4879, %v4916
  %4918 = vmatmul.f32.gmra.mxu0 %v4885
  %v4919 = vpop.f32.mrf.mxu0
  %v4920 = vadd.f32 %v4879, %v4919
  %4921 = vmatmul.f32.gmra.mxu0 %v4888
  %v4922 = vpop.f32.mrf.mxu0
  %v4923 = vadd.f32 %v4879, %v4922
  %4924 = vmatmul.f32.gmra.mxu0 %v4891
  %v4925 = vpop.f32.mrf.mxu0
  %v4926 = vadd.f32 %v4879, %v4925
  %4927 = vmatmul.f32.gmra.mxu0 %v4894
  %v4928 = vpop.f32.mrf.mxu0
  %v4929 = vadd.f32 %v4879, %v4928
  %4930 = vmatmul.f32.gmra.mxu0 %v4897
  %v4931 = vpop.f32.mrf.mxu0
  %v4932 = vadd.f32 %v4879, %v4931
  %4933 = vdwg.mxu0
  %v4934 = vmul.f32 %v4917, 0.5
  %v4935 = vmul.f32 %v4920, 0.5
  %v4936 = vmul.f32 %v4923, 0.5
  %v4937 = vmul.f32 %v4926, 0.5
  %v4938 = vmul.f32 %v4929, 0.5
  %v4939 = vmul.f32 %v4932, 0.5
  %v4940 = vmul.f32 %v4917, 0.044715
  %v4941 = vmul.f32 %v4920, 0.044715
  %v4942 = vmul.f32 %v4923, 0.044715
  %v4943 = vmul.f32 %v4926, 0.044715
  %v4944 = vmul.f32 %v4929, 0.044715
  %v4945 = vmul.f32 %v4932, 0.044715
  %v4946 = vmul.f32 %v4940, %v4917
  %v4947 = vmul.f32 %v4941, %v4920
  %v4948 = vmul.f32 %v4942, %v4923
  %v4949 = vmul.f32 %v4943, %v4926
  %v4950 = vmul.f32 %v4944, %v4929
  %v4951 = vmul.f32 %v4945, %v4932
  %v4952 = vmul.f32 %v4946, %v4917
  %v4953 = vmul.f32 %v4947, %v4920
  %v4954 = vmul.f32 %v4948, %v4923
  %v4955 = vmul.f32 %v4949, %v4926
  %v4956 = vmul.f32 %v4950, %v4929
  %v4957 = vmul.f32 %v4951, %v4932
  %v4958 = vadd.f32 %v4917, %v4952
  %v4959 = vadd.f32 %v4920, %v4953
  %v4960 = vadd.f32 %v4923, %v4954
  %v4961 = vadd.f32 %v4926, %v4955
  %v4962 = vadd.f32 %v4929, %v4956
  %v4963 = vadd.f32 %v4932, %v4957
  %v4964 = vmul.f32 %v4958, 0.7978846
  %v4965 = vmul.f32 %v4959, 0.7978846
  %v4966 = vmul.f32 %v4960, 0.7978846
  %v4967 = vmul.f32 %v4961, 0.7978846
  %v4968 = vmul.f32 %v4962, 0.7978846
  %v4969 = vmul.f32 %v4963, 0.7978846
  %v4970 = vtanh.pop %v4964
  %v4971 = vtanh.pop %v4965
  %v4972 = vtanh.pop %v4966
  %v4973 = vtanh.pop %v4967
  %v4974 = vtanh.pop %v4968
  %v4975 = vtanh.pop %v4969
  %v4976 = vadd.f32 %v4970, 1.0
  %v4977 = vadd.f32 %v4971, 1.0
  %v4978 = vadd.f32 %v4972, 1.0
  %v4979 = vadd.f32 %v4973, 1.0
  %v4980 = vadd.f32 %v4974, 1.0
  %v4981 = vadd.f32 %v4975, 1.0
  %v4982 = vmul.f32 %v4934, %v4976
  %v4983 = vmul.f32 %v4935, %v4977
  %v4984 = vmul.f32 %v4936, %v4978
  %v4985 = vmul.f32 %v4937, %v4979
  %v4986 = vmul.f32 %v4938, %v4980
  %v4987 = vmul.f32 %v4939, %v4981
  %s4988 = scalar_lea.vmem %s57, 128
  %v4989 = vld [vmem:[%s4988] sm:$0xff]
  %v4990 = vld [vmem:[%s4988 + $0x8] sm:$0xff]
  %v4991 = vld [vmem:[%s4988 + $0x10] sm:$0xff]
  %v4992 = vld [vmem:[%s4988 + $0x18] sm:$0xff]
  %v4993 = vld [vmem:[%s4988 + $0x20] sm:$0xff]
  %v4994 = vld [vmem:[%s4988 + $0x28] sm:$0xff]
  %v4995 = vld [vmem:[%s4988 + $0x30] sm:$0xff]
  %v4996 = vld [vmem:[%s4988 + $0x38] sm:$0xff]
  %v4997 = vld [vmem:[%s4988 + $0x40] sm:$0xff]
  %v4998 = vld [vmem:[%s4988 + $0x48] sm:$0xff]
  %v4999 = vld [vmem:[%s4988 + $0x50] sm:$0xff]
  %v5000 = vld [vmem:[%s4988 + $0x58] sm:$0xff]
  %v5001 = vld [vmem:[%s4988 + $0x60] sm:$0xff]
  %v5002 = vld [vmem:[%s4988 + $0x68] sm:$0xff]
  %v5003 = vld [vmem:[%s4988 + $0x70] sm:$0xff]
  %v5004 = vld [vmem:[%s4988 + $0x78] sm:$0xff]
  %s5005 = scalar_lea.vmem %s59, 1
  %v5006 = vld [vmem:[%s5005] sm:$0x1]
  %v5008 = vperm.slane %v5006, 0
  %5010 = vmatpush.msra.mxu0 %v5004
  %5011 = vmatpush.msra.mxu0 %v5003
  %5012 = vmatpush.msra.mxu0 %v5002
  %5013 = vmatpush.msra.mxu0 %v5001
  %5014 = vmatpush.msra.mxu0 %v5000
  %5015 = vmatpush.msra.mxu0 %v4999
  %5016 = vmatpush.msra.mxu0 %v4998
  %5017 = vmatpush.msra.mxu0 %v4997
  %5018 = vmatpush.msra.mxu0 %v4996
  %5019 = vmatpush.msra.mxu0 %v4995
  %5020 = vmatpush.msra.mxu0 %v4994
  %5021 = vmatpush.msra.mxu0 %v4993
  %5022 = vmatpush.msra.mxu0 %v4992
  %5023 = vmatpush.msra.mxu0 %v4991
  %5024 = vmatpush.msra.mxu0 %v4990
  %5025 = vmatpush.msra.mxu0 %v4989
  %5026 = vmatmul.f32.gmra.mxu0 %v4982
  %v5027 = vpop.f32.mrf.mxu0
  %v5028 = vadd.f32 %v5008, %v5027
  %5029 = vmatmul.f32.gmra.mxu0 %v4983
  %v5030 = vpop.f32.mrf.mxu0
  %v5031 = vadd.f32 %v5008, %v5030
  %5032 = vmatmul.f32.gmra.mxu0 %v4984
  %v5033 = vpop.f32.mrf.mxu0
  %v5034 = vadd.f32 %v5008, %v5033
  %5035 = vmatmul.f32.gmra.mxu0 %v4985
  %v5036 = vpop.f32.mrf.mxu0
  %v5037 = vadd.f32 %v5008, %v5036
  %5038 = vmatmul.f32.gmra.mxu0 %v4986
  %v5039 = vpop.f32.mrf.mxu0
  %v5040 = vadd.f32 %v5008, %v5039
  %5041 = vmatmul.f32.gmra.mxu0 %v4987
  %v5042 = vpop.f32.mrf.mxu0
  %v5043 = vadd.f32 %v5008, %v5042
  %5044 = vdwg.mxu0
  %v5045 = vadd.f32 %v4711, %v5028
  %v5046 = vadd.f32 %v4712, %v5031
  %v5047 = vadd.f32 %v4713, %v5034
  %v5048 = vadd.f32 %v4714, %v5037
  %v5049 = vadd.f32 %v4715, %v5040
  %v5050 = vadd.f32 %v4716, %v5043
  %v5051 = vld [vmem:[%s61] sm:$0x1]
  %v5052 = vld [vmem:[%s63] sm:$0x1]
  %v5053 = vsel %vm267, %v5045, 0.0
  %5054 = vadd.xlane.f32.xlu0 %v5053
  %v5055 = vpop.xlane.xlu0 %5054
  %v5056 = vsel %vm267, %v5046, 0.0
  %5057 = vadd.xlane.f32.xlu0 %v5056
  %v5058 = vpop.xlane.xlu0 %5057
  %v5059 = vsel %vm267, %v5047, 0.0
  %5060 = vadd.xlane.f32.xlu0 %v5059
  %v5061 = vpop.xlane.xlu0 %5060
  %v5062 = vsel %vm267, %v5048, 0.0
  %5063 = vadd.xlane.f32.xlu0 %v5062
  %v5064 = vpop.xlane.xlu0 %5063
  %v5065 = vsel %vm267, %v5049, 0.0
  %5066 = vadd.xlane.f32.xlu0 %v5065
  %v5067 = vpop.xlane.xlu0 %5066
  %v5068 = vsel %vm267, %v5050, 0.0
  %5069 = vadd.xlane.f32.xlu0 %v5068
  %v5070 = vpop.xlane.xlu0 %5069
  %v5071 = vmul.f32 %v5055, %v292
  %v5072 = vmul.f32 %v5058, %v292
  %v5073 = vmul.f32 %v5061, %v292
  %v5074 = vmul.f32 %v5064, %v292
  %v5075 = vmul.f32 %v5067, %v292
  %v5076 = vmul.f32 %v5070, %v292
  %v5077 = vsub.f32 %v5045, %v5071
  %v5078 = vsub.f32 %v5046, %v5072
  %v5079 = vsub.f32 %v5047, %v5073
  %v5080 = vsub.f32 %v5048, %v5074
  %v5081 = vsub.f32 %v5049, %v5075
  %v5082 = vsub.f32 %v5050, %v5076
  %v5083 = vmul.f32 %v5077, %v5077
  %v5084 = vmul.f32 %v5078, %v5078
  %v5085 = vmul.f32 %v5079, %v5079
  %v5086 = vmul.f32 %v5080, %v5080
  %v5087 = vmul.f32 %v5081, %v5081
  %v5088 = vmul.f32 %v5082, %v5082
  %v5089 = vsel %vm267, %v5083, 0.0
  %5090 = vadd.xlane.f32.xlu0 %v5089
  %v5091 = vpop.xlane.xlu0 %5090
  %v5092 = vsel %vm267, %v5084, 0.0
  %5093 = vadd.xlane.f32.xlu0 %v5092
  %v5094 = vpop.xlane.xlu0 %5093
  %v5095 = vsel %vm267, %v5085, 0.0
  %5096 = vadd.xlane.f32.xlu0 %v5095
  %v5097 = vpop.xlane.xlu0 %5096
  %v5098 = vsel %vm267, %v5086, 0.0
  %5099 = vadd.xlane.f32.xlu0 %v5098
  %v5100 = vpop.xlane.xlu0 %5099
  %v5101 = vsel %vm267, %v5087, 0.0
  %5102 = vadd.xlane.f32.xlu0 %v5101
  %v5103 = vpop.xlane.xlu0 %5102
  %v5104 = vsel %vm267, %v5088, 0.0
  %5105 = vadd.xlane.f32.xlu0 %v5104
  %v5106 = vpop.xlane.xlu0 %5105
  %v5107 = vmul.f32 %v5091, %v292
  %v5108 = vmul.f32 %v5094, %v292
  %v5109 = vmul.f32 %v5097, %v292
  %v5110 = vmul.f32 %v5100, %v292
  %v5111 = vmul.f32 %v5103, %v292
  %v5112 = vmul.f32 %v5106, %v292
  %v5113 = vadd.f32 %v5107, 1e-05
  %v5114 = vadd.f32 %v5108, 1e-05
  %v5115 = vadd.f32 %v5109, 1e-05
  %v5116 = vadd.f32 %v5110, 1e-05
  %v5117 = vadd.f32 %v5111, 1e-05
  %v5118 = vadd.f32 %v5112, 1e-05
  %v5119 = vrsqrt.pop %v5113
  %v5120 = vmul.f32 %v5119, %v5113
  %v5121 = vmul.f32 %v5120, %v5119
  %v5122 = vmul.f32 0.5, %v5121
  %v5123 = vsub.f32 1.5, %v5122
  %v5124 = vmul.f32 %v5119, %v5123
  %vm5125 = vweird.f32 %v5113
  %vm5126 = vweird.f32 %v5119
  %vm5127 = vmor %vm5125, %vm5126
  %v5128 = vsel %vm5127, %v5119, %v5124
  %v5129 = vrsqrt.pop %v5114
  %v5130 = vmul.f32 %v5129, %v5114
  %v5131 = vmul.f32 %v5130, %v5129
  %v5132 = vmul.f32 0.5, %v5131
  %v5133 = vsub.f32 1.5, %v5132
  %v5134 = vmul.f32 %v5129, %v5133
  %vm5135 = vweird.f32 %v5114
  %vm5136 = vweird.f32 %v5129
  %vm5137 = vmor %vm5135, %vm5136
  %v5138 = vsel %vm5137, %v5129, %v5134
  %v5139 = vrsqrt.pop %v5115
  %v5140 = vmul.f32 %v5139, %v5115
  %v5141 = vmul.f32 %v5140, %v5139
  %v5142 = vmul.f32 0.5, %v5141
  %v5143 = vsub.f32 1.5, %v5142
  %v5144 = vmul.f32 %v5139, %v5143
  %vm5145 = vweird.f32 %v5115
  %vm5146 = vweird.f32 %v5139
  %vm5147 = vmor %vm5145, %vm5146
  %v5148 = vsel %vm5147, %v5139, %v5144
  %v5149 = vrsqrt.pop %v5116
  %v5150 = vmul.f32 %v5149, %v5116
  %v5151 = vmul.f32 %v5150, %v5149
  %v5152 = vmul.f32 0.5, %v5151
  %v5153 = vsub.f32 1.5, %v5152
  %v5154 = vmul.f32 %v5149, %v5153
  %vm5155 = vweird.f32 %v5116
  %vm5156 = vweird.f32 %v5149
  %vm5157 = vmor %vm5155, %vm5156
  %v5158 = vsel %vm5157, %v5149, %v5154
  %v5159 = vrsqrt.pop %v5117
  %v5160 = vmul.f32 %v5159, %v5117
  %v5161 = vmul.f32 %v5160, %v5159
  %v5162 = vmul.f32 0.5, %v5161
  %v5163 = vsub.f32 1.5, %v5162
  %v5164 = vmul.f32 %v5159, %v5163
  %vm5165 = vweird.f32 %v5117
  %vm5166 = vweird.f32 %v5159
  %vm5167 = vmor %vm5165, %vm5166
  %v5168 = vsel %vm5167, %v5159, %v5164
  %v5169 = vrsqrt.pop %v5118
  %v5170 = vmul.f32 %v5169, %v5118
  %v5171 = vmul.f32 %v5170, %v5169
  %v5172 = vmul.f32 0.5, %v5171
  %v5173 = vsub.f32 1.5, %v5172
  %v5174 = vmul.f32 %v5169, %v5173
  %vm5175 = vweird.f32 %v5118
  %vm5176 = vweird.f32 %v5169
  %vm5177 = vmor %vm5175, %vm5176
  %v5178 = vsel %vm5177, %v5169, %v5174
  %v5179 = vmul.f32 %v5077, %v5128
  %v5180 = vmul.f32 %v5078, %v5138
  %v5181 = vmul.f32 %v5079, %v5148
  %v5182 = vmul.f32 %v5080, %v5158
  %v5183 = vmul.f32 %v5081, %v5168
  %v5184 = vmul.f32 %v5082, %v5178
  %v5186 = vperm.slane %v5051, 0
  %v5188 = vmul.f32 %v5179, %v5186
  %v5189 = vmul.f32 %v5180, %v5186
  %v5190 = vmul.f32 %v5181, %v5186
  %v5191 = vmul.f32 %v5182, %v5186
  %v5192 = vmul.f32 %v5183, %v5186
  %v5193 = vmul.f32 %v5184, %v5186
  %v5195 = vperm.slane %v5052, 0
  %v5197 = vadd.f32 %v5188, %v5195
  %v5198 = vadd.f32 %v5189, %v5195
  %v5199 = vadd.f32 %v5190, %v5195
  %v5200 = vadd.f32 %v5191, %v5195
  %v5201 = vadd.f32 %v5192, %v5195
  %v5202 = vadd.f32 %v5193, %v5195
  %v5203 = vld [vmem:[%s65] sm:$0xff]
  %v5204 = vld [vmem:[%s65 + $0x8] sm:$0xff]
  %v5205 = vld [vmem:[%s65 + $0x10] sm:$0xff]
  %v5206 = vld [vmem:[%s65 + $0x18] sm:$0xff]
  %v5207 = vld [vmem:[%s67] sm:$0x1]
  %v5209 = vperm.slane %v5207, 0
  %v5212 = vsel %vm267, %v5197, 0
  %v5215 = vsel %vm267, %v5198, 0
  %v5218 = vsel %vm267, %v5199, 0
  %v5221 = vsel %vm267, %v5200, 0
  %v5224 = vsel %vm267, %v5201, 0
  %v5227 = vsel %vm267, %v5202, 0
  %5229 = vmatpush.msra.mxu0 0.0
  %5230 = vmatpush.msra.mxu0 0.0
  %5231 = vmatpush.msra.mxu0 0.0
  %5232 = vmatpush.msra.mxu0 0.0
  %5233 = vmatpush.msra.mxu0 0.0
  %5234 = vmatpush.msra.mxu0 0.0
  %5235 = vmatpush.msra.mxu0 0.0
  %5236 = vmatpush.msra.mxu0 0.0
  %5237 = vmatpush.msra.mxu0 0.0
  %5238 = vmatpush.msra.mxu0 0.0
  %5239 = vmatpush.msra.mxu0 0.0
  %5240 = vmatpush.msra.mxu0 0.0
  %5241 = vmatpush.msra.mxu0 %v5206
  %5242 = vmatpush.msra.mxu0 %v5205
  %5243 = vmatpush.msra.mxu0 %v5204
  %5244 = vmatpush.msra.mxu0 %v5203
  %5245 = vmatmul.f32.gmra.mxu0 %v5212
  %v5246 = vpop.f32.mrf.mxu0
  %v5247 = vadd.f32 %v5209, %v5246
  %5248 = vmatmul.f32.gmra.mxu0 %v5215
  %v5249 = vpop.f32.mrf.mxu0
  %v5250 = vadd.f32 %v5209, %v5249
  %5251 = vmatmul.f32.gmra.mxu0 %v5218
  %v5252 = vpop.f32.mrf.mxu0
  %v5253 = vadd.f32 %v5209, %v5252
  %5254 = vmatmul.f32.gmra.mxu0 %v5221
  %v5255 = vpop.f32.mrf.mxu0
  %v5256 = vadd.f32 %v5209, %v5255
  %5257 = vmatmul.f32.gmra.mxu0 %v5224
  %v5258 = vpop.f32.mrf.mxu0
  %v5259 = vadd.f32 %v5209, %v5258
  %5260 = vmatmul.f32.gmra.mxu0 %v5227
  %v5261 = vpop.f32.mrf.mxu0
  %v5262 = vadd.f32 %v5209, %v5261
  %5263 = vdwg.mxu0
  %v5264 = vlaneseq
  %v5265 = vand.u32 %v5264, 127
  %vm5266 = vcmp.ge.s32.totalorder %v5265, 7
  %vm5267 = vcmp.lt.s32.totalorder %v5265, 10
  %vm5268 = vmand %vm5266, %vm5267
  %v5269 = vtanh.pop %v5247
  %v5270 = vtanh.pop %v5250
  %v5271 = vtanh.pop %v5253
  %v5272 = vtanh.pop %v5256
  %v5273 = vtanh.pop %v5259
  %v5274 = vtanh.pop %v5262
  %v5275 = vsel %vm5268, %v5269, %v5247
  %v5276 = vsel %vm5268, %v5270, %v5250
  %v5277 = vsel %vm5268, %v5271, %v5253
  %v5278 = vsel %vm5268, %v5272, %v5256
  %v5279 = vsel %vm5268, %v5273, %v5259
  %v5280 = vsel %vm5268, %v5274, %v5262
  %5281 = vst [vmem:[%s69] sm:$0xff] %v5275
  %5282 = vst [vmem:[%s69 + $0x8] sm:$0xff] %v5276
  %5283 = vst [vmem:[%s69 + $0x10] sm:$0xff] %v5277
  %5284 = vst [vmem:[%s69 + $0x18] sm:$0xff] %v5278
  %5285 = vst [vmem:[%s69 + $0x20] sm:$0xff] %v5279
  %5286 = vst [vmem:[%s69 + $0x28] sm:$0xff] %v5280
  // Predicated region
  $region138: #{decision_transformer_forward.1} parent=0 // pred_check
    _
  $region139: #{decision_transformer_forward.1} parent=0 // pred_check_branch
    %5288 = sbr.rel (0) target = $region141
  $region140: #{decision_transformer_forward.1} parent=0 // pred_region
    _
  $region141: #{decision_transformer_forward.1} parent=0 // pred_fallthru
    _
  // Predicated region
  $region142: #{decision_transformer_forward.1} parent=0 // pred_check
    _
  $region143: #{decision_transformer_forward.1} parent=0 // pred_check_branch
    %5290 = sbr.rel (0) target = $region145
  $region144: #{decision_transformer_forward.1} parent=0 // pred_region
    _
  $region145: #{decision_transformer_forward.1} parent=0 // pred_fallthru
    _

</llo_original>
